<compile_context>
chip_gen: v5e
topology: v5e:2x2
jax: 0.10.0
libtpu: 0.0.40
codegen_flags: <defaults>
</compile_context>

<pallas_src>
import functools

import jax
import jax.numpy as jnp
from jax.experimental import pallas as pl
from jax.experimental.pallas import tpu as pltpu

EPS_NORM = 1e-8
EPS_LN = 1e-5


# --------------------------------------------------------------------------
# Small helpers
# --------------------------------------------------------------------------
def _round_up(x, m):
    return ((x + m - 1) // m) * m


def _pad_rows(x, target, axis=0):
    pad = target - x.shape[axis]
    if pad <= 0:
        return x
    widths = [(0, 0)] * x.ndim
    widths[axis] = (0, pad)
    return jnp.pad(x, widths)


@functools.lru_cache(maxsize=None)
def _vmem_limit_bytes():
    """Generation-aware VMEM limit: 3/4 of physical, capped at 100 MiB."""
    cap = 64 * 1024 * 1024          # safe fallback (v7x per-TC physical VMEM)
    try:
        info = pltpu.get_tpu_info()
        cap = int(getattr(info, "vmem_capacity_bytes", cap))
    except Exception:
        pass
    return int(min(cap * 3 // 4, 100 * 1024 * 1024))


def _pick_node_tile(n_rows, max_tile):
    tn = min(max_tile, _round_up(n_rows, 8))
    # prefer >=2 grid steps on the parallel node axis (v7x has 2 TensorCores)
    if tn >= n_rows and n_rows > 8:
        tn = _round_up((n_rows + 1) // 2, 8)
    n_pad = _round_up(n_rows, tn)
    return tn, n_pad


def _pick_edge_tile(n_rows, max_tile):
    te = min(max_tile, _round_up(n_rows, 128))     # keep edge tiles 128-aligned
    e_pad = _round_up(n_rows, te)
    if e_pad // te < 2 and te >= 256 and (te // 2) % 128 == 0:
        te //= 2                                    # >=2 edge blocks when possible
    return te, e_pad


# --------------------------------------------------------------------------
# Shared math (used inside the Pallas kernels AND the pure-JAX reference)
# --------------------------------------------------------------------------
def _ln_scalar(s, g, b):
    mu = jnp.mean(s, axis=-1, keepdims=True)
    var = jnp.mean((s - mu) ** 2, axis=-1, keepdims=True)
    return (s - mu) * jax.lax.rsqrt(var + EPS_LN) * g + b


def _ln_vector(v3):
    """GCPLayerNorm vector branch.  v3: (3, rows, channels)."""
    sq = v3[0] * v3[0] + v3[1] * v3[1] + v3[2] * v3[2]
    inv = 1.0 / jnp.sqrt(jnp.mean(sq, axis=-1, keepdims=True) + EPS_NORM)
    return v3 * inv[None]


def _gcp(p, s, v3, *, scalar_act, vector_act):
    """Geometry-Complete Perceptron.  s: (R, s_in), v3: (3, R, v_in)."""
    f32 = jnp.float32
    rows = s.shape[0]
    v_in = v3.shape[2]
    h = p["Wd"].shape[1]
    v_out = p["Wu"].shape[1]
    # stacked x/y/z down-projection: ONE (3R, v_in) x (v_in, h) MXU matmul
    hv = jnp.dot(v3.reshape(3 * rows, v_in), p["Wd"], preferred_element_type=f32)
    hv3 = hv.reshape(3, rows, h)
    vnorm = jnp.sqrt(hv3[0] * hv3[0] + hv3[1] * hv3[1] + hv3[2] * hv3[2] + EPS_NORM)
    s_pre = (jnp.dot(s, p["Wss"], preferred_element_type=f32)
             + jnp.dot(vnorm, p["Wsv"], preferred_element_type=f32)
             + p["bs"])
    gate_in = jax.nn.silu(s_pre) if vector_act else s_pre
    gate = jax.nn.sigmoid(jnp.dot(gate_in, p["Wg"], preferred_element_type=f32)
                          + p["bg"])
    vo3 = (jnp.dot(hv, p["Wu"], preferred_element_type=f32)
           .reshape(3, rows, v_out) * gate[None])
    so = jax.nn.silu(s_pre) if scalar_act else s_pre
    return so, vo3


# --------------------------------------------------------------------------
# Pallas kernels
# --------------------------------------------------------------------------
def _node_norm_kernel(s_ref, v_ref, g_ref, b_ref, s0_ref, v0_ref):
    """GCPLayerNorm (norm0), applied ONCE per node (reused by gather + node kernel)."""
    s0_ref[...] = _ln_scalar(s_ref[...], g_ref[...], b_ref[...])
    v0_ref[...] = _ln_vector(v_ref[...])


def _message_kernel(ms_ref, mv_ref,
                    wd0_ref, wss0_ref, wsv0_ref, bs0_ref, wu0_ref, wg0_ref, bg0_ref,
                    wd1_ref, wss1_ref, wsv1_ref, bs1_ref, wu1_ref, wg1_ref, bg1_ref,
                    out_ref):
    """Fused msg-GCP0(+act) + msg-GCP1 + residual fusion; emits flat message slab."""
    p0 = dict(Wd=wd0_ref[...], Wss=wss0_ref[...], Wsv=wsv0_ref[...], bs=bs0_ref[...],
              Wu=wu0_ref[...], Wg=wg0_ref[...], bg=bg0_ref[...])
    p1 = dict(Wd=wd1_ref[...], Wss=wss1_ref[...], Wsv=wsv1_ref[...], bs=bs1_ref[...],
              Wu=wu1_ref[...], Wg=wg1_ref[...], bg=bg1_ref[...])
    m_s, m_v = _gcp(p0, ms_ref[...], mv_ref[...], scalar_act=True, vector_act=True)
    m2_s, m2_v = _gcp(p1, m_s, m_v, scalar_act=False, vector_act=False)
    s = m_s + m2_s                    # (te, ns)
    v = m_v + m2_v                    # (3, te, nv)
    out_ref[...] = jnp.concatenate([s, v[0], v[1], v[2]], axis=-1)


def _scatter_mean_kernel(bmin_ref, bmax_ref, col_ref, msg_ref, inv_ref,
                         out_ref, acc_ref):
    """scatter(message, col, 'mean'); edges pre-sorted by col, empty tiles skipped."""
    e = pl.program_id(1)
    tn = out_ref.shape[0]
    te = msg_ref.shape[0]
    tile_start = pl.program_id(0) * tn

    @pl.when(e == 0)
    def _():
        acc_ref[...] = jnp.zeros_like(acc_ref)

    # edge block e covers destination nodes [bmin, bmax]; skip if disjoint from tile
    overlap = jnp.logical_and(bmax_ref[e] >= tile_start,
                              bmin_ref[e] < tile_start + tn)

    @pl.when(overlap)
    def _():
        node_ids = (jax.lax.broadcasted_iota(jnp.int32, (tn, te), 0) + tile_start)
        onehot = (node_ids == col_ref[...]).astype(jnp.float32)        # (tn, te)
        acc_ref[...] += jnp.dot(onehot, msg_ref[...],
                                preferred_element_type=jnp.float32)

    @pl.when(e == pl.num_programs(1) - 1)
    def _():
        out_ref[...] = acc_ref[...] * inv_ref[...]      # precomputed 1/count


def _node_kernel(s0_ref, v0_ref, agg_ref, g1_ref, b1_ref,
                 wda_ref, wssa_ref, wsva_ref, bsa_ref, wua_ref, wga_ref, bga_ref,
                 wdb_ref, wssb_ref, wsvb_ref, bsb_ref, wub_ref, wgb_ref, bgb_ref,
                 out_ref):
    """Fused residual(agg) + norm1 + ff-GCP0(+act) + ff-GCP1 + residual."""
    ns = s0_ref.shape[1]
    nv = v0_ref.shape[2]
    agg = agg_ref[...]
    s1 = s0_ref[...] + agg[:, :ns]
    v1 = v0_ref[...] + jnp.stack(
        [agg[:, ns + k * nv: ns + (k + 1) * nv] for k in range(3)], axis=0)
    s2 = _ln_scalar(s1, g1_ref[...], b1_ref[...])
    v2 = _ln_vector(v1)

    pa = dict(Wd=wda_ref[...], Wss=wssa_ref[...], Wsv=wsva_ref[...], bs=bsa_ref[...],
              Wu=wua_ref[...], Wg=wga_ref[...], bg=bga_ref[...])
    pb = dict(Wd=wdb_ref[...], Wss=wssb_ref[...], Wsv=wsvb_ref[...], bs=bsb_ref[...],
              Wu=wub_ref[...], Wg=wgb_ref[...], bg=bgb_ref[...])
    h_s, h_v = _gcp(pa, s2, v2, scalar_act=True, vector_act=True)
    o_s, o_v = _gcp(pb, h_s, h_v, scalar_act=False, vector_act=False)
    out_s = s2 + o_s
    out_v = v2 + o_v
    out_ref[...] = jnp.concatenate([out_s, out_v[0], out_v[1], out_v[2]], axis=-1)


# --------------------------------------------------------------------------
# pallas_call wrappers
# --------------------------------------------------------------------------
def _node_norm_pallas(norm_p, node_s, nv3, tn, vmem):
    N_pad, ns = node_s.shape
    nv = nv3.shape[2]
    full = lambda a: pl.BlockSpec(a.shape, lambda i: (0,) * a.ndim)
    return pl.pallas_call(
        _node_norm_kernel,
        grid=(N_pad // tn,),
        in_specs=[pl.BlockSpec((tn, ns), lambda i: (i, 0)),
                  pl.BlockSpec((3, tn, nv), lambda i: (0, i, 0)),
                  full(norm_p["gamma"]), full(norm_p["beta"])],
        out_specs=(pl.BlockSpec((tn, ns), lambda i: (i, 0)),
                   pl.BlockSpec((3, tn, nv), lambda i: (0, i, 0))),
        out_shape=(jax.ShapeDtypeStruct((N_pad, ns), jnp.float32),
                   jax.ShapeDtypeStruct((3, N_pad, nv), jnp.float32)),
        compiler_params=pltpu.CompilerParams(
            dimension_semantics=("parallel",), vmem_limit_bytes=vmem),
    )(node_s, nv3, norm_p["gamma"], norm_p["beta"])


def _message_pallas(params, ms, mv, te, vmem):
    E_pad, s_in = ms.shape
    v_in = mv.shape[2]
    p0, p1 = params["msg0"], params["msg1"]
    ns = p0["Wss"].shape[1]
    nv = p0["Wu"].shape[1]
    M = ns + 3 * nv
    weights = (p0["Wd"], p0["Wss"], p0["Wsv"], p0["bs"], p0["Wu"], p0["Wg"], p0["bg"],
               p1["Wd"], p1["Wss"], p1["Wsv"], p1["bs"], p1["Wu"], p1["Wg"], p1["bg"])
    full = lambda a: pl.BlockSpec(a.shape, lambda i: (0,) * a.ndim)
    return pl.pallas_call(
        _message_kernel,
        grid=(E_pad // te,),
        in_specs=[pl.BlockSpec((te, s_in), lambda i: (i, 0)),
                  pl.BlockSpec((3, te, v_in), lambda i: (0, i, 0))]
                 + [full(w) for w in weights],
        out_specs=pl.BlockSpec((te, M), lambda i: (i, 0)),
        out_shape=jax.ShapeDtypeStruct((E_pad, M), jnp.float32),
        compiler_params=pltpu.CompilerParams(
            dimension_semantics=("parallel",), vmem_limit_bytes=vmem),
    )(ms, mv, *weights)


def _scatter_mean_pallas(msg, col2d, blk_min, blk_max, inv_cnt, N_pad, tn, te, vmem):
    E_pad, M = msg.shape
    n_eblk = E_pad // te
    grid_spec = pltpu.PrefetchScalarGridSpec(
        num_scalar_prefetch=2,
        grid=(N_pad // tn, n_eblk),
        in_specs=[pl.BlockSpec((1, te), lambda n, e, bmin, bmax: (0, e)),
                  pl.BlockSpec((te, M), lambda n, e, bmin, bmax: (e, 0)),
                  pl.BlockSpec((tn, 1), lambda n, e, bmin, bmax: (n, 0))],
        out_specs=pl.BlockSpec((tn, M), lambda n, e, bmin, bmax: (n, 0)),
        scratch_shapes=[pltpu.VMEM((tn, M), jnp.float32)],
    )
    return pl.pallas_call(
        _scatter_mean_kernel,
        grid_spec=grid_spec,
        out_shape=jax.ShapeDtypeStruct((N_pad, M), jnp.float32),
        compiler_params=pltpu.CompilerParams(
            dimension_semantics=("parallel", "arbitrary"), vmem_limit_bytes=vmem),
    )(blk_min, blk_max, col2d, msg, inv_cnt)


def _node_update_pallas(params, s0, v0, agg, tn, vmem):
    N_pad, ns = s0.shape
    nv = v0.shape[2]
    M = ns + 3 * nv
    n1, pa, pb = params["norm1"], params["ff0"], params["ff1"]
    weights = (n1["gamma"], n1["beta"],
               pa["Wd"], pa["Wss"], pa["Wsv"], pa["bs"], pa["Wu"], pa["Wg"], pa["bg"],
               pb["Wd"], pb["Wss"], pb["Wsv"], pb["bs"], pb["Wu"], pb["Wg"], pb["bg"])
    full = lambda a: pl.BlockSpec(a.shape, lambda i: (0,) * a.ndim)
    return pl.pallas_call(
        _node_kernel,
        grid=(N_pad // tn,),
        in_specs=[pl.BlockSpec((tn, ns), lambda i: (i, 0)),
                  pl.BlockSpec((3, tn, nv), lambda i: (0, i, 0)),
                  pl.BlockSpec((tn, M), lambda i: (i, 0))]
                 + [full(w) for w in weights],
        out_specs=pl.BlockSpec((tn, M), lambda i: (i, 0)),
        out_shape=jax.ShapeDtypeStruct((N_pad, M), jnp.float32),
        compiler_params=pltpu.CompilerParams(
            dimension_semantics=("parallel",), vmem_limit_bytes=vmem),
    )(s0, v0, agg, *weights)


# --------------------------------------------------------------------------
# Pure-JAX reference (same math graph; used for verification)
# --------------------------------------------------------------------------
def _forward_reference(params, node_s, nv3, edge_s, ev3, row, col):
    ns_dim = node_s.shape[1]
    nv_dim = nv3.shape[2]
    N = node_s.shape[0]
    n0, n1 = params["norm0"], params["norm1"]

    s0 = _ln_scalar(node_s, n0["gamma"], n0["beta"])
    v0 = _ln_vector(nv3)

    ms = jnp.concatenate([s0[row], edge_s, s0[col]], axis=-1)
    mv = jnp.concatenate([v0[:, row, :], ev3, v0[:, col, :]], axis=-1)
    m_s, m_v = _gcp(params["msg0"], ms, mv, scalar_act=True, vector_act=True)
    m2_s, m2_v = _gcp(params["msg1"], m_s, m_v, scalar_act=False, vector_act=False)
    msg_s, msg_v = m_s + m2_s, m_v + m2_v
    msg_flat = jnp.concatenate([msg_s, msg_v[0], msg_v[1], msg_v[2]], axis=-1)

    onehot = (jnp.arange(N, dtype=jnp.int32)[:, None] == col[None, :]).astype(jnp.float32)
    agg = jnp.dot(onehot, msg_flat, preferred_element_type=jnp.float32)
    agg = agg / jnp.maximum(jnp.sum(onehot, axis=-1, keepdims=True), 1.0)
    a_s = agg[:, :ns_dim]
    a_v = jnp.stack([agg[:, ns_dim + k * nv_dim: ns_dim + (k + 1) * nv_dim]
                     for k in range(3)], axis=0)

    s1, v1 = s0 + a_s, v0 + a_v
    s2 = _ln_scalar(s1, n1["gamma"], n1["beta"])
    v2 = _ln_vector(v1)
    h_s, h_v = _gcp(params["ff0"], s2, v2, scalar_act=True, vector_act=True)
    o_s, o_v = _gcp(params["ff1"], h_s, h_v, scalar_act=False, vector_act=False)
    return s2 + o_s, v2 + o_v


# --------------------------------------------------------------------------
# GCPInteractions forward
# --------------------------------------------------------------------------
def gcp_interactions_forward(params, node_s, node_v, edge_s, edge_v, edge_index,
                             frames, *, use_pallas=True, node_tile=512, edge_tile=1024):
    del frames  # TODO(synk): frames unused (ablate_frame_updates=True path)
    N, ns_dim = node_s.shape
    nv_dim = node_v.shape[1]
    E = edge_s.shape[0]

    node_s = node_s.astype(jnp.float32)
    edge_s = edge_s.astype(jnp.float32)
    nv3 = jnp.transpose(node_v.astype(jnp.float32), (2, 0, 1))   # (3, N, nv)
    ev3 = jnp.transpose(edge_v.astype(jnp.float32), (2, 0, 1))   # (3, E, ev)
    row = edge_index[0].astype(jnp.int32)
    col = edge_index[1].astype(jnp.int32)

    if not use_pallas:
        out_s, out_v3 = _forward_reference(params, node_s, nv3, edge_s, ev3, row, col)
        return out_s, jnp.transpose(out_v3, (1, 2, 0))

    vmem = _vmem_limit_bytes()
    tn, N_pad = _pick_node_tile(N, node_tile)
    te, E_pad = _pick_edge_tile(E, edge_tile)
    M = ns_dim + 3 * nv_dim

    # ---- 0) normalize node features ONCE (reused for gather + node residual) ----
    node_s_p = _pad_rows(node_s, N_pad)
    nv3_p = _pad_rows(nv3, N_pad, axis=1)
    s0, v0 = _node_norm_pallas(params["norm0"], node_s_p, nv3_p, tn, vmem)

    # ---- sort edges by destination so the scatter can tile-skip ----
    perm = jnp.argsort(col)
    row_s, col_s = row[perm], col[perm]
    edge_s_s = edge_s[perm]
    ev3_s = ev3[:, perm, :]

    # ---- gather + concat message inputs (XLA layout plumbing) ----
    # TODO(synk): for very large E a fully in-kernel DMA gather of resident node
    #             features would remove this HBM round trip.
    ms = jnp.concatenate([s0[row_s], edge_s_s, s0[col_s]], axis=-1)          # (E, 2ns+es)
    mv = jnp.concatenate([v0[:, row_s, :], ev3_s, v0[:, col_s, :]], axis=-1)  # (3, E, 2nv+ev)
    ms = _pad_rows(ms, E_pad)
    mv = _pad_rows(mv, E_pad, axis=1)

    # ---- 1) fused message kernel -> flat message slab (E_pad, ns+3nv) ----
    msg = _message_pallas(params, ms, mv, te, vmem)

    # ---- 2) scatter-mean with per-edge-block range skipping ----
    col_pad = jnp.pad(col_s, (0, E_pad - E), constant_values=-1)
    valid = jnp.arange(E_pad, dtype=jnp.int32) < E
    n_eblk = E_pad // te
    blk_min = jnp.where(valid, col_pad, jnp.int32(2 ** 30)) \
        .reshape(n_eblk, te).min(axis=1).astype(jnp.int32)
    blk_max = col_pad.reshape(n_eblk, te).max(axis=1).astype(jnp.int32)
    counts = jnp.zeros((N_pad,), jnp.float32).at[col].add(1.0)
    inv_cnt = (1.0 / jnp.maximum(counts, 1.0)).reshape(N_pad, 1)
    agg = _scatter_mean_pallas(msg, col_pad.reshape(1, E_pad),
                               blk_min, blk_max, inv_cnt, N_pad, tn, te, vmem)

    # ---- 3) fused node update -> flat slab (N_pad, ns+3nv) ----
    out_flat = _node_update_pallas(params, s0, v0, agg, tn, vmem)

    out_s = out_flat[:N, :ns_dim]
    out_v = out_flat[:N, ns_dim:].reshape(N, 3, nv_dim).transpose(0, 2, 1)   # (N, nv, 3)
    return out_s, out_v


# --------------------------------------------------------------------------
# Parameter construction (deterministic, synthetic)
# --------------------------------------------------------------------------
def make_gcp_params(key, s_in, v_in, s_out, v_out):
    h = max(v_in, v_out)
    k = jax.random.split(key, 5)
    init = lambda kk, shp, fan: (jax.random.normal(kk, shp, jnp.float32)
                                 / jnp.sqrt(jnp.float32(fan)))
    return dict(
        Wd=init(k[0], (v_in, h), v_in),
        Wss=init(k[1], (s_in, s_out), s_in + h),
        Wsv=init(k[2], (h, s_out), s_in + h),
        bs=jnp.zeros((1, s_out), jnp.float32),
        Wu=init(k[3], (h, v_out), h),
        Wg=init(k[4], (s_out, v_out), s_out),
        bg=jnp.zeros((1, v_out), jnp.float32),
    )


def make_ln_params(dim):
    return dict(gamma=jnp.ones((1, dim), jnp.float32),
                beta=jnp.zeros((1, dim), jnp.float32))


def make_interaction_params(key, node_dims, edge_dims):
    ns, nv = node_dims
    es, ev = edge_dims
    hs, hv = 4 * ns, 2 * nv
    k = jax.random.split(key, 4)
    return dict(
        msg0=make_gcp_params(k[0], 2 * ns + es, 2 * nv + ev, ns, nv),
        msg1=make_gcp_params(k[1], ns, nv, ns, nv),
        norm0=make_ln_params(ns),
        norm1=make_ln_params(ns),
        ff0=make_gcp_params(k[2], ns, nv, hs, hv),
        ff1=make_gcp_params(k[3], hs, hv, ns, nv),
    )


# --------------------------------------------------------------------------
# Demo / self-check
# --------------------------------------------------------------------------
if __name__ == "__main__":
    key = jax.random.PRNGKey(0)
    N, E = 16, 48                 # nodes, edges
    NODE_DIMS = (32, 8)           # (scalar, vector-channels)
    EDGE_DIMS = (16, 4)

    kp, k1, k2, k3, k4, k5 = jax.random.split(key, 6)
    params = make_interaction_params(kp, NODE_DIMS, EDGE_DIMS)

    node_s = jax.random.normal(k1, (N, NODE_DIMS[0]), jnp.float32)
    node_v = jax.random.normal(k2, (N, NODE_DIMS[1], 3), jnp.float32)
    edge_s = jax.random.normal(k3, (E, EDGE_DIMS[0]), jnp.float32)
    edge_v = jax.random.normal(k4, (E, EDGE_DIMS[1], 3), jnp.float32)
    frames = jax.random.normal(k5, (E, 3, 3), jnp.float32)

    idx = jnp.arange(E, dtype=jnp.int32)
    edge_index = jnp.stack([(idx * 7 + 3) % N, idx % N], axis=0)   # (2, E)

    fwd = jax.jit(functools.partial(gcp_interactions_forward, use_pallas=True))
    out_s, out_v = fwd(params, node_s, node_v, edge_s, edge_v, edge_index, frames)
    jax.block_until_ready((out_s, out_v))

    # pure-JAX reference check
    ref_s, ref_v = gcp_interactions_forward(
        params, node_s, node_v, edge_s, edge_v, edge_index, frames, use_pallas=False)
    assert out_s.shape == (N, NODE_DIMS[0]) and out_v.shape == (N, NODE_DIMS[1], 3)
    assert jnp.allclose(out_s, ref_s, atol=1e-3, rtol=1e-3), \
        float(jnp.max(jnp.abs(out_s - ref_s)))
    assert jnp.allclose(out_v, ref_v, atol=1e-3, rtol=1e-3), \
        float(jnp.max(jnp.abs(out_v - ref_v)))

    print("KERNEL_OK")
</pallas_src>

<mosaic_0001>
module attributes {stable_mosaic.version = 11 : i64} {
  func.func @_node_norm_kernel(%arg0: i32, %arg1: memref<8x32xf32, #tpu.memory_space<vmem>>, %arg2: memref<3x8x8xf32, #tpu.memory_space<vmem>>, %arg3: memref<1x32xf32, #tpu.memory_space<vmem>>, %arg4: memref<1x32xf32, #tpu.memory_space<vmem>>, %arg5: memref<8x32xf32, #tpu.memory_space<vmem>>, %arg6: memref<3x8x8xf32, #tpu.memory_space<vmem>>) attributes {dimension_semantics = [#tpu.dimension_semantics<parallel>], iteration_bounds = array<i64: 2>, scalar_prefetch = 0 : i64, scratch_operands = 0 : i64, tpu.core_type = #tpu.core_type<tc>, window_params = [{transform_indices = @transform_0, window_bounds = array<i64: 8, 32>}, {transform_indices = @transform_1, window_bounds = array<i64: 3, 8, 8>}, {pipeline_mode = #tpu.pipeline_mode<synchronous>, transform_indices = @transform_2, window_bounds = array<i64: 1, 32>}, {pipeline_mode = #tpu.pipeline_mode<synchronous>, transform_indices = @transform_3, window_bounds = array<i64: 1, 32>}, {transform_indices = @transform_4, window_bounds = array<i64: 8, 32>}, {transform_indices = @transform_5, window_bounds = array<i64: 3, 8, 8>}]} {
    %c0 = arith.constant 0 : index
    %c0_0 = arith.constant 0 : index
    %0 = vector.load %arg1[%c0, %c0_0] : memref<8x32xf32, #tpu.memory_space<vmem>>, vector<8x32xf32>
    %c0_1 = arith.constant 0 : index
    %c0_2 = arith.constant 0 : index
    %1 = vector.load %arg3[%c0_1, %c0_2] : memref<1x32xf32, #tpu.memory_space<vmem>>, vector<1x32xf32>
    %c0_3 = arith.constant 0 : index
    %c0_4 = arith.constant 0 : index
    %2 = vector.load %arg4[%c0_3, %c0_4] : memref<1x32xf32, #tpu.memory_space<vmem>>, vector<1x32xf32>
    %cst = arith.constant dense<0.000000e+00> : vector<8xf32>
    %3 = vector.multi_reduction <add>, %0, %cst [1] : vector<8x32xf32> to vector<8xf32>
    %4 = vector.shape_cast %3 : vector<8xf32> to vector<8x1xf32>
    %cst_5 = arith.constant 3.200000e+01 : f32
    %5 = vector.broadcast %cst_5 : f32 to vector<8x1xf32>
    %6 = arith.divf %4, %5 : vector<8x1xf32>
    %7 = vector.broadcast %6 : vector<8x1xf32> to vector<8x32xf32>
    %8 = arith.subf %0, %7 : vector<8x32xf32>
    %9 = arith.mulf %8, %8 : vector<8x32xf32>
    %cst_6 = arith.constant dense<0.000000e+00> : vector<8xf32>
    %10 = vector.multi_reduction <add>, %9, %cst_6 [1] : vector<8x32xf32> to vector<8xf32>
    %11 = vector.shape_cast %10 : vector<8xf32> to vector<8x1xf32>
    %cst_7 = arith.constant 3.200000e+01 : f32
    %12 = vector.broadcast %cst_7 : f32 to vector<8x1xf32>
    %13 = arith.divf %11, %12 : vector<8x1xf32>
    %14 = vector.broadcast %6 : vector<8x1xf32> to vector<8x32xf32>
    %15 = arith.subf %0, %14 : vector<8x32xf32>
    %cst_8 = arith.constant 9.99999974E-6 : f32
    %16 = vector.broadcast %cst_8 : f32 to vector<8x1xf32>
    %17 = arith.addf %13, %16 : vector<8x1xf32>
    %18 = math.rsqrt %17 : vector<8x1xf32>
    %19 = vector.broadcast %18 : vector<8x1xf32> to vector<8x32xf32>
    %20 = arith.mulf %15, %19 : vector<8x32xf32>
    %21 = vector.broadcast %1 : vector<1x32xf32> to vector<8x32xf32>
    %22 = arith.mulf %20, %21 : vector<8x32xf32>
    %23 = vector.broadcast %2 : vector<1x32xf32> to vector<8x32xf32>
    %24 = arith.addf %22, %23 : vector<8x32xf32>
    %c0_9 = arith.constant 0 : index
    %c0_10 = arith.constant 0 : index
    %25 = vector.load %arg5[%c0_9, %c0_10] : memref<8x32xf32, #tpu.memory_space<vmem>>, vector<8x32xf32>
    tpu.vector_store %arg5[%c0_9, %c0_10], %24 {strides = array<i32>} : memref<8x32xf32, #tpu.memory_space<vmem>>, vector<8x32xf32>,
    %c0_11 = arith.constant 0 : index
    %c0_12 = arith.constant 0 : index
    %c0_13 = arith.constant 0 : index
    %26 = vector.load %arg2[%c0_11, %c0_12, %c0_13] : memref<3x8x8xf32, #tpu.memory_space<vmem>>, vector<3x8x8xf32>
    %27 = vector.extract_strided_slice %26 {offsets = [0, 0, 0], sizes = [1, 8, 8], strides = [1, 1, 1]} : vector<3x8x8xf32> to vector<1x8x8xf32>
    %28 = vector.shape_cast %27 : vector<1x8x8xf32> to vector<8x8xf32>
    %29 = vector.extract_strided_slice %26 {offsets = [0, 0, 0], sizes = [1, 8, 8], strides = [1, 1, 1]} : vector<3x8x8xf32> to vector<1x8x8xf32>
    %30 = vector.shape_cast %29 : vector<1x8x8xf32> to vector<8x8xf32>
    %31 = arith.mulf %28, %30 : vector<8x8xf32>
    %32 = vector.extract_strided_slice %26 {offsets = [1, 0, 0], sizes = [1, 8, 8], strides = [1, 1, 1]} : vector<3x8x8xf32> to vector<1x8x8xf32>
    %33 = vector.shape_cast %32 : vector<1x8x8xf32> to vector<8x8xf32>
    %34 = vector.extract_strided_slice %26 {offsets = [1, 0, 0], sizes = [1, 8, 8], strides = [1, 1, 1]} : vector<3x8x8xf32> to vector<1x8x8xf32>
    %35 = vector.shape_cast %34 : vector<1x8x8xf32> to vector<8x8xf32>
    %36 = arith.mulf %33, %35 : vector<8x8xf32>
    %37 = arith.addf %31, %36 : vector<8x8xf32>
    %38 = vector.extract_strided_slice %26 {offsets = [2, 0, 0], sizes = [1, 8, 8], strides = [1, 1, 1]} : vector<3x8x8xf32> to vector<1x8x8xf32>
    %39 = vector.shape_cast %38 : vector<1x8x8xf32> to vector<8x8xf32>
    %40 = vector.extract_strided_slice %26 {offsets = [2, 0, 0], sizes = [1, 8, 8], strides = [1, 1, 1]} : vector<3x8x8xf32> to vector<1x8x8xf32>
    %41 = vector.shape_cast %40 : vector<1x8x8xf32> to vector<8x8xf32>
    %42 = arith.mulf %39, %41 : vector<8x8xf32>
    %43 = arith.addf %37, %42 : vector<8x8xf32>
    %cst_14 = arith.constant dense<0.000000e+00> : vector<8xf32>
    %44 = vector.multi_reduction <add>, %43, %cst_14 [1] : vector<8x8xf32> to vector<8xf32>
    %45 = vector.shape_cast %44 : vector<8xf32> to vector<8x1xf32>
    %cst_15 = arith.constant 8.000000e+00 : f32
    %46 = vector.broadcast %cst_15 : f32 to vector<8x1xf32>
    %47 = arith.divf %45, %46 : vector<8x1xf32>
    %cst_16 = arith.constant 9.99999993E-9 : f32
    %48 = vector.broadcast %cst_16 : f32 to vector<8x1xf32>
    %49 = arith.addf %47, %48 : vector<8x1xf32>
    %50 = math.sqrt %49 : vector<8x1xf32>
    %cst_17 = arith.constant 1.000000e+00 : f32
    %51 = vector.broadcast %cst_17 : f32 to vector<8x1xf32>
    %52 = arith.divf %51, %50 : vector<8x1xf32>
    %53 = vector.shape_cast %52 : vector<8x1xf32> to vector<1x8x1xf32>
    %54 = vector.broadcast %53 : vector<1x8x1xf32> to vector<3x8x8xf32>
    %55 = arith.mulf %26, %54 : vector<3x8x8xf32>
    %c0_18 = arith.constant 0 : index
    %c0_19 = arith.constant 0 : index
    %c0_20 = arith.constant 0 : index
    %56 = vector.load %arg6[%c0_18, %c0_19, %c0_20] : memref<3x8x8xf32, #tpu.memory_space<vmem>>, vector<3x8x8xf32>
    tpu.vector_store %arg6[%c0_18, %c0_19, %c0_20], %55 {strides = array<i32>} : memref<3x8x8xf32, #tpu.memory_space<vmem>>, vector<3x8x8xf32>,
    return
  }
  func.func @transform_0(%arg0: i32) -> (i32, i32) {
    %c0_i32 = arith.constant 0 : i32
    %c0_i32_0 = arith.constant 0 : i32
    return %arg0, %c0_i32 : i32, i32
  }
  func.func @transform_1(%arg0: i32) -> (i32, i32, i32) {
    %c0_i32 = arith.constant 0 : i32
    %c0_i32_0 = arith.constant 0 : i32
    %c0_i32_1 = arith.constant 0 : i32
    return %c0_i32, %arg0, %c0_i32_0 : i32, i32, i32
  }
  func.func @transform_2(%arg0: i32) -> (i32, i32) {
    %c0_i32 = arith.constant 0 : i32
    %c0_i32_0 = arith.constant 0 : i32
    %c0_i32_1 = arith.constant 0 : i32
    return %c0_i32, %c0_i32_0 : i32, i32
  }
  func.func @transform_3(%arg0: i32) -> (i32, i32) {
    %c0_i32 = arith.constant 0 : i32
    %c0_i32_0 = arith.constant 0 : i32
    %c0_i32_1 = arith.constant 0 : i32
    return %c0_i32, %c0_i32_0 : i32, i32
  }
  func.func @transform_4(%arg0: i32) -> (i32, i32) {
    %c0_i32 = arith.constant 0 : i32
    %c0_i32_0 = arith.constant 0 : i32
    return %arg0, %c0_i32 : i32, i32
  }
  func.func @transform_5(%arg0: i32) -> (i32, i32, i32) {
    %c0_i32 = arith.constant 0 : i32
    %c0_i32_0 = arith.constant 0 : i32
    %c0_i32_1 = arith.constant 0 : i32
    return %c0_i32, %arg0, %c0_i32_0 : i32, i32, i32
  }
}

module attributes {stable_mosaic.version = 11 : i64} {
  func.func @_message_kernel(%arg0: i32, %arg1: memref<128x80xf32, #tpu.memory_space<vmem>>, %arg2: memref<3x128x20xf32, #tpu.memory_space<vmem>>, %arg3: memref<20x20xf32, #tpu.memory_space<vmem>>, %arg4: memref<80x32xf32, #tpu.memory_space<vmem>>, %arg5: memref<20x32xf32, #tpu.memory_space<vmem>>, %arg6: memref<1x32xf32, #tpu.memory_space<vmem>>, %arg7: memref<20x8xf32, #tpu.memory_space<vmem>>, %arg8: memref<32x8xf32, #tpu.memory_space<vmem>>, %arg9: memref<1x8xf32, #tpu.memory_space<vmem>>, %arg10: memref<8x8xf32, #tpu.memory_space<vmem>>, %arg11: memref<32x32xf32, #tpu.memory_space<vmem>>, %arg12: memref<8x32xf32, #tpu.memory_space<vmem>>, %arg13: memref<1x32xf32, #tpu.memory_space<vmem>>, %arg14: memref<8x8xf32, #tpu.memory_space<vmem>>, %arg15: memref<32x8xf32, #tpu.memory_space<vmem>>, %arg16: memref<1x8xf32, #tpu.memory_space<vmem>>, %arg17: memref<128x56xf32, #tpu.memory_space<vmem>>) attributes {dimension_semantics = [#tpu.dimension_semantics<parallel>], iteration_bounds = array<i64: 1>, scalar_prefetch = 0 : i64, scratch_operands = 0 : i64, tpu.core_type = #tpu.core_type<tc>, window_params = [{transform_indices = @transform_0, window_bounds = array<i64: 128, 80>}, {transform_indices = @transform_1, window_bounds = array<i64: 3, 128, 20>}, {pipeline_mode = #tpu.pipeline_mode<synchronous>, transform_indices = @transform_2, window_bounds = array<i64: 20, 20>}, {pipeline_mode = #tpu.pipeline_mode<synchronous>, transform_indices = @transform_3, window_bounds = array<i64: 80, 32>}, {pipeline_mode = #tpu.pipeline_mode<synchronous>, transform_indices = @transform_4, window_bounds = array<i64: 20, 32>}, {pipeline_mode = #tpu.pipeline_mode<synchronous>, transform_indices = @transform_5, window_bounds = array<i64: 1, 32>}, {pipeline_mode = #tpu.pipeline_mode<synchronous>, transform_indices = @transform_6, window_bounds = array<i64: 20, 8>}, {pipeline_mode = #tpu.pipeline_mode<synchronous>, transform_indices = @transform_7, window_bounds = array<i64: 32, 8>}, {pipeline_mode = #tpu.pipeline_mode<synchronous>, transform_indices = @transform_8, window_bounds = array<i64: 1, 8>}, {pipeline_mode = #tpu.pipeline_mode<synchronous>, transform_indices = @transform_9, window_bounds = array<i64: 8, 8>}, {pipeline_mode = #tpu.pipeline_mode<synchronous>, transform_indices = @transform_10, window_bounds = array<i64: 32, 32>}, {pipeline_mode = #tpu.pipeline_mode<synchronous>, transform_indices = @transform_11, window_bounds = array<i64: 8, 32>}, {pipeline_mode = #tpu.pipeline_mode<synchronous>, transform_indices = @transform_12, window_bounds = array<i64: 1, 32>}, {pipeline_mode = #tpu.pipeline_mode<synchronous>, transform_indices = @transform_13, window_bounds = array<i64: 8, 8>}, {pipeline_mode = #tpu.pipeline_mode<synchronous>, transform_indices = @transform_14, window_bounds = array<i64: 32, 8>}, {pipeline_mode = #tpu.pipeline_mode<synchronous>, transform_indices = @transform_15, window_bounds = array<i64: 1, 8>}, {transform_indices = @transform_16, window_bounds = array<i64: 128, 56>}]} {
    %c0 = arith.constant 0 : index
    %c0_0 = arith.constant 0 : index
    %0 = vector.load %arg3[%c0, %c0_0] : memref<20x20xf32, #tpu.memory_space<vmem>>, vector<20x20xf32>
    %c0_1 = arith.constant 0 : index
    %c0_2 = arith.constant 0 : index
    %1 = vector.load %arg4[%c0_1, %c0_2] : memref<80x32xf32, #tpu.memory_space<vmem>>, vector<80x32xf32>
    %c0_3 = arith.constant 0 : index
    %c0_4 = arith.constant 0 : index
    %2 = vector.load %arg5[%c0_3, %c0_4] : memref<20x32xf32, #tpu.memory_space<vmem>>, vector<20x32xf32>
    %c0_5 = arith.constant 0 : index
    %c0_6 = arith.constant 0 : index
    %3 = vector.load %arg6[%c0_5, %c0_6] : memref<1x32xf32, #tpu.memory_space<vmem>>, vector<1x32xf32>
    %c0_7 = arith.constant 0 : index
    %c0_8 = arith.constant 0 : index
    %4 = vector.load %arg7[%c0_7, %c0_8] : memref<20x8xf32, #tpu.memory_space<vmem>>, vector<20x8xf32>
    %c0_9 = arith.constant 0 : index
    %c0_10 = arith.constant 0 : index
    %5 = vector.load %arg8[%c0_9, %c0_10] : memref<32x8xf32, #tpu.memory_space<vmem>>, vector<32x8xf32>
    %c0_11 = arith.constant 0 : index
    %c0_12 = arith.constant 0 : index
    %6 = vector.load %arg9[%c0_11, %c0_12] : memref<1x8xf32, #tpu.memory_space<vmem>>, vector<1x8xf32>
    %c0_13 = arith.constant 0 : index
    %c0_14 = arith.constant 0 : index
    %7 = vector.load %arg10[%c0_13, %c0_14] : memref<8x8xf32, #tpu.memory_space<vmem>>, vector<8x8xf32>
    %c0_15 = arith.constant 0 : index
    %c0_16 = arith.constant 0 : index
    %8 = vector.load %arg11[%c0_15, %c0_16] : memref<32x32xf32, #tpu.memory_space<vmem>>, vector<32x32xf32>
    %c0_17 = arith.constant 0 : index
    %c0_18 = arith.constant 0 : index
    %9 = vector.load %arg12[%c0_17, %c0_18] : memref<8x32xf32, #tpu.memory_space<vmem>>, vector<8x32xf32>
    %c0_19 = arith.constant 0 : index
    %c0_20 = arith.constant 0 : index
    %10 = vector.load %arg13[%c0_19, %c0_20] : memref<1x32xf32, #tpu.memory_space<vmem>>, vector<1x32xf32>
    %c0_21 = arith.constant 0 : index
    %c0_22 = arith.constant 0 : index
    %11 = vector.load %arg14[%c0_21, %c0_22] : memref<8x8xf32, #tpu.memory_space<vmem>>, vector<8x8xf32>
    %c0_23 = arith.constant 0 : index
    %c0_24 = arith.constant 0 : index
    %12 = vector.load %arg15[%c0_23, %c0_24] : memref<32x8xf32, #tpu.memory_space<vmem>>, vector<32x8xf32>
    %c0_25 = arith.constant 0 : index
    %c0_26 = arith.constant 0 : index
    %13 = vector.load %arg16[%c0_25, %c0_26] : memref<1x8xf32, #tpu.memory_space<vmem>>, vector<1x8xf32>
    %c0_27 = arith.constant 0 : index
    %c0_28 = arith.constant 0 : index
    %14 = vector.load %arg1[%c0_27, %c0_28] : memref<128x80xf32, #tpu.memory_space<vmem>>, vector<128x80xf32>
    %c0_29 = arith.constant 0 : index
    %c0_30 = arith.constant 0 : index
    %c0_31 = arith.constant 0 : index
    %15 = vector.load %arg2[%c0_29, %c0_30, %c0_31] : memref<3x128x20xf32, #tpu.memory_space<vmem>>, vector<3x128x20xf32>
    %16 = vector.shape_cast %15 : vector<3x128x20xf32> to vector<384x20xf32>
    %cst = arith.constant dense<0.000000e+00> : vector<384x20xf32>
    %17 = tpu.matmul %16, %0, %cst {dimension_numbers = #tpu.dot_dimension_numbers<[1], [0], [0], [1], [0, 0, 1, 1], [], []>} : vector<384x20xf32>, vector<20x20xf32>, vector<384x20xf32> -> vector<384x20xf32>
    %18 = vector.shape_cast %17 : vector<384x20xf32> to vector<3x128x20xf32>
    %19 = vector.extract_strided_slice %18 {offsets = [0, 0, 0], sizes = [1, 128, 20], strides = [1, 1, 1]} : vector<3x128x20xf32> to vector<1x128x20xf32>
    %20 = vector.shape_cast %19 : vector<1x128x20xf32> to vector<128x20xf32>
    %21 = vector.extract_strided_slice %18 {offsets = [0, 0, 0], sizes = [1, 128, 20], strides = [1, 1, 1]} : vector<3x128x20xf32> to vector<1x128x20xf32>
    %22 = vector.shape_cast %21 : vector<1x128x20xf32> to vector<128x20xf32>
    %23 = arith.mulf %20, %22 : vector<128x20xf32>
    %24 = vector.extract_strided_slice %18 {offsets = [1, 0, 0], sizes = [1, 128, 20], strides = [1, 1, 1]} : vector<3x128x20xf32> to vector<1x128x20xf32>
    %25 = vector.shape_cast %24 : vector<1x128x20xf32> to vector<128x20xf32>
    %26 = vector.extract_strided_slice %18 {offsets = [1, 0, 0], sizes = [1, 128, 20], strides = [1, 1, 1]} : vector<3x128x20xf32> to vector<1x128x20xf32>
    %27 = vector.shape_cast %26 : vector<1x128x20xf32> to vector<128x20xf32>
    %28 = arith.mulf %25, %27 : vector<128x20xf32>
    %29 = arith.addf %23, %28 : vector<128x20xf32>
    %30 = vector.extract_strided_slice %18 {offsets = [2, 0, 0], sizes = [1, 128, 20], strides = [1, 1, 1]} : vector<3x128x20xf32> to vector<1x128x20xf32>
    %31 = vector.shape_cast %30 : vector<1x128x20xf32> to vector<128x20xf32>
    %32 = vector.extract_strided_slice %18 {offsets = [2, 0, 0], sizes = [1, 128, 20], strides = [1, 1, 1]} : vector<3x128x20xf32> to vector<1x128x20xf32>
    %33 = vector.shape_cast %32 : vector<1x128x20xf32> to vector<128x20xf32>
    %34 = arith.mulf %31, %33 : vector<128x20xf32>
    %35 = arith.addf %29, %34 : vector<128x20xf32>
    %cst_32 = arith.constant 9.99999993E-9 : f32
    %36 = vector.broadcast %cst_32 : f32 to vector<128x20xf32>
    %37 = arith.addf %35, %36 : vector<128x20xf32>
    %38 = math.sqrt %37 : vector<128x20xf32>
    %cst_33 = arith.constant dense<0.000000e+00> : vector<128x32xf32>
    %39 = tpu.matmul %14, %1, %cst_33 {dimension_numbers = #tpu.dot_dimension_numbers<[1], [0], [0], [1], [0, 0, 1, 1], [], []>} : vector<128x80xf32>, vector<80x32xf32>, vector<128x32xf32> -> vector<128x32xf32>
    %cst_34 = arith.constant dense<0.000000e+00> : vector<128x32xf32>
    %40 = tpu.matmul %38, %2, %cst_34 {dimension_numbers = #tpu.dot_dimension_numbers<[1], [0], [0], [1], [0, 0, 1, 1], [], []>} : vector<128x20xf32>, vector<20x32xf32>, vector<128x32xf32> -> vector<128x32xf32>
    %41 = arith.addf %39, %40 : vector<128x32xf32>
    %42 = vector.broadcast %3 : vector<1x32xf32> to vector<128x32xf32>
    %43 = arith.addf %41, %42 : vector<128x32xf32>
    %44 = arith.negf %43 : vector<128x32xf32>
    %45 = math.exp %44 : vector<128x32xf32>
    %cst_35 = arith.constant 1.000000e+00 : f32
    %46 = vector.broadcast %cst_35 : f32 to vector<128x32xf32>
    %47 = arith.addf %46, %45 : vector<128x32xf32>
    %48 = arith.divf %46, %47 : vector<128x32xf32>
    %49 = arith.mulf %43, %48 : vector<128x32xf32>
    %cst_36 = arith.constant dense<0.000000e+00> : vector<128x8xf32>
    %50 = tpu.matmul %49, %5, %cst_36 {dimension_numbers = #tpu.dot_dimension_numbers<[1], [0], [0], [1], [0, 0, 1, 1], [], []>} : vector<128x32xf32>, vector<32x8xf32>, vector<128x8xf32> -> vector<128x8xf32>
    %51 = vector.broadcast %6 : vector<1x8xf32> to vector<128x8xf32>
    %52 = arith.addf %50, %51 : vector<128x8xf32>
    %53 = arith.negf %52 : vector<128x8xf32>
    %54 = math.exp %53 : vector<128x8xf32>
    %cst_37 = arith.constant 1.000000e+00 : f32
    %55 = vector.broadcast %cst_37 : f32 to vector<128x8xf32>
    %56 = arith.addf %55, %54 : vector<128x8xf32>
    %57 = arith.divf %55, %56 : vector<128x8xf32>
    %cst_38 = arith.constant dense<0.000000e+00> : vector<384x8xf32>
    %58 = tpu.matmul %17, %4, %cst_38 {dimension_numbers = #tpu.dot_dimension_numbers<[1], [0], [0], [1], [0, 0, 1, 1], [], []>} : vector<384x20xf32>, vector<20x8xf32>, vector<384x8xf32> -> vector<384x8xf32>
    %59 = vector.shape_cast %58 : vector<384x8xf32> to vector<3x128x8xf32>
    %60 = vector.shape_cast %57 : vector<128x8xf32> to vector<1x128x8xf32>
    %61 = vector.broadcast %60 : vector<1x128x8xf32> to vector<3x128x8xf32>
    %62 = arith.mulf %59, %61 : vector<3x128x8xf32>
    %63 = arith.negf %43 : vector<128x32xf32>
    %64 = math.exp %63 : vector<128x32xf32>
    %cst_39 = arith.constant 1.000000e+00 : f32
    %65 = vector.broadcast %cst_39 : f32 to vector<128x32xf32>
    %66 = arith.addf %65, %64 : vector<128x32xf32>
    %67 = arith.divf %65, %66 : vector<128x32xf32>
    %68 = arith.mulf %43, %67 : vector<128x32xf32>
    %69 = vector.shape_cast %62 : vector<3x128x8xf32> to vector<384x8xf32>
    %cst_40 = arith.constant dense<0.000000e+00> : vector<384x8xf32>
    %70 = tpu.matmul %69, %7, %cst_40 {dimension_numbers = #tpu.dot_dimension_numbers<[1], [0], [0], [1], [0, 0, 1, 1], [], []>} : vector<384x8xf32>, vector<8x8xf32>, vector<384x8xf32> -> vector<384x8xf32>
    %71 = vector.shape_cast %70 : vector<384x8xf32> to vector<3x128x8xf32>
    %72 = vector.extract_strided_slice %71 {offsets = [0, 0, 0], sizes = [1, 128, 8], strides = [1, 1, 1]} : vector<3x128x8xf32> to vector<1x128x8xf32>
    %73 = vector.shape_cast %72 : vector<1x128x8xf32> to vector<128x8xf32>
    %74 = vector.extract_strided_slice %71 {offsets = [0, 0, 0], sizes = [1, 128, 8], strides = [1, 1, 1]} : vector<3x128x8xf32> to vector<1x128x8xf32>
    %75 = vector.shape_cast %74 : vector<1x128x8xf32> to vector<128x8xf32>
    %76 = arith.mulf %73, %75 : vector<128x8xf32>
    %77 = vector.extract_strided_slice %71 {offsets = [1, 0, 0], sizes = [1, 128, 8], strides = [1, 1, 1]} : vector<3x128x8xf32> to vector<1x128x8xf32>
    %78 = vector.shape_cast %77 : vector<1x128x8xf32> to vector<128x8xf32>
    %79 = vector.extract_strided_slice %71 {offsets = [1, 0, 0], sizes = [1, 128, 8], strides = [1, 1, 1]} : vector<3x128x8xf32> to vector<1x128x8xf32>
    %80 = vector.shape_cast %79 : vector<1x128x8xf32> to vector<128x8xf32>
    %81 = arith.mulf %78, %80 : vector<128x8xf32>
    %82 = arith.addf %76, %81 : vector<128x8xf32>
    %83 = vector.extract_strided_slice %71 {offsets = [2, 0, 0], sizes = [1, 128, 8], strides = [1, 1, 1]} : vector<3x128x8xf32> to vector<1x128x8xf32>
    %84 = vector.shape_cast %83 : vector<1x128x8xf32> to vector<128x8xf32>
    %85 = vector.extract_strided_slice %71 {offsets = [2, 0, 0], sizes = [1, 128, 8], strides = [1, 1, 1]} : vector<3x128x8xf32> to vector<1x128x8xf32>
    %86 = vector.shape_cast %85 : vector<1x128x8xf32> to vector<128x8xf32>
    %87 = arith.mulf %84, %86 : vector<128x8xf32>
    %88 = arith.addf %82, %87 : vector<128x8xf32>
    %cst_41 = arith.constant 9.99999993E-9 : f32
    %89 = vector.broadcast %cst_41 : f32 to vector<128x8xf32>
    %90 = arith.addf %88, %89 : vector<128x8xf32>
    %91 = math.sqrt %90 : vector<128x8xf32>
    %cst_42 = arith.constant dense<0.000000e+00> : vector<128x32xf32>
    %92 = tpu.matmul %68, %8, %cst_42 {dimension_numbers = #tpu.dot_dimension_numbers<[1], [0], [0], [1], [0, 0, 1, 1], [], []>} : vector<128x32xf32>, vector<32x32xf32>, vector<128x32xf32> -> vector<128x32xf32>
    %cst_43 = arith.constant dense<0.000000e+00> : vector<128x32xf32>
    %93 = tpu.matmul %91, %9, %cst_43 {dimension_numbers = #tpu.dot_dimension_numbers<[1], [0], [0], [1], [0, 0, 1, 1], [], []>} : vector<128x8xf32>, vector<8x32xf32>, vector<128x32xf32> -> vector<128x32xf32>
    %94 = arith.addf %92, %93 : vector<128x32xf32>
    %95 = vector.broadcast %10 : vector<1x32xf32> to vector<128x32xf32>
    %96 = arith.addf %94, %95 : vector<128x32xf32>
    %cst_44 = arith.constant dense<0.000000e+00> : vector<128x8xf32>
    %97 = tpu.matmul %96, %12, %cst_44 {dimension_numbers = #tpu.dot_dimension_numbers<[1], [0], [0], [1], [0, 0, 1, 1], [], []>} : vector<128x32xf32>, vector<32x8xf32>, vector<128x8xf32> -> vector<128x8xf32>
    %98 = vector.broadcast %13 : vector<1x8xf32> to vector<128x8xf32>
    %99 = arith.addf %97, %98 : vector<128x8xf32>
    %100 = arith.negf %99 : vector<128x8xf32>
    %101 = math.exp %100 : vector<128x8xf32>
    %cst_45 = arith.constant 1.000000e+00 : f32
    %102 = vector.broadcast %cst_45 : f32 to vector<128x8xf32>
    %103 = arith.addf %102, %101 : vector<128x8xf32>
    %104 = arith.divf %102, %103 : vector<128x8xf32>
    %cst_46 = arith.constant dense<0.000000e+00> : vector<384x8xf32>
    %105 = tpu.matmul %70, %11, %cst_46 {dimension_numbers = #tpu.dot_dimension_numbers<[1], [0], [0], [1], [0, 0, 1, 1], [], []>} : vector<384x8xf32>, vector<8x8xf32>, vector<384x8xf32> -> vector<384x8xf32>
    %106 = vector.shape_cast %105 : vector<384x8xf32> to vector<3x128x8xf32>
    %107 = vector.shape_cast %104 : vector<128x8xf32> to vector<1x128x8xf32>
    %108 = vector.broadcast %107 : vector<1x128x8xf32> to vector<3x128x8xf32>
    %109 = arith.mulf %106, %108 : vector<3x128x8xf32>
    %110 = arith.addf %68, %96 : vector<128x32xf32>
    %111 = arith.addf %62, %109 : vector<3x128x8xf32>
    %112 = vector.extract_strided_slice %111 {offsets = [0, 0, 0], sizes = [1, 128, 8], strides = [1, 1, 1]} : vector<3x128x8xf32> to vector<1x128x8xf32>
    %113 = vector.shape_cast %112 : vector<1x128x8xf32> to vector<128x8xf32>
    %114 = vector.extract_strided_slice %111 {offsets = [1, 0, 0], sizes = [1, 128, 8], strides = [1, 1, 1]} : vector<3x128x8xf32> to vector<1x128x8xf32>
    %115 = vector.shape_cast %114 : vector<1x128x8xf32> to vector<128x8xf32>
    %116 = vector.extract_strided_slice %111 {offsets = [2, 0, 0], sizes = [1, 128, 8], strides = [1, 1, 1]} : vector<3x128x8xf32> to vector<1x128x8xf32>
    %117 = vector.shape_cast %116 : vector<1x128x8xf32> to vector<128x8xf32>
    %118 = tpu.concatenate %110, %113, %115, %117 in 1 : vector<128x32xf32>, vector<128x8xf32>, vector<128x8xf32>, vector<128x8xf32> -> vector<128x56xf32>
    %c0_47 = arith.constant 0 : index
    %c0_48 = arith.constant 0 : index
    %119 = vector.load %arg17[%c0_47, %c0_48] : memref<128x56xf32, #tpu.memory_space<vmem>>, vector<128x56xf32>
    tpu.vector_store %arg17[%c0_47, %c0_48], %118 {strides = array<i32>} : memref<128x56xf32, #tpu.memory_space<vmem>>, vector<128x56xf32>,
    return
  }
  func.func @transform_0(%arg0: i32) -> (i32, i32) {
    %c0_i32 = arith.constant 0 : i32
    %c0_i32_0 = arith.constant 0 : i32
    return %arg0, %c0_i32 : i32, i32
  }
  func.func @transform_1(%arg0: i32) -> (i32, i32, i32) {
    %c0_i32 = arith.constant 0 : i32
    %c0_i32_0 = arith.constant 0 : i32
    %c0_i32_1 = arith.constant 0 : i32
    return %c0_i32, %arg0, %c0_i32_0 : i32, i32, i32
  }
  func.func @transform_2(%arg0: i32) -> (i32, i32) {
    %c0_i32 = arith.constant 0 : i32
    %c0_i32_0 = arith.constant 0 : i32
    %c0_i32_1 = arith.constant 0 : i32
    return %c0_i32, %c0_i32_0 : i32, i32
  }
  func.func @transform_3(%arg0: i32) -> (i32, i32) {
    %c0_i32 = arith.constant 0 : i32
    %c0_i32_0 = arith.constant 0 : i32
    %c0_i32_1 = arith.constant 0 : i32
    return %c0_i32, %c0_i32_0 : i32, i32
  }
  func.func @transform_4(%arg0: i32) -> (i32, i32) {
    %c0_i32 = arith.constant 0 : i32
    %c0_i32_0 = arith.constant 0 : i32
    %c0_i32_1 = arith.constant 0 : i32
    return %c0_i32, %c0_i32_0 : i32, i32
  }
  func.func @transform_5(%arg0: i32) -> (i32, i32) {
    %c0_i32 = arith.constant 0 : i32
    %c0_i32_0 = arith.constant 0 : i32
    %c0_i32_1 = arith.constant 0 : i32
    return %c0_i32, %c0_i32_0 : i32, i32
  }
  func.func @transform_6(%arg0: i32) -> (i32, i32) {
    %c0_i32 = arith.constant 0 : i32
    %c0_i32_0 = arith.constant 0 : i32
    %c0_i32_1 = arith.constant 0 : i32
    return %c0_i32, %c0_i32_0 : i32, i32
  }
  func.func @transform_7(%arg0: i32) -> (i32, i32) {
    %c0_i32 = arith.constant 0 : i32
    %c0_i32_0 = arith.constant 0 : i32
    %c0_i32_1 = arith.constant 0 : i32
    return %c0_i32, %c0_i32_0 : i32, i32
  }
  func.func @transform_8(%arg0: i32) -> (i32, i32) {
    %c0_i32 = arith.constant 0 : i32
    %c0_i32_0 = arith.constant 0 : i32
    %c0_i32_1 = arith.constant 0 : i32
    return %c0_i32, %c0_i32_0 : i32, i32
  }
  func.func @transform_9(%arg0: i32) -> (i32, i32) {
    %c0_i32 = arith.constant 0 : i32
    %c0_i32_0 = arith.constant 0 : i32
    %c0_i32_1 = arith.constant 0 : i32
    return %c0_i32, %c0_i32_0 : i32, i32
  }
  func.func @transform_10(%arg0: i32) -> (i32, i32) {
    %c0_i32 = arith.constant 0 : i32
    %c0_i32_0 = arith.constant 0 : i32
    %c0_i32_1 = arith.constant 0 : i32
    return %c0_i32, %c0_i32_0 : i32, i32
  }
  func.func @transform_11(%arg0: i32) -> (i32, i32) {
    %c0_i32 = arith.constant 0 : i32
    %c0_i32_0 = arith.constant 0 : i32
    %c0_i32_1 = arith.constant 0 : i32
    return %c0_i32, %c0_i32_0 : i32, i32
  }
  func.func @transform_12(%arg0: i32) -> (i32, i32) {
    %c0_i32 = arith.constant 0 : i32
    %c0_i32_0 = arith.constant 0 : i32
    %c0_i32_1 = arith.constant 0 : i32
    return %c0_i32, %c0_i32_0 : i32, i32
  }
  func.func @transform_13(%arg0: i32) -> (i32, i32) {
    %c0_i32 = arith.constant 0 : i32
    %c0_i32_0 = arith.constant 0 : i32
    %c0_i32_1 = arith.constant 0 : i32
    return %c0_i32, %c0_i32_0 : i32, i32
  }
  func.func @transform_14(%arg0: i32) -> (i32, i32) {
    %c0_i32 = arith.constant 0 : i32
    %c0_i32_0 = arith.constant 0 : i32
    %c0_i32_1 = arith.constant 0 : i32
    return %c0_i32, %c0_i32_0 : i32, i32
  }
  func.func @transform_15(%arg0: i32) -> (i32, i32) {
    %c0_i32 = arith.constant 0 : i32
    %c0_i32_0 = arith.constant 0 : i32
    %c0_i32_1 = arith.constant 0 : i32
    return %c0_i32, %c0_i32_0 : i32, i32
  }
  func.func @transform_16(%arg0: i32) -> (i32, i32) {
    %c0_i32 = arith.constant 0 : i32
    %c0_i32_0 = arith.constant 0 : i32
    return %arg0, %c0_i32 : i32, i32
  }
}

module attributes {stable_mosaic.version = 11 : i64} {
  func.func @_scatter_mean_kernel(%arg0: i32, %arg1: i32, %arg2: memref<1xi32, #tpu.memory_space<smem>>, %arg3: memref<1xi32, #tpu.memory_space<smem>>, %arg4: memref<1x128xi32, #tpu.memory_space<vmem>>, %arg5: memref<128x56xf32, #tpu.memory_space<vmem>>, %arg6: memref<8x1xf32, #tpu.memory_space<vmem>>, %arg7: memref<8x56xf32, #tpu.memory_space<vmem>>, %arg8: memref<8x56xf32, #tpu.memory_space<vmem>>) attributes {dimension_semantics = [#tpu.dimension_semantics<parallel>, #tpu.dimension_semantics<arbitrary>], iteration_bounds = array<i64: 2, 1>, scalar_prefetch = 2 : i64, scratch_operands = 1 : i64, tpu.core_type = #tpu.core_type<tc>, window_params = [{transform_indices = @transform_0, window_bounds = array<i64: 1, 128>}, {transform_indices = @transform_1, window_bounds = array<i64: 128, 56>}, {transform_indices = @transform_2, window_bounds = array<i64: 8, 1>}, {transform_indices = @transform_3, window_bounds = array<i64: 8, 56>}]} {
    %c8_i32 = arith.constant 8 : i32
    %0 = arith.muli %arg0, %c8_i32 : i32
    %c0_i32 = arith.constant 0 : i32
    %1 = arith.cmpi eq, %arg1, %c0_i32 : i32
    %2 = arith.extui %1 : i1 to i32
    %c0_i32_0 = arith.constant 0 : i32
    %3 = arith.cmpi ne, %2, %c0_i32_0 : i32
    scf.if %3 {
      %cst = arith.constant 0.000000e+00 : f32
      %17 = vector.broadcast %cst : f32 to vector<8x56xf32>
      %c0 = arith.constant 0 : index
      %c0_5 = arith.constant 0 : index
      %18 = vector.load %arg8[%c0, %c0_5] : memref<8x56xf32, #tpu.memory_space<vmem>>, vector<8x56xf32>
      tpu.vector_store %arg8[%c0, %c0_5], %17 {strides = array<i32>} : memref<8x56xf32, #tpu.memory_space<vmem>>, vector<8x56xf32>,
    } else {
    }
    %4 = arith.index_cast %arg1 : i32 to index
    %5 = memref.load %arg3[%4] : memref<1xi32, #tpu.memory_space<smem>>
    %6 = arith.cmpi sge, %5, %0 : i32
    %7 = arith.index_cast %arg1 : i32 to index
    %8 = memref.load %arg2[%7] : memref<1xi32, #tpu.memory_space<smem>>
    %c8_i32_1 = arith.constant 8 : i32
    %9 = arith.addi %0, %c8_i32_1 : i32
    %10 = arith.cmpi slt, %8, %9 : i32
    %11 = arith.andi %6, %10 : i1
    %12 = arith.extui %11 : i1 to i32
    %c0_i32_2 = arith.constant 0 : i32
    %13 = arith.cmpi ne, %12, %c0_i32_2 : i32
    scf.if %13 {
      %17 = tpu.iota {dimensions = array<i32: 0>} : vector<8x128xi32>
      %18 = vector.broadcast %0 : i32 to vector<8x128xi32>
      %19 = arith.addi %17, %18 : vector<8x128xi32>
      %c0 = arith.constant 0 : index
      %c0_5 = arith.constant 0 : index
      %20 = vector.load %arg4[%c0, %c0_5] : memref<1x128xi32, #tpu.memory_space<vmem>>, vector<1x128xi32>
      %21 = vector.broadcast %20 : vector<1x128xi32> to vector<8x128xi32>
      %22 = arith.cmpi eq, %19, %21 : vector<8x128xi32>
      %23 = arith.extui %22 : vector<8x128xi1> to vector<8x128xi32>
      %24 = arith.sitofp %23 : vector<8x128xi32> to vector<8x128xf32>
      %c0_6 = arith.constant 0 : index
      %c0_7 = arith.constant 0 : index
      %25 = vector.load %arg8[%c0_6, %c0_7] : memref<8x56xf32, #tpu.memory_space<vmem>>, vector<8x56xf32>
      %c0_8 = arith.constant 0 : index
      %c0_9 = arith.constant 0 : index
      %26 = vector.load %arg5[%c0_8, %c0_9] : memref<128x56xf32, #tpu.memory_space<vmem>>, vector<128x56xf32>
      %cst = arith.constant dense<0.000000e+00> : vector<8x56xf32>
      %27 = tpu.matmul %24, %26, %cst {dimension_numbers = #tpu.dot_dimension_numbers<[1], [0], [0], [1], [0, 0, 1, 1], [], []>} : vector<8x128xf32>, vector<128x56xf32>, vector<8x56xf32> -> vector<8x56xf32>
      %28 = arith.addf %25, %27 : vector<8x56xf32>
      %c0_10 = arith.constant 0 : index
      %c0_11 = arith.constant 0 : index
      %29 = vector.load %arg8[%c0_10, %c0_11] : memref<8x56xf32, #tpu.memory_space<vmem>>, vector<8x56xf32>
      tpu.vector_store %arg8[%c0_10, %c0_11], %28 {strides = array<i32>} : memref<8x56xf32, #tpu.memory_space<vmem>>, vector<8x56xf32>,
    } else {
    }
    %c0_i32_3 = arith.constant 0 : i32
    %14 = arith.cmpi eq, %arg1, %c0_i32_3 : i32
    %15 = arith.extui %14 : i1 to i32
    %c0_i32_4 = arith.constant 0 : i32
    %16 = arith.cmpi ne, %15, %c0_i32_4 : i32
    scf.if %16 {
      %c0 = arith.constant 0 : index
      %c0_5 = arith.constant 0 : index
      %17 = vector.load %arg8[%c0, %c0_5] : memref<8x56xf32, #tpu.memory_space<vmem>>, vector<8x56xf32>
      %c0_6 = arith.constant 0 : index
      %c0_7 = arith.constant 0 : index
      %18 = vector.load %arg6[%c0_6, %c0_7] : memref<8x1xf32, #tpu.memory_space<vmem>>, vector<8x1xf32>
      %19 = vector.broadcast %18 : vector<8x1xf32> to vector<8x56xf32>
      %20 = arith.mulf %17, %19 : vector<8x56xf32>
      %c0_8 = arith.constant 0 : index
      %c0_9 = arith.constant 0 : index
      %21 = vector.load %arg7[%c0_8, %c0_9] : memref<8x56xf32, #tpu.memory_space<vmem>>, vector<8x56xf32>
      tpu.vector_store %arg7[%c0_8, %c0_9], %20 {strides = array<i32>} : memref<8x56xf32, #tpu.memory_space<vmem>>, vector<8x56xf32>,
    } else {
    }
    return
  }
  func.func @transform_0(%arg0: i32, %arg1: i32, %arg2: memref<1xi32, #tpu.memory_space<smem>>, %arg3: memref<1xi32, #tpu.memory_space<smem>>) -> (i32, i32) {
    %c0_i32 = arith.constant 0 : i32
    %c0_i32_0 = arith.constant 0 : i32
    return %c0_i32, %arg1 : i32, i32
  }
  func.func @transform_1(%arg0: i32, %arg1: i32, %arg2: memref<1xi32, #tpu.memory_space<smem>>, %arg3: memref<1xi32, #tpu.memory_space<smem>>) -> (i32, i32) {
    %c0_i32 = arith.constant 0 : i32
    %c0_i32_0 = arith.constant 0 : i32
    return %arg1, %c0_i32 : i32, i32
  }
  func.func @transform_2(%arg0: i32, %arg1: i32, %arg2: memref<1xi32, #tpu.memory_space<smem>>, %arg3: memref<1xi32, #tpu.memory_space<smem>>) -> (i32, i32) {
    %c0_i32 = arith.constant 0 : i32
    %c0_i32_0 = arith.constant 0 : i32
    return %arg0, %c0_i32 : i32, i32
  }
  func.func @transform_3(%arg0: i32, %arg1: i32, %arg2: memref<1xi32, #tpu.memory_space<smem>>, %arg3: memref<1xi32, #tpu.memory_space<smem>>) -> (i32, i32) {
    %c0_i32 = arith.constant 0 : i32
    %c0_i32_0 = arith.constant 0 : i32
    return %arg0, %c0_i32 : i32, i32
  }
}

module attributes {stable_mosaic.version = 11 : i64} {
  func.func @_node_kernel(%arg0: i32, %arg1: memref<8x32xf32, #tpu.memory_space<vmem>>, %arg2: memref<3x8x8xf32, #tpu.memory_space<vmem>>, %arg3: memref<8x56xf32, #tpu.memory_space<vmem>>, %arg4: memref<1x32xf32, #tpu.memory_space<vmem>>, %arg5: memref<1x32xf32, #tpu.memory_space<vmem>>, %arg6: memref<8x16xf32, #tpu.memory_space<vmem>>, %arg7: memref<32x128xf32, #tpu.memory_space<vmem>>, %arg8: memref<16x128xf32, #tpu.memory_space<vmem>>, %arg9: memref<1x128xf32, #tpu.memory_space<vmem>>, %arg10: memref<16x16xf32, #tpu.memory_space<vmem>>, %arg11: memref<128x16xf32, #tpu.memory_space<vmem>>, %arg12: memref<1x16xf32, #tpu.memory_space<vmem>>, %arg13: memref<16x16xf32, #tpu.memory_space<vmem>>, %arg14: memref<128x32xf32, #tpu.memory_space<vmem>>, %arg15: memref<16x32xf32, #tpu.memory_space<vmem>>, %arg16: memref<1x32xf32, #tpu.memory_space<vmem>>, %arg17: memref<16x8xf32, #tpu.memory_space<vmem>>, %arg18: memref<32x8xf32, #tpu.memory_space<vmem>>, %arg19: memref<1x8xf32, #tpu.memory_space<vmem>>, %arg20: memref<8x56xf32, #tpu.memory_space<vmem>>) attributes {dimension_semantics = [#tpu.dimension_semantics<parallel>], iteration_bounds = array<i64: 2>, scalar_prefetch = 0 : i64, scratch_operands = 0 : i64, tpu.core_type = #tpu.core_type<tc>, window_params = [{transform_indices = @transform_0, window_bounds = array<i64: 8, 32>}, {transform_indices = @transform_1, window_bounds = array<i64: 3, 8, 8>}, {transform_indices = @transform_2, window_bounds = array<i64: 8, 56>}, {pipeline_mode = #tpu.pipeline_mode<synchronous>, transform_indices = @transform_3, window_bounds = array<i64: 1, 32>}, {pipeline_mode = #tpu.pipeline_mode<synchronous>, transform_indices = @transform_4, window_bounds = array<i64: 1, 32>}, {pipeline_mode = #tpu.pipeline_mode<synchronous>, transform_indices = @transform_5, window_bounds = array<i64: 8, 16>}, {pipeline_mode = #tpu.pipeline_mode<synchronous>, transform_indices = @transform_6, window_bounds = array<i64: 32, 128>}, {pipeline_mode = #tpu.pipeline_mode<synchronous>, transform_indices = @transform_7, window_bounds = array<i64: 16, 128>}, {pipeline_mode = #tpu.pipeline_mode<synchronous>, transform_indices = @transform_8, window_bounds = array<i64: 1, 128>}, {pipeline_mode = #tpu.pipeline_mode<synchronous>, transform_indices = @transform_9, window_bounds = array<i64: 16, 16>}, {pipeline_mode = #tpu.pipeline_mode<synchronous>, transform_indices = @transform_10, window_bounds = array<i64: 128, 16>}, {pipeline_mode = #tpu.pipeline_mode<synchronous>, transform_indices = @transform_11, window_bounds = array<i64: 1, 16>}, {pipeline_mode = #tpu.pipeline_mode<synchronous>, transform_indices = @transform_12, window_bounds = array<i64: 16, 16>}, {pipeline_mode = #tpu.pipeline_mode<synchronous>, transform_indices = @transform_13, window_bounds = array<i64: 128, 32>}, {pipeline_mode = #tpu.pipeline_mode<synchronous>, transform_indices = @transform_14, window_bounds = array<i64: 16, 32>}, {pipeline_mode = #tpu.pipeline_mode<synchronous>, transform_indices = @transform_15, window_bounds = array<i64: 1, 32>}, {pipeline_mode = #tpu.pipeline_mode<synchronous>, transform_indices = @transform_16, window_bounds = array<i64: 16, 8>}, {pipeline_mode = #tpu.pipeline_mode<synchronous>, transform_indices = @transform_17, window_bounds = array<i64: 32, 8>}, {pipeline_mode = #tpu.pipeline_mode<synchronous>, transform_indices = @transform_18, window_bounds = array<i64: 1, 8>}, {transform_indices = @transform_19, window_bounds = array<i64: 8, 56>}]} {
    %c0 = arith.constant 0 : index
    %c0_0 = arith.constant 0 : index
    %0 = vector.load %arg3[%c0, %c0_0] : memref<8x56xf32, #tpu.memory_space<vmem>>, vector<8x56xf32>
    %c0_1 = arith.constant 0 : index
    %c0_2 = arith.constant 0 : index
    %1 = vector.load %arg1[%c0_1, %c0_2] : memref<8x32xf32, #tpu.memory_space<vmem>>, vector<8x32xf32>
    %2 = vector.extract_strided_slice %0 {offsets = [0, 0], sizes = [8, 32], strides = [1, 1]} : vector<8x56xf32> to vector<8x32xf32>
    %3 = arith.addf %1, %2 : vector<8x32xf32>
    %c0_3 = arith.constant 0 : index
    %c0_4 = arith.constant 0 : index
    %c0_5 = arith.constant 0 : index
    %4 = vector.load %arg2[%c0_3, %c0_4, %c0_5] : memref<3x8x8xf32, #tpu.memory_space<vmem>>, vector<3x8x8xf32>
    %5 = vector.extract_strided_slice %0 {offsets = [0, 32], sizes = [8, 8], strides = [1, 1]} : vector<8x56xf32> to vector<8x8xf32>
    %6 = vector.extract_strided_slice %0 {offsets = [0, 40], sizes = [8, 8], strides = [1, 1]} : vector<8x56xf32> to vector<8x8xf32>
    %7 = vector.extract_strided_slice %0 {offsets = [0, 48], sizes = [8, 8], strides = [1, 1]} : vector<8x56xf32> to vector<8x8xf32>
    %8 = vector.shape_cast %5 : vector<8x8xf32> to vector<1x8x8xf32>
    %9 = vector.shape_cast %6 : vector<8x8xf32> to vector<1x8x8xf32>
    %10 = vector.shape_cast %7 : vector<8x8xf32> to vector<1x8x8xf32>
    %11 = tpu.concatenate %8, %9, %10 in 0 : vector<1x8x8xf32>, vector<1x8x8xf32>, vector<1x8x8xf32> -> vector<3x8x8xf32>
    %12 = arith.addf %4, %11 : vector<3x8x8xf32>
    %c0_6 = arith.constant 0 : index
    %c0_7 = arith.constant 0 : index
    %13 = vector.load %arg4[%c0_6, %c0_7] : memref<1x32xf32, #tpu.memory_space<vmem>>, vector<1x32xf32>
    %c0_8 = arith.constant 0 : index
    %c0_9 = arith.constant 0 : index
    %14 = vector.load %arg5[%c0_8, %c0_9] : memref<1x32xf32, #tpu.memory_space<vmem>>, vector<1x32xf32>
    %cst = arith.constant dense<0.000000e+00> : vector<8xf32>
    %15 = vector.multi_reduction <add>, %3, %cst [1] : vector<8x32xf32> to vector<8xf32>
    %16 = vector.shape_cast %15 : vector<8xf32> to vector<8x1xf32>
    %cst_10 = arith.constant 3.200000e+01 : f32
    %17 = vector.broadcast %cst_10 : f32 to vector<8x1xf32>
    %18 = arith.divf %16, %17 : vector<8x1xf32>
    %19 = vector.broadcast %18 : vector<8x1xf32> to vector<8x32xf32>
    %20 = arith.subf %3, %19 : vector<8x32xf32>
    %21 = arith.mulf %20, %20 : vector<8x32xf32>
    %cst_11 = arith.constant dense<0.000000e+00> : vector<8xf32>
    %22 = vector.multi_reduction <add>, %21, %cst_11 [1] : vector<8x32xf32> to vector<8xf32>
    %23 = vector.shape_cast %22 : vector<8xf32> to vector<8x1xf32>
    %cst_12 = arith.constant 3.200000e+01 : f32
    %24 = vector.broadcast %cst_12 : f32 to vector<8x1xf32>
    %25 = arith.divf %23, %24 : vector<8x1xf32>
    %26 = vector.broadcast %18 : vector<8x1xf32> to vector<8x32xf32>
    %27 = arith.subf %3, %26 : vector<8x32xf32>
    %cst_13 = arith.constant 9.99999974E-6 : f32
    %28 = vector.broadcast %cst_13 : f32 to vector<8x1xf32>
    %29 = arith.addf %25, %28 : vector<8x1xf32>
    %30 = math.rsqrt %29 : vector<8x1xf32>
    %31 = vector.broadcast %30 : vector<8x1xf32> to vector<8x32xf32>
    %32 = arith.mulf %27, %31 : vector<8x32xf32>
    %33 = vector.broadcast %13 : vector<1x32xf32> to vector<8x32xf32>
    %34 = arith.mulf %32, %33 : vector<8x32xf32>
    %35 = vector.broadcast %14 : vector<1x32xf32> to vector<8x32xf32>
    %36 = arith.addf %34, %35 : vector<8x32xf32>
    %37 = vector.extract_strided_slice %12 {offsets = [0, 0, 0], sizes = [1, 8, 8], strides = [1, 1, 1]} : vector<3x8x8xf32> to vector<1x8x8xf32>
    %38 = vector.shape_cast %37 : vector<1x8x8xf32> to vector<8x8xf32>
    %39 = vector.extract_strided_slice %12 {offsets = [0, 0, 0], sizes = [1, 8, 8], strides = [1, 1, 1]} : vector<3x8x8xf32> to vector<1x8x8xf32>
    %40 = vector.shape_cast %39 : vector<1x8x8xf32> to vector<8x8xf32>
    %41 = arith.mulf %38, %40 : vector<8x8xf32>
    %42 = vector.extract_strided_slice %12 {offsets = [1, 0, 0], sizes = [1, 8, 8], strides = [1, 1, 1]} : vector<3x8x8xf32> to vector<1x8x8xf32>
    %43 = vector.shape_cast %42 : vector<1x8x8xf32> to vector<8x8xf32>
    %44 = vector.extract_strided_slice %12 {offsets = [1, 0, 0], sizes = [1, 8, 8], strides = [1, 1, 1]} : vector<3x8x8xf32> to vector<1x8x8xf32>
    %45 = vector.shape_cast %44 : vector<1x8x8xf32> to vector<8x8xf32>
    %46 = arith.mulf %43, %45 : vector<8x8xf32>
    %47 = arith.addf %41, %46 : vector<8x8xf32>
    %48 = vector.extract_strided_slice %12 {offsets = [2, 0, 0], sizes = [1, 8, 8], strides = [1, 1, 1]} : vector<3x8x8xf32> to vector<1x8x8xf32>
    %49 = vector.shape_cast %48 : vector<1x8x8xf32> to vector<8x8xf32>
    %50 = vector.extract_strided_slice %12 {offsets = [2, 0, 0], sizes = [1, 8, 8], strides = [1, 1, 1]} : vector<3x8x8xf32> to vector<1x8x8xf32>
    %51 = vector.shape_cast %50 : vector<1x8x8xf32> to vector<8x8xf32>
    %52 = arith.mulf %49, %51 : vector<8x8xf32>
    %53 = arith.addf %47, %52 : vector<8x8xf32>
    %cst_14 = arith.constant dense<0.000000e+00> : vector<8xf32>
    %54 = vector.multi_reduction <add>, %53, %cst_14 [1] : vector<8x8xf32> to vector<8xf32>
    %55 = vector.shape_cast %54 : vector<8xf32> to vector<8x1xf32>
    %cst_15 = arith.constant 8.000000e+00 : f32
    %56 = vector.broadcast %cst_15 : f32 to vector<8x1xf32>
    %57 = arith.divf %55, %56 : vector<8x1xf32>
    %cst_16 = arith.constant 9.99999993E-9 : f32
    %58 = vector.broadcast %cst_16 : f32 to vector<8x1xf32>
    %59 = arith.addf %57, %58 : vector<8x1xf32>
    %60 = math.sqrt %59 : vector<8x1xf32>
    %cst_17 = arith.constant 1.000000e+00 : f32
    %61 = vector.broadcast %cst_17 : f32 to vector<8x1xf32>
    %62 = arith.divf %61, %60 : vector<8x1xf32>
    %63 = vector.shape_cast %62 : vector<8x1xf32> to vector<1x8x1xf32>
    %64 = vector.broadcast %63 : vector<1x8x1xf32> to vector<3x8x8xf32>
    %65 = arith.mulf %12, %64 : vector<3x8x8xf32>
    %c0_18 = arith.constant 0 : index
    %c0_19 = arith.constant 0 : index
    %66 = vector.load %arg6[%c0_18, %c0_19] : memref<8x16xf32, #tpu.memory_space<vmem>>, vector<8x16xf32>
    %c0_20 = arith.constant 0 : index
    %c0_21 = arith.constant 0 : index
    %67 = vector.load %arg7[%c0_20, %c0_21] : memref<32x128xf32, #tpu.memory_space<vmem>>, vector<32x128xf32>
    %c0_22 = arith.constant 0 : index
    %c0_23 = arith.constant 0 : index
    %68 = vector.load %arg8[%c0_22, %c0_23] : memref<16x128xf32, #tpu.memory_space<vmem>>, vector<16x128xf32>
    %c0_24 = arith.constant 0 : index
    %c0_25 = arith.constant 0 : index
    %69 = vector.load %arg9[%c0_24, %c0_25] : memref<1x128xf32, #tpu.memory_space<vmem>>, vector<1x128xf32>
    %c0_26 = arith.constant 0 : index
    %c0_27 = arith.constant 0 : index
    %70 = vector.load %arg10[%c0_26, %c0_27] : memref<16x16xf32, #tpu.memory_space<vmem>>, vector<16x16xf32>
    %c0_28 = arith.constant 0 : index
    %c0_29 = arith.constant 0 : index
    %71 = vector.load %arg11[%c0_28, %c0_29] : memref<128x16xf32, #tpu.memory_space<vmem>>, vector<128x16xf32>
    %c0_30 = arith.constant 0 : index
    %c0_31 = arith.constant 0 : index
    %72 = vector.load %arg12[%c0_30, %c0_31] : memref<1x16xf32, #tpu.memory_space<vmem>>, vector<1x16xf32>
    %c0_32 = arith.constant 0 : index
    %c0_33 = arith.constant 0 : index
    %73 = vector.load %arg13[%c0_32, %c0_33] : memref<16x16xf32, #tpu.memory_space<vmem>>, vector<16x16xf32>
    %c0_34 = arith.constant 0 : index
    %c0_35 = arith.constant 0 : index
    %74 = vector.load %arg14[%c0_34, %c0_35] : memref<128x32xf32, #tpu.memory_space<vmem>>, vector<128x32xf32>
    %c0_36 = arith.constant 0 : index
    %c0_37 = arith.constant 0 : index
    %75 = vector.load %arg15[%c0_36, %c0_37] : memref<16x32xf32, #tpu.memory_space<vmem>>, vector<16x32xf32>
    %c0_38 = arith.constant 0 : index
    %c0_39 = arith.constant 0 : index
    %76 = vector.load %arg16[%c0_38, %c0_39] : memref<1x32xf32, #tpu.memory_space<vmem>>, vector<1x32xf32>
    %c0_40 = arith.constant 0 : index
    %c0_41 = arith.constant 0 : index
    %77 = vector.load %arg17[%c0_40, %c0_41] : memref<16x8xf32, #tpu.memory_space<vmem>>, vector<16x8xf32>
    %c0_42 = arith.constant 0 : index
    %c0_43 = arith.constant 0 : index
    %78 = vector.load %arg18[%c0_42, %c0_43] : memref<32x8xf32, #tpu.memory_space<vmem>>, vector<32x8xf32>
    %c0_44 = arith.constant 0 : index
    %c0_45 = arith.constant 0 : index
    %79 = vector.load %arg19[%c0_44, %c0_45] : memref<1x8xf32, #tpu.memory_space<vmem>>, vector<1x8xf32>
    %80 = vector.shape_cast %65 : vector<3x8x8xf32> to vector<24x8xf32>
    %cst_46 = arith.constant dense<0.000000e+00> : vector<24x16xf32>
    %81 = tpu.matmul %80, %66, %cst_46 {dimension_numbers = #tpu.dot_dimension_numbers<[1], [0], [0], [1], [0, 0, 1, 1], [], []>} : vector<24x8xf32>, vector<8x16xf32>, vector<24x16xf32> -> vector<24x16xf32>
    %82 = vector.shape_cast %81 : vector<24x16xf32> to vector<3x8x16xf32>
    %83 = vector.extract_strided_slice %82 {offsets = [0, 0, 0], sizes = [1, 8, 16], strides = [1, 1, 1]} : vector<3x8x16xf32> to vector<1x8x16xf32>
    %84 = vector.shape_cast %83 : vector<1x8x16xf32> to vector<8x16xf32>
    %85 = vector.extract_strided_slice %82 {offsets = [0, 0, 0], sizes = [1, 8, 16], strides = [1, 1, 1]} : vector<3x8x16xf32> to vector<1x8x16xf32>
    %86 = vector.shape_cast %85 : vector<1x8x16xf32> to vector<8x16xf32>
    %87 = arith.mulf %84, %86 : vector<8x16xf32>
    %88 = vector.extract_strided_slice %82 {offsets = [1, 0, 0], sizes = [1, 8, 16], strides = [1, 1, 1]} : vector<3x8x16xf32> to vector<1x8x16xf32>
    %89 = vector.shape_cast %88 : vector<1x8x16xf32> to vector<8x16xf32>
    %90 = vector.extract_strided_slice %82 {offsets = [1, 0, 0], sizes = [1, 8, 16], strides = [1, 1, 1]} : vector<3x8x16xf32> to vector<1x8x16xf32>
    %91 = vector.shape_cast %90 : vector<1x8x16xf32> to vector<8x16xf32>
    %92 = arith.mulf %89, %91 : vector<8x16xf32>
    %93 = arith.addf %87, %92 : vector<8x16xf32>
    %94 = vector.extract_strided_slice %82 {offsets = [2, 0, 0], sizes = [1, 8, 16], strides = [1, 1, 1]} : vector<3x8x16xf32> to vector<1x8x16xf32>
    %95 = vector.shape_cast %94 : vector<1x8x16xf32> to vector<8x16xf32>
    %96 = vector.extract_strided_slice %82 {offsets = [2, 0, 0], sizes = [1, 8, 16], strides = [1, 1, 1]} : vector<3x8x16xf32> to vector<1x8x16xf32>
    %97 = vector.shape_cast %96 : vector<1x8x16xf32> to vector<8x16xf32>
    %98 = arith.mulf %95, %97 : vector<8x16xf32>
    %99 = arith.addf %93, %98 : vector<8x16xf32>
    %cst_47 = arith.constant 9.99999993E-9 : f32
    %100 = vector.broadcast %cst_47 : f32 to vector<8x16xf32>
    %101 = arith.addf %99, %100 : vector<8x16xf32>
    %102 = math.sqrt %101 : vector<8x16xf32>
    %cst_48 = arith.constant dense<0.000000e+00> : vector<8x128xf32>
    %103 = tpu.matmul %36, %67, %cst_48 {dimension_numbers = #tpu.dot_dimension_numbers<[1], [0], [0], [1], [0, 0, 1, 1], [], []>} : vector<8x32xf32>, vector<32x128xf32>, vector<8x128xf32> -> vector<8x128xf32>
    %cst_49 = arith.constant dense<0.000000e+00> : vector<8x128xf32>
    %104 = tpu.matmul %102, %68, %cst_49 {dimension_numbers = #tpu.dot_dimension_numbers<[1], [0], [0], [1], [0, 0, 1, 1], [], []>} : vector<8x16xf32>, vector<16x128xf32>, vector<8x128xf32> -> vector<8x128xf32>
    %105 = arith.addf %103, %104 : vector<8x128xf32>
    %106 = vector.broadcast %69 : vector<1x128xf32> to vector<8x128xf32>
    %107 = arith.addf %105, %106 : vector<8x128xf32>
    %108 = arith.negf %107 : vector<8x128xf32>
    %109 = math.exp %108 : vector<8x128xf32>
    %cst_50 = arith.constant 1.000000e+00 : f32
    %110 = vector.broadcast %cst_50 : f32 to vector<8x128xf32>
    %111 = arith.addf %110, %109 : vector<8x128xf32>
    %112 = arith.divf %110, %111 : vector<8x128xf32>
    %113 = arith.mulf %107, %112 : vector<8x128xf32>
    %cst_51 = arith.constant dense<0.000000e+00> : vector<8x16xf32>
    %114 = tpu.matmul %113, %71, %cst_51 {dimension_numbers = #tpu.dot_dimension_numbers<[1], [0], [0], [1], [0, 0, 1, 1], [], []>} : vector<8x128xf32>, vector<128x16xf32>, vector<8x16xf32> -> vector<8x16xf32>
    %115 = vector.broadcast %72 : vector<1x16xf32> to vector<8x16xf32>
    %116 = arith.addf %114, %115 : vector<8x16xf32>
    %117 = arith.negf %116 : vector<8x16xf32>
    %118 = math.exp %117 : vector<8x16xf32>
    %cst_52 = arith.constant 1.000000e+00 : f32
    %119 = vector.broadcast %cst_52 : f32 to vector<8x16xf32>
    %120 = arith.addf %119, %118 : vector<8x16xf32>
    %121 = arith.divf %119, %120 : vector<8x16xf32>
    %cst_53 = arith.constant dense<0.000000e+00> : vector<24x16xf32>
    %122 = tpu.matmul %81, %70, %cst_53 {dimension_numbers = #tpu.dot_dimension_numbers<[1], [0], [0], [1], [0, 0, 1, 1], [], []>} : vector<24x16xf32>, vector<16x16xf32>, vector<24x16xf32> -> vector<24x16xf32>
    %123 = vector.shape_cast %122 : vector<24x16xf32> to vector<3x8x16xf32>
    %124 = vector.shape_cast %121 : vector<8x16xf32> to vector<1x8x16xf32>
    %125 = vector.broadcast %124 : vector<1x8x16xf32> to vector<3x8x16xf32>
    %126 = arith.mulf %123, %125 : vector<3x8x16xf32>
    %127 = arith.negf %107 : vector<8x128xf32>
    %128 = math.exp %127 : vector<8x128xf32>
    %cst_54 = arith.constant 1.000000e+00 : f32
    %129 = vector.broadcast %cst_54 : f32 to vector<8x128xf32>
    %130 = arith.addf %129, %128 : vector<8x128xf32>
    %131 = arith.divf %129, %130 : vector<8x128xf32>
    %132 = arith.mulf %107, %131 : vector<8x128xf32>
    %133 = vector.shape_cast %126 : vector<3x8x16xf32> to vector<24x16xf32>
    %cst_55 = arith.constant dense<0.000000e+00> : vector<24x16xf32>
    %134 = tpu.matmul %133, %73, %cst_55 {dimension_numbers = #tpu.dot_dimension_numbers<[1], [0], [0], [1], [0, 0, 1, 1], [], []>} : vector<24x16xf32>, vector<16x16xf32>, vector<24x16xf32> -> vector<24x16xf32>
    %135 = vector.shape_cast %134 : vector<24x16xf32> to vector<3x8x16xf32>
    %136 = vector.extract_strided_slice %135 {offsets = [0, 0, 0], sizes = [1, 8, 16], strides = [1, 1, 1]} : vector<3x8x16xf32> to vector<1x8x16xf32>
    %137 = vector.shape_cast %136 : vector<1x8x16xf32> to vector<8x16xf32>
    %138 = vector.extract_strided_slice %135 {offsets = [0, 0, 0], sizes = [1, 8, 16], strides = [1, 1, 1]} : vector<3x8x16xf32> to vector<1x8x16xf32>
    %139 = vector.shape_cast %138 : vector<1x8x16xf32> to vector<8x16xf32>
    %140 = arith.mulf %137, %139 : vector<8x16xf32>
    %141 = vector.extract_strided_slice %135 {offsets = [1, 0, 0], sizes = [1, 8, 16], strides = [1, 1, 1]} : vector<3x8x16xf32> to vector<1x8x16xf32>
    %142 = vector.shape_cast %141 : vector<1x8x16xf32> to vector<8x16xf32>
    %143 = vector.extract_strided_slice %135 {offsets = [1, 0, 0], sizes = [1, 8, 16], strides = [1, 1, 1]} : vector<3x8x16xf32> to vector<1x8x16xf32>
    %144 = vector.shape_cast %143 : vector<1x8x16xf32> to vector<8x16xf32>
    %145 = arith.mulf %142, %144 : vector<8x16xf32>
    %146 = arith.addf %140, %145 : vector<8x16xf32>
    %147 = vector.extract_strided_slice %135 {offsets = [2, 0, 0], sizes = [1, 8, 16], strides = [1, 1, 1]} : vector<3x8x16xf32> to vector<1x8x16xf32>
    %148 = vector.shape_cast %147 : vector<1x8x16xf32> to vector<8x16xf32>
    %149 = vector.extract_strided_slice %135 {offsets = [2, 0, 0], sizes = [1, 8, 16], strides = [1, 1, 1]} : vector<3x8x16xf32> to vector<1x8x16xf32>
    %150 = vector.shape_cast %149 : vector<1x8x16xf32> to vector<8x16xf32>
    %151 = arith.mulf %148, %150 : vector<8x16xf32>
    %152 = arith.addf %146, %151 : vector<8x16xf32>
    %cst_56 = arith.constant 9.99999993E-9 : f32
    %153 = vector.broadcast %cst_56 : f32 to vector<8x16xf32>
    %154 = arith.addf %152, %153 : vector<8x16xf32>
    %155 = math.sqrt %154 : vector<8x16xf32>
    %cst_57 = arith.constant dense<0.000000e+00> : vector<8x32xf32>
    %156 = tpu.matmul %132, %74, %cst_57 {dimension_numbers = #tpu.dot_dimension_numbers<[1], [0], [0], [1], [0, 0, 1, 1], [], []>} : vector<8x128xf32>, vector<128x32xf32>, vector<8x32xf32> -> vector<8x32xf32>
    %cst_58 = arith.constant dense<0.000000e+00> : vector<8x32xf32>
    %157 = tpu.matmul %155, %75, %cst_58 {dimension_numbers = #tpu.dot_dimension_numbers<[1], [0], [0], [1], [0, 0, 1, 1], [], []>} : vector<8x16xf32>, vector<16x32xf32>, vector<8x32xf32> -> vector<8x32xf32>
    %158 = arith.addf %156, %157 : vector<8x32xf32>
    %159 = vector.broadcast %76 : vector<1x32xf32> to vector<8x32xf32>
    %160 = arith.addf %158, %159 : vector<8x32xf32>
    %cst_59 = arith.constant dense<0.000000e+00> : vector<8x8xf32>
    %161 = tpu.matmul %160, %78, %cst_59 {dimension_numbers = #tpu.dot_dimension_numbers<[1], [0], [0], [1], [0, 0, 1, 1], [], []>} : vector<8x32xf32>, vector<32x8xf32>, vector<8x8xf32> -> vector<8x8xf32>
    %162 = vector.broadcast %79 : vector<1x8xf32> to vector<8x8xf32>
    %163 = arith.addf %161, %162 : vector<8x8xf32>
    %164 = arith.negf %163 : vector<8x8xf32>
    %165 = math.exp %164 : vector<8x8xf32>
    %cst_60 = arith.constant 1.000000e+00 : f32
    %166 = vector.broadcast %cst_60 : f32 to vector<8x8xf32>
    %167 = arith.addf %166, %165 : vector<8x8xf32>
    %168 = arith.divf %166, %167 : vector<8x8xf32>
    %cst_61 = arith.constant dense<0.000000e+00> : vector<24x8xf32>
    %169 = tpu.matmul %134, %77, %cst_61 {dimension_numbers = #tpu.dot_dimension_numbers<[1], [0], [0], [1], [0, 0, 1, 1], [], []>} : vector<24x16xf32>, vector<16x8xf32>, vector<24x8xf32> -> vector<24x8xf32>
    %170 = vector.shape_cast %169 : vector<24x8xf32> to vector<3x8x8xf32>
    %171 = vector.shape_cast %168 : vector<8x8xf32> to vector<1x8x8xf32>
    %172 = vector.broadcast %171 : vector<1x8x8xf32> to vector<3x8x8xf32>
    %173 = arith.mulf %170, %172 : vector<3x8x8xf32>
    %174 = arith.addf %36, %160 : vector<8x32xf32>
    %175 = arith.addf %65, %173 : vector<3x8x8xf32>
    %176 = vector.extract_strided_slice %175 {offsets = [0, 0, 0], sizes = [1, 8, 8], strides = [1, 1, 1]} : vector<3x8x8xf32> to vector<1x8x8xf32>
    %177 = vector.shape_cast %176 : vector<1x8x8xf32> to vector<8x8xf32>
    %178 = vector.extract_strided_slice %175 {offsets = [1, 0, 0], sizes = [1, 8, 8], strides = [1, 1, 1]} : vector<3x8x8xf32> to vector<1x8x8xf32>
    %179 = vector.shape_cast %178 : vector<1x8x8xf32> to vector<8x8xf32>
    %180 = vector.extract_strided_slice %175 {offsets = [2, 0, 0], sizes = [1, 8, 8], strides = [1, 1, 1]} : vector<3x8x8xf32> to vector<1x8x8xf32>
    %181 = vector.shape_cast %180 : vector<1x8x8xf32> to vector<8x8xf32>
    %182 = tpu.concatenate %174, %177, %179, %181 in 1 : vector<8x32xf32>, vector<8x8xf32>, vector<8x8xf32>, vector<8x8xf32> -> vector<8x56xf32>
    %c0_62 = arith.constant 0 : index
    %c0_63 = arith.constant 0 : index
    %183 = vector.load %arg20[%c0_62, %c0_63] : memref<8x56xf32, #tpu.memory_space<vmem>>, vector<8x56xf32>
    tpu.vector_store %arg20[%c0_62, %c0_63], %182 {strides = array<i32>} : memref<8x56xf32, #tpu.memory_space<vmem>>, vector<8x56xf32>,
    return
  }
  func.func @transform_0(%arg0: i32) -> (i32, i32) {
    %c0_i32 = arith.constant 0 : i32
    %c0_i32_0 = arith.constant 0 : i32
    return %arg0, %c0_i32 : i32, i32
  }
  func.func @transform_1(%arg0: i32) -> (i32, i32, i32) {
    %c0_i32 = arith.constant 0 : i32
    %c0_i32_0 = arith.constant 0 : i32
    %c0_i32_1 = arith.constant 0 : i32
    return %c0_i32, %arg0, %c0_i32_0 : i32, i32, i32
  }
  func.func @transform_2(%arg0: i32) -> (i32, i32) {
    %c0_i32 = arith.constant 0 : i32
    %c0_i32_0 = arith.constant 0 : i32
    return %arg0, %c0_i32 : i32, i32
  }
  func.func @transform_3(%arg0: i32) -> (i32, i32) {
    %c0_i32 = arith.constant 0 : i32
    %c0_i32_0 = arith.constant 0 : i32
    %c0_i32_1 = arith.constant 0 : i32
    return %c0_i32, %c0_i32_0 : i32, i32
  }
  func.func @transform_4(%arg0: i32) -> (i32, i32) {
    %c0_i32 = arith.constant 0 : i32
    %c0_i32_0 = arith.constant 0 : i32
    %c0_i32_1 = arith.constant 0 : i32
    return %c0_i32, %c0_i32_0 : i32, i32
  }
  func.func @transform_5(%arg0: i32) -> (i32, i32) {
    %c0_i32 = arith.constant 0 : i32
    %c0_i32_0 = arith.constant 0 : i32
    %c0_i32_1 = arith.constant 0 : i32
    return %c0_i32, %c0_i32_0 : i32, i32
  }
  func.func @transform_6(%arg0: i32) -> (i32, i32) {
    %c0_i32 = arith.constant 0 : i32
    %c0_i32_0 = arith.constant 0 : i32
    %c0_i32_1 = arith.constant 0 : i32
    return %c0_i32, %c0_i32_0 : i32, i32
  }
  func.func @transform_7(%arg0: i32) -> (i32, i32) {
    %c0_i32 = arith.constant 0 : i32
    %c0_i32_0 = arith.constant 0 : i32
    %c0_i32_1 = arith.constant 0 : i32
    return %c0_i32, %c0_i32_0 : i32, i32
  }
  func.func @transform_8(%arg0: i32) -> (i32, i32) {
    %c0_i32 = arith.constant 0 : i32
    %c0_i32_0 = arith.constant 0 : i32
    %c0_i32_1 = arith.constant 0 : i32
    return %c0_i32, %c0_i32_0 : i32, i32
  }
  func.func @transform_9(%arg0: i32) -> (i32, i32) {
    %c0_i32 = arith.constant 0 : i32
    %c0_i32_0 = arith.constant 0 : i32
    %c0_i32_1 = arith.constant 0 : i32
    return %c0_i32, %c0_i32_0 : i32, i32
  }
  func.func @transform_10(%arg0: i32) -> (i32, i32) {
    %c0_i32 = arith.constant 0 : i32
    %c0_i32_0 = arith.constant 0 : i32
    %c0_i32_1 = arith.constant 0 : i32
    return %c0_i32, %c0_i32_0 : i32, i32
  }
  func.func @transform_11(%arg0: i32) -> (i32, i32) {
    %c0_i32 = arith.constant 0 : i32
    %c0_i32_0 = arith.constant 0 : i32
    %c0_i32_1 = arith.constant 0 : i32
    return %c0_i32, %c0_i32_0 : i32, i32
  }
  func.func @transform_12(%arg0: i32) -> (i32, i32) {
    %c0_i32 = arith.constant 0 : i32
    %c0_i32_0 = arith.constant 0 : i32
    %c0_i32_1 = arith.constant 0 : i32
    return %c0_i32, %c0_i32_0 : i32, i32
  }
  func.func @transform_13(%arg0: i32) -> (i32, i32) {
    %c0_i32 = arith.constant 0 : i32
    %c0_i32_0 = arith.constant 0 : i32
    %c0_i32_1 = arith.constant 0 : i32
    return %c0_i32, %c0_i32_0 : i32, i32
  }
  func.func @transform_14(%arg0: i32) -> (i32, i32) {
    %c0_i32 = arith.constant 0 : i32
    %c0_i32_0 = arith.constant 0 : i32
    %c0_i32_1 = arith.constant 0 : i32
    return %c0_i32, %c0_i32_0 : i32, i32
  }
  func.func @transform_15(%arg0: i32) -> (i32, i32) {
    %c0_i32 = arith.constant 0 : i32
    %c0_i32_0 = arith.constant 0 : i32
    %c0_i32_1 = arith.constant 0 : i32
    return %c0_i32, %c0_i32_0 : i32, i32
  }
  func.func @transform_16(%arg0: i32) -> (i32, i32) {
    %c0_i32 = arith.constant 0 : i32
    %c0_i32_0 = arith.constant 0 : i32
    %c0_i32_1 = arith.constant 0 : i32
    return %c0_i32, %c0_i32_0 : i32, i32
  }
  func.func @transform_17(%arg0: i32) -> (i32, i32) {
    %c0_i32 = arith.constant 0 : i32
    %c0_i32_0 = arith.constant 0 : i32
    %c0_i32_1 = arith.constant 0 : i32
    return %c0_i32, %c0_i32_0 : i32, i32
  }
  func.func @transform_18(%arg0: i32) -> (i32, i32) {
    %c0_i32 = arith.constant 0 : i32
    %c0_i32_0 = arith.constant 0 : i32
    %c0_i32_1 = arith.constant 0 : i32
    return %c0_i32, %c0_i32_0 : i32, i32
  }
  func.func @transform_19(%arg0: i32) -> (i32, i32) {
    %c0_i32 = arith.constant 0 : i32
    %c0_i32_0 = arith.constant 0 : i32
    return %arg0, %c0_i32 : i32, i32
  }
}

</mosaic_0001>

<llo_original>
// kernel: gcp_interactions_forward.4
$region0: #{gcp_interactions_forward.4}
  #allocation0 [shape = 'u32[]', space=smem, size = 0x4, offset = 0x4, fixed_abs, tag = 'smem constant byte address 0x4 - core index']
  #allocation1 [shape = 'u32[72,128]{1,0:T(1,128)}', space=vmem, size = 0x9000, scoped, tag = 'internal scratch']
  %s0 = inlined_call_operand.vmem [shape: f32[16,32], index: 0, kind: input, shape index: {}]
  %s1 = inlined_call_operand.vmem [shape: f32[3,16,8], index: 1, kind: input, shape index: {}]
  %s2 = inlined_call_operand.vmem [shape: f32[1,32], index: 2, kind: input, shape index: {}]
  %s3 = inlined_call_operand.vmem [shape: f32[1,32], index: 3, kind: input, shape index: {}]
  %s4 = inlined_call_operand.vmem [shape: f32[16,32], index: 4, kind: output, shape index: {0}]
  %s5 = inlined_call_operand.vmem [shape: f32[3,16,8], index: 5, kind: output, shape index: {1}]
  %6 = xla_tuple %s4, %s5
  %s7 = sld [smem:[#allocation0]]
  $region129: #{gcp_interactions_forward.4} parent=0
    _
  %s9 = ssub.s32 1, %s7
  %s10 = scalar_select 0, %s9, %s7
  $region1: #{gcp_interactions_forward.4} parent=0
    #allocation2 [shape = 'u8[24576]{0}', space=vmem, size = 0x6000, scoped, tag = 'input window, operand 1']
    #allocation3 [shape = 'u8[24576]{0}', space=vmem, size = 0x6000, scoped, tag = 'output window, operand 1']
    loop: start=0, step=1, limit=4
    $region2: #{gcp_interactions_forward.4} parent=1 // loop_pre_header
      _
    $region3: #{gcp_interactions_forward.4} parent=1 // loop_header
      %s12 = sphi 0, %s16
      %p13 = scmp.ge.s32.totalorder %s12, 4
      %s22 = sphi 0, %s24
      %s25 = sphi 0, %s22
      %s26 = sphi 0, %s25
      %s42 = sphi 0, %s26
      %s48 = sphi 0, %s50
      %s51 = sphi 0, %s48
      %s52 = sphi 0, %s51
      %s68 = sphi 0, %s52
      %s72 = sphi 0, %s72
      %s74 = sphi 0, %s72
      %s75 = sphi 0, %s74
      %s89 = sphi 0, %s75
      %s93 = sphi 0, %s93
      %s95 = sphi 0, %s93
      %s96 = sphi 0, %s95
      %s110 = sphi 0, %s96
      %s116 = sphi 0, %s118
      %s119 = sphi 0, %s116
      %s120 = sphi 0, %s119
      %s136 = sphi 0, %s120
      %s142 = sphi 0, %s144
      %s145 = sphi 0, %s142
      %s146 = sphi 0, %s145
      %s162 = sphi 0, %s146
    $region4: #{gcp_interactions_forward.4} parent=1 // loop_header_branch
      %15 = sbr.rel (%p13) target = $region8
    $region5: #{gcp_interactions_forward.4} parent=1 // loop_body
      %s17 = ssub.s32 %s12, 1
      %s18 = ssub.s32 %s12, 2
      %s19 = sadd.s32 %s12, 1
      %s20 = ssub.s32 %s12, %s19
      %p21 = scmp.eq.s32.totalorder %s20, 0
      %s23 = sadd.s32 %s22, 1
      %s24 = scalar_select %p21, %s22, %s23
      %p27 = pneg %p21
      %p28 = scmp.eq.s32.totalorder %s12, 1
      %p29 = por %p27, %p28
      %p30 = scmp.ne.s32.totalorder %s22, %s25
      %p31 = scmp.eq.s32.totalorder %s12, 0
      %p32 = por %p30, %p31
      %p33 = scmp.ne.s32.totalorder %s22, %s25
      %p34 = scmp.eq.s32.totalorder %s17, 1
      %p35 = por %p33, %p34
      %p36 = scmp.ne.s32.totalorder %s25, %s26
      %p37 = scmp.eq.s32.totalorder %s17, 0
      %p38 = por %p36, %p37
      %p39 = scmp.ne.s32.totalorder %s25, %s26
      %p40 = scmp.eq.s32.totalorder %s18, 1
      %p41 = por %p39, %p40
      %p43 = scmp.ne.s32.totalorder %s26, %s42
      %p44 = scmp.eq.s32.totalorder %s18, 0
      %p45 = por %p43, %p44
      %s46 = ssub.s32 %s12, %s19
      %p47 = scmp.eq.s32.totalorder %s46, 0
      %s49 = sadd.s32 %s48, 1
      %s50 = scalar_select %p47, %s48, %s49
      %p53 = pneg %p47
      %p54 = scmp.eq.s32.totalorder %s12, 1
      %p55 = por %p53, %p54
      %p56 = scmp.ne.s32.totalorder %s48, %s51
      %p57 = scmp.eq.s32.totalorder %s12, 0
      %p58 = por %p56, %p57
      %p59 = scmp.ne.s32.totalorder %s48, %s51
      %p60 = scmp.eq.s32.totalorder %s17, 1
      %p61 = por %p59, %p60
      %p62 = scmp.ne.s32.totalorder %s51, %s52
      %p63 = scmp.eq.s32.totalorder %s17, 0
      %p64 = por %p62, %p63
      %p65 = scmp.ne.s32.totalorder %s51, %s52
      %p66 = scmp.eq.s32.totalorder %s18, 1
      %p67 = por %p65, %p66
      %p69 = scmp.ne.s32.totalorder %s52, %s68
      %p70 = scmp.eq.s32.totalorder %s18, 0
      %p71 = por %p69, %p70
      %s73 = sadd.s32 %s72, 1
      %p76 = scmp.eq.s32.totalorder %s12, 1
      %p77 = scmp.ne.s32.totalorder %s72, %s74
      %p78 = scmp.eq.s32.totalorder %s12, 0
      %p79 = por %p77, %p78
      %p80 = scmp.ne.s32.totalorder %s72, %s74
      %p81 = scmp.eq.s32.totalorder %s17, 1
      %p82 = por %p80, %p81
      %p83 = scmp.ne.s32.totalorder %s74, %s75
      %p84 = scmp.eq.s32.totalorder %s17, 0
      %p85 = por %p83, %p84
      %p86 = scmp.ne.s32.totalorder %s74, %s75
      %p87 = scmp.eq.s32.totalorder %s18, 1
      %p88 = por %p86, %p87
      %p90 = scmp.ne.s32.totalorder %s75, %s89
      %p91 = scmp.eq.s32.totalorder %s18, 0
      %p92 = por %p90, %p91
      %s94 = sadd.s32 %s93, 1
      %p97 = scmp.eq.s32.totalorder %s12, 1
      %p98 = scmp.ne.s32.totalorder %s93, %s95
      %p99 = scmp.eq.s32.totalorder %s12, 0
      %p100 = por %p98, %p99
      %p101 = scmp.ne.s32.totalorder %s93, %s95
      %p102 = scmp.eq.s32.totalorder %s17, 1
      %p103 = por %p101, %p102
      %p104 = scmp.ne.s32.totalorder %s95, %s96
      %p105 = scmp.eq.s32.totalorder %s17, 0
      %p106 = por %p104, %p105
      %p107 = scmp.ne.s32.totalorder %s95, %s96
      %p108 = scmp.eq.s32.totalorder %s18, 1
      %p109 = por %p107, %p108
      %p111 = scmp.ne.s32.totalorder %s96, %s110
      %p112 = scmp.eq.s32.totalorder %s18, 0
      %p113 = por %p111, %p112
      %s114 = ssub.s32 %s12, %s19
      %p115 = scmp.eq.s32.totalorder %s114, 0
      %s117 = sadd.s32 %s116, 1
      %s118 = scalar_select %p115, %s116, %s117
      %p121 = pneg %p115
      %p122 = scmp.eq.s32.totalorder %s12, 1
      %p123 = por %p121, %p122
      %p124 = scmp.ne.s32.totalorder %s116, %s119
      %p125 = scmp.eq.s32.totalorder %s12, 0
      %p126 = por %p124, %p125
      %p127 = scmp.ne.s32.totalorder %s116, %s119
      %p128 = scmp.eq.s32.totalorder %s17, 1
      %p129 = por %p127, %p128
      %p130 = scmp.ne.s32.totalorder %s119, %s120
      %p131 = scmp.eq.s32.totalorder %s17, 0
      %p132 = por %p130, %p131
      %p133 = scmp.ne.s32.totalorder %s119, %s120
      %p134 = scmp.eq.s32.totalorder %s18, 1
      %p135 = por %p133, %p134
      %p137 = scmp.ne.s32.totalorder %s120, %s136
      %p138 = scmp.eq.s32.totalorder %s18, 0
      %p139 = por %p137, %p138
      %s140 = ssub.s32 %s12, %s19
      %p141 = scmp.eq.s32.totalorder %s140, 0
      %s143 = sadd.s32 %s142, 1
      %s144 = scalar_select %p141, %s142, %s143
      %p147 = pneg %p141
      %p148 = scmp.eq.s32.totalorder %s12, 1
      %p149 = por %p147, %p148
      %p150 = scmp.ne.s32.totalorder %s142, %s145
      %p151 = scmp.eq.s32.totalorder %s12, 0
      %p152 = por %p150, %p151
      %p153 = scmp.ne.s32.totalorder %s142, %s145
      %p154 = scmp.eq.s32.totalorder %s17, 1
      %p155 = por %p153, %p154
      %p156 = scmp.ne.s32.totalorder %s145, %s146
      %p157 = scmp.eq.s32.totalorder %s17, 0
      %p158 = por %p156, %p157
      %p159 = scmp.ne.s32.totalorder %s145, %s146
      %p160 = scmp.eq.s32.totalorder %s18, 1
      %p161 = por %p159, %p160
      %p163 = scmp.ne.s32.totalorder %s146, %s162
      %p164 = scmp.eq.s32.totalorder %s18, 0
      %p165 = por %p163, %p164
      %p166 = scmp.le.s32.totalorder 1, %s12
      %p167 = scmp.lt.s32.totalorder %s12, 3
      %p168 = pnand %p166, %p167
      %p169 = pneg %p168
      // Predicated region
      $region9: #{gcp_interactions_forward.4} parent=5 // pred_check
        _
      $region10: #{gcp_interactions_forward.4} parent=5 // pred_check_branch
        %171 = sbr.rel (%p168) target = $region12
      $region11: #{gcp_interactions_forward.4} parent=5 // pred_region
        %s172 = ssub.s32 %s12, 1
        // Predicated region
        $region13: #{gcp_interactions_forward.4} parent=11 // pred_check
          %p173 = pneg %p85
        $region14: #{gcp_interactions_forward.4} parent=11 // pred_check_branch
          %175 = sbr.rel (%p173) target = $region16
        $region15: #{gcp_interactions_forward.4} parent=11 // pred_region
          _
        $region16: #{gcp_interactions_forward.4} parent=11 // pred_fallthru
          _
        // Predicated region
        $region17: #{gcp_interactions_forward.4} parent=11 // pred_check
          %p176 = pneg %p106
        $region18: #{gcp_interactions_forward.4} parent=11 // pred_check_branch
          %178 = sbr.rel (%p176) target = $region20
        $region19: #{gcp_interactions_forward.4} parent=11 // pred_region
          _
        $region20: #{gcp_interactions_forward.4} parent=11 // pred_fallthru
          _
      $region12: #{gcp_interactions_forward.4} parent=5 // pred_fallthru
        _
      %p179 = scmp.lt.s32.totalorder %s12, 2
      // Predicated region
      $region21: #{gcp_interactions_forward.4} parent=5 // pred_check
        %p180 = pneg %p179
      $region22: #{gcp_interactions_forward.4} parent=5 // pred_check_branch
        %182 = sbr.rel (%p180) target = $region24
      $region23: #{gcp_interactions_forward.4} parent=5 // pred_region
        // Predicated region
        $region25: #{gcp_interactions_forward.4} parent=23 // pred_check
          %p183 = pneg %p32
        $region26: #{gcp_interactions_forward.4} parent=23 // pred_check_branch
          %185 = sbr.rel (%p183) target = $region28
        $region27: #{gcp_interactions_forward.4} parent=23 // pred_region
          %p186 = scmp.lt.s32.totalorder %s12, 1
          %s187 = scalar_select %p186, %s12, 1
          %s188 = smul.addr %s187, 8
          %s189 = scalar_lea.vmem %s0, %s188
        $region28: #{gcp_interactions_forward.4} parent=23 // pred_fallthru
          _
        // Predicated region
        $region29: #{gcp_interactions_forward.4} parent=23 // pred_check
          %p190 = pneg %p58
        $region30: #{gcp_interactions_forward.4} parent=23 // pred_check_branch
          %192 = sbr.rel (%p190) target = $region32
        $region31: #{gcp_interactions_forward.4} parent=23 // pred_region
          %s193 = sand.u32 %s48, 1
          %s194 = sand.u32 %s48, 1
          %s195 = smul.addr %s194, 24
          %s196 = scalar_lea.vmem [#allocation2], %s195
          %s197 = smul.addr %s12, 8
          %s198 = scalar_lea.vmem %s1, %s197
          // Predicated region
          $region33: #{gcp_interactions_forward.4} parent=31 // pred_check
            _
          $region34: #{gcp_interactions_forward.4} parent=31 // pred_check_branch
            %200 = sbr.rel (0) target = $region36
          $region35: #{gcp_interactions_forward.4} parent=31 // pred_region
            // Predicated region
            $region37: #{gcp_interactions_forward.4} parent=35 // pred_check
              _
            $region38: #{gcp_interactions_forward.4} parent=35 // pred_check_branch
              %202 = sbr.rel (0) target = $region40
            $region39: #{gcp_interactions_forward.4} parent=35 // pred_region
              // Predicated region
              $region52: #{gcp_interactions_forward.4} parent=39 // pred_check
                _
              $region53: #{gcp_interactions_forward.4} parent=39 // pred_check_branch
                %222 = sbr.rel (0) target = $region55
              $region54: #{gcp_interactions_forward.4} parent=39 // pred_region
                loop: start=0, step=1, limit=1
                $region56: #{gcp_interactions_forward.4} parent=54 // loop_pre_header
                  _
                $region57: #{gcp_interactions_forward.4} parent=54 // loop_header
                  %s224 = sphi 0, %s228
                  %p225 = scmp.ge.s32.totalorder %s224, 1
                  %s229 = sphi %s198, %s198
                  %s230 = sphi %s196, %s196
                $region58: #{gcp_interactions_forward.4} parent=54 // loop_header_branch
                  %227 = sbr.rel (%p225) target = $region62
                $region59: #{gcp_interactions_forward.4} parent=54 // loop_body
                  %v231 = vld [vmem:[%s229] sm:$0xff]
                  %232 = vst [vmem:[%s230] sm:$0xff] %v231
                  %v233 = vld [vmem:[%s229 + $0x10] sm:$0xff]
                  %234 = vst [vmem:[%s230 + $0x8] sm:$0xff] %v233
                  %v235 = vld [vmem:[%s229 + $0x20] sm:$0xff]
                  %236 = vst [vmem:[%s230 + $0x10] sm:$0xff] %v235
                $region60: #{gcp_interactions_forward.4} parent=54 // loop_footer
                  %s228 = sadd.s32 1, %s224
                $region61: #{gcp_interactions_forward.4} parent=54 // loop_footer_branch
                  %223 = sbr.rel target = $region57
                $region62: #{gcp_interactions_forward.4} parent=54 // loop_exit
                  _
              $region55: #{gcp_interactions_forward.4} parent=39 // pred_fallthru
                _
              // Predicated region
              $region63: #{gcp_interactions_forward.4} parent=39 // pred_check
                _
              $region64: #{gcp_interactions_forward.4} parent=39 // pred_check_branch
                %238 = sbr.rel target = $region66
              $region65: #{gcp_interactions_forward.4} parent=39 // pred_region
                _
              $region66: #{gcp_interactions_forward.4} parent=39 // pred_fallthru
                _
            $region40: #{gcp_interactions_forward.4} parent=35 // pred_fallthru
              _
            // Predicated region
            $region41: #{gcp_interactions_forward.4} parent=35 // pred_check
              _
            $region42: #{gcp_interactions_forward.4} parent=35 // pred_check_branch
              %204 = sbr.rel target = $region44
            $region43: #{gcp_interactions_forward.4} parent=35 // pred_region
              %s206 = ssub.s32 256, 1
              loop: start=0, step=1, limit=1
              $region45: #{gcp_interactions_forward.4} parent=43 // loop_pre_header
                _
              $region46: #{gcp_interactions_forward.4} parent=43 // loop_header
                %s208 = sphi 0, %s212
                %p209 = scmp.ge.s32.totalorder %s208, 1
                %s213 = sphi %s198, %s198
                %s214 = sphi %s196, %s196
              $region47: #{gcp_interactions_forward.4} parent=43 // loop_header_branch
                %211 = sbr.rel (%p209) target = $region51
              $region48: #{gcp_interactions_forward.4} parent=43 // loop_body
                %v215 = vld [vmem:[%s213] sm:%s206]
                %216 = vst [vmem:[%s214] sm:%s206] %v215
                %v217 = vld [vmem:[%s213 + $0x10] sm:%s206]
                %218 = vst [vmem:[%s214 + $0x8] sm:%s206] %v217
                %v219 = vld [vmem:[%s213 + $0x20] sm:%s206]
                %220 = vst [vmem:[%s214 + $0x10] sm:%s206] %v219
              $region49: #{gcp_interactions_forward.4} parent=43 // loop_footer
                %s212 = sadd.s32 1, %s208
              $region50: #{gcp_interactions_forward.4} parent=43 // loop_footer_branch
                %207 = sbr.rel target = $region46
              $region51: #{gcp_interactions_forward.4} parent=43 // loop_exit
                _
            $region44: #{gcp_interactions_forward.4} parent=35 // pred_fallthru
              _
          $region36: #{gcp_interactions_forward.4} parent=31 // pred_fallthru
            _
          %239 = vnop
        $region32: #{gcp_interactions_forward.4} parent=23 // pred_fallthru
          _
      $region24: #{gcp_interactions_forward.4} parent=5 // pred_fallthru
        _
      %p240 = scmp.le.s32.totalorder 1, %s12
      %p241 = scmp.lt.s32.totalorder %s12, 3
      %p242 = pnand %p240, %p241
      %p243 = pneg %p242
      // Predicated region
      $region67: #{gcp_interactions_forward.4} parent=5 // pred_check
        _
      $region68: #{gcp_interactions_forward.4} parent=5 // pred_check_branch
        %245 = sbr.rel (%p242) target = $region70
      $region69: #{gcp_interactions_forward.4} parent=5 // pred_region
        %s246 = ssub.s32 %s12, 1
        %s247 = sand.u32 %s51, 1
        %s248 = sand.u32 %s51, 1
        %s249 = smul.addr %s248, 24
        %s250 = scalar_lea.vmem [#allocation2], %s249
        // Predicated region
        $region71: #{gcp_interactions_forward.4} parent=69 // pred_check
          %p251 = pneg %p64
        $region72: #{gcp_interactions_forward.4} parent=69 // pred_check_branch
          %253 = sbr.rel (%p251) target = $region74
        $region73: #{gcp_interactions_forward.4} parent=69 // pred_region
          _
        $region74: #{gcp_interactions_forward.4} parent=69 // pred_fallthru
          _
        %p254 = scmp.lt.s32.totalorder %s17, 1
        %s255 = scalar_select %p254, %s17, 1
        %s256 = smul.addr %s255, 8
        %s257 = scalar_lea.vmem %s0, %s256
        %p258 = pneg %p38
        %p259 = pneg %p35
        %s260 = sand.u32 %s51, 1
        %s261 = sand.u32 %s51, 1
        %s262 = smul.addr %s261, 24
        %s263 = scalar_lea.vmem [#allocation2], %s262
        %p264 = pneg %p64
        %p265 = pneg %p61
        %p266 = pneg %p85
        %p267 = pneg %p82
        %p268 = pneg %p106
        %p269 = pneg %p103
        %p270 = pneg %p132
        %p271 = pneg %p129
        %p272 = scmp.lt.s32.totalorder %s17, 1
        %s273 = scalar_select %p272, %s17, 1
        %s274 = smul.addr %s273, 8
        %s275 = scalar_lea.vmem %s4, %s274
        %p276 = pneg %p158
        %p277 = pneg %p155
        %s278 = sand.u32 %s145, 1
        %s279 = sand.u32 %s145, 1
        %s280 = smul.addr %s279, 24
        %s281 = scalar_lea.vmem [#allocation3], %s280
        %p282 = scmp.lt.s32.totalorder %s17, 1
        %s283 = scalar_select %p282, %s17, 1
        %s284 = smul.addr %s283, 8
        %s285 = scalar_lea.vmem %s0, %s284
        %p286 = scmp.lt.s32.totalorder %s17, 1
        %s287 = scalar_select %p286, %s17, 1
        %s288 = smul.addr %s287, 8
        %s289 = scalar_lea.vmem %s4, %s288
        %v290 = vld [vmem:[%s285] sm:$0xff]
        %v291 = vld [vmem:[%s2] sm:$0x1]
        %v292 = vld [vmem:[%s3] sm:$0x1]
        %vm293 = vcmask 261120
        %v294 = vsel %vm293, %v290, 0.0
        %295 = vadd.xlane.f32.xlu0 %v294
        %v296 = vpop.xlane.xlu0 %295
        %v297 = vrcp.pop 32.0
        %v298 = vmul.f32 32.0, %v297
        %v299 = vsub.f32 1.0, %v298
        %v300 = vmul.f32 %v297, %v299
        %v301 = vadd.f32 %v297, %v300
        %vm302 = vweird.f32 %v297
        %v303 = vsel %vm302, %v297, %v301
        %v304 = vmul.f32 %v296, %v303
        %v305 = vsub.f32 %v290, %v304
        %v306 = vmul.f32 %v305, %v305
        %v307 = vsel %vm293, %v306, 0.0
        %308 = vadd.xlane.f32.xlu0 %v307
        %v309 = vpop.xlane.xlu0 %308
        %v310 = vmul.f32 %v309, %v303
        %v311 = vadd.f32 %v310, 1e-05
        %v312 = vrsqrt.pop %v311
        %v313 = vmul.f32 %v312, %v311
        %v314 = vmul.f32 %v313, %v312
        %v315 = vmul.f32 0.5, %v314
        %v316 = vsub.f32 1.5, %v315
        %v317 = vmul.f32 %v312, %v316
        %vm318 = vweird.f32 %v311
        %vm319 = vweird.f32 %v312
        %vm320 = vmor %vm318, %vm319
        %v321 = vsel %vm320, %v312, %v317
        %v322 = vmul.f32 %v305, %v321
        %v324 = vperm.slane %v291, 0
        %v326 = vmul.f32 %v322, %v324
        %v328 = vperm.slane %v292, 0
        %v330 = vadd.f32 %v326, %v328
        %331 = vst.msk [vmem:[%s289] sm:$0xff] %vm293, %v330
        %v332 = vld [vmem:[%s250] sm:$0xff]
        %v333 = vld [vmem:[%s250 + $0x8] sm:$0xff]
        %v334 = vld [vmem:[%s250 + $0x10] sm:$0xff]
        %v335 = vmul.f32 %v332, %v332
        %v336 = vmul.f32 %v333, %v333
        %v337 = vadd.f32 %v335, %v336
        %v338 = vmul.f32 %v334, %v334
        %v339 = vadd.f32 %v337, %v338
        %vm340 = vcmask 64512
        %v341 = vsel %vm340, %v339, 0.0
        %342 = vadd.xlane.f32.xlu0 %v341
        %v343 = vpop.xlane.xlu0 %342
        %v344 = vrcp.pop 8.0
        %v345 = vmul.f32 8.0, %v344
        %v346 = vsub.f32 1.0, %v345
        %v347 = vmul.f32 %v344, %v346
        %v348 = vadd.f32 %v344, %v347
        %vm349 = vweird.f32 %v344
        %v350 = vsel %vm349, %v344, %v348
        %v351 = vmul.f32 %v343, %v350
        %v352 = vadd.f32 %v351, 1e-08
        %v353 = vrsqrt.pop %v352
        %v354 = vmul.f32 %v353, %v352
        %v355 = vmul.f32 %v354, %v353
        %v356 = vmul.f32 0.5, %v355
        %v357 = vsub.f32 1.5, %v356
        %v358 = vmul.f32 %v353, %v357
        %v359 = vmul.f32 %v352, %v358
        %vm360 = vcmp.eq.f32.partialorder %v352, inf
        %v361 = vsel %vm360, %v352, %v359
        %vm362 = vcmp.eq.f32.partialorder %v352, 0.0
        %v363 = vand.u32 %v352, 2147483648
        %v364 = vsel %vm362, %v363, %v361
        %v365 = vrcp.pop %v364
        %v366 = vmul.f32 %v364, %v365
        %v367 = vsub.f32 1.0, %v366
        %v368 = vmul.f32 %v365, %v367
        %v369 = vadd.f32 %v365, %v368
        %vm370 = vweird.f32 %v364
        %vm371 = vweird.f32 %v365
        %vm372 = vmor %vm370, %vm371
        %v373 = vsel %vm372, %v365, %v369
        %v374 = vand.u32 2147483647, %v364
        %vm375 = vcmp.eq.f32.partialorder %v374, 8.507059e+37
        %v376 = vand.u32 %v364, 2147483648
        %v377 = vor.u32 1.1754944e-38, %v376
        %v378 = vsel %vm375, %v377, %v373
        %v379 = vmul.f32 1.0, %v378
        %v380 = vmul.f32 %v332, %v379
        %v381 = vmul.f32 %v333, %v379
        %v382 = vmul.f32 %v334, %v379
        %383 = vst.msk [vmem:[%s281] sm:$0xff] %vm340, %v380
        %384 = vst.msk [vmem:[%s281 + $0x8] sm:$0xff] %vm340, %v381
        %385 = vst.msk [vmem:[%s281 + $0x10] sm:$0xff] %vm340, %v382
        %p386 = scmp.lt.s32.totalorder %s17, 1
        %s387 = scalar_select %p386, %s17, 1
        %s388 = smul.addr %s387, 8
        %s389 = scalar_lea.vmem %s4, %s388
        %s390 = sand.u32 %s145, 1
        %s391 = sand.u32 %s145, 1
        %s392 = smul.addr %s391, 24
        %s393 = scalar_lea.vmem [#allocation3], %s392
        // Predicated region
        $region75: #{gcp_interactions_forward.4} parent=69 // pred_check
          %p394 = pneg %p129
        $region76: #{gcp_interactions_forward.4} parent=69 // pred_check_branch
          %396 = sbr.rel (%p394) target = $region78
        $region77: #{gcp_interactions_forward.4} parent=69 // pred_region
          _
        $region78: #{gcp_interactions_forward.4} parent=69 // pred_fallthru
          _
        // Predicated region
        $region79: #{gcp_interactions_forward.4} parent=69 // pred_check
          %p397 = pneg %p155
        $region80: #{gcp_interactions_forward.4} parent=69 // pred_check_branch
          %399 = sbr.rel (%p397) target = $region82
        $region81: #{gcp_interactions_forward.4} parent=69 // pred_region
          %s400 = smul.addr %s17, 8
          %s401 = scalar_lea.vmem %s5, %s400
          // Predicated region
          $region83: #{gcp_interactions_forward.4} parent=81 // pred_check
            _
          $region84: #{gcp_interactions_forward.4} parent=81 // pred_check_branch
            %403 = sbr.rel (0) target = $region86
          $region85: #{gcp_interactions_forward.4} parent=81 // pred_region
            // Predicated region
            $region87: #{gcp_interactions_forward.4} parent=85 // pred_check
              _
            $region88: #{gcp_interactions_forward.4} parent=85 // pred_check_branch
              %405 = sbr.rel (0) target = $region90
            $region89: #{gcp_interactions_forward.4} parent=85 // pred_region
              // Predicated region
              $region102: #{gcp_interactions_forward.4} parent=89 // pred_check
                _
              $region103: #{gcp_interactions_forward.4} parent=89 // pred_check_branch
                %425 = sbr.rel (0) target = $region105
              $region104: #{gcp_interactions_forward.4} parent=89 // pred_region
                loop: start=0, step=1, limit=1
                $region106: #{gcp_interactions_forward.4} parent=104 // loop_pre_header
                  _
                $region107: #{gcp_interactions_forward.4} parent=104 // loop_header
                  %s427 = sphi 0, %s431
                  %p428 = scmp.ge.s32.totalorder %s427, 1
                  %s432 = sphi %s393, %s393
                  %s433 = sphi %s401, %s401
                $region108: #{gcp_interactions_forward.4} parent=104 // loop_header_branch
                  %430 = sbr.rel (%p428) target = $region112
                $region109: #{gcp_interactions_forward.4} parent=104 // loop_body
                  %v434 = vld [vmem:[%s432] sm:$0xff]
                  %435 = vst [vmem:[%s433] sm:$0xff] %v434
                  %v436 = vld [vmem:[%s432 + $0x8] sm:$0xff]
                  %437 = vst [vmem:[%s433 + $0x10] sm:$0xff] %v436
                  %v438 = vld [vmem:[%s432 + $0x10] sm:$0xff]
                  %439 = vst [vmem:[%s433 + $0x20] sm:$0xff] %v438
                $region110: #{gcp_interactions_forward.4} parent=104 // loop_footer
                  %s431 = sadd.s32 1, %s427
                $region111: #{gcp_interactions_forward.4} parent=104 // loop_footer_branch
                  %426 = sbr.rel target = $region107
                $region112: #{gcp_interactions_forward.4} parent=104 // loop_exit
                  _
              $region105: #{gcp_interactions_forward.4} parent=89 // pred_fallthru
                _
              // Predicated region
              $region113: #{gcp_interactions_forward.4} parent=89 // pred_check
                _
              $region114: #{gcp_interactions_forward.4} parent=89 // pred_check_branch
                %441 = sbr.rel target = $region116
              $region115: #{gcp_interactions_forward.4} parent=89 // pred_region
                _
              $region116: #{gcp_interactions_forward.4} parent=89 // pred_fallthru
                _
            $region90: #{gcp_interactions_forward.4} parent=85 // pred_fallthru
              _
            // Predicated region
            $region91: #{gcp_interactions_forward.4} parent=85 // pred_check
              _
            $region92: #{gcp_interactions_forward.4} parent=85 // pred_check_branch
              %407 = sbr.rel target = $region94
            $region93: #{gcp_interactions_forward.4} parent=85 // pred_region
              %s409 = ssub.s32 256, 1
              loop: start=0, step=1, limit=1
              $region95: #{gcp_interactions_forward.4} parent=93 // loop_pre_header
                _
              $region96: #{gcp_interactions_forward.4} parent=93 // loop_header
                %s411 = sphi 0, %s415
                %p412 = scmp.ge.s32.totalorder %s411, 1
                %s416 = sphi %s393, %s393
                %s417 = sphi %s401, %s401
              $region97: #{gcp_interactions_forward.4} parent=93 // loop_header_branch
                %414 = sbr.rel (%p412) target = $region101
              $region98: #{gcp_interactions_forward.4} parent=93 // loop_body
                %v418 = vld [vmem:[%s416] sm:%s409]
                %419 = vst [vmem:[%s417] sm:%s409] %v418
                %v420 = vld [vmem:[%s416 + $0x8] sm:%s409]
                %421 = vst [vmem:[%s417 + $0x10] sm:%s409] %v420
                %v422 = vld [vmem:[%s416 + $0x10] sm:%s409]
                %423 = vst [vmem:[%s417 + $0x20] sm:%s409] %v422
              $region99: #{gcp_interactions_forward.4} parent=93 // loop_footer
                %s415 = sadd.s32 1, %s411
              $region100: #{gcp_interactions_forward.4} parent=93 // loop_footer_branch
                %410 = sbr.rel target = $region96
              $region101: #{gcp_interactions_forward.4} parent=93 // loop_exit
                _
            $region94: #{gcp_interactions_forward.4} parent=85 // pred_fallthru
              _
          $region86: #{gcp_interactions_forward.4} parent=81 // pred_fallthru
            _
          %442 = vnop
        $region82: #{gcp_interactions_forward.4} parent=69 // pred_fallthru
          _
      $region70: #{gcp_interactions_forward.4} parent=5 // pred_fallthru
        _
      %p443 = scmp.le.s32.totalorder 2, %s12
      // Predicated region
      $region117: #{gcp_interactions_forward.4} parent=5 // pred_check
        %p444 = pneg %p443
      $region118: #{gcp_interactions_forward.4} parent=5 // pred_check_branch
        %446 = sbr.rel (%p444) target = $region120
      $region119: #{gcp_interactions_forward.4} parent=5 // pred_region
        %s447 = ssub.s32 %s12, 2
        // Predicated region
        $region121: #{gcp_interactions_forward.4} parent=119 // pred_check
          %p448 = pneg %p135
        $region122: #{gcp_interactions_forward.4} parent=119 // pred_check_branch
          %450 = sbr.rel (%p448) target = $region124
        $region123: #{gcp_interactions_forward.4} parent=119 // pred_region
          %p451 = scmp.lt.s32.totalorder %s18, 1
          %s452 = scalar_select %p451, %s18, 1
          %s453 = smul.addr %s452, 8
          %s454 = scalar_lea.vmem %s4, %s453
        $region124: #{gcp_interactions_forward.4} parent=119 // pred_fallthru
          _
        // Predicated region
        $region125: #{gcp_interactions_forward.4} parent=119 // pred_check
          %p455 = pneg %p161
        $region126: #{gcp_interactions_forward.4} parent=119 // pred_check_branch
          %457 = sbr.rel (%p455) target = $region128
        $region127: #{gcp_interactions_forward.4} parent=119 // pred_region
          %s458 = sand.u32 %s146, 1
          %s459 = sand.u32 %s146, 1
          %s460 = smul.addr %s459, 24
          %s461 = scalar_lea.vmem [#allocation3], %s460
        $region128: #{gcp_interactions_forward.4} parent=119 // pred_fallthru
          _
      $region120: #{gcp_interactions_forward.4} parent=5 // pred_fallthru
        _
    $region6: #{gcp_interactions_forward.4} parent=1 // loop_footer
      %s16 = sadd.s32 1, %s12
    $region7: #{gcp_interactions_forward.4} parent=1 // loop_footer_branch
      %11 = sbr.rel target = $region3
    $region8: #{gcp_interactions_forward.4} parent=1 // loop_exit
      _

// kernel: gcp_interactions_forward.6
$region0: #{gcp_interactions_forward.6}
  #allocation0 [shape = 'u32[]', space=smem, size = 0x4, offset = 0x4, fixed_abs, tag = 'smem constant byte address 0x4 - core index']
  #allocation1 [shape = 'u32[72,128]{1,0:T(1,128)}', space=vmem, size = 0x9000, scoped, tag = 'internal scratch']
  #allocation2 [shape = 'f32[8,56]{1,0:T(8,128)}', space=vmem, size = 0x1000, scoped, tag = 'scratch operand']
  #allocation3 [shape = 's32[1]{0}', space=sflag, size = 0x4, scoped, tag = 'scoped memory for gcp_interactions_forward.6']
  #allocation4 [shape = 's32[1]{0:T(128)S(6)}', space=smem, size = 0x200, scoped, tag = 'prefetched SMEM operand 0']
  #allocation5 [shape = 's32[1]{0:T(128)S(6)}', space=smem, size = 0x200, scoped, tag = 'prefetched SMEM operand 1']
  %s0 = inlined_call_operand.<no memory space> [shape: s32[1], index: 0, kind: input, shape index: {}]
  %s1 = inlined_call_operand.<no memory space> [shape: s32[1], index: 1, kind: input, shape index: {}]
  %s2 = inlined_call_operand.vmem [shape: s32[1,128], index: 2, kind: input, shape index: {}]
  %s3 = inlined_call_operand.vmem [shape: f32[128,56], index: 3, kind: input, shape index: {}]
  %s4 = inlined_call_operand.vmem [shape: f32[16,1], index: 4, kind: input, shape index: {}]
  %s5 = inlined_call_operand.vmem [shape: f32[16,56], index: 5, kind: output, shape index: {}]
  %s6 = sld [smem:[#allocation0]]
  $region57: #{gcp_interactions_forward.6} parent=0
    _
  %s8 = ssub.s32 1, %s6
  %s9 = scalar_select 0, %s8, %s6
  %10 = sst [smem:[#allocation4]] %s0
  %11 = sst [smem:[#allocation5]] %s1
  loop: start=0, step=1, limit=4
  $region2: #{gcp_interactions_forward.6} parent=0 // loop_pre_header
    _
  $region3: #{gcp_interactions_forward.6} parent=0 // loop_header
    %s13 = sphi 0, %s17
    %p14 = scmp.ge.s32.totalorder %s13, 4
    %s20 = sphi 0, %s32
    %s21 = sphi 0, %s28
    %s22 = sphi 0, %s20
    %s23 = sphi 0, %s21
    %s24 = sphi 0, %s22
    %s25 = sphi 0, %s23
    %s35 = sphi 0, %s37
    %s38 = sphi 0, %s35
    %s39 = sphi 0, %s38
    %s55 = sphi 0, %s39
    %s61 = sphi 0, %s63
    %s64 = sphi 0, %s61
    %s65 = sphi 0, %s64
    %s81 = sphi 0, %s65
    %s87 = sphi 0, %s89
    %s90 = sphi 0, %s87
    %s91 = sphi 0, %s90
    %s107 = sphi 0, %s91
    %s113 = sphi 0, %s115
    %s116 = sphi 0, %s113
    %s117 = sphi 0, %s116
    %s133 = sphi 0, %s117
  $region4: #{gcp_interactions_forward.6} parent=0 // loop_header_branch
    %16 = sbr.rel (%p14) target = $region8
  $region5: #{gcp_interactions_forward.6} parent=0 // loop_body
    %s18 = ssub.s32 %s13, 1
    %s19 = ssub.s32 %s13, 2
    %s26 = sadd.s32 1, %s21
    %p27 = scmp.ge.s32.totalorder %s26, 1
    %s28 = scalar_select %p27, 0, %s26
    %s29 = sadd.s32 1, %s20
    %s30 = scalar_select %p27, %s29, %s20
    %p31 = scmp.ge.s32.totalorder %s30, 2
    %s32 = scalar_select %p31, 0, %s30
    %s33 = ssub.s32 %s21, %s28
    %p34 = scmp.eq.s32.totalorder %s33, 0
    %s36 = sadd.s32 %s35, 1
    %s37 = scalar_select %p34, %s35, %s36
    %p40 = pneg %p34
    %p41 = scmp.eq.s32.totalorder %s13, 1
    %p42 = por %p40, %p41
    %p43 = scmp.ne.s32.totalorder %s35, %s38
    %p44 = scmp.eq.s32.totalorder %s13, 0
    %p45 = por %p43, %p44
    %p46 = scmp.ne.s32.totalorder %s35, %s38
    %p47 = scmp.eq.s32.totalorder %s18, 1
    %p48 = por %p46, %p47
    %p49 = scmp.ne.s32.totalorder %s38, %s39
    %p50 = scmp.eq.s32.totalorder %s18, 0
    %p51 = por %p49, %p50
    %p52 = scmp.ne.s32.totalorder %s38, %s39
    %p53 = scmp.eq.s32.totalorder %s19, 1
    %p54 = por %p52, %p53
    %p56 = scmp.ne.s32.totalorder %s39, %s55
    %p57 = scmp.eq.s32.totalorder %s19, 0
    %p58 = por %p56, %p57
    %s59 = ssub.s32 %s21, %s28
    %p60 = scmp.eq.s32.totalorder %s59, 0
    %s62 = sadd.s32 %s61, 1
    %s63 = scalar_select %p60, %s61, %s62
    %p66 = pneg %p60
    %p67 = scmp.eq.s32.totalorder %s13, 1
    %p68 = por %p66, %p67
    %p69 = scmp.ne.s32.totalorder %s61, %s64
    %p70 = scmp.eq.s32.totalorder %s13, 0
    %p71 = por %p69, %p70
    %p72 = scmp.ne.s32.totalorder %s61, %s64
    %p73 = scmp.eq.s32.totalorder %s18, 1
    %p74 = por %p72, %p73
    %p75 = scmp.ne.s32.totalorder %s64, %s65
    %p76 = scmp.eq.s32.totalorder %s18, 0
    %p77 = por %p75, %p76
    %p78 = scmp.ne.s32.totalorder %s64, %s65
    %p79 = scmp.eq.s32.totalorder %s19, 1
    %p80 = por %p78, %p79
    %p82 = scmp.ne.s32.totalorder %s65, %s81
    %p83 = scmp.eq.s32.totalorder %s19, 0
    %p84 = por %p82, %p83
    %s85 = ssub.s32 %s20, %s32
    %p86 = scmp.eq.s32.totalorder %s85, 0
    %s88 = sadd.s32 %s87, 1
    %s89 = scalar_select %p86, %s87, %s88
    %p92 = pneg %p86
    %p93 = scmp.eq.s32.totalorder %s13, 1
    %p94 = por %p92, %p93
    %p95 = scmp.ne.s32.totalorder %s87, %s90
    %p96 = scmp.eq.s32.totalorder %s13, 0
    %p97 = por %p95, %p96
    %p98 = scmp.ne.s32.totalorder %s87, %s90
    %p99 = scmp.eq.s32.totalorder %s18, 1
    %p100 = por %p98, %p99
    %p101 = scmp.ne.s32.totalorder %s90, %s91
    %p102 = scmp.eq.s32.totalorder %s18, 0
    %p103 = por %p101, %p102
    %p104 = scmp.ne.s32.totalorder %s90, %s91
    %p105 = scmp.eq.s32.totalorder %s19, 1
    %p106 = por %p104, %p105
    %p108 = scmp.ne.s32.totalorder %s91, %s107
    %p109 = scmp.eq.s32.totalorder %s19, 0
    %p110 = por %p108, %p109
    %s111 = ssub.s32 %s20, %s32
    %p112 = scmp.eq.s32.totalorder %s111, 0
    %s114 = sadd.s32 %s113, 1
    %s115 = scalar_select %p112, %s113, %s114
    %p118 = pneg %p112
    %p119 = scmp.eq.s32.totalorder %s13, 1
    %p120 = por %p118, %p119
    %p121 = scmp.ne.s32.totalorder %s113, %s116
    %p122 = scmp.eq.s32.totalorder %s13, 0
    %p123 = por %p121, %p122
    %p124 = scmp.ne.s32.totalorder %s113, %s116
    %p125 = scmp.eq.s32.totalorder %s18, 1
    %p126 = por %p124, %p125
    %p127 = scmp.ne.s32.totalorder %s116, %s117
    %p128 = scmp.eq.s32.totalorder %s18, 0
    %p129 = por %p127, %p128
    %p130 = scmp.ne.s32.totalorder %s116, %s117
    %p131 = scmp.eq.s32.totalorder %s19, 1
    %p132 = por %p130, %p131
    %p134 = scmp.ne.s32.totalorder %s117, %s133
    %p135 = scmp.eq.s32.totalorder %s19, 0
    %p136 = por %p134, %p135
    %p137 = scmp.le.s32.totalorder 1, %s13
    %p138 = scmp.lt.s32.totalorder %s13, 3
    %p139 = pnand %p137, %p138
    %p140 = pneg %p139
    // Predicated region
    $region9: #{gcp_interactions_forward.6} parent=5 // pred_check
      _
    $region10: #{gcp_interactions_forward.6} parent=5 // pred_check_branch
      %142 = sbr.rel (%p139) target = $region12
    $region11: #{gcp_interactions_forward.6} parent=5 // pred_region
      %s143 = ssub.s32 %s13, 1
      // Predicated region
      $region13: #{gcp_interactions_forward.6} parent=11 // pred_check
        %p144 = pneg %p51
      $region14: #{gcp_interactions_forward.6} parent=11 // pred_check_branch
        %146 = sbr.rel (%p144) target = $region16
      $region15: #{gcp_interactions_forward.6} parent=11 // pred_region
        %p147 = scmp.lt.s32.totalorder %s23, 0
        %s148 = scalar_select %p147, %s23, 0
        %s149 = scalar_lea.vmem %s2, %s148
      $region16: #{gcp_interactions_forward.6} parent=11 // pred_fallthru
        _
      // Predicated region
      $region17: #{gcp_interactions_forward.6} parent=11 // pred_check
        %p150 = pneg %p77
      $region18: #{gcp_interactions_forward.6} parent=11 // pred_check_branch
        %152 = sbr.rel (%p150) target = $region20
      $region19: #{gcp_interactions_forward.6} parent=11 // pred_region
        %s153 = smul.u32 16, %s23
        %p154 = scmp.lt.s32.totalorder %s153, 15
        %s155 = scalar_select %p154, %s153, 15
        %s156 = smul.addr %s155, 8
        %s157 = scalar_lea.vmem %s3, %s156
        %s158 = smul.u32 16, %s23
      $region20: #{gcp_interactions_forward.6} parent=11 // pred_fallthru
        _
    $region12: #{gcp_interactions_forward.6} parent=5 // pred_fallthru
      _
    %p159 = scmp.lt.s32.totalorder %s13, 2
    // Predicated region
    $region21: #{gcp_interactions_forward.6} parent=5 // pred_check
      %p160 = pneg %p159
    $region22: #{gcp_interactions_forward.6} parent=5 // pred_check_branch
      %162 = sbr.rel (%p160) target = $region24
    $region23: #{gcp_interactions_forward.6} parent=5 // pred_region
      // Predicated region
      $region25: #{gcp_interactions_forward.6} parent=23 // pred_check
        %p163 = pneg %p97
      $region26: #{gcp_interactions_forward.6} parent=23 // pred_check_branch
        %165 = sbr.rel (%p163) target = $region28
      $region27: #{gcp_interactions_forward.6} parent=23 // pred_region
        %p166 = scmp.lt.s32.totalorder %s20, 1
        %s167 = scalar_select %p166, %s20, 1
        %s168 = smul.addr %s167, 8
        %s169 = scalar_lea.vmem %s4, %s168
      $region28: #{gcp_interactions_forward.6} parent=23 // pred_fallthru
        _
    $region24: #{gcp_interactions_forward.6} parent=5 // pred_fallthru
      _
    %p170 = scmp.le.s32.totalorder 1, %s13
    %p171 = scmp.lt.s32.totalorder %s13, 3
    %p172 = pnand %p170, %p171
    %p173 = pneg %p172
    // Predicated region
    $region29: #{gcp_interactions_forward.6} parent=5 // pred_check
      _
    $region30: #{gcp_interactions_forward.6} parent=5 // pred_check_branch
      %175 = sbr.rel (%p172) target = $region32
    $region31: #{gcp_interactions_forward.6} parent=5 // pred_region
      %s176 = ssub.s32 %s13, 1
      %p177 = scmp.lt.s32.totalorder %s23, 0
      %s178 = scalar_select %p177, %s23, 0
      %s179 = scalar_lea.vmem %s2, %s178
      %p180 = pneg %p51
      %p181 = pneg %p48
      %s182 = smul.u32 16, %s23
      %p183 = scmp.lt.s32.totalorder %s182, 15
      %s184 = scalar_select %p183, %s182, 15
      %s185 = smul.addr %s184, 8
      %s186 = scalar_lea.vmem %s3, %s185
      %p187 = pneg %p77
      %p188 = pneg %p74
      %p189 = scmp.lt.s32.totalorder %s22, 1
      %s190 = scalar_select %p189, %s22, 1
      %s191 = smul.addr %s190, 8
      %s192 = scalar_lea.vmem %s4, %s191
      %p193 = pneg %p103
      %p194 = pneg %p100
      %p195 = pneg %p129
      %p196 = pneg %p126
      %p197 = scmp.lt.s32.totalorder %s22, 1
      %s198 = scalar_select %p197, %s22, 1
      %s199 = smul.addr %s198, 8
      %s200 = scalar_lea.vmem %s5, %s199
      %p201 = scmp.lt.s32.totalorder %s23, 0
      %s202 = scalar_select %p201, %s23, 0
      %s203 = scalar_lea.vmem %s2, %s202
      %s204 = smul.u32 16, %s23
      %p205 = scmp.lt.s32.totalorder %s204, 15
      %s206 = scalar_select %p205, %s204, 15
      %s207 = smul.addr %s206, 8
      %s208 = scalar_lea.vmem %s3, %s207
      %s209 = smul.u32 16, %s23
      %p210 = scmp.lt.s32.totalorder %s22, 1
      %s211 = scalar_select %p210, %s22, 1
      %s212 = smul.addr %s211, 8
      %s213 = scalar_lea.vmem %s4, %s212
      %p214 = scmp.lt.s32.totalorder %s22, 1
      %s215 = scalar_select %p214, %s22, 1
      %s216 = smul.addr %s215, 8
      %s217 = scalar_lea.vmem %s5, %s216
      %s218 = smul.u32 %s22, 8
      %p219 = scmp.eq.s32.totalorder %s23, 0
      // Predicated region
      $region33: #{gcp_interactions_forward.6} parent=31 // pred_check
        %p220 = pneg %p219
      $region34: #{gcp_interactions_forward.6} parent=31 // pred_check_branch
        %222 = sbr.rel (%p220) target = $region36
      $region35: #{gcp_interactions_forward.6} parent=31 // pred_region
        %vm223 = vcmask 457728
        %224 = vst.msk [vmem:[#allocation2] sm:$0xff] %vm223, 0.0
      $region36: #{gcp_interactions_forward.6} parent=31 // pred_fallthru
        _
      %s225 = sld [smem:[#allocation5 + %s23]]
      %p226 = scmp.ge.s32.totalorder %s225, %s218
      %s227 = sld [smem:[#allocation4 + %s23]]
      %s228 = sadd.s32 %s218, 8
      %p229 = scmp.lt.s32.totalorder %s227, %s228
      %p230 = pnand %p226, %p229
      %p231 = pneg %p230
      // Predicated region
      $region37: #{gcp_interactions_forward.6} parent=31 // pred_check
        _
      $region38: #{gcp_interactions_forward.6} parent=31 // pred_check_branch
        %233 = sbr.rel (%p230) target = $region40
      $region39: #{gcp_interactions_forward.6} parent=31 // pred_region
        %v234 = vlaneseq
        %v235 = vshrl.u32 %v234, 7
        %v236 = vstv %s218
        %v237 = vadd.s32 %v235, %v236
        %v238 = vld [vmem:[%s203] sm:$0x1]
        %v239 = vperm.slane %v238, 0
        %vm240 = vcmp.eq.s32.totalorder %v237, %v239
        %v241 = vsel %vm240, 1, 0
        %v242 = vcvt.s32.f32 %v241
        %v243 = vld [vmem:[#allocation2] sm:$0xff]
        %v244 = vld [vmem:[%s208] sm:$0xff]
        %v245 = vld [vmem:[%s208 + $0x8] sm:$0xff]
        %v246 = vld [vmem:[%s208 + $0x10] sm:$0xff]
        %v247 = vld [vmem:[%s208 + $0x18] sm:$0xff]
        %v248 = vld [vmem:[%s208 + $0x20] sm:$0xff]
        %v249 = vld [vmem:[%s208 + $0x28] sm:$0xff]
        %v250 = vld [vmem:[%s208 + $0x30] sm:$0xff]
        %v251 = vld [vmem:[%s208 + $0x38] sm:$0xff]
        %v252 = vld [vmem:[%s208 + $0x40] sm:$0xff]
        %v253 = vld [vmem:[%s208 + $0x48] sm:$0xff]
        %v254 = vld [vmem:[%s208 + $0x50] sm:$0xff]
        %v255 = vld [vmem:[%s208 + $0x58] sm:$0xff]
        %v256 = vld [vmem:[%s208 + $0x60] sm:$0xff]
        %v257 = vld [vmem:[%s208 + $0x68] sm:$0xff]
        %v258 = vld [vmem:[%s208 + $0x70] sm:$0xff]
        %v259 = vld [vmem:[%s208 + $0x78] sm:$0xff]
        %260 = vmatpush.msra.mxu0 %v259
        %261 = vmatpush.msra.mxu0 %v258
        %262 = vmatpush.msra.mxu0 %v257
        %263 = vmatpush.msra.mxu0 %v256
        %264 = vmatpush.msra.mxu0 %v255
        %265 = vmatpush.msra.mxu0 %v254
        %266 = vmatpush.msra.mxu0 %v253
        %267 = vmatpush.msra.mxu0 %v252
        %268 = vmatpush.msra.mxu0 %v251
        %269 = vmatpush.msra.mxu0 %v250
        %270 = vmatpush.msra.mxu0 %v249
        %271 = vmatpush.msra.mxu0 %v248
        %272 = vmatpush.msra.mxu0 %v247
        %273 = vmatpush.msra.mxu0 %v246
        %274 = vmatpush.msra.mxu0 %v245
        %275 = vmatpush.msra.mxu0 %v244
        %276 = vmatmul.f32.gmra.mxu0 %v242
        %v277 = vpop.f32.mrf.mxu0
        %v278 = vadd.f32 0.0, %v277
        %279 = vdwg.mxu0
        %v280 = vadd.f32 %v243, %v278
        %vm281 = vcmask 457728
        %282 = vst.msk [vmem:[#allocation2] sm:$0xff] %vm281, %v280
      $region40: #{gcp_interactions_forward.6} parent=31 // pred_fallthru
        _
      // Predicated region
      $region41: #{gcp_interactions_forward.6} parent=31 // pred_check
        %p283 = pneg %p219
      $region42: #{gcp_interactions_forward.6} parent=31 // pred_check_branch
        %285 = sbr.rel (%p283) target = $region44
      $region43: #{gcp_interactions_forward.6} parent=31 // pred_region
        %v286 = vld [vmem:[#allocation2] sm:$0xff]
        %v287 = vld [vmem:[%s213] sm:$0xff]
        %289 = vset.pattern.permute.xlu0 0
        %290 = vperm.xlu0 %289, %v287
        %v291 = vpop.permute.xlu0 %290
        %v293 = vmul.f32 %v286, %v291
        %vm294 = vcmask 457728
        %295 = vst.msk [vmem:[%s217] sm:$0xff] %vm294, %v293
      $region44: #{gcp_interactions_forward.6} parent=31 // pred_fallthru
        _
      %p296 = scmp.lt.s32.totalorder %s22, 1
      %s297 = scalar_select %p296, %s22, 1
      %s298 = smul.addr %s297, 8
      %s299 = scalar_lea.vmem %s5, %s298
      // Predicated region
      $region45: #{gcp_interactions_forward.6} parent=31 // pred_check
        %p300 = pneg %p126
      $region46: #{gcp_interactions_forward.6} parent=31 // pred_check_branch
        %302 = sbr.rel (%p300) target = $region48
      $region47: #{gcp_interactions_forward.6} parent=31 // pred_region
        _
      $region48: #{gcp_interactions_forward.6} parent=31 // pred_fallthru
        _
    $region32: #{gcp_interactions_forward.6} parent=5 // pred_fallthru
      _
    %p303 = scmp.le.s32.totalorder 2, %s13
    // Predicated region
    $region49: #{gcp_interactions_forward.6} parent=5 // pred_check
      %p304 = pneg %p303
    $region50: #{gcp_interactions_forward.6} parent=5 // pred_check_branch
      %306 = sbr.rel (%p304) target = $region52
    $region51: #{gcp_interactions_forward.6} parent=5 // pred_region
      %s307 = ssub.s32 %s13, 2
      // Predicated region
      $region53: #{gcp_interactions_forward.6} parent=51 // pred_check
        %p308 = pneg %p132
      $region54: #{gcp_interactions_forward.6} parent=51 // pred_check_branch
        %310 = sbr.rel (%p308) target = $region56
      $region55: #{gcp_interactions_forward.6} parent=51 // pred_region
        %p311 = scmp.lt.s32.totalorder %s24, 1
        %s312 = scalar_select %p311, %s24, 1
        %s313 = smul.addr %s312, 8
        %s314 = scalar_lea.vmem %s5, %s313
      $region56: #{gcp_interactions_forward.6} parent=51 // pred_fallthru
        _
    $region52: #{gcp_interactions_forward.6} parent=5 // pred_fallthru
      _
  $region6: #{gcp_interactions_forward.6} parent=0 // loop_footer
    %s17 = sadd.s32 1, %s13
  $region7: #{gcp_interactions_forward.6} parent=0 // loop_footer_branch
    %12 = sbr.rel target = $region3
  $region8: #{gcp_interactions_forward.6} parent=0 // loop_exit
    _

// kernel: gcp_interactions_forward.7
$region0: #{gcp_interactions_forward.7}
  #allocation0 [shape = 'u32[]', space=smem, size = 0x4, offset = 0x4, fixed_abs, tag = 'smem constant byte address 0x4 - core index']
  #allocation1 [shape = 'u32[72,128]{1,0:T(1,128)}', space=vmem, size = 0x9000, scoped, tag = 'internal scratch']
  %s0 = inlined_call_operand.vmem [shape: f32[16,32], index: 0, kind: input, shape index: {}]
  %s1 = inlined_call_operand.vmem [shape: f32[3,16,8], index: 1, kind: input, shape index: {}]
  %s2 = inlined_call_operand.vmem [shape: f32[16,56], index: 2, kind: input, shape index: {}]
  %s3 = inlined_call_operand.vmem [shape: f32[1,32], index: 3, kind: input, shape index: {}]
  %s4 = inlined_call_operand.vmem [shape: f32[1,32], index: 4, kind: input, shape index: {}]
  %s5 = inlined_call_operand.vmem [shape: f32[8,16], index: 5, kind: input, shape index: {}]
  %s6 = inlined_call_operand.vmem [shape: f32[32,128], index: 6, kind: input, shape index: {}]
  %s7 = inlined_call_operand.vmem [shape: f32[16,128], index: 7, kind: input, shape index: {}]
  %s8 = inlined_call_operand.vmem [shape: f32[1,128], index: 8, kind: input, shape index: {}]
  %s9 = inlined_call_operand.vmem [shape: f32[16,16], index: 9, kind: input, shape index: {}]
  %s10 = inlined_call_operand.vmem [shape: f32[128,16], index: 10, kind: input, shape index: {}]
  %s11 = inlined_call_operand.vmem [shape: f32[1,16], index: 11, kind: input, shape index: {}]
  %s12 = inlined_call_operand.vmem [shape: f32[16,16], index: 12, kind: input, shape index: {}]
  %s13 = inlined_call_operand.vmem [shape: f32[128,32], index: 13, kind: input, shape index: {}]
  %s14 = inlined_call_operand.vmem [shape: f32[16,32], index: 14, kind: input, shape index: {}]
  %s15 = inlined_call_operand.vmem [shape: f32[1,32], index: 15, kind: input, shape index: {}]
  %s16 = inlined_call_operand.vmem [shape: f32[16,8], index: 16, kind: input, shape index: {}]
  %s17 = inlined_call_operand.vmem [shape: f32[32,8], index: 17, kind: input, shape index: {}]
  %s18 = inlined_call_operand.vmem [shape: f32[1,8], index: 18, kind: input, shape index: {}]
  %s19 = inlined_call_operand.vmem [shape: f32[16,56], index: 19, kind: output, shape index: {}]
  %s20 = sld [smem:[#allocation0]]
  $region147: #{gcp_interactions_forward.7} parent=0
    _
  %s22 = ssub.s32 1, %s20
  %s23 = scalar_select 0, %s22, %s20
  $region1: #{gcp_interactions_forward.7} parent=0
    #allocation2 [shape = 'u8[24576]{0}', space=vmem, size = 0x6000, scoped, tag = 'input window, operand 1']
    loop: start=0, step=1, limit=4
    $region2: #{gcp_interactions_forward.7} parent=1 // loop_pre_header
      _
    $region3: #{gcp_interactions_forward.7} parent=1 // loop_header
      %s25 = sphi 0, %s29
      %p26 = scmp.ge.s32.totalorder %s25, 4
      %s35 = sphi 0, %s37
      %s38 = sphi 0, %s35
      %s39 = sphi 0, %s38
      %s55 = sphi 0, %s39
      %s61 = sphi 0, %s63
      %s64 = sphi 0, %s61
      %s65 = sphi 0, %s64
      %s81 = sphi 0, %s65
      %s87 = sphi 0, %s89
      %s90 = sphi 0, %s87
      %s91 = sphi 0, %s90
      %s107 = sphi 0, %s91
      %s111 = sphi 0, %s111
      %s113 = sphi 0, %s111
      %s114 = sphi 0, %s113
      %s128 = sphi 0, %s114
      %s132 = sphi 0, %s132
      %s134 = sphi 0, %s132
      %s135 = sphi 0, %s134
      %s149 = sphi 0, %s135
      %s153 = sphi 0, %s153
      %s155 = sphi 0, %s153
      %s156 = sphi 0, %s155
      %s170 = sphi 0, %s156
      %s174 = sphi 0, %s174
      %s176 = sphi 0, %s174
      %s177 = sphi 0, %s176
      %s191 = sphi 0, %s177
      %s195 = sphi 0, %s195
      %s197 = sphi 0, %s195
      %s198 = sphi 0, %s197
      %s212 = sphi 0, %s198
      %s216 = sphi 0, %s216
      %s218 = sphi 0, %s216
      %s219 = sphi 0, %s218
      %s233 = sphi 0, %s219
      %s237 = sphi 0, %s237
      %s239 = sphi 0, %s237
      %s240 = sphi 0, %s239
      %s254 = sphi 0, %s240
      %s258 = sphi 0, %s258
      %s260 = sphi 0, %s258
      %s261 = sphi 0, %s260
      %s275 = sphi 0, %s261
      %s279 = sphi 0, %s279
      %s281 = sphi 0, %s279
      %s282 = sphi 0, %s281
      %s296 = sphi 0, %s282
      %s300 = sphi 0, %s300
      %s302 = sphi 0, %s300
      %s303 = sphi 0, %s302
      %s317 = sphi 0, %s303
      %s321 = sphi 0, %s321
      %s323 = sphi 0, %s321
      %s324 = sphi 0, %s323
      %s338 = sphi 0, %s324
      %s342 = sphi 0, %s342
      %s344 = sphi 0, %s342
      %s345 = sphi 0, %s344
      %s359 = sphi 0, %s345
      %s363 = sphi 0, %s363
      %s365 = sphi 0, %s363
      %s366 = sphi 0, %s365
      %s380 = sphi 0, %s366
      %s384 = sphi 0, %s384
      %s386 = sphi 0, %s384
      %s387 = sphi 0, %s386
      %s401 = sphi 0, %s387
      %s405 = sphi 0, %s405
      %s407 = sphi 0, %s405
      %s408 = sphi 0, %s407
      %s422 = sphi 0, %s408
      %s426 = sphi 0, %s426
      %s428 = sphi 0, %s426
      %s429 = sphi 0, %s428
      %s443 = sphi 0, %s429
      %s449 = sphi 0, %s451
      %s452 = sphi 0, %s449
      %s453 = sphi 0, %s452
      %s469 = sphi 0, %s453
    $region4: #{gcp_interactions_forward.7} parent=1 // loop_header_branch
      %28 = sbr.rel (%p26) target = $region8
    $region5: #{gcp_interactions_forward.7} parent=1 // loop_body
      %s30 = ssub.s32 %s25, 1
      %s31 = ssub.s32 %s25, 2
      %s32 = sadd.s32 %s25, 1
      %s33 = ssub.s32 %s25, %s32
      %p34 = scmp.eq.s32.totalorder %s33, 0
      %s36 = sadd.s32 %s35, 1
      %s37 = scalar_select %p34, %s35, %s36
      %p40 = pneg %p34
      %p41 = scmp.eq.s32.totalorder %s25, 1
      %p42 = por %p40, %p41
      %p43 = scmp.ne.s32.totalorder %s35, %s38
      %p44 = scmp.eq.s32.totalorder %s25, 0
      %p45 = por %p43, %p44
      %p46 = scmp.ne.s32.totalorder %s35, %s38
      %p47 = scmp.eq.s32.totalorder %s30, 1
      %p48 = por %p46, %p47
      %p49 = scmp.ne.s32.totalorder %s38, %s39
      %p50 = scmp.eq.s32.totalorder %s30, 0
      %p51 = por %p49, %p50
      %p52 = scmp.ne.s32.totalorder %s38, %s39
      %p53 = scmp.eq.s32.totalorder %s31, 1
      %p54 = por %p52, %p53
      %p56 = scmp.ne.s32.totalorder %s39, %s55
      %p57 = scmp.eq.s32.totalorder %s31, 0
      %p58 = por %p56, %p57
      %s59 = ssub.s32 %s25, %s32
      %p60 = scmp.eq.s32.totalorder %s59, 0
      %s62 = sadd.s32 %s61, 1
      %s63 = scalar_select %p60, %s61, %s62
      %p66 = pneg %p60
      %p67 = scmp.eq.s32.totalorder %s25, 1
      %p68 = por %p66, %p67
      %p69 = scmp.ne.s32.totalorder %s61, %s64
      %p70 = scmp.eq.s32.totalorder %s25, 0
      %p71 = por %p69, %p70
      %p72 = scmp.ne.s32.totalorder %s61, %s64
      %p73 = scmp.eq.s32.totalorder %s30, 1
      %p74 = por %p72, %p73
      %p75 = scmp.ne.s32.totalorder %s64, %s65
      %p76 = scmp.eq.s32.totalorder %s30, 0
      %p77 = por %p75, %p76
      %p78 = scmp.ne.s32.totalorder %s64, %s65
      %p79 = scmp.eq.s32.totalorder %s31, 1
      %p80 = por %p78, %p79
      %p82 = scmp.ne.s32.totalorder %s65, %s81
      %p83 = scmp.eq.s32.totalorder %s31, 0
      %p84 = por %p82, %p83
      %s85 = ssub.s32 %s25, %s32
      %p86 = scmp.eq.s32.totalorder %s85, 0
      %s88 = sadd.s32 %s87, 1
      %s89 = scalar_select %p86, %s87, %s88
      %p92 = pneg %p86
      %p93 = scmp.eq.s32.totalorder %s25, 1
      %p94 = por %p92, %p93
      %p95 = scmp.ne.s32.totalorder %s87, %s90
      %p96 = scmp.eq.s32.totalorder %s25, 0
      %p97 = por %p95, %p96
      %p98 = scmp.ne.s32.totalorder %s87, %s90
      %p99 = scmp.eq.s32.totalorder %s30, 1
      %p100 = por %p98, %p99
      %p101 = scmp.ne.s32.totalorder %s90, %s91
      %p102 = scmp.eq.s32.totalorder %s30, 0
      %p103 = por %p101, %p102
      %p104 = scmp.ne.s32.totalorder %s90, %s91
      %p105 = scmp.eq.s32.totalorder %s31, 1
      %p106 = por %p104, %p105
      %p108 = scmp.ne.s32.totalorder %s91, %s107
      %p109 = scmp.eq.s32.totalorder %s31, 0
      %p110 = por %p108, %p109
      %s112 = sadd.s32 %s111, 1
      %p115 = scmp.eq.s32.totalorder %s25, 1
      %p116 = scmp.ne.s32.totalorder %s111, %s113
      %p117 = scmp.eq.s32.totalorder %s25, 0
      %p118 = por %p116, %p117
      %p119 = scmp.ne.s32.totalorder %s111, %s113
      %p120 = scmp.eq.s32.totalorder %s30, 1
      %p121 = por %p119, %p120
      %p122 = scmp.ne.s32.totalorder %s113, %s114
      %p123 = scmp.eq.s32.totalorder %s30, 0
      %p124 = por %p122, %p123
      %p125 = scmp.ne.s32.totalorder %s113, %s114
      %p126 = scmp.eq.s32.totalorder %s31, 1
      %p127 = por %p125, %p126
      %p129 = scmp.ne.s32.totalorder %s114, %s128
      %p130 = scmp.eq.s32.totalorder %s31, 0
      %p131 = por %p129, %p130
      %s133 = sadd.s32 %s132, 1
      %p136 = scmp.eq.s32.totalorder %s25, 1
      %p137 = scmp.ne.s32.totalorder %s132, %s134
      %p138 = scmp.eq.s32.totalorder %s25, 0
      %p139 = por %p137, %p138
      %p140 = scmp.ne.s32.totalorder %s132, %s134
      %p141 = scmp.eq.s32.totalorder %s30, 1
      %p142 = por %p140, %p141
      %p143 = scmp.ne.s32.totalorder %s134, %s135
      %p144 = scmp.eq.s32.totalorder %s30, 0
      %p145 = por %p143, %p144
      %p146 = scmp.ne.s32.totalorder %s134, %s135
      %p147 = scmp.eq.s32.totalorder %s31, 1
      %p148 = por %p146, %p147
      %p150 = scmp.ne.s32.totalorder %s135, %s149
      %p151 = scmp.eq.s32.totalorder %s31, 0
      %p152 = por %p150, %p151
      %s154 = sadd.s32 %s153, 1
      %p157 = scmp.eq.s32.totalorder %s25, 1
      %p158 = scmp.ne.s32.totalorder %s153, %s155
      %p159 = scmp.eq.s32.totalorder %s25, 0
      %p160 = por %p158, %p159
      %p161 = scmp.ne.s32.totalorder %s153, %s155
      %p162 = scmp.eq.s32.totalorder %s30, 1
      %p163 = por %p161, %p162
      %p164 = scmp.ne.s32.totalorder %s155, %s156
      %p165 = scmp.eq.s32.totalorder %s30, 0
      %p166 = por %p164, %p165
      %p167 = scmp.ne.s32.totalorder %s155, %s156
      %p168 = scmp.eq.s32.totalorder %s31, 1
      %p169 = por %p167, %p168
      %p171 = scmp.ne.s32.totalorder %s156, %s170
      %p172 = scmp.eq.s32.totalorder %s31, 0
      %p173 = por %p171, %p172
      %s175 = sadd.s32 %s174, 1
      %p178 = scmp.eq.s32.totalorder %s25, 1
      %p179 = scmp.ne.s32.totalorder %s174, %s176
      %p180 = scmp.eq.s32.totalorder %s25, 0
      %p181 = por %p179, %p180
      %p182 = scmp.ne.s32.totalorder %s174, %s176
      %p183 = scmp.eq.s32.totalorder %s30, 1
      %p184 = por %p182, %p183
      %p185 = scmp.ne.s32.totalorder %s176, %s177
      %p186 = scmp.eq.s32.totalorder %s30, 0
      %p187 = por %p185, %p186
      %p188 = scmp.ne.s32.totalorder %s176, %s177
      %p189 = scmp.eq.s32.totalorder %s31, 1
      %p190 = por %p188, %p189
      %p192 = scmp.ne.s32.totalorder %s177, %s191
      %p193 = scmp.eq.s32.totalorder %s31, 0
      %p194 = por %p192, %p193
      %s196 = sadd.s32 %s195, 1
      %p199 = scmp.eq.s32.totalorder %s25, 1
      %p200 = scmp.ne.s32.totalorder %s195, %s197
      %p201 = scmp.eq.s32.totalorder %s25, 0
      %p202 = por %p200, %p201
      %p203 = scmp.ne.s32.totalorder %s195, %s197
      %p204 = scmp.eq.s32.totalorder %s30, 1
      %p205 = por %p203, %p204
      %p206 = scmp.ne.s32.totalorder %s197, %s198
      %p207 = scmp.eq.s32.totalorder %s30, 0
      %p208 = por %p206, %p207
      %p209 = scmp.ne.s32.totalorder %s197, %s198
      %p210 = scmp.eq.s32.totalorder %s31, 1
      %p211 = por %p209, %p210
      %p213 = scmp.ne.s32.totalorder %s198, %s212
      %p214 = scmp.eq.s32.totalorder %s31, 0
      %p215 = por %p213, %p214
      %s217 = sadd.s32 %s216, 1
      %p220 = scmp.eq.s32.totalorder %s25, 1
      %p221 = scmp.ne.s32.totalorder %s216, %s218
      %p222 = scmp.eq.s32.totalorder %s25, 0
      %p223 = por %p221, %p222
      %p224 = scmp.ne.s32.totalorder %s216, %s218
      %p225 = scmp.eq.s32.totalorder %s30, 1
      %p226 = por %p224, %p225
      %p227 = scmp.ne.s32.totalorder %s218, %s219
      %p228 = scmp.eq.s32.totalorder %s30, 0
      %p229 = por %p227, %p228
      %p230 = scmp.ne.s32.totalorder %s218, %s219
      %p231 = scmp.eq.s32.totalorder %s31, 1
      %p232 = por %p230, %p231
      %p234 = scmp.ne.s32.totalorder %s219, %s233
      %p235 = scmp.eq.s32.totalorder %s31, 0
      %p236 = por %p234, %p235
      %s238 = sadd.s32 %s237, 1
      %p241 = scmp.eq.s32.totalorder %s25, 1
      %p242 = scmp.ne.s32.totalorder %s237, %s239
      %p243 = scmp.eq.s32.totalorder %s25, 0
      %p244 = por %p242, %p243
      %p245 = scmp.ne.s32.totalorder %s237, %s239
      %p246 = scmp.eq.s32.totalorder %s30, 1
      %p247 = por %p245, %p246
      %p248 = scmp.ne.s32.totalorder %s239, %s240
      %p249 = scmp.eq.s32.totalorder %s30, 0
      %p250 = por %p248, %p249
      %p251 = scmp.ne.s32.totalorder %s239, %s240
      %p252 = scmp.eq.s32.totalorder %s31, 1
      %p253 = por %p251, %p252
      %p255 = scmp.ne.s32.totalorder %s240, %s254
      %p256 = scmp.eq.s32.totalorder %s31, 0
      %p257 = por %p255, %p256
      %s259 = sadd.s32 %s258, 1
      %p262 = scmp.eq.s32.totalorder %s25, 1
      %p263 = scmp.ne.s32.totalorder %s258, %s260
      %p264 = scmp.eq.s32.totalorder %s25, 0
      %p265 = por %p263, %p264
      %p266 = scmp.ne.s32.totalorder %s258, %s260
      %p267 = scmp.eq.s32.totalorder %s30, 1
      %p268 = por %p266, %p267
      %p269 = scmp.ne.s32.totalorder %s260, %s261
      %p270 = scmp.eq.s32.totalorder %s30, 0
      %p271 = por %p269, %p270
      %p272 = scmp.ne.s32.totalorder %s260, %s261
      %p273 = scmp.eq.s32.totalorder %s31, 1
      %p274 = por %p272, %p273
      %p276 = scmp.ne.s32.totalorder %s261, %s275
      %p277 = scmp.eq.s32.totalorder %s31, 0
      %p278 = por %p276, %p277
      %s280 = sadd.s32 %s279, 1
      %p283 = scmp.eq.s32.totalorder %s25, 1
      %p284 = scmp.ne.s32.totalorder %s279, %s281
      %p285 = scmp.eq.s32.totalorder %s25, 0
      %p286 = por %p284, %p285
      %p287 = scmp.ne.s32.totalorder %s279, %s281
      %p288 = scmp.eq.s32.totalorder %s30, 1
      %p289 = por %p287, %p288
      %p290 = scmp.ne.s32.totalorder %s281, %s282
      %p291 = scmp.eq.s32.totalorder %s30, 0
      %p292 = por %p290, %p291
      %p293 = scmp.ne.s32.totalorder %s281, %s282
      %p294 = scmp.eq.s32.totalorder %s31, 1
      %p295 = por %p293, %p294
      %p297 = scmp.ne.s32.totalorder %s282, %s296
      %p298 = scmp.eq.s32.totalorder %s31, 0
      %p299 = por %p297, %p298
      %s301 = sadd.s32 %s300, 1
      %p304 = scmp.eq.s32.totalorder %s25, 1
      %p305 = scmp.ne.s32.totalorder %s300, %s302
      %p306 = scmp.eq.s32.totalorder %s25, 0
      %p307 = por %p305, %p306
      %p308 = scmp.ne.s32.totalorder %s300, %s302
      %p309 = scmp.eq.s32.totalorder %s30, 1
      %p310 = por %p308, %p309
      %p311 = scmp.ne.s32.totalorder %s302, %s303
      %p312 = scmp.eq.s32.totalorder %s30, 0
      %p313 = por %p311, %p312
      %p314 = scmp.ne.s32.totalorder %s302, %s303
      %p315 = scmp.eq.s32.totalorder %s31, 1
      %p316 = por %p314, %p315
      %p318 = scmp.ne.s32.totalorder %s303, %s317
      %p319 = scmp.eq.s32.totalorder %s31, 0
      %p320 = por %p318, %p319
      %s322 = sadd.s32 %s321, 1
      %p325 = scmp.eq.s32.totalorder %s25, 1
      %p326 = scmp.ne.s32.totalorder %s321, %s323
      %p327 = scmp.eq.s32.totalorder %s25, 0
      %p328 = por %p326, %p327
      %p329 = scmp.ne.s32.totalorder %s321, %s323
      %p330 = scmp.eq.s32.totalorder %s30, 1
      %p331 = por %p329, %p330
      %p332 = scmp.ne.s32.totalorder %s323, %s324
      %p333 = scmp.eq.s32.totalorder %s30, 0
      %p334 = por %p332, %p333
      %p335 = scmp.ne.s32.totalorder %s323, %s324
      %p336 = scmp.eq.s32.totalorder %s31, 1
      %p337 = por %p335, %p336
      %p339 = scmp.ne.s32.totalorder %s324, %s338
      %p340 = scmp.eq.s32.totalorder %s31, 0
      %p341 = por %p339, %p340
      %s343 = sadd.s32 %s342, 1
      %p346 = scmp.eq.s32.totalorder %s25, 1
      %p347 = scmp.ne.s32.totalorder %s342, %s344
      %p348 = scmp.eq.s32.totalorder %s25, 0
      %p349 = por %p347, %p348
      %p350 = scmp.ne.s32.totalorder %s342, %s344
      %p351 = scmp.eq.s32.totalorder %s30, 1
      %p352 = por %p350, %p351
      %p353 = scmp.ne.s32.totalorder %s344, %s345
      %p354 = scmp.eq.s32.totalorder %s30, 0
      %p355 = por %p353, %p354
      %p356 = scmp.ne.s32.totalorder %s344, %s345
      %p357 = scmp.eq.s32.totalorder %s31, 1
      %p358 = por %p356, %p357
      %p360 = scmp.ne.s32.totalorder %s345, %s359
      %p361 = scmp.eq.s32.totalorder %s31, 0
      %p362 = por %p360, %p361
      %s364 = sadd.s32 %s363, 1
      %p367 = scmp.eq.s32.totalorder %s25, 1
      %p368 = scmp.ne.s32.totalorder %s363, %s365
      %p369 = scmp.eq.s32.totalorder %s25, 0
      %p370 = por %p368, %p369
      %p371 = scmp.ne.s32.totalorder %s363, %s365
      %p372 = scmp.eq.s32.totalorder %s30, 1
      %p373 = por %p371, %p372
      %p374 = scmp.ne.s32.totalorder %s365, %s366
      %p375 = scmp.eq.s32.totalorder %s30, 0
      %p376 = por %p374, %p375
      %p377 = scmp.ne.s32.totalorder %s365, %s366
      %p378 = scmp.eq.s32.totalorder %s31, 1
      %p379 = por %p377, %p378
      %p381 = scmp.ne.s32.totalorder %s366, %s380
      %p382 = scmp.eq.s32.totalorder %s31, 0
      %p383 = por %p381, %p382
      %s385 = sadd.s32 %s384, 1
      %p388 = scmp.eq.s32.totalorder %s25, 1
      %p389 = scmp.ne.s32.totalorder %s384, %s386
      %p390 = scmp.eq.s32.totalorder %s25, 0
      %p391 = por %p389, %p390
      %p392 = scmp.ne.s32.totalorder %s384, %s386
      %p393 = scmp.eq.s32.totalorder %s30, 1
      %p394 = por %p392, %p393
      %p395 = scmp.ne.s32.totalorder %s386, %s387
      %p396 = scmp.eq.s32.totalorder %s30, 0
      %p397 = por %p395, %p396
      %p398 = scmp.ne.s32.totalorder %s386, %s387
      %p399 = scmp.eq.s32.totalorder %s31, 1
      %p400 = por %p398, %p399
      %p402 = scmp.ne.s32.totalorder %s387, %s401
      %p403 = scmp.eq.s32.totalorder %s31, 0
      %p404 = por %p402, %p403
      %s406 = sadd.s32 %s405, 1
      %p409 = scmp.eq.s32.totalorder %s25, 1
      %p410 = scmp.ne.s32.totalorder %s405, %s407
      %p411 = scmp.eq.s32.totalorder %s25, 0
      %p412 = por %p410, %p411
      %p413 = scmp.ne.s32.totalorder %s405, %s407
      %p414 = scmp.eq.s32.totalorder %s30, 1
      %p415 = por %p413, %p414
      %p416 = scmp.ne.s32.totalorder %s407, %s408
      %p417 = scmp.eq.s32.totalorder %s30, 0
      %p418 = por %p416, %p417
      %p419 = scmp.ne.s32.totalorder %s407, %s408
      %p420 = scmp.eq.s32.totalorder %s31, 1
      %p421 = por %p419, %p420
      %p423 = scmp.ne.s32.totalorder %s408, %s422
      %p424 = scmp.eq.s32.totalorder %s31, 0
      %p425 = por %p423, %p424
      %s427 = sadd.s32 %s426, 1
      %p430 = scmp.eq.s32.totalorder %s25, 1
      %p431 = scmp.ne.s32.totalorder %s426, %s428
      %p432 = scmp.eq.s32.totalorder %s25, 0
      %p433 = por %p431, %p432
      %p434 = scmp.ne.s32.totalorder %s426, %s428
      %p435 = scmp.eq.s32.totalorder %s30, 1
      %p436 = por %p434, %p435
      %p437 = scmp.ne.s32.totalorder %s428, %s429
      %p438 = scmp.eq.s32.totalorder %s30, 0
      %p439 = por %p437, %p438
      %p440 = scmp.ne.s32.totalorder %s428, %s429
      %p441 = scmp.eq.s32.totalorder %s31, 1
      %p442 = por %p440, %p441
      %p444 = scmp.ne.s32.totalorder %s429, %s443
      %p445 = scmp.eq.s32.totalorder %s31, 0
      %p446 = por %p444, %p445
      %s447 = ssub.s32 %s25, %s32
      %p448 = scmp.eq.s32.totalorder %s447, 0
      %s450 = sadd.s32 %s449, 1
      %s451 = scalar_select %p448, %s449, %s450
      %p454 = pneg %p448
      %p455 = scmp.eq.s32.totalorder %s25, 1
      %p456 = por %p454, %p455
      %p457 = scmp.ne.s32.totalorder %s449, %s452
      %p458 = scmp.eq.s32.totalorder %s25, 0
      %p459 = por %p457, %p458
      %p460 = scmp.ne.s32.totalorder %s449, %s452
      %p461 = scmp.eq.s32.totalorder %s30, 1
      %p462 = por %p460, %p461
      %p463 = scmp.ne.s32.totalorder %s452, %s453
      %p464 = scmp.eq.s32.totalorder %s30, 0
      %p465 = por %p463, %p464
      %p466 = scmp.ne.s32.totalorder %s452, %s453
      %p467 = scmp.eq.s32.totalorder %s31, 1
      %p468 = por %p466, %p467
      %p470 = scmp.ne.s32.totalorder %s453, %s469
      %p471 = scmp.eq.s32.totalorder %s31, 0
      %p472 = por %p470, %p471
      %p473 = scmp.le.s32.totalorder 1, %s25
      %p474 = scmp.lt.s32.totalorder %s25, 3
      %p475 = pnand %p473, %p474
      %p476 = pneg %p475
      // Predicated region
      $region9: #{gcp_interactions_forward.7} parent=5 // pred_check
        _
      $region10: #{gcp_interactions_forward.7} parent=5 // pred_check_branch
        %478 = sbr.rel (%p475) target = $region12
      $region11: #{gcp_interactions_forward.7} parent=5 // pred_region
        %s479 = ssub.s32 %s25, 1
        // Predicated region
        $region13: #{gcp_interactions_forward.7} parent=11 // pred_check
          %p480 = pneg %p124
        $region14: #{gcp_interactions_forward.7} parent=11 // pred_check_branch
          %482 = sbr.rel (%p480) target = $region16
        $region15: #{gcp_interactions_forward.7} parent=11 // pred_region
          _
        $region16: #{gcp_interactions_forward.7} parent=11 // pred_fallthru
          _
        // Predicated region
        $region17: #{gcp_interactions_forward.7} parent=11 // pred_check
          %p483 = pneg %p145
        $region18: #{gcp_interactions_forward.7} parent=11 // pred_check_branch
          %485 = sbr.rel (%p483) target = $region20
        $region19: #{gcp_interactions_forward.7} parent=11 // pred_region
          _
        $region20: #{gcp_interactions_forward.7} parent=11 // pred_fallthru
          _
        // Predicated region
        $region21: #{gcp_interactions_forward.7} parent=11 // pred_check
          %p486 = pneg %p166
        $region22: #{gcp_interactions_forward.7} parent=11 // pred_check_branch
          %488 = sbr.rel (%p486) target = $region24
        $region23: #{gcp_interactions_forward.7} parent=11 // pred_region
          _
        $region24: #{gcp_interactions_forward.7} parent=11 // pred_fallthru
          _
        // Predicated region
        $region25: #{gcp_interactions_forward.7} parent=11 // pred_check
          %p489 = pneg %p187
        $region26: #{gcp_interactions_forward.7} parent=11 // pred_check_branch
          %491 = sbr.rel (%p489) target = $region28
        $region27: #{gcp_interactions_forward.7} parent=11 // pred_region
          _
        $region28: #{gcp_interactions_forward.7} parent=11 // pred_fallthru
          _
        // Predicated region
        $region29: #{gcp_interactions_forward.7} parent=11 // pred_check
          %p492 = pneg %p208
        $region30: #{gcp_interactions_forward.7} parent=11 // pred_check_branch
          %494 = sbr.rel (%p492) target = $region32
        $region31: #{gcp_interactions_forward.7} parent=11 // pred_region
          _
        $region32: #{gcp_interactions_forward.7} parent=11 // pred_fallthru
          _
        // Predicated region
        $region33: #{gcp_interactions_forward.7} parent=11 // pred_check
          %p495 = pneg %p229
        $region34: #{gcp_interactions_forward.7} parent=11 // pred_check_branch
          %497 = sbr.rel (%p495) target = $region36
        $region35: #{gcp_interactions_forward.7} parent=11 // pred_region
          _
        $region36: #{gcp_interactions_forward.7} parent=11 // pred_fallthru
          _
        // Predicated region
        $region37: #{gcp_interactions_forward.7} parent=11 // pred_check
          %p498 = pneg %p250
        $region38: #{gcp_interactions_forward.7} parent=11 // pred_check_branch
          %500 = sbr.rel (%p498) target = $region40
        $region39: #{gcp_interactions_forward.7} parent=11 // pred_region
          _
        $region40: #{gcp_interactions_forward.7} parent=11 // pred_fallthru
          _
        // Predicated region
        $region41: #{gcp_interactions_forward.7} parent=11 // pred_check
          %p501 = pneg %p271
        $region42: #{gcp_interactions_forward.7} parent=11 // pred_check_branch
          %503 = sbr.rel (%p501) target = $region44
        $region43: #{gcp_interactions_forward.7} parent=11 // pred_region
          _
        $region44: #{gcp_interactions_forward.7} parent=11 // pred_fallthru
          _
        // Predicated region
        $region45: #{gcp_interactions_forward.7} parent=11 // pred_check
          %p504 = pneg %p292
        $region46: #{gcp_interactions_forward.7} parent=11 // pred_check_branch
          %506 = sbr.rel (%p504) target = $region48
        $region47: #{gcp_interactions_forward.7} parent=11 // pred_region
          _
        $region48: #{gcp_interactions_forward.7} parent=11 // pred_fallthru
          _
        // Predicated region
        $region49: #{gcp_interactions_forward.7} parent=11 // pred_check
          %p507 = pneg %p313
        $region50: #{gcp_interactions_forward.7} parent=11 // pred_check_branch
          %509 = sbr.rel (%p507) target = $region52
        $region51: #{gcp_interactions_forward.7} parent=11 // pred_region
          _
        $region52: #{gcp_interactions_forward.7} parent=11 // pred_fallthru
          _
        // Predicated region
        $region53: #{gcp_interactions_forward.7} parent=11 // pred_check
          %p510 = pneg %p334
        $region54: #{gcp_interactions_forward.7} parent=11 // pred_check_branch
          %512 = sbr.rel (%p510) target = $region56
        $region55: #{gcp_interactions_forward.7} parent=11 // pred_region
          _
        $region56: #{gcp_interactions_forward.7} parent=11 // pred_fallthru
          _
        // Predicated region
        $region57: #{gcp_interactions_forward.7} parent=11 // pred_check
          %p513 = pneg %p355
        $region58: #{gcp_interactions_forward.7} parent=11 // pred_check_branch
          %515 = sbr.rel (%p513) target = $region60
        $region59: #{gcp_interactions_forward.7} parent=11 // pred_region
          _
        $region60: #{gcp_interactions_forward.7} parent=11 // pred_fallthru
          _
        // Predicated region
        $region61: #{gcp_interactions_forward.7} parent=11 // pred_check
          %p516 = pneg %p376
        $region62: #{gcp_interactions_forward.7} parent=11 // pred_check_branch
          %518 = sbr.rel (%p516) target = $region64
        $region63: #{gcp_interactions_forward.7} parent=11 // pred_region
          _
        $region64: #{gcp_interactions_forward.7} parent=11 // pred_fallthru
          _
        // Predicated region
        $region65: #{gcp_interactions_forward.7} parent=11 // pred_check
          %p519 = pneg %p397
        $region66: #{gcp_interactions_forward.7} parent=11 // pred_check_branch
          %521 = sbr.rel (%p519) target = $region68
        $region67: #{gcp_interactions_forward.7} parent=11 // pred_region
          _
        $region68: #{gcp_interactions_forward.7} parent=11 // pred_fallthru
          _
        // Predicated region
        $region69: #{gcp_interactions_forward.7} parent=11 // pred_check
          %p522 = pneg %p418
        $region70: #{gcp_interactions_forward.7} parent=11 // pred_check_branch
          %524 = sbr.rel (%p522) target = $region72
        $region71: #{gcp_interactions_forward.7} parent=11 // pred_region
          _
        $region72: #{gcp_interactions_forward.7} parent=11 // pred_fallthru
          _
        // Predicated region
        $region73: #{gcp_interactions_forward.7} parent=11 // pred_check
          %p525 = pneg %p439
        $region74: #{gcp_interactions_forward.7} parent=11 // pred_check_branch
          %527 = sbr.rel (%p525) target = $region76
        $region75: #{gcp_interactions_forward.7} parent=11 // pred_region
          _
        $region76: #{gcp_interactions_forward.7} parent=11 // pred_fallthru
          _
      $region12: #{gcp_interactions_forward.7} parent=5 // pred_fallthru
        _
      %p528 = scmp.lt.s32.totalorder %s25, 2
      // Predicated region
      $region77: #{gcp_interactions_forward.7} parent=5 // pred_check
        %p529 = pneg %p528
      $region78: #{gcp_interactions_forward.7} parent=5 // pred_check_branch
        %531 = sbr.rel (%p529) target = $region80
      $region79: #{gcp_interactions_forward.7} parent=5 // pred_region
        // Predicated region
        $region81: #{gcp_interactions_forward.7} parent=79 // pred_check
          %p532 = pneg %p45
        $region82: #{gcp_interactions_forward.7} parent=79 // pred_check_branch
          %534 = sbr.rel (%p532) target = $region84
        $region83: #{gcp_interactions_forward.7} parent=79 // pred_region
          %p535 = scmp.lt.s32.totalorder %s25, 1
          %s536 = scalar_select %p535, %s25, 1
          %s537 = smul.addr %s536, 8
          %s538 = scalar_lea.vmem %s0, %s537
        $region84: #{gcp_interactions_forward.7} parent=79 // pred_fallthru
          _
        // Predicated region
        $region85: #{gcp_interactions_forward.7} parent=79 // pred_check
          %p539 = pneg %p71
        $region86: #{gcp_interactions_forward.7} parent=79 // pred_check_branch
          %541 = sbr.rel (%p539) target = $region88
        $region87: #{gcp_interactions_forward.7} parent=79 // pred_region
          %s542 = sand.u32 %s61, 1
          %s543 = sand.u32 %s61, 1
          %s544 = smul.addr %s543, 24
          %s545 = scalar_lea.vmem [#allocation2], %s544
          %s546 = smul.addr %s25, 8
          %s547 = scalar_lea.vmem %s1, %s546
          // Predicated region
          $region89: #{gcp_interactions_forward.7} parent=87 // pred_check
            _
          $region90: #{gcp_interactions_forward.7} parent=87 // pred_check_branch
            %549 = sbr.rel (0) target = $region92
          $region91: #{gcp_interactions_forward.7} parent=87 // pred_region
            // Predicated region
            $region93: #{gcp_interactions_forward.7} parent=91 // pred_check
              _
            $region94: #{gcp_interactions_forward.7} parent=91 // pred_check_branch
              %551 = sbr.rel (0) target = $region96
            $region95: #{gcp_interactions_forward.7} parent=91 // pred_region
              // Predicated region
              $region108: #{gcp_interactions_forward.7} parent=95 // pred_check
                _
              $region109: #{gcp_interactions_forward.7} parent=95 // pred_check_branch
                %571 = sbr.rel (0) target = $region111
              $region110: #{gcp_interactions_forward.7} parent=95 // pred_region
                loop: start=0, step=1, limit=1
                $region112: #{gcp_interactions_forward.7} parent=110 // loop_pre_header
                  _
                $region113: #{gcp_interactions_forward.7} parent=110 // loop_header
                  %s573 = sphi 0, %s577
                  %p574 = scmp.ge.s32.totalorder %s573, 1
                  %s578 = sphi %s547, %s547
                  %s579 = sphi %s545, %s545
                $region114: #{gcp_interactions_forward.7} parent=110 // loop_header_branch
                  %576 = sbr.rel (%p574) target = $region118
                $region115: #{gcp_interactions_forward.7} parent=110 // loop_body
                  %v580 = vld [vmem:[%s578] sm:$0xff]
                  %581 = vst [vmem:[%s579] sm:$0xff] %v580
                  %v582 = vld [vmem:[%s578 + $0x10] sm:$0xff]
                  %583 = vst [vmem:[%s579 + $0x8] sm:$0xff] %v582
                  %v584 = vld [vmem:[%s578 + $0x20] sm:$0xff]
                  %585 = vst [vmem:[%s579 + $0x10] sm:$0xff] %v584
                $region116: #{gcp_interactions_forward.7} parent=110 // loop_footer
                  %s577 = sadd.s32 1, %s573
                $region117: #{gcp_interactions_forward.7} parent=110 // loop_footer_branch
                  %572 = sbr.rel target = $region113
                $region118: #{gcp_interactions_forward.7} parent=110 // loop_exit
                  _
              $region111: #{gcp_interactions_forward.7} parent=95 // pred_fallthru
                _
              // Predicated region
              $region119: #{gcp_interactions_forward.7} parent=95 // pred_check
                _
              $region120: #{gcp_interactions_forward.7} parent=95 // pred_check_branch
                %587 = sbr.rel target = $region122
              $region121: #{gcp_interactions_forward.7} parent=95 // pred_region
                _
              $region122: #{gcp_interactions_forward.7} parent=95 // pred_fallthru
                _
            $region96: #{gcp_interactions_forward.7} parent=91 // pred_fallthru
              _
            // Predicated region
            $region97: #{gcp_interactions_forward.7} parent=91 // pred_check
              _
            $region98: #{gcp_interactions_forward.7} parent=91 // pred_check_branch
              %553 = sbr.rel target = $region100
            $region99: #{gcp_interactions_forward.7} parent=91 // pred_region
              %s555 = ssub.s32 256, 1
              loop: start=0, step=1, limit=1
              $region101: #{gcp_interactions_forward.7} parent=99 // loop_pre_header
                _
              $region102: #{gcp_interactions_forward.7} parent=99 // loop_header
                %s557 = sphi 0, %s561
                %p558 = scmp.ge.s32.totalorder %s557, 1
                %s562 = sphi %s547, %s547
                %s563 = sphi %s545, %s545
              $region103: #{gcp_interactions_forward.7} parent=99 // loop_header_branch
                %560 = sbr.rel (%p558) target = $region107
              $region104: #{gcp_interactions_forward.7} parent=99 // loop_body
                %v564 = vld [vmem:[%s562] sm:%s555]
                %565 = vst [vmem:[%s563] sm:%s555] %v564
                %v566 = vld [vmem:[%s562 + $0x10] sm:%s555]
                %567 = vst [vmem:[%s563 + $0x8] sm:%s555] %v566
                %v568 = vld [vmem:[%s562 + $0x20] sm:%s555]
                %569 = vst [vmem:[%s563 + $0x10] sm:%s555] %v568
              $region105: #{gcp_interactions_forward.7} parent=99 // loop_footer
                %s561 = sadd.s32 1, %s557
              $region106: #{gcp_interactions_forward.7} parent=99 // loop_footer_branch
                %556 = sbr.rel target = $region102
              $region107: #{gcp_interactions_forward.7} parent=99 // loop_exit
                _
            $region100: #{gcp_interactions_forward.7} parent=91 // pred_fallthru
              _
          $region92: #{gcp_interactions_forward.7} parent=87 // pred_fallthru
            _
          %588 = vnop
        $region88: #{gcp_interactions_forward.7} parent=79 // pred_fallthru
          _
        // Predicated region
        $region123: #{gcp_interactions_forward.7} parent=79 // pred_check
          %p589 = pneg %p97
        $region124: #{gcp_interactions_forward.7} parent=79 // pred_check_branch
          %591 = sbr.rel (%p589) target = $region126
        $region125: #{gcp_interactions_forward.7} parent=79 // pred_region
          %p592 = scmp.lt.s32.totalorder %s25, 1
          %s593 = scalar_select %p592, %s25, 1
          %s594 = smul.addr %s593, 8
          %s595 = scalar_lea.vmem %s2, %s594
        $region126: #{gcp_interactions_forward.7} parent=79 // pred_fallthru
          _
      $region80: #{gcp_interactions_forward.7} parent=5 // pred_fallthru
        _
      %p596 = scmp.le.s32.totalorder 1, %s25
      %p597 = scmp.lt.s32.totalorder %s25, 3
      %p598 = pnand %p596, %p597
      %p599 = pneg %p598
      // Predicated region
      $region127: #{gcp_interactions_forward.7} parent=5 // pred_check
        _
      $region128: #{gcp_interactions_forward.7} parent=5 // pred_check_branch
        %601 = sbr.rel (%p598) target = $region130
      $region129: #{gcp_interactions_forward.7} parent=5 // pred_region
        %s602 = ssub.s32 %s25, 1
        %s603 = sand.u32 %s64, 1
        %s604 = sand.u32 %s64, 1
        %s605 = smul.addr %s604, 24
        %s606 = scalar_lea.vmem [#allocation2], %s605
        // Predicated region
        $region131: #{gcp_interactions_forward.7} parent=129 // pred_check
          %p607 = pneg %p77
        $region132: #{gcp_interactions_forward.7} parent=129 // pred_check_branch
          %609 = sbr.rel (%p607) target = $region134
        $region133: #{gcp_interactions_forward.7} parent=129 // pred_region
          _
        $region134: #{gcp_interactions_forward.7} parent=129 // pred_fallthru
          _
        %p610 = scmp.lt.s32.totalorder %s30, 1
        %s611 = scalar_select %p610, %s30, 1
        %s612 = smul.addr %s611, 8
        %s613 = scalar_lea.vmem %s0, %s612
        %p614 = pneg %p51
        %p615 = pneg %p48
        %s616 = sand.u32 %s64, 1
        %s617 = sand.u32 %s64, 1
        %s618 = smul.addr %s617, 24
        %s619 = scalar_lea.vmem [#allocation2], %s618
        %p620 = pneg %p77
        %p621 = pneg %p74
        %p622 = scmp.lt.s32.totalorder %s30, 1
        %s623 = scalar_select %p622, %s30, 1
        %s624 = smul.addr %s623, 8
        %s625 = scalar_lea.vmem %s2, %s624
        %p626 = pneg %p103
        %p627 = pneg %p100
        %p628 = pneg %p124
        %p629 = pneg %p121
        %p630 = pneg %p145
        %p631 = pneg %p142
        %p632 = pneg %p166
        %p633 = pneg %p163
        %p634 = pneg %p187
        %p635 = pneg %p184
        %p636 = pneg %p208
        %p637 = pneg %p205
        %p638 = pneg %p229
        %p639 = pneg %p226
        %p640 = pneg %p250
        %p641 = pneg %p247
        %p642 = pneg %p271
        %p643 = pneg %p268
        %p644 = pneg %p292
        %p645 = pneg %p289
        %p646 = pneg %p313
        %p647 = pneg %p310
        %p648 = pneg %p334
        %p649 = pneg %p331
        %p650 = pneg %p355
        %p651 = pneg %p352
        %p652 = pneg %p376
        %p653 = pneg %p373
        %p654 = pneg %p397
        %p655 = pneg %p394
        %p656 = pneg %p418
        %p657 = pneg %p415
        %p658 = pneg %p439
        %p659 = pneg %p436
        %p660 = pneg %p465
        %p661 = pneg %p462
        %p662 = scmp.lt.s32.totalorder %s30, 1
        %s663 = scalar_select %p662, %s30, 1
        %s664 = smul.addr %s663, 8
        %s665 = scalar_lea.vmem %s19, %s664
        %p666 = scmp.lt.s32.totalorder %s30, 1
        %s667 = scalar_select %p666, %s30, 1
        %s668 = smul.addr %s667, 8
        %s669 = scalar_lea.vmem %s0, %s668
        %p670 = scmp.lt.s32.totalorder %s30, 1
        %s671 = scalar_select %p670, %s30, 1
        %s672 = smul.addr %s671, 8
        %s673 = scalar_lea.vmem %s2, %s672
        %p674 = scmp.lt.s32.totalorder %s30, 1
        %s675 = scalar_select %p674, %s30, 1
        %s676 = smul.addr %s675, 8
        %s677 = scalar_lea.vmem %s19, %s676
        %v678 = vld [vmem:[%s673] sm:$0xff]
        %v679 = vld [vmem:[%s669] sm:$0xff]
        %v680 = vadd.f32 %v679, %v678
        %v681 = vld [vmem:[%s606] sm:$0xff]
        %v682 = vld [vmem:[%s606 + $0x8] sm:$0xff]
        %v683 = vld [vmem:[%s606 + $0x10] sm:$0xff]
        %685 = vrot.lane.b32.xlu0 %v678, 120
        %v686 = vpop.permute.xlu0 %685
        %687 = vrot.lane.b32.xlu0 %v678, 112
        %v688 = vpop.permute.xlu0 %687
        %689 = vrot.lane.b32.xlu0 %v678, 96
        %v690 = vpop.permute.xlu0 %689
        %691 = vrot.lane.b32.xlu0 %v686, 96
        %v692 = vpop.permute.xlu0 %691
        %693 = vrot.lane.b32.xlu0 %v688, 96
        %v694 = vpop.permute.xlu0 %693
        %v698 = vadd.f32 %v681, %v690
        %v699 = vadd.f32 %v682, %v692
        %v700 = vadd.f32 %v683, %v694
        %v701 = vld [vmem:[%s3] sm:$0x1]
        %v702 = vld [vmem:[%s4] sm:$0x1]
        %vm703 = vcmask 261120
        %v704 = vsel %vm703, %v680, 0.0
        %705 = vadd.xlane.f32.xlu0 %v704
        %v706 = vpop.xlane.xlu0 %705
        %v707 = vrcp.pop 32.0
        %v708 = vmul.f32 32.0, %v707
        %v709 = vsub.f32 1.0, %v708
        %v710 = vmul.f32 %v707, %v709
        %v711 = vadd.f32 %v707, %v710
        %vm712 = vweird.f32 %v707
        %v713 = vsel %vm712, %v707, %v711
        %v714 = vmul.f32 %v706, %v713
        %v715 = vsub.f32 %v680, %v714
        %v716 = vmul.f32 %v715, %v715
        %v717 = vsel %vm703, %v716, 0.0
        %718 = vadd.xlane.f32.xlu0 %v717
        %v719 = vpop.xlane.xlu0 %718
        %v720 = vmul.f32 %v719, %v713
        %v721 = vadd.f32 %v720, 1e-05
        %v722 = vrsqrt.pop %v721
        %v723 = vmul.f32 %v722, %v721
        %v724 = vmul.f32 %v723, %v722
        %v725 = vmul.f32 0.5, %v724
        %v726 = vsub.f32 1.5, %v725
        %v727 = vmul.f32 %v722, %v726
        %vm728 = vweird.f32 %v721
        %vm729 = vweird.f32 %v722
        %vm730 = vmor %vm728, %vm729
        %v731 = vsel %vm730, %v722, %v727
        %v732 = vmul.f32 %v715, %v731
        %v734 = vperm.slane %v701, 0
        %v736 = vmul.f32 %v732, %v734
        %v738 = vperm.slane %v702, 0
        %v740 = vadd.f32 %v736, %v738
        %v741 = vmul.f32 %v698, %v698
        %v742 = vmul.f32 %v699, %v699
        %v743 = vadd.f32 %v741, %v742
        %v744 = vmul.f32 %v700, %v700
        %v745 = vadd.f32 %v743, %v744
        %vm746 = vcmask 64512
        %v747 = vsel %vm746, %v745, 0.0
        %748 = vadd.xlane.f32.xlu0 %v747
        %v749 = vpop.xlane.xlu0 %748
        %v750 = vrcp.pop 8.0
        %v751 = vmul.f32 8.0, %v750
        %v752 = vsub.f32 1.0, %v751
        %v753 = vmul.f32 %v750, %v752
        %v754 = vadd.f32 %v750, %v753
        %vm755 = vweird.f32 %v750
        %v756 = vsel %vm755, %v750, %v754
        %v757 = vmul.f32 %v749, %v756
        %v758 = vadd.f32 %v757, 1e-08
        %v759 = vrsqrt.pop %v758
        %v760 = vmul.f32 %v759, %v758
        %v761 = vmul.f32 %v760, %v759
        %v762 = vmul.f32 0.5, %v761
        %v763 = vsub.f32 1.5, %v762
        %v764 = vmul.f32 %v759, %v763
        %v765 = vmul.f32 %v758, %v764
        %vm766 = vcmp.eq.f32.partialorder %v758, inf
        %v767 = vsel %vm766, %v758, %v765
        %vm768 = vcmp.eq.f32.partialorder %v758, 0.0
        %v769 = vand.u32 %v758, 2147483648
        %v770 = vsel %vm768, %v769, %v767
        %v771 = vrcp.pop %v770
        %v772 = vmul.f32 %v770, %v771
        %v773 = vsub.f32 1.0, %v772
        %v774 = vmul.f32 %v771, %v773
        %v775 = vadd.f32 %v771, %v774
        %vm776 = vweird.f32 %v770
        %vm777 = vweird.f32 %v771
        %vm778 = vmor %vm776, %vm777
        %v779 = vsel %vm778, %v771, %v775
        %v780 = vand.u32 2147483647, %v770
        %vm781 = vcmp.eq.f32.partialorder %v780, 8.507059e+37
        %v782 = vand.u32 %v770, 2147483648
        %v783 = vor.u32 1.1754944e-38, %v782
        %v784 = vsel %vm781, %v783, %v779
        %v785 = vmul.f32 1.0, %v784
        %v786 = vmul.f32 %v698, %v785
        %v787 = vmul.f32 %v699, %v785
        %v788 = vmul.f32 %v700, %v785
        %v789 = vld [vmem:[%s5] sm:$0xff]
        %v790 = vld [vmem:[%s6] sm:$0xff]
        %v791 = vld [vmem:[%s6 + $0x8] sm:$0xff]
        %v792 = vld [vmem:[%s6 + $0x10] sm:$0xff]
        %v793 = vld [vmem:[%s6 + $0x18] sm:$0xff]
        %v794 = vld [vmem:[%s7] sm:$0xff]
        %v795 = vld [vmem:[%s7 + $0x8] sm:$0xff]
        %v796 = vld [vmem:[%s8] sm:$0x1]
        %v797 = vld [vmem:[%s9] sm:$0xff]
        %v798 = vld [vmem:[%s9 + $0x8] sm:$0xff]
        %v799 = vld [vmem:[%s10] sm:$0xff]
        %v800 = vld [vmem:[%s10 + $0x8] sm:$0xff]
        %v801 = vld [vmem:[%s10 + $0x10] sm:$0xff]
        %v802 = vld [vmem:[%s10 + $0x18] sm:$0xff]
        %v803 = vld [vmem:[%s10 + $0x20] sm:$0xff]
        %v804 = vld [vmem:[%s10 + $0x28] sm:$0xff]
        %v805 = vld [vmem:[%s10 + $0x30] sm:$0xff]
        %v806 = vld [vmem:[%s10 + $0x38] sm:$0xff]
        %v807 = vld [vmem:[%s10 + $0x40] sm:$0xff]
        %v808 = vld [vmem:[%s10 + $0x48] sm:$0xff]
        %v809 = vld [vmem:[%s10 + $0x50] sm:$0xff]
        %v810 = vld [vmem:[%s10 + $0x58] sm:$0xff]
        %v811 = vld [vmem:[%s10 + $0x60] sm:$0xff]
        %v812 = vld [vmem:[%s10 + $0x68] sm:$0xff]
        %v813 = vld [vmem:[%s10 + $0x70] sm:$0xff]
        %v814 = vld [vmem:[%s10 + $0x78] sm:$0xff]
        %v815 = vld [vmem:[%s11] sm:$0x1]
        %v816 = vld [vmem:[%s12] sm:$0xff]
        %v817 = vld [vmem:[%s12 + $0x8] sm:$0xff]
        %v818 = vld [vmem:[%s13] sm:$0xff]
        %v819 = vld [vmem:[%s13 + $0x8] sm:$0xff]
        %v820 = vld [vmem:[%s13 + $0x10] sm:$0xff]
        %v821 = vld [vmem:[%s13 + $0x18] sm:$0xff]
        %v822 = vld [vmem:[%s13 + $0x20] sm:$0xff]
        %v823 = vld [vmem:[%s13 + $0x28] sm:$0xff]
        %v824 = vld [vmem:[%s13 + $0x30] sm:$0xff]
        %v825 = vld [vmem:[%s13 + $0x38] sm:$0xff]
        %v826 = vld [vmem:[%s13 + $0x40] sm:$0xff]
        %v827 = vld [vmem:[%s13 + $0x48] sm:$0xff]
        %v828 = vld [vmem:[%s13 + $0x50] sm:$0xff]
        %v829 = vld [vmem:[%s13 + $0x58] sm:$0xff]
        %v830 = vld [vmem:[%s13 + $0x60] sm:$0xff]
        %v831 = vld [vmem:[%s13 + $0x68] sm:$0xff]
        %v832 = vld [vmem:[%s13 + $0x70] sm:$0xff]
        %v833 = vld [vmem:[%s13 + $0x78] sm:$0xff]
        %v834 = vld [vmem:[%s14] sm:$0xff]
        %v835 = vld [vmem:[%s14 + $0x8] sm:$0xff]
        %v836 = vld [vmem:[%s15] sm:$0x1]
        %v837 = vld [vmem:[%s16] sm:$0xff]
        %v838 = vld [vmem:[%s16 + $0x8] sm:$0xff]
        %v839 = vld [vmem:[%s17] sm:$0xff]
        %v840 = vld [vmem:[%s17 + $0x8] sm:$0xff]
        %v841 = vld [vmem:[%s17 + $0x10] sm:$0xff]
        %v842 = vld [vmem:[%s17 + $0x18] sm:$0xff]
        %v843 = vld [vmem:[%s18] sm:$0x1]
        %v845 = vsel %vm746, %v786, 0
        %v848 = vsel %vm746, %v787, 0
        %v851 = vsel %vm746, %v788, 0
        %853 = vmatpush.msra.mxu0 0.0
        %854 = vmatpush.msra.mxu0 0.0
        %855 = vmatpush.msra.mxu0 0.0
        %856 = vmatpush.msra.mxu0 0.0
        %857 = vmatpush.msra.mxu0 0.0
        %858 = vmatpush.msra.mxu0 0.0
        %859 = vmatpush.msra.mxu0 0.0
        %860 = vmatpush.msra.mxu0 0.0
        %861 = vmatpush.msra.mxu0 0.0
        %862 = vmatpush.msra.mxu0 0.0
        %863 = vmatpush.msra.mxu0 0.0
        %864 = vmatpush.msra.mxu0 0.0
        %865 = vmatpush.msra.mxu0 0.0
        %866 = vmatpush.msra.mxu0 0.0
        %867 = vmatpush.msra.mxu0 0.0
        %868 = vmatpush.msra.mxu0 %v789
        %869 = vmatmul.f32.gmra.mxu0 %v845
        %v870 = vpop.f32.mrf.mxu0
        %v871 = vadd.f32 0.0, %v870
        %872 = vmatmul.f32.gmra.mxu0 %v848
        %v873 = vpop.f32.mrf.mxu0
        %v874 = vadd.f32 0.0, %v873
        %875 = vmatmul.f32.gmra.mxu0 %v851
        %v876 = vpop.f32.mrf.mxu0
        %v877 = vadd.f32 0.0, %v876
        %878 = vdwg.mxu0
        %v879 = vmul.f32 %v871, %v871
        %v880 = vmul.f32 %v874, %v874
        %v881 = vadd.f32 %v879, %v880
        %v882 = vmul.f32 %v877, %v877
        %v883 = vadd.f32 %v881, %v882
        %v884 = vadd.f32 %v883, 1e-08
        %v885 = vrsqrt.pop %v884
        %v886 = vmul.f32 %v885, %v884
        %v887 = vmul.f32 %v886, %v885
        %v888 = vmul.f32 0.5, %v887
        %v889 = vsub.f32 1.5, %v888
        %v890 = vmul.f32 %v885, %v889
        %v891 = vmul.f32 %v884, %v890
        %vm892 = vcmp.eq.f32.partialorder %v884, inf
        %v893 = vsel %vm892, %v884, %v891
        %vm894 = vcmp.eq.f32.partialorder %v884, 0.0
        %v895 = vand.u32 %v884, 2147483648
        %v896 = vsel %vm894, %v895, %v893
        %vm897 = vcmask 130048
        %v899 = vsel %vm897, %v896, 0
        %901 = vmatpush.msra.mxu0 0.0
        %902 = vmatpush.msra.mxu0 0.0
        %903 = vmatpush.msra.mxu0 0.0
        %904 = vmatpush.msra.mxu0 0.0
        %905 = vmatpush.msra.mxu0 0.0
        %906 = vmatpush.msra.mxu0 0.0
        %907 = vmatpush.msra.mxu0 0.0
        %908 = vmatpush.msra.mxu0 0.0
        %909 = vmatpush.msra.mxu0 0.0
        %910 = vmatpush.msra.mxu0 0.0
        %911 = vmatpush.msra.mxu0 0.0
        %912 = vmatpush.msra.mxu0 0.0
        %913 = vmatpush.msra.mxu0 0.0
        %914 = vmatpush.msra.mxu0 0.0
        %915 = vmatpush.msra.mxu0 %v795
        %916 = vmatpush.msra.mxu0 %v794
        %917 = vmatmul.f32.gmra.mxu0 %v899
        %v918 = vpop.f32.mrf.mxu0
        %v919 = vadd.f32 0.0, %v918
        %920 = vdwg.mxu0
        %v922 = vsel %vm703, %v740, 0
        %924 = vmatpush.msra.mxu0 0.0
        %925 = vmatpush.msra.mxu0 0.0
        %926 = vmatpush.msra.mxu0 0.0
        %927 = vmatpush.msra.mxu0 0.0
        %928 = vmatpush.msra.mxu0 0.0
        %929 = vmatpush.msra.mxu0 0.0
        %930 = vmatpush.msra.mxu0 0.0
        %931 = vmatpush.msra.mxu0 0.0
        %932 = vmatpush.msra.mxu0 0.0
        %933 = vmatpush.msra.mxu0 0.0
        %934 = vmatpush.msra.mxu0 0.0
        %935 = vmatpush.msra.mxu0 0.0
        %936 = vmatpush.msra.mxu0 %v793
        %937 = vmatpush.msra.mxu0 %v792
        %938 = vmatpush.msra.mxu0 %v791
        %939 = vmatpush.msra.mxu0 %v790
        %940 = vmatmul.f32.gmra.mxu0 %v922
        %v941 = vpop.f32.mrf.mxu0
        %v942 = vadd.f32 %v919, %v941
        %943 = vdwg.mxu0
        %v945 = vperm.slane %v796, 0
        %v947 = vadd.f32 %v942, %v945
        %v948 = vxor.u32 %v947, 2147483648
        %v949 = vmul.f32 %v948, 1.442695
        %v950 = vpow.pop %v949
        %v951 = vadd.f32 %v950, 1.0
        %v952 = vrcp.pop %v951
        %v953 = vmul.f32 %v951, %v952
        %v954 = vsub.f32 1.0, %v953
        %v955 = vmul.f32 %v952, %v954
        %v956 = vadd.f32 %v952, %v955
        %vm957 = vweird.f32 %v951
        %vm958 = vweird.f32 %v952
        %vm959 = vmor %vm957, %vm958
        %v960 = vsel %vm959, %v952, %v956
        %v961 = vand.u32 2147483647, %v951
        %vm962 = vcmp.eq.f32.partialorder %v961, 8.507059e+37
        %v963 = vand.u32 %v951, 2147483648
        %v964 = vor.u32 1.1754944e-38, %v963
        %v965 = vsel %vm962, %v964, %v960
        %v966 = vmul.f32 1.0, %v965
        %v967 = vmul.f32 %v947, %v966
        %v969 = vperm.slane %v815, 0
        %971 = vmatpush.msra.mxu0 %v814
        %972 = vmatpush.msra.mxu0 %v813
        %973 = vmatpush.msra.mxu0 %v812
        %974 = vmatpush.msra.mxu0 %v811
        %975 = vmatpush.msra.mxu0 %v810
        %976 = vmatpush.msra.mxu0 %v809
        %977 = vmatpush.msra.mxu0 %v808
        %978 = vmatpush.msra.mxu0 %v807
        %979 = vmatpush.msra.mxu0 %v806
        %980 = vmatpush.msra.mxu0 %v805
        %981 = vmatpush.msra.mxu0 %v804
        %982 = vmatpush.msra.mxu0 %v803
        %983 = vmatpush.msra.mxu0 %v802
        %984 = vmatpush.msra.mxu0 %v801
        %985 = vmatpush.msra.mxu0 %v800
        %986 = vmatpush.msra.mxu0 %v799
        %987 = vmatmul.f32.gmra.mxu0 %v967
        %v988 = vpop.f32.mrf.mxu0
        %v989 = vadd.f32 %v969, %v988
        %990 = vdwg.mxu0
        %v991 = vxor.u32 %v989, 2147483648
        %v992 = vmul.f32 %v991, 1.442695
        %v993 = vpow.pop %v992
        %v994 = vadd.f32 %v993, 1.0
        %v995 = vrcp.pop %v994
        %v996 = vmul.f32 %v994, %v995
        %v997 = vsub.f32 1.0, %v996
        %v998 = vmul.f32 %v995, %v997
        %v999 = vadd.f32 %v995, %v998
        %vm1000 = vweird.f32 %v994
        %vm1001 = vweird.f32 %v995
        %vm1002 = vmor %vm1000, %vm1001
        %v1003 = vsel %vm1002, %v995, %v999
        %v1004 = vand.u32 2147483647, %v994
        %vm1005 = vcmp.eq.f32.partialorder %v1004, 8.507059e+37
        %v1006 = vand.u32 %v994, 2147483648
        %v1007 = vor.u32 1.1754944e-38, %v1006
        %v1008 = vsel %vm1005, %v1007, %v1003
        %v1009 = vmul.f32 1.0, %v1008
        %v1011 = vsel %vm897, %v871, 0
        %v1014 = vsel %vm897, %v874, 0
        %v1017 = vsel %vm897, %v877, 0
        %1019 = vmatpush.msra.mxu0 0.0
        %1020 = vmatpush.msra.mxu0 0.0
        %1021 = vmatpush.msra.mxu0 0.0
        %1022 = vmatpush.msra.mxu0 0.0
        %1023 = vmatpush.msra.mxu0 0.0
        %1024 = vmatpush.msra.mxu0 0.0
        %1025 = vmatpush.msra.mxu0 0.0
        %1026 = vmatpush.msra.mxu0 0.0
        %1027 = vmatpush.msra.mxu0 0.0
        %1028 = vmatpush.msra.mxu0 0.0
        %1029 = vmatpush.msra.mxu0 0.0
        %1030 = vmatpush.msra.mxu0 0.0
        %1031 = vmatpush.msra.mxu0 0.0
        %1032 = vmatpush.msra.mxu0 0.0
        %1033 = vmatpush.msra.mxu0 %v798
        %1034 = vmatpush.msra.mxu0 %v797
        %1035 = vmatmul.f32.gmra.mxu0 %v1011
        %v1036 = vpop.f32.mrf.mxu0
        %v1037 = vadd.f32 0.0, %v1036
        %1038 = vmatmul.f32.gmra.mxu0 %v1014
        %v1039 = vpop.f32.mrf.mxu0
        %v1040 = vadd.f32 0.0, %v1039
        %1041 = vmatmul.f32.gmra.mxu0 %v1017
        %v1042 = vpop.f32.mrf.mxu0
        %v1043 = vadd.f32 0.0, %v1042
        %1044 = vdwg.mxu0
        %v1045 = vmul.f32 %v1037, %v1009
        %v1046 = vmul.f32 %v1040, %v1009
        %v1047 = vmul.f32 %v1043, %v1009
        %v1049 = vsel %vm897, %v1045, 0
        %v1052 = vsel %vm897, %v1046, 0
        %v1055 = vsel %vm897, %v1047, 0
        %1057 = vmatpush.msra.mxu0 0.0
        %1058 = vmatpush.msra.mxu0 0.0
        %1059 = vmatpush.msra.mxu0 0.0
        %1060 = vmatpush.msra.mxu0 0.0
        %1061 = vmatpush.msra.mxu0 0.0
        %1062 = vmatpush.msra.mxu0 0.0
        %1063 = vmatpush.msra.mxu0 0.0
        %1064 = vmatpush.msra.mxu0 0.0
        %1065 = vmatpush.msra.mxu0 0.0
        %1066 = vmatpush.msra.mxu0 0.0
        %1067 = vmatpush.msra.mxu0 0.0
        %1068 = vmatpush.msra.mxu0 0.0
        %1069 = vmatpush.msra.mxu0 0.0
        %1070 = vmatpush.msra.mxu0 0.0
        %1071 = vmatpush.msra.mxu0 %v817
        %1072 = vmatpush.msra.mxu0 %v816
        %1073 = vmatmul.f32.gmra.mxu0 %v1049
        %v1074 = vpop.f32.mrf.mxu0
        %v1075 = vadd.f32 0.0, %v1074
        %1076 = vmatmul.f32.gmra.mxu0 %v1052
        %v1077 = vpop.f32.mrf.mxu0
        %v1078 = vadd.f32 0.0, %v1077
        %1079 = vmatmul.f32.gmra.mxu0 %v1055
        %v1080 = vpop.f32.mrf.mxu0
        %v1081 = vadd.f32 0.0, %v1080
        %1082 = vdwg.mxu0
        %v1083 = vmul.f32 %v1075, %v1075
        %v1084 = vmul.f32 %v1078, %v1078
        %v1085 = vadd.f32 %v1083, %v1084
        %v1086 = vmul.f32 %v1081, %v1081
        %v1087 = vadd.f32 %v1085, %v1086
        %v1088 = vadd.f32 %v1087, 1e-08
        %v1089 = vrsqrt.pop %v1088
        %v1090 = vmul.f32 %v1089, %v1088
        %v1091 = vmul.f32 %v1090, %v1089
        %v1092 = vmul.f32 0.5, %v1091
        %v1093 = vsub.f32 1.5, %v1092
        %v1094 = vmul.f32 %v1089, %v1093
        %v1095 = vmul.f32 %v1088, %v1094
        %vm1096 = vcmp.eq.f32.partialorder %v1088, inf
        %v1097 = vsel %vm1096, %v1088, %v1095
        %vm1098 = vcmp.eq.f32.partialorder %v1088, 0.0
        %v1099 = vand.u32 %v1088, 2147483648
        %v1100 = vsel %vm1098, %v1099, %v1097
        %v1102 = vsel %vm897, %v1100, 0
        %1104 = vmatpush.msra.mxu0 0.0
        %1105 = vmatpush.msra.mxu0 0.0
        %1106 = vmatpush.msra.mxu0 0.0
        %1107 = vmatpush.msra.mxu0 0.0
        %1108 = vmatpush.msra.mxu0 0.0
        %1109 = vmatpush.msra.mxu0 0.0
        %1110 = vmatpush.msra.mxu0 0.0
        %1111 = vmatpush.msra.mxu0 0.0
        %1112 = vmatpush.msra.mxu0 0.0
        %1113 = vmatpush.msra.mxu0 0.0
        %1114 = vmatpush.msra.mxu0 0.0
        %1115 = vmatpush.msra.mxu0 0.0
        %1116 = vmatpush.msra.mxu0 0.0
        %1117 = vmatpush.msra.mxu0 0.0
        %1118 = vmatpush.msra.mxu0 %v835
        %1119 = vmatpush.msra.mxu0 %v834
        %1120 = vmatmul.f32.gmra.mxu0 %v1102
        %v1121 = vpop.f32.mrf.mxu0
        %v1122 = vadd.f32 0.0, %v1121
        %1123 = vdwg.mxu0
        %1124 = vmatpush.msra.mxu0 %v833
        %1125 = vmatpush.msra.mxu0 %v832
        %1126 = vmatpush.msra.mxu0 %v831
        %1127 = vmatpush.msra.mxu0 %v830
        %1128 = vmatpush.msra.mxu0 %v829
        %1129 = vmatpush.msra.mxu0 %v828
        %1130 = vmatpush.msra.mxu0 %v827
        %1131 = vmatpush.msra.mxu0 %v826
        %1132 = vmatpush.msra.mxu0 %v825
        %1133 = vmatpush.msra.mxu0 %v824
        %1134 = vmatpush.msra.mxu0 %v823
        %1135 = vmatpush.msra.mxu0 %v822
        %1136 = vmatpush.msra.mxu0 %v821
        %1137 = vmatpush.msra.mxu0 %v820
        %1138 = vmatpush.msra.mxu0 %v819
        %1139 = vmatpush.msra.mxu0 %v818
        %1140 = vmatmul.f32.gmra.mxu0 %v967
        %v1141 = vpop.f32.mrf.mxu0
        %v1142 = vadd.f32 %v1122, %v1141
        %1143 = vdwg.mxu0
        %v1145 = vperm.slane %v836, 0
        %v1147 = vadd.f32 %v1142, %v1145
        %v1149 = vperm.slane %v843, 0
        %v1152 = vsel %vm703, %v1147, 0
        %1154 = vmatpush.msra.mxu0 0.0
        %1155 = vmatpush.msra.mxu0 0.0
        %1156 = vmatpush.msra.mxu0 0.0
        %1157 = vmatpush.msra.mxu0 0.0
        %1158 = vmatpush.msra.mxu0 0.0
        %1159 = vmatpush.msra.mxu0 0.0
        %1160 = vmatpush.msra.mxu0 0.0
        %1161 = vmatpush.msra.mxu0 0.0
        %1162 = vmatpush.msra.mxu0 0.0
        %1163 = vmatpush.msra.mxu0 0.0
        %1164 = vmatpush.msra.mxu0 0.0
        %1165 = vmatpush.msra.mxu0 0.0
        %1166 = vmatpush.msra.mxu0 %v842
        %1167 = vmatpush.msra.mxu0 %v841
        %1168 = vmatpush.msra.mxu0 %v840
        %1169 = vmatpush.msra.mxu0 %v839
        %1170 = vmatmul.f32.gmra.mxu0 %v1152
        %v1171 = vpop.f32.mrf.mxu0
        %v1172 = vadd.f32 %v1149, %v1171
        %1173 = vdwg.mxu0
        %v1174 = vxor.u32 %v1172, 2147483648
        %v1175 = vmul.f32 %v1174, 1.442695
        %v1176 = vpow.pop %v1175
        %v1177 = vadd.f32 %v1176, 1.0
        %v1178 = vrcp.pop %v1177
        %v1179 = vmul.f32 %v1177, %v1178
        %v1180 = vsub.f32 1.0, %v1179
        %v1181 = vmul.f32 %v1178, %v1180
        %v1182 = vadd.f32 %v1178, %v1181
        %vm1183 = vweird.f32 %v1177
        %vm1184 = vweird.f32 %v1178
        %vm1185 = vmor %vm1183, %vm1184
        %v1186 = vsel %vm1185, %v1178, %v1182
        %v1187 = vand.u32 2147483647, %v1177
        %vm1188 = vcmp.eq.f32.partialorder %v1187, 8.507059e+37
        %v1189 = vand.u32 %v1177, 2147483648
        %v1190 = vor.u32 1.1754944e-38, %v1189
        %v1191 = vsel %vm1188, %v1190, %v1186
        %v1192 = vmul.f32 1.0, %v1191
        %v1194 = vsel %vm897, %v1075, 0
        %v1197 = vsel %vm897, %v1078, 0
        %v1200 = vsel %vm897, %v1081, 0
        %1202 = vmatpush.msra.mxu0 0.0
        %1203 = vmatpush.msra.mxu0 0.0
        %1204 = vmatpush.msra.mxu0 0.0
        %1205 = vmatpush.msra.mxu0 0.0
        %1206 = vmatpush.msra.mxu0 0.0
        %1207 = vmatpush.msra.mxu0 0.0
        %1208 = vmatpush.msra.mxu0 0.0
        %1209 = vmatpush.msra.mxu0 0.0
        %1210 = vmatpush.msra.mxu0 0.0
        %1211 = vmatpush.msra.mxu0 0.0
        %1212 = vmatpush.msra.mxu0 0.0
        %1213 = vmatpush.msra.mxu0 0.0
        %1214 = vmatpush.msra.mxu0 0.0
        %1215 = vmatpush.msra.mxu0 0.0
        %1216 = vmatpush.msra.mxu0 %v838
        %1217 = vmatpush.msra.mxu0 %v837
        %1218 = vmatmul.f32.gmra.mxu0 %v1194
        %v1219 = vpop.f32.mrf.mxu0
        %v1220 = vadd.f32 0.0, %v1219
        %1221 = vmatmul.f32.gmra.mxu0 %v1197
        %v1222 = vpop.f32.mrf.mxu0
        %v1223 = vadd.f32 0.0, %v1222
        %1224 = vmatmul.f32.gmra.mxu0 %v1200
        %v1225 = vpop.f32.mrf.mxu0
        %v1226 = vadd.f32 0.0, %v1225
        %1227 = vdwg.mxu0
        %v1228 = vmul.f32 %v1220, %v1192
        %v1229 = vmul.f32 %v1223, %v1192
        %v1230 = vmul.f32 %v1226, %v1192
        %v1231 = vadd.f32 %v740, %v1147
        %v1232 = vadd.f32 %v786, %v1228
        %v1233 = vadd.f32 %v787, %v1229
        %v1234 = vadd.f32 %v788, %v1230
        %1236 = vrot.lane.b32.xlu0 %v1232, 32
        %v1237 = vpop.permute.xlu0 %1236
        %1240 = vrot.lane.b32.xlu0 %v1233, 40
        %v1241 = vpop.permute.xlu0 %1240
        %1244 = vrot.lane.b32.xlu0 %v1234, 48
        %v1245 = vpop.permute.xlu0 %1244
        %v1247 = vsel %vm703, %v1231, %v1237
        %vm1248 = vcmask 326656
        %v1249 = vsel %vm1248, %v1247, %v1241
        %vm1250 = vcmask 392192
        %v1251 = vsel %vm1250, %v1249, %v1245
        %vm1252 = vcmask 457728
        %1253 = vst.msk [vmem:[%s677] sm:$0xff] %vm1252, %v1251
        %p1254 = scmp.lt.s32.totalorder %s30, 1
        %s1255 = scalar_select %p1254, %s30, 1
        %s1256 = smul.addr %s1255, 8
        %s1257 = scalar_lea.vmem %s19, %s1256
        // Predicated region
        $region135: #{gcp_interactions_forward.7} parent=129 // pred_check
          %p1258 = pneg %p462
        $region136: #{gcp_interactions_forward.7} parent=129 // pred_check_branch
          %1260 = sbr.rel (%p1258) target = $region138
        $region137: #{gcp_interactions_forward.7} parent=129 // pred_region
          _
        $region138: #{gcp_interactions_forward.7} parent=129 // pred_fallthru
          _
      $region130: #{gcp_interactions_forward.7} parent=5 // pred_fallthru
        _
      %p1261 = scmp.le.s32.totalorder 2, %s25
      // Predicated region
      $region139: #{gcp_interactions_forward.7} parent=5 // pred_check
        %p1262 = pneg %p1261
      $region140: #{gcp_interactions_forward.7} parent=5 // pred_check_branch
        %1264 = sbr.rel (%p1262) target = $region142
      $region141: #{gcp_interactions_forward.7} parent=5 // pred_region
        %s1265 = ssub.s32 %s25, 2
        // Predicated region
        $region143: #{gcp_interactions_forward.7} parent=141 // pred_check
          %p1266 = pneg %p468
        $region144: #{gcp_interactions_forward.7} parent=141 // pred_check_branch
          %1268 = sbr.rel (%p1266) target = $region146
        $region145: #{gcp_interactions_forward.7} parent=141 // pred_region
          %p1269 = scmp.lt.s32.totalorder %s31, 1
          %s1270 = scalar_select %p1269, %s31, 1
          %s1271 = smul.addr %s1270, 8
          %s1272 = scalar_lea.vmem %s19, %s1271
        $region146: #{gcp_interactions_forward.7} parent=141 // pred_fallthru
          _
      $region142: #{gcp_interactions_forward.7} parent=5 // pred_fallthru
        _
    $region6: #{gcp_interactions_forward.7} parent=1 // loop_footer
      %s29 = sadd.s32 1, %s25
    $region7: #{gcp_interactions_forward.7} parent=1 // loop_footer_branch
      %24 = sbr.rel target = $region3
    $region8: #{gcp_interactions_forward.7} parent=1 // loop_exit
      _

// kernel: gcp_interactions_forward.5
$region0: #{gcp_interactions_forward.5}
  #allocation0 [shape = 'u32[]', space=smem, size = 0x4, offset = 0x4, fixed_abs, tag = 'smem constant byte address 0x4 - core index']
  #allocation1 [shape = 'u32[72,128]{1,0:T(1,128)}', space=vmem, size = 0x9000, scoped, tag = 'internal scratch']
  %s0 = inlined_call_operand.vmem [shape: f32[128,80], index: 0, kind: input, shape index: {}]
  %s1 = inlined_call_operand.vmem [shape: f32[3,128,20], index: 1, kind: input, shape index: {}]
  %s2 = inlined_call_operand.vmem [shape: f32[20,20], index: 2, kind: input, shape index: {}]
  %s3 = inlined_call_operand.vmem [shape: f32[80,32], index: 3, kind: input, shape index: {}]
  %s4 = inlined_call_operand.vmem [shape: f32[20,32], index: 4, kind: input, shape index: {}]
  %s5 = inlined_call_operand.vmem [shape: f32[1,32], index: 5, kind: input, shape index: {}]
  %s6 = inlined_call_operand.vmem [shape: f32[20,8], index: 6, kind: input, shape index: {}]
  %s7 = inlined_call_operand.vmem [shape: f32[32,8], index: 7, kind: input, shape index: {}]
  %s8 = inlined_call_operand.vmem [shape: f32[1,8], index: 8, kind: input, shape index: {}]
  %s9 = inlined_call_operand.vmem [shape: f32[8,8], index: 9, kind: input, shape index: {}]
  %s10 = inlined_call_operand.vmem [shape: f32[32,32], index: 10, kind: input, shape index: {}]
  %s11 = inlined_call_operand.vmem [shape: f32[8,32], index: 11, kind: input, shape index: {}]
  %s12 = inlined_call_operand.vmem [shape: f32[1,32], index: 12, kind: input, shape index: {}]
  %s13 = inlined_call_operand.vmem [shape: f32[8,8], index: 13, kind: input, shape index: {}]
  %s14 = inlined_call_operand.vmem [shape: f32[32,8], index: 14, kind: input, shape index: {}]
  %s15 = inlined_call_operand.vmem [shape: f32[1,8], index: 15, kind: input, shape index: {}]
  %s16 = inlined_call_operand.vmem [shape: f32[128,56], index: 16, kind: output, shape index: {}]
  %s17 = sld [smem:[#allocation0]]
  $region74: #{gcp_interactions_forward.5} parent=0
    _
  %s19 = ssub.s32 1, %s17
  %s20 = scalar_select 0, %s19, %s17
  // Predicated region
  $region2: #{gcp_interactions_forward.5} parent=0 // pred_check
    _
  $region3: #{gcp_interactions_forward.5} parent=0 // pred_check_branch
    %22 = sbr.rel (0) target = $region5
  $region4: #{gcp_interactions_forward.5} parent=0 // pred_region
    _
  $region5: #{gcp_interactions_forward.5} parent=0 // pred_fallthru
    _
  // Predicated region
  $region6: #{gcp_interactions_forward.5} parent=0 // pred_check
    _
  $region7: #{gcp_interactions_forward.5} parent=0 // pred_check_branch
    %24 = sbr.rel (0) target = $region9
  $region8: #{gcp_interactions_forward.5} parent=0 // pred_region
    _
  $region9: #{gcp_interactions_forward.5} parent=0 // pred_fallthru
    _
  // Predicated region
  $region10: #{gcp_interactions_forward.5} parent=0 // pred_check
    _
  $region11: #{gcp_interactions_forward.5} parent=0 // pred_check_branch
    %26 = sbr.rel (0) target = $region13
  $region12: #{gcp_interactions_forward.5} parent=0 // pred_region
    _
  $region13: #{gcp_interactions_forward.5} parent=0 // pred_fallthru
    _
  // Predicated region
  $region14: #{gcp_interactions_forward.5} parent=0 // pred_check
    _
  $region15: #{gcp_interactions_forward.5} parent=0 // pred_check_branch
    %28 = sbr.rel (0) target = $region17
  $region16: #{gcp_interactions_forward.5} parent=0 // pred_region
    _
  $region17: #{gcp_interactions_forward.5} parent=0 // pred_fallthru
    _
  // Predicated region
  $region18: #{gcp_interactions_forward.5} parent=0 // pred_check
    _
  $region19: #{gcp_interactions_forward.5} parent=0 // pred_check_branch
    %30 = sbr.rel (0) target = $region21
  $region20: #{gcp_interactions_forward.5} parent=0 // pred_region
    _
  $region21: #{gcp_interactions_forward.5} parent=0 // pred_fallthru
    _
  // Predicated region
  $region22: #{gcp_interactions_forward.5} parent=0 // pred_check
    _
  $region23: #{gcp_interactions_forward.5} parent=0 // pred_check_branch
    %32 = sbr.rel (0) target = $region25
  $region24: #{gcp_interactions_forward.5} parent=0 // pred_region
    _
  $region25: #{gcp_interactions_forward.5} parent=0 // pred_fallthru
    _
  // Predicated region
  $region26: #{gcp_interactions_forward.5} parent=0 // pred_check
    _
  $region27: #{gcp_interactions_forward.5} parent=0 // pred_check_branch
    %34 = sbr.rel (0) target = $region29
  $region28: #{gcp_interactions_forward.5} parent=0 // pred_region
    _
  $region29: #{gcp_interactions_forward.5} parent=0 // pred_fallthru
    _
  // Predicated region
  $region30: #{gcp_interactions_forward.5} parent=0 // pred_check
    _
  $region31: #{gcp_interactions_forward.5} parent=0 // pred_check_branch
    %36 = sbr.rel (0) target = $region33
  $region32: #{gcp_interactions_forward.5} parent=0 // pred_region
    _
  $region33: #{gcp_interactions_forward.5} parent=0 // pred_fallthru
    _
  // Predicated region
  $region34: #{gcp_interactions_forward.5} parent=0 // pred_check
    _
  $region35: #{gcp_interactions_forward.5} parent=0 // pred_check_branch
    %38 = sbr.rel (0) target = $region37
  $region36: #{gcp_interactions_forward.5} parent=0 // pred_region
    _
  $region37: #{gcp_interactions_forward.5} parent=0 // pred_fallthru
    _
  // Predicated region
  $region38: #{gcp_interactions_forward.5} parent=0 // pred_check
    _
  $region39: #{gcp_interactions_forward.5} parent=0 // pred_check_branch
    %40 = sbr.rel (0) target = $region41
  $region40: #{gcp_interactions_forward.5} parent=0 // pred_region
    _
  $region41: #{gcp_interactions_forward.5} parent=0 // pred_fallthru
    _
  // Predicated region
  $region42: #{gcp_interactions_forward.5} parent=0 // pred_check
    _
  $region43: #{gcp_interactions_forward.5} parent=0 // pred_check_branch
    %42 = sbr.rel (0) target = $region45
  $region44: #{gcp_interactions_forward.5} parent=0 // pred_region
    _
  $region45: #{gcp_interactions_forward.5} parent=0 // pred_fallthru
    _
  // Predicated region
  $region46: #{gcp_interactions_forward.5} parent=0 // pred_check
    _
  $region47: #{gcp_interactions_forward.5} parent=0 // pred_check_branch
    %44 = sbr.rel (0) target = $region49
  $region48: #{gcp_interactions_forward.5} parent=0 // pred_region
    _
  $region49: #{gcp_interactions_forward.5} parent=0 // pred_fallthru
    _
  // Predicated region
  $region50: #{gcp_interactions_forward.5} parent=0 // pred_check
    _
  $region51: #{gcp_interactions_forward.5} parent=0 // pred_check_branch
    %46 = sbr.rel (0) target = $region53
  $region52: #{gcp_interactions_forward.5} parent=0 // pred_region
    _
  $region53: #{gcp_interactions_forward.5} parent=0 // pred_fallthru
    _
  // Predicated region
  $region54: #{gcp_interactions_forward.5} parent=0 // pred_check
    _
  $region55: #{gcp_interactions_forward.5} parent=0 // pred_check_branch
    %48 = sbr.rel (0) target = $region57
  $region56: #{gcp_interactions_forward.5} parent=0 // pred_region
    _
  $region57: #{gcp_interactions_forward.5} parent=0 // pred_fallthru
    _
  // Predicated region
  $region58: #{gcp_interactions_forward.5} parent=0 // pred_check
    _
  $region59: #{gcp_interactions_forward.5} parent=0 // pred_check_branch
    %50 = sbr.rel (0) target = $region61
  $region60: #{gcp_interactions_forward.5} parent=0 // pred_region
    _
  $region61: #{gcp_interactions_forward.5} parent=0 // pred_fallthru
    _
  // Predicated region
  $region62: #{gcp_interactions_forward.5} parent=0 // pred_check
    _
  $region63: #{gcp_interactions_forward.5} parent=0 // pred_check_branch
    %52 = sbr.rel (0) target = $region65
  $region64: #{gcp_interactions_forward.5} parent=0 // pred_region
    _
  $region65: #{gcp_interactions_forward.5} parent=0 // pred_fallthru
    _
  %v53 = vld [vmem:[%s2] sm:$0xff]
  %v54 = vld [vmem:[%s2 + $0x8] sm:$0xff]
  %v55 = vld [vmem:[%s2 + $0x10] sm:$0xf]
  %v56 = vld [vmem:[%s3] sm:$0xff]
  %v57 = vld [vmem:[%s3 + $0x8] sm:$0xff]
  %v58 = vld [vmem:[%s3 + $0x10] sm:$0xff]
  %v59 = vld [vmem:[%s3 + $0x18] sm:$0xff]
  %v60 = vld [vmem:[%s3 + $0x20] sm:$0xff]
  %v61 = vld [vmem:[%s3 + $0x28] sm:$0xff]
  %v62 = vld [vmem:[%s3 + $0x30] sm:$0xff]
  %v63 = vld [vmem:[%s3 + $0x38] sm:$0xff]
  %v64 = vld [vmem:[%s3 + $0x40] sm:$0xff]
  %v65 = vld [vmem:[%s3 + $0x48] sm:$0xff]
  %v66 = vld [vmem:[%s4] sm:$0xff]
  %v67 = vld [vmem:[%s4 + $0x8] sm:$0xff]
  %v68 = vld [vmem:[%s4 + $0x10] sm:$0xf]
  %v69 = vld [vmem:[%s5] sm:$0x1]
  %v70 = vld [vmem:[%s6] sm:$0xff]
  %v71 = vld [vmem:[%s6 + $0x8] sm:$0xff]
  %v72 = vld [vmem:[%s6 + $0x10] sm:$0xf]
  %v73 = vld [vmem:[%s7] sm:$0xff]
  %v74 = vld [vmem:[%s7 + $0x8] sm:$0xff]
  %v75 = vld [vmem:[%s7 + $0x10] sm:$0xff]
  %v76 = vld [vmem:[%s7 + $0x18] sm:$0xff]
  %v77 = vld [vmem:[%s8] sm:$0x1]
  %v78 = vld [vmem:[%s9] sm:$0xff]
  %v79 = vld [vmem:[%s10] sm:$0xff]
  %v80 = vld [vmem:[%s10 + $0x8] sm:$0xff]
  %v81 = vld [vmem:[%s10 + $0x10] sm:$0xff]
  %v82 = vld [vmem:[%s10 + $0x18] sm:$0xff]
  %v83 = vld [vmem:[%s11] sm:$0xff]
  %v84 = vld [vmem:[%s12] sm:$0x1]
  %v85 = vld [vmem:[%s13] sm:$0xff]
  %v86 = vld [vmem:[%s14] sm:$0xff]
  %v87 = vld [vmem:[%s14 + $0x8] sm:$0xff]
  %v88 = vld [vmem:[%s14 + $0x10] sm:$0xff]
  %v89 = vld [vmem:[%s14 + $0x18] sm:$0xff]
  %v90 = vld [vmem:[%s15] sm:$0x1]
  %v91 = vld [vmem:[%s0] sm:$0xff]
  %v92 = vld [vmem:[%s0 + $0x8] sm:$0xff]
  %v93 = vld [vmem:[%s0 + $0x10] sm:$0xff]
  %v94 = vld [vmem:[%s0 + $0x18] sm:$0xff]
  %v95 = vld [vmem:[%s0 + $0x20] sm:$0xff]
  %v96 = vld [vmem:[%s0 + $0x28] sm:$0xff]
  %v97 = vld [vmem:[%s0 + $0x30] sm:$0xff]
  %v98 = vld [vmem:[%s0 + $0x38] sm:$0xff]
  %v99 = vld [vmem:[%s0 + $0x40] sm:$0xff]
  %v100 = vld [vmem:[%s0 + $0x48] sm:$0xff]
  %v101 = vld [vmem:[%s0 + $0x50] sm:$0xff]
  %v102 = vld [vmem:[%s0 + $0x58] sm:$0xff]
  %v103 = vld [vmem:[%s0 + $0x60] sm:$0xff]
  %v104 = vld [vmem:[%s0 + $0x68] sm:$0xff]
  %v105 = vld [vmem:[%s0 + $0x70] sm:$0xff]
  %v106 = vld [vmem:[%s0 + $0x78] sm:$0xff]
  %v107 = vld [vmem:[%s1] sm:$0xff]
  %v108 = vld [vmem:[%s1 + $0x8] sm:$0xff]
  %v109 = vld [vmem:[%s1 + $0x10] sm:$0xff]
  %v110 = vld [vmem:[%s1 + $0x18] sm:$0xff]
  %v111 = vld [vmem:[%s1 + $0x20] sm:$0xff]
  %v112 = vld [vmem:[%s1 + $0x28] sm:$0xff]
  %v113 = vld [vmem:[%s1 + $0x30] sm:$0xff]
  %v114 = vld [vmem:[%s1 + $0x38] sm:$0xff]
  %v115 = vld [vmem:[%s1 + $0x40] sm:$0xff]
  %v116 = vld [vmem:[%s1 + $0x48] sm:$0xff]
  %v117 = vld [vmem:[%s1 + $0x50] sm:$0xff]
  %v118 = vld [vmem:[%s1 + $0x58] sm:$0xff]
  %v119 = vld [vmem:[%s1 + $0x60] sm:$0xff]
  %v120 = vld [vmem:[%s1 + $0x68] sm:$0xff]
  %v121 = vld [vmem:[%s1 + $0x70] sm:$0xff]
  %v122 = vld [vmem:[%s1 + $0x78] sm:$0xff]
  %v123 = vld [vmem:[%s1 + $0x80] sm:$0xff]
  %v124 = vld [vmem:[%s1 + $0x88] sm:$0xff]
  %v125 = vld [vmem:[%s1 + $0x90] sm:$0xff]
  %v126 = vld [vmem:[%s1 + $0x98] sm:$0xff]
  %v127 = vld [vmem:[%s1 + $0xa0] sm:$0xff]
  %v128 = vld [vmem:[%s1 + $0xa8] sm:$0xff]
  %v129 = vld [vmem:[%s1 + $0xb0] sm:$0xff]
  %v130 = vld [vmem:[%s1 + $0xb8] sm:$0xff]
  %v131 = vld [vmem:[%s1 + $0xc0] sm:$0xff]
  %v132 = vld [vmem:[%s1 + $0xc8] sm:$0xff]
  %v133 = vld [vmem:[%s1 + $0xd0] sm:$0xff]
  %v134 = vld [vmem:[%s1 + $0xd8] sm:$0xff]
  %v135 = vld [vmem:[%s1 + $0xe0] sm:$0xff]
  %v136 = vld [vmem:[%s1 + $0xe8] sm:$0xff]
  %v137 = vld [vmem:[%s1 + $0xf0] sm:$0xff]
  %v138 = vld [vmem:[%s1 + $0xf8] sm:$0xff]
  %v139 = vld [vmem:[%s1 + $0x100] sm:$0xff]
  %v140 = vld [vmem:[%s1 + $0x108] sm:$0xff]
  %v141 = vld [vmem:[%s1 + $0x110] sm:$0xff]
  %v142 = vld [vmem:[%s1 + $0x118] sm:$0xff]
  %v143 = vld [vmem:[%s1 + $0x120] sm:$0xff]
  %v144 = vld [vmem:[%s1 + $0x128] sm:$0xff]
  %v145 = vld [vmem:[%s1 + $0x130] sm:$0xff]
  %v146 = vld [vmem:[%s1 + $0x138] sm:$0xff]
  %v147 = vld [vmem:[%s1 + $0x140] sm:$0xff]
  %v148 = vld [vmem:[%s1 + $0x148] sm:$0xff]
  %v149 = vld [vmem:[%s1 + $0x150] sm:$0xff]
  %v150 = vld [vmem:[%s1 + $0x158] sm:$0xff]
  %v151 = vld [vmem:[%s1 + $0x160] sm:$0xff]
  %v152 = vld [vmem:[%s1 + $0x168] sm:$0xff]
  %v153 = vld [vmem:[%s1 + $0x170] sm:$0xff]
  %v154 = vld [vmem:[%s1 + $0x178] sm:$0xff]
  %vm155 = vcmask 162816
  %v157 = vsel %vm155, %v107, 0
  %v160 = vsel %vm155, %v108, 0
  %v163 = vsel %vm155, %v109, 0
  %v166 = vsel %vm155, %v110, 0
  %v169 = vsel %vm155, %v111, 0
  %v172 = vsel %vm155, %v112, 0
  %v175 = vsel %vm155, %v113, 0
  %v178 = vsel %vm155, %v114, 0
  %v181 = vsel %vm155, %v115, 0
  %v184 = vsel %vm155, %v116, 0
  %v187 = vsel %vm155, %v117, 0
  %v190 = vsel %vm155, %v118, 0
  %v193 = vsel %vm155, %v119, 0
  %v196 = vsel %vm155, %v120, 0
  %v199 = vsel %vm155, %v121, 0
  %v202 = vsel %vm155, %v122, 0
  %v205 = vsel %vm155, %v123, 0
  %v208 = vsel %vm155, %v124, 0
  %v211 = vsel %vm155, %v125, 0
  %v214 = vsel %vm155, %v126, 0
  %v217 = vsel %vm155, %v127, 0
  %v220 = vsel %vm155, %v128, 0
  %v223 = vsel %vm155, %v129, 0
  %v226 = vsel %vm155, %v130, 0
  %v229 = vsel %vm155, %v131, 0
  %v232 = vsel %vm155, %v132, 0
  %v235 = vsel %vm155, %v133, 0
  %v238 = vsel %vm155, %v134, 0
  %v241 = vsel %vm155, %v135, 0
  %v244 = vsel %vm155, %v136, 0
  %v247 = vsel %vm155, %v137, 0
  %v250 = vsel %vm155, %v138, 0
  %v253 = vsel %vm155, %v139, 0
  %v256 = vsel %vm155, %v140, 0
  %v259 = vsel %vm155, %v141, 0
  %v262 = vsel %vm155, %v142, 0
  %v265 = vsel %vm155, %v143, 0
  %v268 = vsel %vm155, %v144, 0
  %v271 = vsel %vm155, %v145, 0
  %v274 = vsel %vm155, %v146, 0
  %v277 = vsel %vm155, %v147, 0
  %v280 = vsel %vm155, %v148, 0
  %v283 = vsel %vm155, %v149, 0
  %v286 = vsel %vm155, %v150, 0
  %v289 = vsel %vm155, %v151, 0
  %v292 = vsel %vm155, %v152, 0
  %v295 = vsel %vm155, %v153, 0
  %v298 = vsel %vm155, %v154, 0
  %vm300 = vcmask 1043456
  %v302 = vsel %vm300, %v55, 0
  %304 = vmatpush.msra.mxu0 0.0
  %305 = vmatpush.msra.mxu0 0.0
  %306 = vmatpush.msra.mxu0 0.0
  %307 = vmatpush.msra.mxu0 0.0
  %308 = vmatpush.msra.mxu0 0.0
  %309 = vmatpush.msra.mxu0 0.0
  %310 = vmatpush.msra.mxu0 0.0
  %311 = vmatpush.msra.mxu0 0.0
  %312 = vmatpush.msra.mxu0 0.0
  %313 = vmatpush.msra.mxu0 0.0
  %314 = vmatpush.msra.mxu0 0.0
  %315 = vmatpush.msra.mxu0 0.0
  %316 = vmatpush.msra.mxu0 0.0
  %317 = vmatpush.msra.mxu0 %v302
  %318 = vmatpush.msra.mxu0 %v54
  %319 = vmatpush.msra.mxu0 %v53
  %320 = vmatmul.f32.gmra.mxu0 %v157
  %v321 = vpop.f32.mrf.mxu0
  %v322 = vadd.f32 0.0, %v321
  %323 = vmatmul.f32.gmra.mxu0 %v160
  %v324 = vpop.f32.mrf.mxu0
  %v325 = vadd.f32 0.0, %v324
  %326 = vmatmul.f32.gmra.mxu0 %v163
  %v327 = vpop.f32.mrf.mxu0
  %v328 = vadd.f32 0.0, %v327
  %329 = vmatmul.f32.gmra.mxu0 %v166
  %v330 = vpop.f32.mrf.mxu0
  %v331 = vadd.f32 0.0, %v330
  %332 = vmatmul.f32.gmra.mxu0 %v169
  %v333 = vpop.f32.mrf.mxu0
  %v334 = vadd.f32 0.0, %v333
  %335 = vmatmul.f32.gmra.mxu0 %v172
  %v336 = vpop.f32.mrf.mxu0
  %v337 = vadd.f32 0.0, %v336
  %338 = vmatmul.f32.gmra.mxu0 %v175
  %v339 = vpop.f32.mrf.mxu0
  %v340 = vadd.f32 0.0, %v339
  %341 = vmatmul.f32.gmra.mxu0 %v178
  %v342 = vpop.f32.mrf.mxu0
  %v343 = vadd.f32 0.0, %v342
  %344 = vmatmul.f32.gmra.mxu0 %v181
  %v345 = vpop.f32.mrf.mxu0
  %v346 = vadd.f32 0.0, %v345
  %347 = vmatmul.f32.gmra.mxu0 %v184
  %v348 = vpop.f32.mrf.mxu0
  %v349 = vadd.f32 0.0, %v348
  %350 = vmatmul.f32.gmra.mxu0 %v187
  %v351 = vpop.f32.mrf.mxu0
  %v352 = vadd.f32 0.0, %v351
  %353 = vmatmul.f32.gmra.mxu0 %v190
  %v354 = vpop.f32.mrf.mxu0
  %v355 = vadd.f32 0.0, %v354
  %356 = vmatmul.f32.gmra.mxu0 %v193
  %v357 = vpop.f32.mrf.mxu0
  %v358 = vadd.f32 0.0, %v357
  %359 = vmatmul.f32.gmra.mxu0 %v196
  %v360 = vpop.f32.mrf.mxu0
  %v361 = vadd.f32 0.0, %v360
  %362 = vmatmul.f32.gmra.mxu0 %v199
  %v363 = vpop.f32.mrf.mxu0
  %v364 = vadd.f32 0.0, %v363
  %365 = vmatmul.f32.gmra.mxu0 %v202
  %v366 = vpop.f32.mrf.mxu0
  %v367 = vadd.f32 0.0, %v366
  %368 = vmatmul.f32.gmra.mxu0 %v205
  %v369 = vpop.f32.mrf.mxu0
  %v370 = vadd.f32 0.0, %v369
  %371 = vmatmul.f32.gmra.mxu0 %v208
  %v372 = vpop.f32.mrf.mxu0
  %v373 = vadd.f32 0.0, %v372
  %374 = vmatmul.f32.gmra.mxu0 %v211
  %v375 = vpop.f32.mrf.mxu0
  %v376 = vadd.f32 0.0, %v375
  %377 = vmatmul.f32.gmra.mxu0 %v214
  %v378 = vpop.f32.mrf.mxu0
  %v379 = vadd.f32 0.0, %v378
  %380 = vmatmul.f32.gmra.mxu0 %v217
  %v381 = vpop.f32.mrf.mxu0
  %v382 = vadd.f32 0.0, %v381
  %383 = vmatmul.f32.gmra.mxu0 %v220
  %v384 = vpop.f32.mrf.mxu0
  %v385 = vadd.f32 0.0, %v384
  %386 = vmatmul.f32.gmra.mxu0 %v223
  %v387 = vpop.f32.mrf.mxu0
  %v388 = vadd.f32 0.0, %v387
  %389 = vmatmul.f32.gmra.mxu0 %v226
  %v390 = vpop.f32.mrf.mxu0
  %v391 = vadd.f32 0.0, %v390
  %392 = vmatmul.f32.gmra.mxu0 %v229
  %v393 = vpop.f32.mrf.mxu0
  %v394 = vadd.f32 0.0, %v393
  %395 = vmatmul.f32.gmra.mxu0 %v232
  %v396 = vpop.f32.mrf.mxu0
  %v397 = vadd.f32 0.0, %v396
  %398 = vmatmul.f32.gmra.mxu0 %v235
  %v399 = vpop.f32.mrf.mxu0
  %v400 = vadd.f32 0.0, %v399
  %401 = vmatmul.f32.gmra.mxu0 %v238
  %v402 = vpop.f32.mrf.mxu0
  %v403 = vadd.f32 0.0, %v402
  %404 = vmatmul.f32.gmra.mxu0 %v241
  %v405 = vpop.f32.mrf.mxu0
  %v406 = vadd.f32 0.0, %v405
  %407 = vmatmul.f32.gmra.mxu0 %v244
  %v408 = vpop.f32.mrf.mxu0
  %v409 = vadd.f32 0.0, %v408
  %410 = vmatmul.f32.gmra.mxu0 %v247
  %v411 = vpop.f32.mrf.mxu0
  %v412 = vadd.f32 0.0, %v411
  %413 = vmatmul.f32.gmra.mxu0 %v250
  %v414 = vpop.f32.mrf.mxu0
  %v415 = vadd.f32 0.0, %v414
  %416 = vmatmul.f32.gmra.mxu0 %v253
  %v417 = vpop.f32.mrf.mxu0
  %v418 = vadd.f32 0.0, %v417
  %419 = vmatmul.f32.gmra.mxu0 %v256
  %v420 = vpop.f32.mrf.mxu0
  %v421 = vadd.f32 0.0, %v420
  %422 = vmatmul.f32.gmra.mxu0 %v259
  %v423 = vpop.f32.mrf.mxu0
  %v424 = vadd.f32 0.0, %v423
  %425 = vmatmul.f32.gmra.mxu0 %v262
  %v426 = vpop.f32.mrf.mxu0
  %v427 = vadd.f32 0.0, %v426
  %428 = vmatmul.f32.gmra.mxu0 %v265
  %v429 = vpop.f32.mrf.mxu0
  %v430 = vadd.f32 0.0, %v429
  %431 = vmatmul.f32.gmra.mxu0 %v268
  %v432 = vpop.f32.mrf.mxu0
  %v433 = vadd.f32 0.0, %v432
  %434 = vmatmul.f32.gmra.mxu0 %v271
  %v435 = vpop.f32.mrf.mxu0
  %v436 = vadd.f32 0.0, %v435
  %437 = vmatmul.f32.gmra.mxu0 %v274
  %v438 = vpop.f32.mrf.mxu0
  %v439 = vadd.f32 0.0, %v438
  %440 = vmatmul.f32.gmra.mxu0 %v277
  %v441 = vpop.f32.mrf.mxu0
  %v442 = vadd.f32 0.0, %v441
  %443 = vmatmul.f32.gmra.mxu0 %v280
  %v444 = vpop.f32.mrf.mxu0
  %v445 = vadd.f32 0.0, %v444
  %446 = vmatmul.f32.gmra.mxu0 %v283
  %v447 = vpop.f32.mrf.mxu0
  %v448 = vadd.f32 0.0, %v447
  %449 = vmatmul.f32.gmra.mxu0 %v286
  %v450 = vpop.f32.mrf.mxu0
  %v451 = vadd.f32 0.0, %v450
  %452 = vmatmul.f32.gmra.mxu0 %v289
  %v453 = vpop.f32.mrf.mxu0
  %v454 = vadd.f32 0.0, %v453
  %455 = vmatmul.f32.gmra.mxu0 %v292
  %v456 = vpop.f32.mrf.mxu0
  %v457 = vadd.f32 0.0, %v456
  %458 = vmatmul.f32.gmra.mxu0 %v295
  %v459 = vpop.f32.mrf.mxu0
  %v460 = vadd.f32 0.0, %v459
  %461 = vmatmul.f32.gmra.mxu0 %v298
  %v462 = vpop.f32.mrf.mxu0
  %v463 = vadd.f32 0.0, %v462
  %464 = vdwg.mxu0
  %v465 = vmul.f32 %v322, %v322
  %v466 = vmul.f32 %v325, %v325
  %v467 = vmul.f32 %v328, %v328
  %v468 = vmul.f32 %v331, %v331
  %v469 = vmul.f32 %v334, %v334
  %v470 = vmul.f32 %v337, %v337
  %v471 = vmul.f32 %v340, %v340
  %v472 = vmul.f32 %v343, %v343
  %v473 = vmul.f32 %v346, %v346
  %v474 = vmul.f32 %v349, %v349
  %v475 = vmul.f32 %v352, %v352
  %v476 = vmul.f32 %v355, %v355
  %v477 = vmul.f32 %v358, %v358
  %v478 = vmul.f32 %v361, %v361
  %v479 = vmul.f32 %v364, %v364
  %v480 = vmul.f32 %v367, %v367
  %v481 = vmul.f32 %v370, %v370
  %v482 = vmul.f32 %v373, %v373
  %v483 = vmul.f32 %v376, %v376
  %v484 = vmul.f32 %v379, %v379
  %v485 = vmul.f32 %v382, %v382
  %v486 = vmul.f32 %v385, %v385
  %v487 = vmul.f32 %v388, %v388
  %v488 = vmul.f32 %v391, %v391
  %v489 = vmul.f32 %v394, %v394
  %v490 = vmul.f32 %v397, %v397
  %v491 = vmul.f32 %v400, %v400
  %v492 = vmul.f32 %v403, %v403
  %v493 = vmul.f32 %v406, %v406
  %v494 = vmul.f32 %v409, %v409
  %v495 = vmul.f32 %v412, %v412
  %v496 = vmul.f32 %v415, %v415
  %v497 = vadd.f32 %v465, %v481
  %v498 = vadd.f32 %v466, %v482
  %v499 = vadd.f32 %v467, %v483
  %v500 = vadd.f32 %v468, %v484
  %v501 = vadd.f32 %v469, %v485
  %v502 = vadd.f32 %v470, %v486
  %v503 = vadd.f32 %v471, %v487
  %v504 = vadd.f32 %v472, %v488
  %v505 = vadd.f32 %v473, %v489
  %v506 = vadd.f32 %v474, %v490
  %v507 = vadd.f32 %v475, %v491
  %v508 = vadd.f32 %v476, %v492
  %v509 = vadd.f32 %v477, %v493
  %v510 = vadd.f32 %v478, %v494
  %v511 = vadd.f32 %v479, %v495
  %v512 = vadd.f32 %v480, %v496
  %v513 = vmul.f32 %v418, %v418
  %v514 = vmul.f32 %v421, %v421
  %v515 = vmul.f32 %v424, %v424
  %v516 = vmul.f32 %v427, %v427
  %v517 = vmul.f32 %v430, %v430
  %v518 = vmul.f32 %v433, %v433
  %v519 = vmul.f32 %v436, %v436
  %v520 = vmul.f32 %v439, %v439
  %v521 = vmul.f32 %v442, %v442
  %v522 = vmul.f32 %v445, %v445
  %v523 = vmul.f32 %v448, %v448
  %v524 = vmul.f32 %v451, %v451
  %v525 = vmul.f32 %v454, %v454
  %v526 = vmul.f32 %v457, %v457
  %v527 = vmul.f32 %v460, %v460
  %v528 = vmul.f32 %v463, %v463
  %v529 = vadd.f32 %v497, %v513
  %v530 = vadd.f32 %v498, %v514
  %v531 = vadd.f32 %v499, %v515
  %v532 = vadd.f32 %v500, %v516
  %v533 = vadd.f32 %v501, %v517
  %v534 = vadd.f32 %v502, %v518
  %v535 = vadd.f32 %v503, %v519
  %v536 = vadd.f32 %v504, %v520
  %v537 = vadd.f32 %v505, %v521
  %v538 = vadd.f32 %v506, %v522
  %v539 = vadd.f32 %v507, %v523
  %v540 = vadd.f32 %v508, %v524
  %v541 = vadd.f32 %v509, %v525
  %v542 = vadd.f32 %v510, %v526
  %v543 = vadd.f32 %v511, %v527
  %v544 = vadd.f32 %v512, %v528
  %v545 = vadd.f32 %v529, 1e-08
  %v546 = vadd.f32 %v530, 1e-08
  %v547 = vadd.f32 %v531, 1e-08
  %v548 = vadd.f32 %v532, 1e-08
  %v549 = vadd.f32 %v533, 1e-08
  %v550 = vadd.f32 %v534, 1e-08
  %v551 = vadd.f32 %v535, 1e-08
  %v552 = vadd.f32 %v536, 1e-08
  %v553 = vadd.f32 %v537, 1e-08
  %v554 = vadd.f32 %v538, 1e-08
  %v555 = vadd.f32 %v539, 1e-08
  %v556 = vadd.f32 %v540, 1e-08
  %v557 = vadd.f32 %v541, 1e-08
  %v558 = vadd.f32 %v542, 1e-08
  %v559 = vadd.f32 %v543, 1e-08
  %v560 = vadd.f32 %v544, 1e-08
  %v561 = vrsqrt.pop %v545
  %v562 = vmul.f32 %v561, %v545
  %v563 = vmul.f32 %v562, %v561
  %v564 = vmul.f32 0.5, %v563
  %v565 = vsub.f32 1.5, %v564
  %v566 = vmul.f32 %v561, %v565
  %v567 = vmul.f32 %v545, %v566
  %vm568 = vcmp.eq.f32.partialorder %v545, inf
  %v569 = vsel %vm568, %v545, %v567
  %vm570 = vcmp.eq.f32.partialorder %v545, 0.0
  %v571 = vand.u32 %v545, 2147483648
  %v572 = vsel %vm570, %v571, %v569
  %v573 = vrsqrt.pop %v546
  %v574 = vmul.f32 %v573, %v546
  %v575 = vmul.f32 %v574, %v573
  %v576 = vmul.f32 0.5, %v575
  %v577 = vsub.f32 1.5, %v576
  %v578 = vmul.f32 %v573, %v577
  %v579 = vmul.f32 %v546, %v578
  %vm580 = vcmp.eq.f32.partialorder %v546, inf
  %v581 = vsel %vm580, %v546, %v579
  %vm582 = vcmp.eq.f32.partialorder %v546, 0.0
  %v583 = vand.u32 %v546, 2147483648
  %v584 = vsel %vm582, %v583, %v581
  %v585 = vrsqrt.pop %v547
  %v586 = vmul.f32 %v585, %v547
  %v587 = vmul.f32 %v586, %v585
  %v588 = vmul.f32 0.5, %v587
  %v589 = vsub.f32 1.5, %v588
  %v590 = vmul.f32 %v585, %v589
  %v591 = vmul.f32 %v547, %v590
  %vm592 = vcmp.eq.f32.partialorder %v547, inf
  %v593 = vsel %vm592, %v547, %v591
  %vm594 = vcmp.eq.f32.partialorder %v547, 0.0
  %v595 = vand.u32 %v547, 2147483648
  %v596 = vsel %vm594, %v595, %v593
  %v597 = vrsqrt.pop %v548
  %v598 = vmul.f32 %v597, %v548
  %v599 = vmul.f32 %v598, %v597
  %v600 = vmul.f32 0.5, %v599
  %v601 = vsub.f32 1.5, %v600
  %v602 = vmul.f32 %v597, %v601
  %v603 = vmul.f32 %v548, %v602
  %vm604 = vcmp.eq.f32.partialorder %v548, inf
  %v605 = vsel %vm604, %v548, %v603
  %vm606 = vcmp.eq.f32.partialorder %v548, 0.0
  %v607 = vand.u32 %v548, 2147483648
  %v608 = vsel %vm606, %v607, %v605
  %v609 = vrsqrt.pop %v549
  %v610 = vmul.f32 %v609, %v549
  %v611 = vmul.f32 %v610, %v609
  %v612 = vmul.f32 0.5, %v611
  %v613 = vsub.f32 1.5, %v612
  %v614 = vmul.f32 %v609, %v613
  %v615 = vmul.f32 %v549, %v614
  %vm616 = vcmp.eq.f32.partialorder %v549, inf
  %v617 = vsel %vm616, %v549, %v615
  %vm618 = vcmp.eq.f32.partialorder %v549, 0.0
  %v619 = vand.u32 %v549, 2147483648
  %v620 = vsel %vm618, %v619, %v617
  %v621 = vrsqrt.pop %v550
  %v622 = vmul.f32 %v621, %v550
  %v623 = vmul.f32 %v622, %v621
  %v624 = vmul.f32 0.5, %v623
  %v625 = vsub.f32 1.5, %v624
  %v626 = vmul.f32 %v621, %v625
  %v627 = vmul.f32 %v550, %v626
  %vm628 = vcmp.eq.f32.partialorder %v550, inf
  %v629 = vsel %vm628, %v550, %v627
  %vm630 = vcmp.eq.f32.partialorder %v550, 0.0
  %v631 = vand.u32 %v550, 2147483648
  %v632 = vsel %vm630, %v631, %v629
  %v633 = vrsqrt.pop %v551
  %v634 = vmul.f32 %v633, %v551
  %v635 = vmul.f32 %v634, %v633
  %v636 = vmul.f32 0.5, %v635
  %v637 = vsub.f32 1.5, %v636
  %v638 = vmul.f32 %v633, %v637
  %v639 = vmul.f32 %v551, %v638
  %vm640 = vcmp.eq.f32.partialorder %v551, inf
  %v641 = vsel %vm640, %v551, %v639
  %vm642 = vcmp.eq.f32.partialorder %v551, 0.0
  %v643 = vand.u32 %v551, 2147483648
  %v644 = vsel %vm642, %v643, %v641
  %v645 = vrsqrt.pop %v552
  %v646 = vmul.f32 %v645, %v552
  %v647 = vmul.f32 %v646, %v645
  %v648 = vmul.f32 0.5, %v647
  %v649 = vsub.f32 1.5, %v648
  %v650 = vmul.f32 %v645, %v649
  %v651 = vmul.f32 %v552, %v650
  %vm652 = vcmp.eq.f32.partialorder %v552, inf
  %v653 = vsel %vm652, %v552, %v651
  %vm654 = vcmp.eq.f32.partialorder %v552, 0.0
  %v655 = vand.u32 %v552, 2147483648
  %v656 = vsel %vm654, %v655, %v653
  %v657 = vrsqrt.pop %v553
  %v658 = vmul.f32 %v657, %v553
  %v659 = vmul.f32 %v658, %v657
  %v660 = vmul.f32 0.5, %v659
  %v661 = vsub.f32 1.5, %v660
  %v662 = vmul.f32 %v657, %v661
  %v663 = vmul.f32 %v553, %v662
  %vm664 = vcmp.eq.f32.partialorder %v553, inf
  %v665 = vsel %vm664, %v553, %v663
  %vm666 = vcmp.eq.f32.partialorder %v553, 0.0
  %v667 = vand.u32 %v553, 2147483648
  %v668 = vsel %vm666, %v667, %v665
  %v669 = vrsqrt.pop %v554
  %v670 = vmul.f32 %v669, %v554
  %v671 = vmul.f32 %v670, %v669
  %v672 = vmul.f32 0.5, %v671
  %v673 = vsub.f32 1.5, %v672
  %v674 = vmul.f32 %v669, %v673
  %v675 = vmul.f32 %v554, %v674
  %vm676 = vcmp.eq.f32.partialorder %v554, inf
  %v677 = vsel %vm676, %v554, %v675
  %vm678 = vcmp.eq.f32.partialorder %v554, 0.0
  %v679 = vand.u32 %v554, 2147483648
  %v680 = vsel %vm678, %v679, %v677
  %v681 = vrsqrt.pop %v555
  %v682 = vmul.f32 %v681, %v555
  %v683 = vmul.f32 %v682, %v681
  %v684 = vmul.f32 0.5, %v683
  %v685 = vsub.f32 1.5, %v684
  %v686 = vmul.f32 %v681, %v685
  %v687 = vmul.f32 %v555, %v686
  %vm688 = vcmp.eq.f32.partialorder %v555, inf
  %v689 = vsel %vm688, %v555, %v687
  %vm690 = vcmp.eq.f32.partialorder %v555, 0.0
  %v691 = vand.u32 %v555, 2147483648
  %v692 = vsel %vm690, %v691, %v689
  %v693 = vrsqrt.pop %v556
  %v694 = vmul.f32 %v693, %v556
  %v695 = vmul.f32 %v694, %v693
  %v696 = vmul.f32 0.5, %v695
  %v697 = vsub.f32 1.5, %v696
  %v698 = vmul.f32 %v693, %v697
  %v699 = vmul.f32 %v556, %v698
  %vm700 = vcmp.eq.f32.partialorder %v556, inf
  %v701 = vsel %vm700, %v556, %v699
  %vm702 = vcmp.eq.f32.partialorder %v556, 0.0
  %v703 = vand.u32 %v556, 2147483648
  %v704 = vsel %vm702, %v703, %v701
  %v705 = vrsqrt.pop %v557
  %v706 = vmul.f32 %v705, %v557
  %v707 = vmul.f32 %v706, %v705
  %v708 = vmul.f32 0.5, %v707
  %v709 = vsub.f32 1.5, %v708
  %v710 = vmul.f32 %v705, %v709
  %v711 = vmul.f32 %v557, %v710
  %vm712 = vcmp.eq.f32.partialorder %v557, inf
  %v713 = vsel %vm712, %v557, %v711
  %vm714 = vcmp.eq.f32.partialorder %v557, 0.0
  %v715 = vand.u32 %v557, 2147483648
  %v716 = vsel %vm714, %v715, %v713
  %v717 = vrsqrt.pop %v558
  %v718 = vmul.f32 %v717, %v558
  %v719 = vmul.f32 %v718, %v717
  %v720 = vmul.f32 0.5, %v719
  %v721 = vsub.f32 1.5, %v720
  %v722 = vmul.f32 %v717, %v721
  %v723 = vmul.f32 %v558, %v722
  %vm724 = vcmp.eq.f32.partialorder %v558, inf
  %v725 = vsel %vm724, %v558, %v723
  %vm726 = vcmp.eq.f32.partialorder %v558, 0.0
  %v727 = vand.u32 %v558, 2147483648
  %v728 = vsel %vm726, %v727, %v725
  %v729 = vrsqrt.pop %v559
  %v730 = vmul.f32 %v729, %v559
  %v731 = vmul.f32 %v730, %v729
  %v732 = vmul.f32 0.5, %v731
  %v733 = vsub.f32 1.5, %v732
  %v734 = vmul.f32 %v729, %v733
  %v735 = vmul.f32 %v559, %v734
  %vm736 = vcmp.eq.f32.partialorder %v559, inf
  %v737 = vsel %vm736, %v559, %v735
  %vm738 = vcmp.eq.f32.partialorder %v559, 0.0
  %v739 = vand.u32 %v559, 2147483648
  %v740 = vsel %vm738, %v739, %v737
  %v741 = vrsqrt.pop %v560
  %v742 = vmul.f32 %v741, %v560
  %v743 = vmul.f32 %v742, %v741
  %v744 = vmul.f32 0.5, %v743
  %v745 = vsub.f32 1.5, %v744
  %v746 = vmul.f32 %v741, %v745
  %v747 = vmul.f32 %v560, %v746
  %vm748 = vcmp.eq.f32.partialorder %v560, inf
  %v749 = vsel %vm748, %v560, %v747
  %vm750 = vcmp.eq.f32.partialorder %v560, 0.0
  %v751 = vand.u32 %v560, 2147483648
  %v752 = vsel %vm750, %v751, %v749
  %v754 = vsel %vm155, %v572, 0
  %v757 = vsel %vm155, %v584, 0
  %v760 = vsel %vm155, %v596, 0
  %v763 = vsel %vm155, %v608, 0
  %v766 = vsel %vm155, %v620, 0
  %v769 = vsel %vm155, %v632, 0
  %v772 = vsel %vm155, %v644, 0
  %v775 = vsel %vm155, %v656, 0
  %v778 = vsel %vm155, %v668, 0
  %v781 = vsel %vm155, %v680, 0
  %v784 = vsel %vm155, %v692, 0
  %v787 = vsel %vm155, %v704, 0
  %v790 = vsel %vm155, %v716, 0
  %v793 = vsel %vm155, %v728, 0
  %v796 = vsel %vm155, %v740, 0
  %v799 = vsel %vm155, %v752, 0
  %v802 = vsel %vm300, %v68, 0
  %804 = vmatpush.msra.mxu0 0.0
  %805 = vmatpush.msra.mxu0 0.0
  %806 = vmatpush.msra.mxu0 0.0
  %807 = vmatpush.msra.mxu0 0.0
  %808 = vmatpush.msra.mxu0 0.0
  %809 = vmatpush.msra.mxu0 0.0
  %810 = vmatpush.msra.mxu0 0.0
  %811 = vmatpush.msra.mxu0 0.0
  %812 = vmatpush.msra.mxu0 0.0
  %813 = vmatpush.msra.mxu0 0.0
  %814 = vmatpush.msra.mxu0 0.0
  %815 = vmatpush.msra.mxu0 0.0
  %816 = vmatpush.msra.mxu0 0.0
  %817 = vmatpush.msra.mxu0 %v802
  %818 = vmatpush.msra.mxu0 %v67
  %819 = vmatpush.msra.mxu0 %v66
  %820 = vmatmul.f32.gmra.mxu0 %v754
  %v821 = vpop.f32.mrf.mxu0
  %v822 = vadd.f32 0.0, %v821
  %823 = vmatmul.f32.gmra.mxu0 %v757
  %v824 = vpop.f32.mrf.mxu0
  %v825 = vadd.f32 0.0, %v824
  %826 = vmatmul.f32.gmra.mxu0 %v760
  %v827 = vpop.f32.mrf.mxu0
  %v828 = vadd.f32 0.0, %v827
  %829 = vmatmul.f32.gmra.mxu0 %v763
  %v830 = vpop.f32.mrf.mxu0
  %v831 = vadd.f32 0.0, %v830
  %832 = vmatmul.f32.gmra.mxu0 %v766
  %v833 = vpop.f32.mrf.mxu0
  %v834 = vadd.f32 0.0, %v833
  %835 = vmatmul.f32.gmra.mxu0 %v769
  %v836 = vpop.f32.mrf.mxu0
  %v837 = vadd.f32 0.0, %v836
  %838 = vmatmul.f32.gmra.mxu0 %v772
  %v839 = vpop.f32.mrf.mxu0
  %v840 = vadd.f32 0.0, %v839
  %841 = vmatmul.f32.gmra.mxu0 %v775
  %v842 = vpop.f32.mrf.mxu0
  %v843 = vadd.f32 0.0, %v842
  %844 = vmatmul.f32.gmra.mxu0 %v778
  %v845 = vpop.f32.mrf.mxu0
  %v846 = vadd.f32 0.0, %v845
  %847 = vmatmul.f32.gmra.mxu0 %v781
  %v848 = vpop.f32.mrf.mxu0
  %v849 = vadd.f32 0.0, %v848
  %850 = vmatmul.f32.gmra.mxu0 %v784
  %v851 = vpop.f32.mrf.mxu0
  %v852 = vadd.f32 0.0, %v851
  %853 = vmatmul.f32.gmra.mxu0 %v787
  %v854 = vpop.f32.mrf.mxu0
  %v855 = vadd.f32 0.0, %v854
  %856 = vmatmul.f32.gmra.mxu0 %v790
  %v857 = vpop.f32.mrf.mxu0
  %v858 = vadd.f32 0.0, %v857
  %859 = vmatmul.f32.gmra.mxu0 %v793
  %v860 = vpop.f32.mrf.mxu0
  %v861 = vadd.f32 0.0, %v860
  %862 = vmatmul.f32.gmra.mxu0 %v796
  %v863 = vpop.f32.mrf.mxu0
  %v864 = vadd.f32 0.0, %v863
  %865 = vmatmul.f32.gmra.mxu0 %v799
  %v866 = vpop.f32.mrf.mxu0
  %v867 = vadd.f32 0.0, %v866
  %868 = vdwg.mxu0
  %vm869 = vcmask 654336
  %v871 = vsel %vm869, %v91, 0
  %v874 = vsel %vm869, %v92, 0
  %v877 = vsel %vm869, %v93, 0
  %v880 = vsel %vm869, %v94, 0
  %v883 = vsel %vm869, %v95, 0
  %v886 = vsel %vm869, %v96, 0
  %v889 = vsel %vm869, %v97, 0
  %v892 = vsel %vm869, %v98, 0
  %v895 = vsel %vm869, %v99, 0
  %v898 = vsel %vm869, %v100, 0
  %v901 = vsel %vm869, %v101, 0
  %v904 = vsel %vm869, %v102, 0
  %v907 = vsel %vm869, %v103, 0
  %v910 = vsel %vm869, %v104, 0
  %v913 = vsel %vm869, %v105, 0
  %v916 = vsel %vm869, %v106, 0
  %918 = vmatpush.msra.mxu0 0.0
  %919 = vmatpush.msra.mxu0 0.0
  %920 = vmatpush.msra.mxu0 0.0
  %921 = vmatpush.msra.mxu0 0.0
  %922 = vmatpush.msra.mxu0 0.0
  %923 = vmatpush.msra.mxu0 0.0
  %924 = vmatpush.msra.mxu0 %v65
  %925 = vmatpush.msra.mxu0 %v64
  %926 = vmatpush.msra.mxu0 %v63
  %927 = vmatpush.msra.mxu0 %v62
  %928 = vmatpush.msra.mxu0 %v61
  %929 = vmatpush.msra.mxu0 %v60
  %930 = vmatpush.msra.mxu0 %v59
  %931 = vmatpush.msra.mxu0 %v58
  %932 = vmatpush.msra.mxu0 %v57
  %933 = vmatpush.msra.mxu0 %v56
  %934 = vmatmul.f32.gmra.mxu0 %v871
  %v935 = vpop.f32.mrf.mxu0
  %v936 = vadd.f32 %v822, %v935
  %937 = vmatmul.f32.gmra.mxu0 %v874
  %v938 = vpop.f32.mrf.mxu0
  %v939 = vadd.f32 %v825, %v938
  %940 = vmatmul.f32.gmra.mxu0 %v877
  %v941 = vpop.f32.mrf.mxu0
  %v942 = vadd.f32 %v828, %v941
  %943 = vmatmul.f32.gmra.mxu0 %v880
  %v944 = vpop.f32.mrf.mxu0
  %v945 = vadd.f32 %v831, %v944
  %946 = vmatmul.f32.gmra.mxu0 %v883
  %v947 = vpop.f32.mrf.mxu0
  %v948 = vadd.f32 %v834, %v947
  %949 = vmatmul.f32.gmra.mxu0 %v886
  %v950 = vpop.f32.mrf.mxu0
  %v951 = vadd.f32 %v837, %v950
  %952 = vmatmul.f32.gmra.mxu0 %v889
  %v953 = vpop.f32.mrf.mxu0
  %v954 = vadd.f32 %v840, %v953
  %955 = vmatmul.f32.gmra.mxu0 %v892
  %v956 = vpop.f32.mrf.mxu0
  %v957 = vadd.f32 %v843, %v956
  %958 = vmatmul.f32.gmra.mxu0 %v895
  %v959 = vpop.f32.mrf.mxu0
  %v960 = vadd.f32 %v846, %v959
  %961 = vmatmul.f32.gmra.mxu0 %v898
  %v962 = vpop.f32.mrf.mxu0
  %v963 = vadd.f32 %v849, %v962
  %964 = vmatmul.f32.gmra.mxu0 %v901
  %v965 = vpop.f32.mrf.mxu0
  %v966 = vadd.f32 %v852, %v965
  %967 = vmatmul.f32.gmra.mxu0 %v904
  %v968 = vpop.f32.mrf.mxu0
  %v969 = vadd.f32 %v855, %v968
  %970 = vmatmul.f32.gmra.mxu0 %v907
  %v971 = vpop.f32.mrf.mxu0
  %v972 = vadd.f32 %v858, %v971
  %973 = vmatmul.f32.gmra.mxu0 %v910
  %v974 = vpop.f32.mrf.mxu0
  %v975 = vadd.f32 %v861, %v974
  %976 = vmatmul.f32.gmra.mxu0 %v913
  %v977 = vpop.f32.mrf.mxu0
  %v978 = vadd.f32 %v864, %v977
  %979 = vmatmul.f32.gmra.mxu0 %v916
  %v980 = vpop.f32.mrf.mxu0
  %v981 = vadd.f32 %v867, %v980
  %982 = vdwg.mxu0
  %v984 = vperm.slane %v69, 0
  %v986 = vadd.f32 %v936, %v984
  %v987 = vadd.f32 %v939, %v984
  %v988 = vadd.f32 %v942, %v984
  %v989 = vadd.f32 %v945, %v984
  %v990 = vadd.f32 %v948, %v984
  %v991 = vadd.f32 %v951, %v984
  %v992 = vadd.f32 %v954, %v984
  %v993 = vadd.f32 %v957, %v984
  %v994 = vadd.f32 %v960, %v984
  %v995 = vadd.f32 %v963, %v984
  %v996 = vadd.f32 %v966, %v984
  %v997 = vadd.f32 %v969, %v984
  %v998 = vadd.f32 %v972, %v984
  %v999 = vadd.f32 %v975, %v984
  %v1000 = vadd.f32 %v978, %v984
  %v1001 = vadd.f32 %v981, %v984
  %v1002 = vxor.u32 %v986, 2147483648
  %v1003 = vxor.u32 %v987, 2147483648
  %v1004 = vxor.u32 %v988, 2147483648
  %v1005 = vxor.u32 %v989, 2147483648
  %v1006 = vxor.u32 %v990, 2147483648
  %v1007 = vxor.u32 %v991, 2147483648
  %v1008 = vxor.u32 %v992, 2147483648
  %v1009 = vxor.u32 %v993, 2147483648
  %v1010 = vxor.u32 %v994, 2147483648
  %v1011 = vxor.u32 %v995, 2147483648
  %v1012 = vxor.u32 %v996, 2147483648
  %v1013 = vxor.u32 %v997, 2147483648
  %v1014 = vxor.u32 %v998, 2147483648
  %v1015 = vxor.u32 %v999, 2147483648
  %v1016 = vxor.u32 %v1000, 2147483648
  %v1017 = vxor.u32 %v1001, 2147483648
  %v1018 = vmul.f32 %v1002, 1.442695
  %v1019 = vpow.pop %v1018
  %v1020 = vmul.f32 %v1003, 1.442695
  %v1021 = vpow.pop %v1020
  %v1022 = vmul.f32 %v1004, 1.442695
  %v1023 = vpow.pop %v1022
  %v1024 = vmul.f32 %v1005, 1.442695
  %v1025 = vpow.pop %v1024
  %v1026 = vmul.f32 %v1006, 1.442695
  %v1027 = vpow.pop %v1026
  %v1028 = vmul.f32 %v1007, 1.442695
  %v1029 = vpow.pop %v1028
  %v1030 = vmul.f32 %v1008, 1.442695
  %v1031 = vpow.pop %v1030
  %v1032 = vmul.f32 %v1009, 1.442695
  %v1033 = vpow.pop %v1032
  %v1034 = vmul.f32 %v1010, 1.442695
  %v1035 = vpow.pop %v1034
  %v1036 = vmul.f32 %v1011, 1.442695
  %v1037 = vpow.pop %v1036
  %v1038 = vmul.f32 %v1012, 1.442695
  %v1039 = vpow.pop %v1038
  %v1040 = vmul.f32 %v1013, 1.442695
  %v1041 = vpow.pop %v1040
  %v1042 = vmul.f32 %v1014, 1.442695
  %v1043 = vpow.pop %v1042
  %v1044 = vmul.f32 %v1015, 1.442695
  %v1045 = vpow.pop %v1044
  %v1046 = vmul.f32 %v1016, 1.442695
  %v1047 = vpow.pop %v1046
  %v1048 = vmul.f32 %v1017, 1.442695
  %v1049 = vpow.pop %v1048
  %v1050 = vadd.f32 %v1019, 1.0
  %v1051 = vadd.f32 %v1021, 1.0
  %v1052 = vadd.f32 %v1023, 1.0
  %v1053 = vadd.f32 %v1025, 1.0
  %v1054 = vadd.f32 %v1027, 1.0
  %v1055 = vadd.f32 %v1029, 1.0
  %v1056 = vadd.f32 %v1031, 1.0
  %v1057 = vadd.f32 %v1033, 1.0
  %v1058 = vadd.f32 %v1035, 1.0
  %v1059 = vadd.f32 %v1037, 1.0
  %v1060 = vadd.f32 %v1039, 1.0
  %v1061 = vadd.f32 %v1041, 1.0
  %v1062 = vadd.f32 %v1043, 1.0
  %v1063 = vadd.f32 %v1045, 1.0
  %v1064 = vadd.f32 %v1047, 1.0
  %v1065 = vadd.f32 %v1049, 1.0
  %v1066 = vrcp.pop %v1050
  %v1067 = vmul.f32 %v1050, %v1066
  %v1068 = vsub.f32 1.0, %v1067
  %v1069 = vmul.f32 %v1066, %v1068
  %v1070 = vadd.f32 %v1066, %v1069
  %vm1071 = vweird.f32 %v1050
  %vm1072 = vweird.f32 %v1066
  %vm1073 = vmor %vm1071, %vm1072
  %v1074 = vsel %vm1073, %v1066, %v1070
  %v1075 = vand.u32 2147483647, %v1050
  %vm1076 = vcmp.eq.f32.partialorder %v1075, 8.507059e+37
  %v1077 = vand.u32 %v1050, 2147483648
  %v1078 = vor.u32 1.1754944e-38, %v1077
  %v1079 = vsel %vm1076, %v1078, %v1074
  %v1080 = vmul.f32 1.0, %v1079
  %v1081 = vrcp.pop %v1051
  %v1082 = vmul.f32 %v1051, %v1081
  %v1083 = vsub.f32 1.0, %v1082
  %v1084 = vmul.f32 %v1081, %v1083
  %v1085 = vadd.f32 %v1081, %v1084
  %vm1086 = vweird.f32 %v1051
  %vm1087 = vweird.f32 %v1081
  %vm1088 = vmor %vm1086, %vm1087
  %v1089 = vsel %vm1088, %v1081, %v1085
  %v1090 = vand.u32 2147483647, %v1051
  %vm1091 = vcmp.eq.f32.partialorder %v1090, 8.507059e+37
  %v1092 = vand.u32 %v1051, 2147483648
  %v1093 = vor.u32 1.1754944e-38, %v1092
  %v1094 = vsel %vm1091, %v1093, %v1089
  %v1095 = vmul.f32 1.0, %v1094
  %v1096 = vrcp.pop %v1052
  %v1097 = vmul.f32 %v1052, %v1096
  %v1098 = vsub.f32 1.0, %v1097
  %v1099 = vmul.f32 %v1096, %v1098
  %v1100 = vadd.f32 %v1096, %v1099
  %vm1101 = vweird.f32 %v1052
  %vm1102 = vweird.f32 %v1096
  %vm1103 = vmor %vm1101, %vm1102
  %v1104 = vsel %vm1103, %v1096, %v1100
  %v1105 = vand.u32 2147483647, %v1052
  %vm1106 = vcmp.eq.f32.partialorder %v1105, 8.507059e+37
  %v1107 = vand.u32 %v1052, 2147483648
  %v1108 = vor.u32 1.1754944e-38, %v1107
  %v1109 = vsel %vm1106, %v1108, %v1104
  %v1110 = vmul.f32 1.0, %v1109
  %v1111 = vrcp.pop %v1053
  %v1112 = vmul.f32 %v1053, %v1111
  %v1113 = vsub.f32 1.0, %v1112
  %v1114 = vmul.f32 %v1111, %v1113
  %v1115 = vadd.f32 %v1111, %v1114
  %vm1116 = vweird.f32 %v1053
  %vm1117 = vweird.f32 %v1111
  %vm1118 = vmor %vm1116, %vm1117
  %v1119 = vsel %vm1118, %v1111, %v1115
  %v1120 = vand.u32 2147483647, %v1053
  %vm1121 = vcmp.eq.f32.partialorder %v1120, 8.507059e+37
  %v1122 = vand.u32 %v1053, 2147483648
  %v1123 = vor.u32 1.1754944e-38, %v1122
  %v1124 = vsel %vm1121, %v1123, %v1119
  %v1125 = vmul.f32 1.0, %v1124
  %v1126 = vrcp.pop %v1054
  %v1127 = vmul.f32 %v1054, %v1126
  %v1128 = vsub.f32 1.0, %v1127
  %v1129 = vmul.f32 %v1126, %v1128
  %v1130 = vadd.f32 %v1126, %v1129
  %vm1131 = vweird.f32 %v1054
  %vm1132 = vweird.f32 %v1126
  %vm1133 = vmor %vm1131, %vm1132
  %v1134 = vsel %vm1133, %v1126, %v1130
  %v1135 = vand.u32 2147483647, %v1054
  %vm1136 = vcmp.eq.f32.partialorder %v1135, 8.507059e+37
  %v1137 = vand.u32 %v1054, 2147483648
  %v1138 = vor.u32 1.1754944e-38, %v1137
  %v1139 = vsel %vm1136, %v1138, %v1134
  %v1140 = vmul.f32 1.0, %v1139
  %v1141 = vrcp.pop %v1055
  %v1142 = vmul.f32 %v1055, %v1141
  %v1143 = vsub.f32 1.0, %v1142
  %v1144 = vmul.f32 %v1141, %v1143
  %v1145 = vadd.f32 %v1141, %v1144
  %vm1146 = vweird.f32 %v1055
  %vm1147 = vweird.f32 %v1141
  %vm1148 = vmor %vm1146, %vm1147
  %v1149 = vsel %vm1148, %v1141, %v1145
  %v1150 = vand.u32 2147483647, %v1055
  %vm1151 = vcmp.eq.f32.partialorder %v1150, 8.507059e+37
  %v1152 = vand.u32 %v1055, 2147483648
  %v1153 = vor.u32 1.1754944e-38, %v1152
  %v1154 = vsel %vm1151, %v1153, %v1149
  %v1155 = vmul.f32 1.0, %v1154
  %v1156 = vrcp.pop %v1056
  %v1157 = vmul.f32 %v1056, %v1156
  %v1158 = vsub.f32 1.0, %v1157
  %v1159 = vmul.f32 %v1156, %v1158
  %v1160 = vadd.f32 %v1156, %v1159
  %vm1161 = vweird.f32 %v1056
  %vm1162 = vweird.f32 %v1156
  %vm1163 = vmor %vm1161, %vm1162
  %v1164 = vsel %vm1163, %v1156, %v1160
  %v1165 = vand.u32 2147483647, %v1056
  %vm1166 = vcmp.eq.f32.partialorder %v1165, 8.507059e+37
  %v1167 = vand.u32 %v1056, 2147483648
  %v1168 = vor.u32 1.1754944e-38, %v1167
  %v1169 = vsel %vm1166, %v1168, %v1164
  %v1170 = vmul.f32 1.0, %v1169
  %v1171 = vrcp.pop %v1057
  %v1172 = vmul.f32 %v1057, %v1171
  %v1173 = vsub.f32 1.0, %v1172
  %v1174 = vmul.f32 %v1171, %v1173
  %v1175 = vadd.f32 %v1171, %v1174
  %vm1176 = vweird.f32 %v1057
  %vm1177 = vweird.f32 %v1171
  %vm1178 = vmor %vm1176, %vm1177
  %v1179 = vsel %vm1178, %v1171, %v1175
  %v1180 = vand.u32 2147483647, %v1057
  %vm1181 = vcmp.eq.f32.partialorder %v1180, 8.507059e+37
  %v1182 = vand.u32 %v1057, 2147483648
  %v1183 = vor.u32 1.1754944e-38, %v1182
  %v1184 = vsel %vm1181, %v1183, %v1179
  %v1185 = vmul.f32 1.0, %v1184
  %v1186 = vrcp.pop %v1058
  %v1187 = vmul.f32 %v1058, %v1186
  %v1188 = vsub.f32 1.0, %v1187
  %v1189 = vmul.f32 %v1186, %v1188
  %v1190 = vadd.f32 %v1186, %v1189
  %vm1191 = vweird.f32 %v1058
  %vm1192 = vweird.f32 %v1186
  %vm1193 = vmor %vm1191, %vm1192
  %v1194 = vsel %vm1193, %v1186, %v1190
  %v1195 = vand.u32 2147483647, %v1058
  %vm1196 = vcmp.eq.f32.partialorder %v1195, 8.507059e+37
  %v1197 = vand.u32 %v1058, 2147483648
  %v1198 = vor.u32 1.1754944e-38, %v1197
  %v1199 = vsel %vm1196, %v1198, %v1194
  %v1200 = vmul.f32 1.0, %v1199
  %v1201 = vrcp.pop %v1059
  %v1202 = vmul.f32 %v1059, %v1201
  %v1203 = vsub.f32 1.0, %v1202
  %v1204 = vmul.f32 %v1201, %v1203
  %v1205 = vadd.f32 %v1201, %v1204
  %vm1206 = vweird.f32 %v1059
  %vm1207 = vweird.f32 %v1201
  %vm1208 = vmor %vm1206, %vm1207
  %v1209 = vsel %vm1208, %v1201, %v1205
  %v1210 = vand.u32 2147483647, %v1059
  %vm1211 = vcmp.eq.f32.partialorder %v1210, 8.507059e+37
  %v1212 = vand.u32 %v1059, 2147483648
  %v1213 = vor.u32 1.1754944e-38, %v1212
  %v1214 = vsel %vm1211, %v1213, %v1209
  %v1215 = vmul.f32 1.0, %v1214
  %v1216 = vrcp.pop %v1060
  %v1217 = vmul.f32 %v1060, %v1216
  %v1218 = vsub.f32 1.0, %v1217
  %v1219 = vmul.f32 %v1216, %v1218
  %v1220 = vadd.f32 %v1216, %v1219
  %vm1221 = vweird.f32 %v1060
  %vm1222 = vweird.f32 %v1216
  %vm1223 = vmor %vm1221, %vm1222
  %v1224 = vsel %vm1223, %v1216, %v1220
  %v1225 = vand.u32 2147483647, %v1060
  %vm1226 = vcmp.eq.f32.partialorder %v1225, 8.507059e+37
  %v1227 = vand.u32 %v1060, 2147483648
  %v1228 = vor.u32 1.1754944e-38, %v1227
  %v1229 = vsel %vm1226, %v1228, %v1224
  %v1230 = vmul.f32 1.0, %v1229
  %v1231 = vrcp.pop %v1061
  %v1232 = vmul.f32 %v1061, %v1231
  %v1233 = vsub.f32 1.0, %v1232
  %v1234 = vmul.f32 %v1231, %v1233
  %v1235 = vadd.f32 %v1231, %v1234
  %vm1236 = vweird.f32 %v1061
  %vm1237 = vweird.f32 %v1231
  %vm1238 = vmor %vm1236, %vm1237
  %v1239 = vsel %vm1238, %v1231, %v1235
  %v1240 = vand.u32 2147483647, %v1061
  %vm1241 = vcmp.eq.f32.partialorder %v1240, 8.507059e+37
  %v1242 = vand.u32 %v1061, 2147483648
  %v1243 = vor.u32 1.1754944e-38, %v1242
  %v1244 = vsel %vm1241, %v1243, %v1239
  %v1245 = vmul.f32 1.0, %v1244
  %v1246 = vrcp.pop %v1062
  %v1247 = vmul.f32 %v1062, %v1246
  %v1248 = vsub.f32 1.0, %v1247
  %v1249 = vmul.f32 %v1246, %v1248
  %v1250 = vadd.f32 %v1246, %v1249
  %vm1251 = vweird.f32 %v1062
  %vm1252 = vweird.f32 %v1246
  %vm1253 = vmor %vm1251, %vm1252
  %v1254 = vsel %vm1253, %v1246, %v1250
  %v1255 = vand.u32 2147483647, %v1062
  %vm1256 = vcmp.eq.f32.partialorder %v1255, 8.507059e+37
  %v1257 = vand.u32 %v1062, 2147483648
  %v1258 = vor.u32 1.1754944e-38, %v1257
  %v1259 = vsel %vm1256, %v1258, %v1254
  %v1260 = vmul.f32 1.0, %v1259
  %v1261 = vrcp.pop %v1063
  %v1262 = vmul.f32 %v1063, %v1261
  %v1263 = vsub.f32 1.0, %v1262
  %v1264 = vmul.f32 %v1261, %v1263
  %v1265 = vadd.f32 %v1261, %v1264
  %vm1266 = vweird.f32 %v1063
  %vm1267 = vweird.f32 %v1261
  %vm1268 = vmor %vm1266, %vm1267
  %v1269 = vsel %vm1268, %v1261, %v1265
  %v1270 = vand.u32 2147483647, %v1063
  %vm1271 = vcmp.eq.f32.partialorder %v1270, 8.507059e+37
  %v1272 = vand.u32 %v1063, 2147483648
  %v1273 = vor.u32 1.1754944e-38, %v1272
  %v1274 = vsel %vm1271, %v1273, %v1269
  %v1275 = vmul.f32 1.0, %v1274
  %v1276 = vrcp.pop %v1064
  %v1277 = vmul.f32 %v1064, %v1276
  %v1278 = vsub.f32 1.0, %v1277
  %v1279 = vmul.f32 %v1276, %v1278
  %v1280 = vadd.f32 %v1276, %v1279
  %vm1281 = vweird.f32 %v1064
  %vm1282 = vweird.f32 %v1276
  %vm1283 = vmor %vm1281, %vm1282
  %v1284 = vsel %vm1283, %v1276, %v1280
  %v1285 = vand.u32 2147483647, %v1064
  %vm1286 = vcmp.eq.f32.partialorder %v1285, 8.507059e+37
  %v1287 = vand.u32 %v1064, 2147483648
  %v1288 = vor.u32 1.1754944e-38, %v1287
  %v1289 = vsel %vm1286, %v1288, %v1284
  %v1290 = vmul.f32 1.0, %v1289
  %v1291 = vrcp.pop %v1065
  %v1292 = vmul.f32 %v1065, %v1291
  %v1293 = vsub.f32 1.0, %v1292
  %v1294 = vmul.f32 %v1291, %v1293
  %v1295 = vadd.f32 %v1291, %v1294
  %vm1296 = vweird.f32 %v1065
  %vm1297 = vweird.f32 %v1291
  %vm1298 = vmor %vm1296, %vm1297
  %v1299 = vsel %vm1298, %v1291, %v1295
  %v1300 = vand.u32 2147483647, %v1065
  %vm1301 = vcmp.eq.f32.partialorder %v1300, 8.507059e+37
  %v1302 = vand.u32 %v1065, 2147483648
  %v1303 = vor.u32 1.1754944e-38, %v1302
  %v1304 = vsel %vm1301, %v1303, %v1299
  %v1305 = vmul.f32 1.0, %v1304
  %v1306 = vmul.f32 %v986, %v1080
  %v1307 = vmul.f32 %v987, %v1095
  %v1308 = vmul.f32 %v988, %v1110
  %v1309 = vmul.f32 %v989, %v1125
  %v1310 = vmul.f32 %v990, %v1140
  %v1311 = vmul.f32 %v991, %v1155
  %v1312 = vmul.f32 %v992, %v1170
  %v1313 = vmul.f32 %v993, %v1185
  %v1314 = vmul.f32 %v994, %v1200
  %v1315 = vmul.f32 %v995, %v1215
  %v1316 = vmul.f32 %v996, %v1230
  %v1317 = vmul.f32 %v997, %v1245
  %v1318 = vmul.f32 %v998, %v1260
  %v1319 = vmul.f32 %v999, %v1275
  %v1320 = vmul.f32 %v1000, %v1290
  %v1321 = vmul.f32 %v1001, %v1305
  %v1323 = vperm.slane %v77, 0
  %vm1325 = vcmask 261120
  %v1327 = vsel %vm1325, %v1306, 0
  %v1330 = vsel %vm1325, %v1307, 0
  %v1333 = vsel %vm1325, %v1308, 0
  %v1336 = vsel %vm1325, %v1309, 0
  %v1339 = vsel %vm1325, %v1310, 0
  %v1342 = vsel %vm1325, %v1311, 0
  %v1345 = vsel %vm1325, %v1312, 0
  %v1348 = vsel %vm1325, %v1313, 0
  %v1351 = vsel %vm1325, %v1314, 0
  %v1354 = vsel %vm1325, %v1315, 0
  %v1357 = vsel %vm1325, %v1316, 0
  %v1360 = vsel %vm1325, %v1317, 0
  %v1363 = vsel %vm1325, %v1318, 0
  %v1366 = vsel %vm1325, %v1319, 0
  %v1369 = vsel %vm1325, %v1320, 0
  %v1372 = vsel %vm1325, %v1321, 0
  %1374 = vmatpush.msra.mxu0 0.0
  %1375 = vmatpush.msra.mxu0 0.0
  %1376 = vmatpush.msra.mxu0 0.0
  %1377 = vmatpush.msra.mxu0 0.0
  %1378 = vmatpush.msra.mxu0 0.0
  %1379 = vmatpush.msra.mxu0 0.0
  %1380 = vmatpush.msra.mxu0 0.0
  %1381 = vmatpush.msra.mxu0 0.0
  %1382 = vmatpush.msra.mxu0 0.0
  %1383 = vmatpush.msra.mxu0 0.0
  %1384 = vmatpush.msra.mxu0 0.0
  %1385 = vmatpush.msra.mxu0 0.0
  %1386 = vmatpush.msra.mxu0 %v76
  %1387 = vmatpush.msra.mxu0 %v75
  %1388 = vmatpush.msra.mxu0 %v74
  %1389 = vmatpush.msra.mxu0 %v73
  %1390 = vmatmul.f32.gmra.mxu0 %v1327
  %v1391 = vpop.f32.mrf.mxu0
  %v1392 = vadd.f32 %v1323, %v1391
  %1393 = vmatmul.f32.gmra.mxu0 %v1330
  %v1394 = vpop.f32.mrf.mxu0
  %v1395 = vadd.f32 %v1323, %v1394
  %1396 = vmatmul.f32.gmra.mxu0 %v1333
  %v1397 = vpop.f32.mrf.mxu0
  %v1398 = vadd.f32 %v1323, %v1397
  %1399 = vmatmul.f32.gmra.mxu0 %v1336
  %v1400 = vpop.f32.mrf.mxu0
  %v1401 = vadd.f32 %v1323, %v1400
  %1402 = vmatmul.f32.gmra.mxu0 %v1339
  %v1403 = vpop.f32.mrf.mxu0
  %v1404 = vadd.f32 %v1323, %v1403
  %1405 = vmatmul.f32.gmra.mxu0 %v1342
  %v1406 = vpop.f32.mrf.mxu0
  %v1407 = vadd.f32 %v1323, %v1406
  %1408 = vmatmul.f32.gmra.mxu0 %v1345
  %v1409 = vpop.f32.mrf.mxu0
  %v1410 = vadd.f32 %v1323, %v1409
  %1411 = vmatmul.f32.gmra.mxu0 %v1348
  %v1412 = vpop.f32.mrf.mxu0
  %v1413 = vadd.f32 %v1323, %v1412
  %1414 = vmatmul.f32.gmra.mxu0 %v1351
  %v1415 = vpop.f32.mrf.mxu0
  %v1416 = vadd.f32 %v1323, %v1415
  %1417 = vmatmul.f32.gmra.mxu0 %v1354
  %v1418 = vpop.f32.mrf.mxu0
  %v1419 = vadd.f32 %v1323, %v1418
  %1420 = vmatmul.f32.gmra.mxu0 %v1357
  %v1421 = vpop.f32.mrf.mxu0
  %v1422 = vadd.f32 %v1323, %v1421
  %1423 = vmatmul.f32.gmra.mxu0 %v1360
  %v1424 = vpop.f32.mrf.mxu0
  %v1425 = vadd.f32 %v1323, %v1424
  %1426 = vmatmul.f32.gmra.mxu0 %v1363
  %v1427 = vpop.f32.mrf.mxu0
  %v1428 = vadd.f32 %v1323, %v1427
  %1429 = vmatmul.f32.gmra.mxu0 %v1366
  %v1430 = vpop.f32.mrf.mxu0
  %v1431 = vadd.f32 %v1323, %v1430
  %1432 = vmatmul.f32.gmra.mxu0 %v1369
  %v1433 = vpop.f32.mrf.mxu0
  %v1434 = vadd.f32 %v1323, %v1433
  %1435 = vmatmul.f32.gmra.mxu0 %v1372
  %v1436 = vpop.f32.mrf.mxu0
  %v1437 = vadd.f32 %v1323, %v1436
  %1438 = vdwg.mxu0
  %v1439 = vxor.u32 %v1392, 2147483648
  %v1440 = vxor.u32 %v1395, 2147483648
  %v1441 = vxor.u32 %v1398, 2147483648
  %v1442 = vxor.u32 %v1401, 2147483648
  %v1443 = vxor.u32 %v1404, 2147483648
  %v1444 = vxor.u32 %v1407, 2147483648
  %v1445 = vxor.u32 %v1410, 2147483648
  %v1446 = vxor.u32 %v1413, 2147483648
  %v1447 = vxor.u32 %v1416, 2147483648
  %v1448 = vxor.u32 %v1419, 2147483648
  %v1449 = vxor.u32 %v1422, 2147483648
  %v1450 = vxor.u32 %v1425, 2147483648
  %v1451 = vxor.u32 %v1428, 2147483648
  %v1452 = vxor.u32 %v1431, 2147483648
  %v1453 = vxor.u32 %v1434, 2147483648
  %v1454 = vxor.u32 %v1437, 2147483648
  %v1455 = vmul.f32 %v1439, 1.442695
  %v1456 = vpow.pop %v1455
  %v1457 = vmul.f32 %v1440, 1.442695
  %v1458 = vpow.pop %v1457
  %v1459 = vmul.f32 %v1441, 1.442695
  %v1460 = vpow.pop %v1459
  %v1461 = vmul.f32 %v1442, 1.442695
  %v1462 = vpow.pop %v1461
  %v1463 = vmul.f32 %v1443, 1.442695
  %v1464 = vpow.pop %v1463
  %v1465 = vmul.f32 %v1444, 1.442695
  %v1466 = vpow.pop %v1465
  %v1467 = vmul.f32 %v1445, 1.442695
  %v1468 = vpow.pop %v1467
  %v1469 = vmul.f32 %v1446, 1.442695
  %v1470 = vpow.pop %v1469
  %v1471 = vmul.f32 %v1447, 1.442695
  %v1472 = vpow.pop %v1471
  %v1473 = vmul.f32 %v1448, 1.442695
  %v1474 = vpow.pop %v1473
  %v1475 = vmul.f32 %v1449, 1.442695
  %v1476 = vpow.pop %v1475
  %v1477 = vmul.f32 %v1450, 1.442695
  %v1478 = vpow.pop %v1477
  %v1479 = vmul.f32 %v1451, 1.442695
  %v1480 = vpow.pop %v1479
  %v1481 = vmul.f32 %v1452, 1.442695
  %v1482 = vpow.pop %v1481
  %v1483 = vmul.f32 %v1453, 1.442695
  %v1484 = vpow.pop %v1483
  %v1485 = vmul.f32 %v1454, 1.442695
  %v1486 = vpow.pop %v1485
  %v1487 = vadd.f32 %v1456, 1.0
  %v1488 = vadd.f32 %v1458, 1.0
  %v1489 = vadd.f32 %v1460, 1.0
  %v1490 = vadd.f32 %v1462, 1.0
  %v1491 = vadd.f32 %v1464, 1.0
  %v1492 = vadd.f32 %v1466, 1.0
  %v1493 = vadd.f32 %v1468, 1.0
  %v1494 = vadd.f32 %v1470, 1.0
  %v1495 = vadd.f32 %v1472, 1.0
  %v1496 = vadd.f32 %v1474, 1.0
  %v1497 = vadd.f32 %v1476, 1.0
  %v1498 = vadd.f32 %v1478, 1.0
  %v1499 = vadd.f32 %v1480, 1.0
  %v1500 = vadd.f32 %v1482, 1.0
  %v1501 = vadd.f32 %v1484, 1.0
  %v1502 = vadd.f32 %v1486, 1.0
  %v1503 = vrcp.pop %v1487
  %v1504 = vmul.f32 %v1487, %v1503
  %v1505 = vsub.f32 1.0, %v1504
  %v1506 = vmul.f32 %v1503, %v1505
  %v1507 = vadd.f32 %v1503, %v1506
  %vm1508 = vweird.f32 %v1487
  %vm1509 = vweird.f32 %v1503
  %vm1510 = vmor %vm1508, %vm1509
  %v1511 = vsel %vm1510, %v1503, %v1507
  %v1512 = vand.u32 2147483647, %v1487
  %vm1513 = vcmp.eq.f32.partialorder %v1512, 8.507059e+37
  %v1514 = vand.u32 %v1487, 2147483648
  %v1515 = vor.u32 1.1754944e-38, %v1514
  %v1516 = vsel %vm1513, %v1515, %v1511
  %v1517 = vmul.f32 1.0, %v1516
  %v1518 = vrcp.pop %v1488
  %v1519 = vmul.f32 %v1488, %v1518
  %v1520 = vsub.f32 1.0, %v1519
  %v1521 = vmul.f32 %v1518, %v1520
  %v1522 = vadd.f32 %v1518, %v1521
  %vm1523 = vweird.f32 %v1488
  %vm1524 = vweird.f32 %v1518
  %vm1525 = vmor %vm1523, %vm1524
  %v1526 = vsel %vm1525, %v1518, %v1522
  %v1527 = vand.u32 2147483647, %v1488
  %vm1528 = vcmp.eq.f32.partialorder %v1527, 8.507059e+37
  %v1529 = vand.u32 %v1488, 2147483648
  %v1530 = vor.u32 1.1754944e-38, %v1529
  %v1531 = vsel %vm1528, %v1530, %v1526
  %v1532 = vmul.f32 1.0, %v1531
  %v1533 = vrcp.pop %v1489
  %v1534 = vmul.f32 %v1489, %v1533
  %v1535 = vsub.f32 1.0, %v1534
  %v1536 = vmul.f32 %v1533, %v1535
  %v1537 = vadd.f32 %v1533, %v1536
  %vm1538 = vweird.f32 %v1489
  %vm1539 = vweird.f32 %v1533
  %vm1540 = vmor %vm1538, %vm1539
  %v1541 = vsel %vm1540, %v1533, %v1537
  %v1542 = vand.u32 2147483647, %v1489
  %vm1543 = vcmp.eq.f32.partialorder %v1542, 8.507059e+37
  %v1544 = vand.u32 %v1489, 2147483648
  %v1545 = vor.u32 1.1754944e-38, %v1544
  %v1546 = vsel %vm1543, %v1545, %v1541
  %v1547 = vmul.f32 1.0, %v1546
  %v1548 = vrcp.pop %v1490
  %v1549 = vmul.f32 %v1490, %v1548
  %v1550 = vsub.f32 1.0, %v1549
  %v1551 = vmul.f32 %v1548, %v1550
  %v1552 = vadd.f32 %v1548, %v1551
  %vm1553 = vweird.f32 %v1490
  %vm1554 = vweird.f32 %v1548
  %vm1555 = vmor %vm1553, %vm1554
  %v1556 = vsel %vm1555, %v1548, %v1552
  %v1557 = vand.u32 2147483647, %v1490
  %vm1558 = vcmp.eq.f32.partialorder %v1557, 8.507059e+37
  %v1559 = vand.u32 %v1490, 2147483648
  %v1560 = vor.u32 1.1754944e-38, %v1559
  %v1561 = vsel %vm1558, %v1560, %v1556
  %v1562 = vmul.f32 1.0, %v1561
  %v1563 = vrcp.pop %v1491
  %v1564 = vmul.f32 %v1491, %v1563
  %v1565 = vsub.f32 1.0, %v1564
  %v1566 = vmul.f32 %v1563, %v1565
  %v1567 = vadd.f32 %v1563, %v1566
  %vm1568 = vweird.f32 %v1491
  %vm1569 = vweird.f32 %v1563
  %vm1570 = vmor %vm1568, %vm1569
  %v1571 = vsel %vm1570, %v1563, %v1567
  %v1572 = vand.u32 2147483647, %v1491
  %vm1573 = vcmp.eq.f32.partialorder %v1572, 8.507059e+37
  %v1574 = vand.u32 %v1491, 2147483648
  %v1575 = vor.u32 1.1754944e-38, %v1574
  %v1576 = vsel %vm1573, %v1575, %v1571
  %v1577 = vmul.f32 1.0, %v1576
  %v1578 = vrcp.pop %v1492
  %v1579 = vmul.f32 %v1492, %v1578
  %v1580 = vsub.f32 1.0, %v1579
  %v1581 = vmul.f32 %v1578, %v1580
  %v1582 = vadd.f32 %v1578, %v1581
  %vm1583 = vweird.f32 %v1492
  %vm1584 = vweird.f32 %v1578
  %vm1585 = vmor %vm1583, %vm1584
  %v1586 = vsel %vm1585, %v1578, %v1582
  %v1587 = vand.u32 2147483647, %v1492
  %vm1588 = vcmp.eq.f32.partialorder %v1587, 8.507059e+37
  %v1589 = vand.u32 %v1492, 2147483648
  %v1590 = vor.u32 1.1754944e-38, %v1589
  %v1591 = vsel %vm1588, %v1590, %v1586
  %v1592 = vmul.f32 1.0, %v1591
  %v1593 = vrcp.pop %v1493
  %v1594 = vmul.f32 %v1493, %v1593
  %v1595 = vsub.f32 1.0, %v1594
  %v1596 = vmul.f32 %v1593, %v1595
  %v1597 = vadd.f32 %v1593, %v1596
  %vm1598 = vweird.f32 %v1493
  %vm1599 = vweird.f32 %v1593
  %vm1600 = vmor %vm1598, %vm1599
  %v1601 = vsel %vm1600, %v1593, %v1597
  %v1602 = vand.u32 2147483647, %v1493
  %vm1603 = vcmp.eq.f32.partialorder %v1602, 8.507059e+37
  %v1604 = vand.u32 %v1493, 2147483648
  %v1605 = vor.u32 1.1754944e-38, %v1604
  %v1606 = vsel %vm1603, %v1605, %v1601
  %v1607 = vmul.f32 1.0, %v1606
  %v1608 = vrcp.pop %v1494
  %v1609 = vmul.f32 %v1494, %v1608
  %v1610 = vsub.f32 1.0, %v1609
  %v1611 = vmul.f32 %v1608, %v1610
  %v1612 = vadd.f32 %v1608, %v1611
  %vm1613 = vweird.f32 %v1494
  %vm1614 = vweird.f32 %v1608
  %vm1615 = vmor %vm1613, %vm1614
  %v1616 = vsel %vm1615, %v1608, %v1612
  %v1617 = vand.u32 2147483647, %v1494
  %vm1618 = vcmp.eq.f32.partialorder %v1617, 8.507059e+37
  %v1619 = vand.u32 %v1494, 2147483648
  %v1620 = vor.u32 1.1754944e-38, %v1619
  %v1621 = vsel %vm1618, %v1620, %v1616
  %v1622 = vmul.f32 1.0, %v1621
  %v1623 = vrcp.pop %v1495
  %v1624 = vmul.f32 %v1495, %v1623
  %v1625 = vsub.f32 1.0, %v1624
  %v1626 = vmul.f32 %v1623, %v1625
  %v1627 = vadd.f32 %v1623, %v1626
  %vm1628 = vweird.f32 %v1495
  %vm1629 = vweird.f32 %v1623
  %vm1630 = vmor %vm1628, %vm1629
  %v1631 = vsel %vm1630, %v1623, %v1627
  %v1632 = vand.u32 2147483647, %v1495
  %vm1633 = vcmp.eq.f32.partialorder %v1632, 8.507059e+37
  %v1634 = vand.u32 %v1495, 2147483648
  %v1635 = vor.u32 1.1754944e-38, %v1634
  %v1636 = vsel %vm1633, %v1635, %v1631
  %v1637 = vmul.f32 1.0, %v1636
  %v1638 = vrcp.pop %v1496
  %v1639 = vmul.f32 %v1496, %v1638
  %v1640 = vsub.f32 1.0, %v1639
  %v1641 = vmul.f32 %v1638, %v1640
  %v1642 = vadd.f32 %v1638, %v1641
  %vm1643 = vweird.f32 %v1496
  %vm1644 = vweird.f32 %v1638
  %vm1645 = vmor %vm1643, %vm1644
  %v1646 = vsel %vm1645, %v1638, %v1642
  %v1647 = vand.u32 2147483647, %v1496
  %vm1648 = vcmp.eq.f32.partialorder %v1647, 8.507059e+37
  %v1649 = vand.u32 %v1496, 2147483648
  %v1650 = vor.u32 1.1754944e-38, %v1649
  %v1651 = vsel %vm1648, %v1650, %v1646
  %v1652 = vmul.f32 1.0, %v1651
  %v1653 = vrcp.pop %v1497
  %v1654 = vmul.f32 %v1497, %v1653
  %v1655 = vsub.f32 1.0, %v1654
  %v1656 = vmul.f32 %v1653, %v1655
  %v1657 = vadd.f32 %v1653, %v1656
  %vm1658 = vweird.f32 %v1497
  %vm1659 = vweird.f32 %v1653
  %vm1660 = vmor %vm1658, %vm1659
  %v1661 = vsel %vm1660, %v1653, %v1657
  %v1662 = vand.u32 2147483647, %v1497
  %vm1663 = vcmp.eq.f32.partialorder %v1662, 8.507059e+37
  %v1664 = vand.u32 %v1497, 2147483648
  %v1665 = vor.u32 1.1754944e-38, %v1664
  %v1666 = vsel %vm1663, %v1665, %v1661
  %v1667 = vmul.f32 1.0, %v1666
  %v1668 = vrcp.pop %v1498
  %v1669 = vmul.f32 %v1498, %v1668
  %v1670 = vsub.f32 1.0, %v1669
  %v1671 = vmul.f32 %v1668, %v1670
  %v1672 = vadd.f32 %v1668, %v1671
  %vm1673 = vweird.f32 %v1498
  %vm1674 = vweird.f32 %v1668
  %vm1675 = vmor %vm1673, %vm1674
  %v1676 = vsel %vm1675, %v1668, %v1672
  %v1677 = vand.u32 2147483647, %v1498
  %vm1678 = vcmp.eq.f32.partialorder %v1677, 8.507059e+37
  %v1679 = vand.u32 %v1498, 2147483648
  %v1680 = vor.u32 1.1754944e-38, %v1679
  %v1681 = vsel %vm1678, %v1680, %v1676
  %v1682 = vmul.f32 1.0, %v1681
  %v1683 = vrcp.pop %v1499
  %v1684 = vmul.f32 %v1499, %v1683
  %v1685 = vsub.f32 1.0, %v1684
  %v1686 = vmul.f32 %v1683, %v1685
  %v1687 = vadd.f32 %v1683, %v1686
  %vm1688 = vweird.f32 %v1499
  %vm1689 = vweird.f32 %v1683
  %vm1690 = vmor %vm1688, %vm1689
  %v1691 = vsel %vm1690, %v1683, %v1687
  %v1692 = vand.u32 2147483647, %v1499
  %vm1693 = vcmp.eq.f32.partialorder %v1692, 8.507059e+37
  %v1694 = vand.u32 %v1499, 2147483648
  %v1695 = vor.u32 1.1754944e-38, %v1694
  %v1696 = vsel %vm1693, %v1695, %v1691
  %v1697 = vmul.f32 1.0, %v1696
  %v1698 = vrcp.pop %v1500
  %v1699 = vmul.f32 %v1500, %v1698
  %v1700 = vsub.f32 1.0, %v1699
  %v1701 = vmul.f32 %v1698, %v1700
  %v1702 = vadd.f32 %v1698, %v1701
  %vm1703 = vweird.f32 %v1500
  %vm1704 = vweird.f32 %v1698
  %vm1705 = vmor %vm1703, %vm1704
  %v1706 = vsel %vm1705, %v1698, %v1702
  %v1707 = vand.u32 2147483647, %v1500
  %vm1708 = vcmp.eq.f32.partialorder %v1707, 8.507059e+37
  %v1709 = vand.u32 %v1500, 2147483648
  %v1710 = vor.u32 1.1754944e-38, %v1709
  %v1711 = vsel %vm1708, %v1710, %v1706
  %v1712 = vmul.f32 1.0, %v1711
  %v1713 = vrcp.pop %v1501
  %v1714 = vmul.f32 %v1501, %v1713
  %v1715 = vsub.f32 1.0, %v1714
  %v1716 = vmul.f32 %v1713, %v1715
  %v1717 = vadd.f32 %v1713, %v1716
  %vm1718 = vweird.f32 %v1501
  %vm1719 = vweird.f32 %v1713
  %vm1720 = vmor %vm1718, %vm1719
  %v1721 = vsel %vm1720, %v1713, %v1717
  %v1722 = vand.u32 2147483647, %v1501
  %vm1723 = vcmp.eq.f32.partialorder %v1722, 8.507059e+37
  %v1724 = vand.u32 %v1501, 2147483648
  %v1725 = vor.u32 1.1754944e-38, %v1724
  %v1726 = vsel %vm1723, %v1725, %v1721
  %v1727 = vmul.f32 1.0, %v1726
  %v1728 = vrcp.pop %v1502
  %v1729 = vmul.f32 %v1502, %v1728
  %v1730 = vsub.f32 1.0, %v1729
  %v1731 = vmul.f32 %v1728, %v1730
  %v1732 = vadd.f32 %v1728, %v1731
  %vm1733 = vweird.f32 %v1502
  %vm1734 = vweird.f32 %v1728
  %vm1735 = vmor %vm1733, %vm1734
  %v1736 = vsel %vm1735, %v1728, %v1732
  %v1737 = vand.u32 2147483647, %v1502
  %vm1738 = vcmp.eq.f32.partialorder %v1737, 8.507059e+37
  %v1739 = vand.u32 %v1502, 2147483648
  %v1740 = vor.u32 1.1754944e-38, %v1739
  %v1741 = vsel %vm1738, %v1740, %v1736
  %v1742 = vmul.f32 1.0, %v1741
  %v1744 = vsel %vm155, %v322, 0
  %v1747 = vsel %vm155, %v325, 0
  %v1750 = vsel %vm155, %v328, 0
  %v1753 = vsel %vm155, %v331, 0
  %v1756 = vsel %vm155, %v334, 0
  %v1759 = vsel %vm155, %v337, 0
  %v1762 = vsel %vm155, %v340, 0
  %v1765 = vsel %vm155, %v343, 0
  %v1768 = vsel %vm155, %v346, 0
  %v1771 = vsel %vm155, %v349, 0
  %v1774 = vsel %vm155, %v352, 0
  %v1777 = vsel %vm155, %v355, 0
  %v1780 = vsel %vm155, %v358, 0
  %v1783 = vsel %vm155, %v361, 0
  %v1786 = vsel %vm155, %v364, 0
  %v1789 = vsel %vm155, %v367, 0
  %v1792 = vsel %vm155, %v370, 0
  %v1795 = vsel %vm155, %v373, 0
  %v1798 = vsel %vm155, %v376, 0
  %v1801 = vsel %vm155, %v379, 0
  %v1804 = vsel %vm155, %v382, 0
  %v1807 = vsel %vm155, %v385, 0
  %v1810 = vsel %vm155, %v388, 0
  %v1813 = vsel %vm155, %v391, 0
  %v1816 = vsel %vm155, %v394, 0
  %v1819 = vsel %vm155, %v397, 0
  %v1822 = vsel %vm155, %v400, 0
  %v1825 = vsel %vm155, %v403, 0
  %v1828 = vsel %vm155, %v406, 0
  %v1831 = vsel %vm155, %v409, 0
  %v1834 = vsel %vm155, %v412, 0
  %v1837 = vsel %vm155, %v415, 0
  %v1840 = vsel %vm155, %v418, 0
  %v1843 = vsel %vm155, %v421, 0
  %v1846 = vsel %vm155, %v424, 0
  %v1849 = vsel %vm155, %v427, 0
  %v1852 = vsel %vm155, %v430, 0
  %v1855 = vsel %vm155, %v433, 0
  %v1858 = vsel %vm155, %v436, 0
  %v1861 = vsel %vm155, %v439, 0
  %v1864 = vsel %vm155, %v442, 0
  %v1867 = vsel %vm155, %v445, 0
  %v1870 = vsel %vm155, %v448, 0
  %v1873 = vsel %vm155, %v451, 0
  %v1876 = vsel %vm155, %v454, 0
  %v1879 = vsel %vm155, %v457, 0
  %v1882 = vsel %vm155, %v460, 0
  %v1885 = vsel %vm155, %v463, 0
  %v1888 = vsel %vm300, %v72, 0
  %1890 = vmatpush.msra.mxu0 0.0
  %1891 = vmatpush.msra.mxu0 0.0
  %1892 = vmatpush.msra.mxu0 0.0
  %1893 = vmatpush.msra.mxu0 0.0
  %1894 = vmatpush.msra.mxu0 0.0
  %1895 = vmatpush.msra.mxu0 0.0
  %1896 = vmatpush.msra.mxu0 0.0
  %1897 = vmatpush.msra.mxu0 0.0
  %1898 = vmatpush.msra.mxu0 0.0
  %1899 = vmatpush.msra.mxu0 0.0
  %1900 = vmatpush.msra.mxu0 0.0
  %1901 = vmatpush.msra.mxu0 0.0
  %1902 = vmatpush.msra.mxu0 0.0
  %1903 = vmatpush.msra.mxu0 %v1888
  %1904 = vmatpush.msra.mxu0 %v71
  %1905 = vmatpush.msra.mxu0 %v70
  %1906 = vmatmul.f32.gmra.mxu0 %v1744
  %v1907 = vpop.f32.mrf.mxu0
  %v1908 = vadd.f32 0.0, %v1907
  %1909 = vmatmul.f32.gmra.mxu0 %v1747
  %v1910 = vpop.f32.mrf.mxu0
  %v1911 = vadd.f32 0.0, %v1910
  %1912 = vmatmul.f32.gmra.mxu0 %v1750
  %v1913 = vpop.f32.mrf.mxu0
  %v1914 = vadd.f32 0.0, %v1913
  %1915 = vmatmul.f32.gmra.mxu0 %v1753
  %v1916 = vpop.f32.mrf.mxu0
  %v1917 = vadd.f32 0.0, %v1916
  %1918 = vmatmul.f32.gmra.mxu0 %v1756
  %v1919 = vpop.f32.mrf.mxu0
  %v1920 = vadd.f32 0.0, %v1919
  %1921 = vmatmul.f32.gmra.mxu0 %v1759
  %v1922 = vpop.f32.mrf.mxu0
  %v1923 = vadd.f32 0.0, %v1922
  %1924 = vmatmul.f32.gmra.mxu0 %v1762
  %v1925 = vpop.f32.mrf.mxu0
  %v1926 = vadd.f32 0.0, %v1925
  %1927 = vmatmul.f32.gmra.mxu0 %v1765
  %v1928 = vpop.f32.mrf.mxu0
  %v1929 = vadd.f32 0.0, %v1928
  %1930 = vmatmul.f32.gmra.mxu0 %v1768
  %v1931 = vpop.f32.mrf.mxu0
  %v1932 = vadd.f32 0.0, %v1931
  %1933 = vmatmul.f32.gmra.mxu0 %v1771
  %v1934 = vpop.f32.mrf.mxu0
  %v1935 = vadd.f32 0.0, %v1934
  %1936 = vmatmul.f32.gmra.mxu0 %v1774
  %v1937 = vpop.f32.mrf.mxu0
  %v1938 = vadd.f32 0.0, %v1937
  %1939 = vmatmul.f32.gmra.mxu0 %v1777
  %v1940 = vpop.f32.mrf.mxu0
  %v1941 = vadd.f32 0.0, %v1940
  %1942 = vmatmul.f32.gmra.mxu0 %v1780
  %v1943 = vpop.f32.mrf.mxu0
  %v1944 = vadd.f32 0.0, %v1943
  %1945 = vmatmul.f32.gmra.mxu0 %v1783
  %v1946 = vpop.f32.mrf.mxu0
  %v1947 = vadd.f32 0.0, %v1946
  %1948 = vmatmul.f32.gmra.mxu0 %v1786
  %v1949 = vpop.f32.mrf.mxu0
  %v1950 = vadd.f32 0.0, %v1949
  %1951 = vmatmul.f32.gmra.mxu0 %v1789
  %v1952 = vpop.f32.mrf.mxu0
  %v1953 = vadd.f32 0.0, %v1952
  %1954 = vmatmul.f32.gmra.mxu0 %v1792
  %v1955 = vpop.f32.mrf.mxu0
  %v1956 = vadd.f32 0.0, %v1955
  %1957 = vmatmul.f32.gmra.mxu0 %v1795
  %v1958 = vpop.f32.mrf.mxu0
  %v1959 = vadd.f32 0.0, %v1958
  %1960 = vmatmul.f32.gmra.mxu0 %v1798
  %v1961 = vpop.f32.mrf.mxu0
  %v1962 = vadd.f32 0.0, %v1961
  %1963 = vmatmul.f32.gmra.mxu0 %v1801
  %v1964 = vpop.f32.mrf.mxu0
  %v1965 = vadd.f32 0.0, %v1964
  %1966 = vmatmul.f32.gmra.mxu0 %v1804
  %v1967 = vpop.f32.mrf.mxu0
  %v1968 = vadd.f32 0.0, %v1967
  %1969 = vmatmul.f32.gmra.mxu0 %v1807
  %v1970 = vpop.f32.mrf.mxu0
  %v1971 = vadd.f32 0.0, %v1970
  %1972 = vmatmul.f32.gmra.mxu0 %v1810
  %v1973 = vpop.f32.mrf.mxu0
  %v1974 = vadd.f32 0.0, %v1973
  %1975 = vmatmul.f32.gmra.mxu0 %v1813
  %v1976 = vpop.f32.mrf.mxu0
  %v1977 = vadd.f32 0.0, %v1976
  %1978 = vmatmul.f32.gmra.mxu0 %v1816
  %v1979 = vpop.f32.mrf.mxu0
  %v1980 = vadd.f32 0.0, %v1979
  %1981 = vmatmul.f32.gmra.mxu0 %v1819
  %v1982 = vpop.f32.mrf.mxu0
  %v1983 = vadd.f32 0.0, %v1982
  %1984 = vmatmul.f32.gmra.mxu0 %v1822
  %v1985 = vpop.f32.mrf.mxu0
  %v1986 = vadd.f32 0.0, %v1985
  %1987 = vmatmul.f32.gmra.mxu0 %v1825
  %v1988 = vpop.f32.mrf.mxu0
  %v1989 = vadd.f32 0.0, %v1988
  %1990 = vmatmul.f32.gmra.mxu0 %v1828
  %v1991 = vpop.f32.mrf.mxu0
  %v1992 = vadd.f32 0.0, %v1991
  %1993 = vmatmul.f32.gmra.mxu0 %v1831
  %v1994 = vpop.f32.mrf.mxu0
  %v1995 = vadd.f32 0.0, %v1994
  %1996 = vmatmul.f32.gmra.mxu0 %v1834
  %v1997 = vpop.f32.mrf.mxu0
  %v1998 = vadd.f32 0.0, %v1997
  %1999 = vmatmul.f32.gmra.mxu0 %v1837
  %v2000 = vpop.f32.mrf.mxu0
  %v2001 = vadd.f32 0.0, %v2000
  %2002 = vmatmul.f32.gmra.mxu0 %v1840
  %v2003 = vpop.f32.mrf.mxu0
  %v2004 = vadd.f32 0.0, %v2003
  %2005 = vmatmul.f32.gmra.mxu0 %v1843
  %v2006 = vpop.f32.mrf.mxu0
  %v2007 = vadd.f32 0.0, %v2006
  %2008 = vmatmul.f32.gmra.mxu0 %v1846
  %v2009 = vpop.f32.mrf.mxu0
  %v2010 = vadd.f32 0.0, %v2009
  %2011 = vmatmul.f32.gmra.mxu0 %v1849
  %v2012 = vpop.f32.mrf.mxu0
  %v2013 = vadd.f32 0.0, %v2012
  %2014 = vmatmul.f32.gmra.mxu0 %v1852
  %v2015 = vpop.f32.mrf.mxu0
  %v2016 = vadd.f32 0.0, %v2015
  %2017 = vmatmul.f32.gmra.mxu0 %v1855
  %v2018 = vpop.f32.mrf.mxu0
  %v2019 = vadd.f32 0.0, %v2018
  %2020 = vmatmul.f32.gmra.mxu0 %v1858
  %v2021 = vpop.f32.mrf.mxu0
  %v2022 = vadd.f32 0.0, %v2021
  %2023 = vmatmul.f32.gmra.mxu0 %v1861
  %v2024 = vpop.f32.mrf.mxu0
  %v2025 = vadd.f32 0.0, %v2024
  %2026 = vmatmul.f32.gmra.mxu0 %v1864
  %v2027 = vpop.f32.mrf.mxu0
  %v2028 = vadd.f32 0.0, %v2027
  %2029 = vmatmul.f32.gmra.mxu0 %v1867
  %v2030 = vpop.f32.mrf.mxu0
  %v2031 = vadd.f32 0.0, %v2030
  %2032 = vmatmul.f32.gmra.mxu0 %v1870
  %v2033 = vpop.f32.mrf.mxu0
  %v2034 = vadd.f32 0.0, %v2033
  %2035 = vmatmul.f32.gmra.mxu0 %v1873
  %v2036 = vpop.f32.mrf.mxu0
  %v2037 = vadd.f32 0.0, %v2036
  %2038 = vmatmul.f32.gmra.mxu0 %v1876
  %v2039 = vpop.f32.mrf.mxu0
  %v2040 = vadd.f32 0.0, %v2039
  %2041 = vmatmul.f32.gmra.mxu0 %v1879
  %v2042 = vpop.f32.mrf.mxu0
  %v2043 = vadd.f32 0.0, %v2042
  %2044 = vmatmul.f32.gmra.mxu0 %v1882
  %v2045 = vpop.f32.mrf.mxu0
  %v2046 = vadd.f32 0.0, %v2045
  %2047 = vmatmul.f32.gmra.mxu0 %v1885
  %v2048 = vpop.f32.mrf.mxu0
  %v2049 = vadd.f32 0.0, %v2048
  %2050 = vdwg.mxu0
  %v2051 = vmul.f32 %v1908, %v1517
  %v2052 = vmul.f32 %v1911, %v1532
  %v2053 = vmul.f32 %v1914, %v1547
  %v2054 = vmul.f32 %v1917, %v1562
  %v2055 = vmul.f32 %v1920, %v1577
  %v2056 = vmul.f32 %v1923, %v1592
  %v2057 = vmul.f32 %v1926, %v1607
  %v2058 = vmul.f32 %v1929, %v1622
  %v2059 = vmul.f32 %v1932, %v1637
  %v2060 = vmul.f32 %v1935, %v1652
  %v2061 = vmul.f32 %v1938, %v1667
  %v2062 = vmul.f32 %v1941, %v1682
  %v2063 = vmul.f32 %v1944, %v1697
  %v2064 = vmul.f32 %v1947, %v1712
  %v2065 = vmul.f32 %v1950, %v1727
  %v2066 = vmul.f32 %v1953, %v1742
  %v2067 = vmul.f32 %v1956, %v1517
  %v2068 = vmul.f32 %v1959, %v1532
  %v2069 = vmul.f32 %v1962, %v1547
  %v2070 = vmul.f32 %v1965, %v1562
  %v2071 = vmul.f32 %v1968, %v1577
  %v2072 = vmul.f32 %v1971, %v1592
  %v2073 = vmul.f32 %v1974, %v1607
  %v2074 = vmul.f32 %v1977, %v1622
  %v2075 = vmul.f32 %v1980, %v1637
  %v2076 = vmul.f32 %v1983, %v1652
  %v2077 = vmul.f32 %v1986, %v1667
  %v2078 = vmul.f32 %v1989, %v1682
  %v2079 = vmul.f32 %v1992, %v1697
  %v2080 = vmul.f32 %v1995, %v1712
  %v2081 = vmul.f32 %v1998, %v1727
  %v2082 = vmul.f32 %v2001, %v1742
  %v2083 = vmul.f32 %v2004, %v1517
  %v2084 = vmul.f32 %v2007, %v1532
  %v2085 = vmul.f32 %v2010, %v1547
  %v2086 = vmul.f32 %v2013, %v1562
  %v2087 = vmul.f32 %v2016, %v1577
  %v2088 = vmul.f32 %v2019, %v1592
  %v2089 = vmul.f32 %v2022, %v1607
  %v2090 = vmul.f32 %v2025, %v1622
  %v2091 = vmul.f32 %v2028, %v1637
  %v2092 = vmul.f32 %v2031, %v1652
  %v2093 = vmul.f32 %v2034, %v1667
  %v2094 = vmul.f32 %v2037, %v1682
  %v2095 = vmul.f32 %v2040, %v1697
  %v2096 = vmul.f32 %v2043, %v1712
  %v2097 = vmul.f32 %v2046, %v1727
  %v2098 = vmul.f32 %v2049, %v1742
  %vm2099 = vcmask 64512
  %v2101 = vsel %vm2099, %v2051, 0
  %v2104 = vsel %vm2099, %v2052, 0
  %v2107 = vsel %vm2099, %v2053, 0
  %v2110 = vsel %vm2099, %v2054, 0
  %v2113 = vsel %vm2099, %v2055, 0
  %v2116 = vsel %vm2099, %v2056, 0
  %v2119 = vsel %vm2099, %v2057, 0
  %v2122 = vsel %vm2099, %v2058, 0
  %v2125 = vsel %vm2099, %v2059, 0
  %v2128 = vsel %vm2099, %v2060, 0
  %v2131 = vsel %vm2099, %v2061, 0
  %v2134 = vsel %vm2099, %v2062, 0
  %v2137 = vsel %vm2099, %v2063, 0
  %v2140 = vsel %vm2099, %v2064, 0
  %v2143 = vsel %vm2099, %v2065, 0
  %v2146 = vsel %vm2099, %v2066, 0
  %v2149 = vsel %vm2099, %v2067, 0
  %v2152 = vsel %vm2099, %v2068, 0
  %v2155 = vsel %vm2099, %v2069, 0
  %v2158 = vsel %vm2099, %v2070, 0
  %v2161 = vsel %vm2099, %v2071, 0
  %v2164 = vsel %vm2099, %v2072, 0
  %v2167 = vsel %vm2099, %v2073, 0
  %v2170 = vsel %vm2099, %v2074, 0
  %v2173 = vsel %vm2099, %v2075, 0
  %v2176 = vsel %vm2099, %v2076, 0
  %v2179 = vsel %vm2099, %v2077, 0
  %v2182 = vsel %vm2099, %v2078, 0
  %v2185 = vsel %vm2099, %v2079, 0
  %v2188 = vsel %vm2099, %v2080, 0
  %v2191 = vsel %vm2099, %v2081, 0
  %v2194 = vsel %vm2099, %v2082, 0
  %v2197 = vsel %vm2099, %v2083, 0
  %v2200 = vsel %vm2099, %v2084, 0
  %v2203 = vsel %vm2099, %v2085, 0
  %v2206 = vsel %vm2099, %v2086, 0
  %v2209 = vsel %vm2099, %v2087, 0
  %v2212 = vsel %vm2099, %v2088, 0
  %v2215 = vsel %vm2099, %v2089, 0
  %v2218 = vsel %vm2099, %v2090, 0
  %v2221 = vsel %vm2099, %v2091, 0
  %v2224 = vsel %vm2099, %v2092, 0
  %v2227 = vsel %vm2099, %v2093, 0
  %v2230 = vsel %vm2099, %v2094, 0
  %v2233 = vsel %vm2099, %v2095, 0
  %v2236 = vsel %vm2099, %v2096, 0
  %v2239 = vsel %vm2099, %v2097, 0
  %v2242 = vsel %vm2099, %v2098, 0
  %2244 = vmatpush.msra.mxu0 0.0
  %2245 = vmatpush.msra.mxu0 0.0
  %2246 = vmatpush.msra.mxu0 0.0
  %2247 = vmatpush.msra.mxu0 0.0
  %2248 = vmatpush.msra.mxu0 0.0
  %2249 = vmatpush.msra.mxu0 0.0
  %2250 = vmatpush.msra.mxu0 0.0
  %2251 = vmatpush.msra.mxu0 0.0
  %2252 = vmatpush.msra.mxu0 0.0
  %2253 = vmatpush.msra.mxu0 0.0
  %2254 = vmatpush.msra.mxu0 0.0
  %2255 = vmatpush.msra.mxu0 0.0
  %2256 = vmatpush.msra.mxu0 0.0
  %2257 = vmatpush.msra.mxu0 0.0
  %2258 = vmatpush.msra.mxu0 0.0
  %2259 = vmatpush.msra.mxu0 %v78
  %2260 = vmatmul.f32.gmra.mxu0 %v2101
  %v2261 = vpop.f32.mrf.mxu0
  %v2262 = vadd.f32 0.0, %v2261
  %2263 = vmatmul.f32.gmra.mxu0 %v2104
  %v2264 = vpop.f32.mrf.mxu0
  %v2265 = vadd.f32 0.0, %v2264
  %2266 = vmatmul.f32.gmra.mxu0 %v2107
  %v2267 = vpop.f32.mrf.mxu0
  %v2268 = vadd.f32 0.0, %v2267
  %2269 = vmatmul.f32.gmra.mxu0 %v2110
  %v2270 = vpop.f32.mrf.mxu0
  %v2271 = vadd.f32 0.0, %v2270
  %2272 = vmatmul.f32.gmra.mxu0 %v2113
  %v2273 = vpop.f32.mrf.mxu0
  %v2274 = vadd.f32 0.0, %v2273
  %2275 = vmatmul.f32.gmra.mxu0 %v2116
  %v2276 = vpop.f32.mrf.mxu0
  %v2277 = vadd.f32 0.0, %v2276
  %2278 = vmatmul.f32.gmra.mxu0 %v2119
  %v2279 = vpop.f32.mrf.mxu0
  %v2280 = vadd.f32 0.0, %v2279
  %2281 = vmatmul.f32.gmra.mxu0 %v2122
  %v2282 = vpop.f32.mrf.mxu0
  %v2283 = vadd.f32 0.0, %v2282
  %2284 = vmatmul.f32.gmra.mxu0 %v2125
  %v2285 = vpop.f32.mrf.mxu0
  %v2286 = vadd.f32 0.0, %v2285
  %2287 = vmatmul.f32.gmra.mxu0 %v2128
  %v2288 = vpop.f32.mrf.mxu0
  %v2289 = vadd.f32 0.0, %v2288
  %2290 = vmatmul.f32.gmra.mxu0 %v2131
  %v2291 = vpop.f32.mrf.mxu0
  %v2292 = vadd.f32 0.0, %v2291
  %2293 = vmatmul.f32.gmra.mxu0 %v2134
  %v2294 = vpop.f32.mrf.mxu0
  %v2295 = vadd.f32 0.0, %v2294
  %2296 = vmatmul.f32.gmra.mxu0 %v2137
  %v2297 = vpop.f32.mrf.mxu0
  %v2298 = vadd.f32 0.0, %v2297
  %2299 = vmatmul.f32.gmra.mxu0 %v2140
  %v2300 = vpop.f32.mrf.mxu0
  %v2301 = vadd.f32 0.0, %v2300
  %2302 = vmatmul.f32.gmra.mxu0 %v2143
  %v2303 = vpop.f32.mrf.mxu0
  %v2304 = vadd.f32 0.0, %v2303
  %2305 = vmatmul.f32.gmra.mxu0 %v2146
  %v2306 = vpop.f32.mrf.mxu0
  %v2307 = vadd.f32 0.0, %v2306
  %2308 = vmatmul.f32.gmra.mxu0 %v2149
  %v2309 = vpop.f32.mrf.mxu0
  %v2310 = vadd.f32 0.0, %v2309
  %2311 = vmatmul.f32.gmra.mxu0 %v2152
  %v2312 = vpop.f32.mrf.mxu0
  %v2313 = vadd.f32 0.0, %v2312
  %2314 = vmatmul.f32.gmra.mxu0 %v2155
  %v2315 = vpop.f32.mrf.mxu0
  %v2316 = vadd.f32 0.0, %v2315
  %2317 = vmatmul.f32.gmra.mxu0 %v2158
  %v2318 = vpop.f32.mrf.mxu0
  %v2319 = vadd.f32 0.0, %v2318
  %2320 = vmatmul.f32.gmra.mxu0 %v2161
  %v2321 = vpop.f32.mrf.mxu0
  %v2322 = vadd.f32 0.0, %v2321
  %2323 = vmatmul.f32.gmra.mxu0 %v2164
  %v2324 = vpop.f32.mrf.mxu0
  %v2325 = vadd.f32 0.0, %v2324
  %2326 = vmatmul.f32.gmra.mxu0 %v2167
  %v2327 = vpop.f32.mrf.mxu0
  %v2328 = vadd.f32 0.0, %v2327
  %2329 = vmatmul.f32.gmra.mxu0 %v2170
  %v2330 = vpop.f32.mrf.mxu0
  %v2331 = vadd.f32 0.0, %v2330
  %2332 = vmatmul.f32.gmra.mxu0 %v2173
  %v2333 = vpop.f32.mrf.mxu0
  %v2334 = vadd.f32 0.0, %v2333
  %2335 = vmatmul.f32.gmra.mxu0 %v2176
  %v2336 = vpop.f32.mrf.mxu0
  %v2337 = vadd.f32 0.0, %v2336
  %2338 = vmatmul.f32.gmra.mxu0 %v2179
  %v2339 = vpop.f32.mrf.mxu0
  %v2340 = vadd.f32 0.0, %v2339
  %2341 = vmatmul.f32.gmra.mxu0 %v2182
  %v2342 = vpop.f32.mrf.mxu0
  %v2343 = vadd.f32 0.0, %v2342
  %2344 = vmatmul.f32.gmra.mxu0 %v2185
  %v2345 = vpop.f32.mrf.mxu0
  %v2346 = vadd.f32 0.0, %v2345
  %2347 = vmatmul.f32.gmra.mxu0 %v2188
  %v2348 = vpop.f32.mrf.mxu0
  %v2349 = vadd.f32 0.0, %v2348
  %2350 = vmatmul.f32.gmra.mxu0 %v2191
  %v2351 = vpop.f32.mrf.mxu0
  %v2352 = vadd.f32 0.0, %v2351
  %2353 = vmatmul.f32.gmra.mxu0 %v2194
  %v2354 = vpop.f32.mrf.mxu0
  %v2355 = vadd.f32 0.0, %v2354
  %2356 = vmatmul.f32.gmra.mxu0 %v2197
  %v2357 = vpop.f32.mrf.mxu0
  %v2358 = vadd.f32 0.0, %v2357
  %2359 = vmatmul.f32.gmra.mxu0 %v2200
  %v2360 = vpop.f32.mrf.mxu0
  %v2361 = vadd.f32 0.0, %v2360
  %2362 = vmatmul.f32.gmra.mxu0 %v2203
  %v2363 = vpop.f32.mrf.mxu0
  %v2364 = vadd.f32 0.0, %v2363
  %2365 = vmatmul.f32.gmra.mxu0 %v2206
  %v2366 = vpop.f32.mrf.mxu0
  %v2367 = vadd.f32 0.0, %v2366
  %2368 = vmatmul.f32.gmra.mxu0 %v2209
  %v2369 = vpop.f32.mrf.mxu0
  %v2370 = vadd.f32 0.0, %v2369
  %2371 = vmatmul.f32.gmra.mxu0 %v2212
  %v2372 = vpop.f32.mrf.mxu0
  %v2373 = vadd.f32 0.0, %v2372
  %2374 = vmatmul.f32.gmra.mxu0 %v2215
  %v2375 = vpop.f32.mrf.mxu0
  %v2376 = vadd.f32 0.0, %v2375
  %2377 = vmatmul.f32.gmra.mxu0 %v2218
  %v2378 = vpop.f32.mrf.mxu0
  %v2379 = vadd.f32 0.0, %v2378
  %2380 = vmatmul.f32.gmra.mxu0 %v2221
  %v2381 = vpop.f32.mrf.mxu0
  %v2382 = vadd.f32 0.0, %v2381
  %2383 = vmatmul.f32.gmra.mxu0 %v2224
  %v2384 = vpop.f32.mrf.mxu0
  %v2385 = vadd.f32 0.0, %v2384
  %2386 = vmatmul.f32.gmra.mxu0 %v2227
  %v2387 = vpop.f32.mrf.mxu0
  %v2388 = vadd.f32 0.0, %v2387
  %2389 = vmatmul.f32.gmra.mxu0 %v2230
  %v2390 = vpop.f32.mrf.mxu0
  %v2391 = vadd.f32 0.0, %v2390
  %2392 = vmatmul.f32.gmra.mxu0 %v2233
  %v2393 = vpop.f32.mrf.mxu0
  %v2394 = vadd.f32 0.0, %v2393
  %2395 = vmatmul.f32.gmra.mxu0 %v2236
  %v2396 = vpop.f32.mrf.mxu0
  %v2397 = vadd.f32 0.0, %v2396
  %2398 = vmatmul.f32.gmra.mxu0 %v2239
  %v2399 = vpop.f32.mrf.mxu0
  %v2400 = vadd.f32 0.0, %v2399
  %2401 = vmatmul.f32.gmra.mxu0 %v2242
  %v2402 = vpop.f32.mrf.mxu0
  %v2403 = vadd.f32 0.0, %v2402
  %2404 = vdwg.mxu0
  %v2405 = vmul.f32 %v2262, %v2262
  %v2406 = vmul.f32 %v2265, %v2265
  %v2407 = vmul.f32 %v2268, %v2268
  %v2408 = vmul.f32 %v2271, %v2271
  %v2409 = vmul.f32 %v2274, %v2274
  %v2410 = vmul.f32 %v2277, %v2277
  %v2411 = vmul.f32 %v2280, %v2280
  %v2412 = vmul.f32 %v2283, %v2283
  %v2413 = vmul.f32 %v2286, %v2286
  %v2414 = vmul.f32 %v2289, %v2289
  %v2415 = vmul.f32 %v2292, %v2292
  %v2416 = vmul.f32 %v2295, %v2295
  %v2417 = vmul.f32 %v2298, %v2298
  %v2418 = vmul.f32 %v2301, %v2301
  %v2419 = vmul.f32 %v2304, %v2304
  %v2420 = vmul.f32 %v2307, %v2307
  %v2421 = vmul.f32 %v2310, %v2310
  %v2422 = vmul.f32 %v2313, %v2313
  %v2423 = vmul.f32 %v2316, %v2316
  %v2424 = vmul.f32 %v2319, %v2319
  %v2425 = vmul.f32 %v2322, %v2322
  %v2426 = vmul.f32 %v2325, %v2325
  %v2427 = vmul.f32 %v2328, %v2328
  %v2428 = vmul.f32 %v2331, %v2331
  %v2429 = vmul.f32 %v2334, %v2334
  %v2430 = vmul.f32 %v2337, %v2337
  %v2431 = vmul.f32 %v2340, %v2340
  %v2432 = vmul.f32 %v2343, %v2343
  %v2433 = vmul.f32 %v2346, %v2346
  %v2434 = vmul.f32 %v2349, %v2349
  %v2435 = vmul.f32 %v2352, %v2352
  %v2436 = vmul.f32 %v2355, %v2355
  %v2437 = vadd.f32 %v2405, %v2421
  %v2438 = vadd.f32 %v2406, %v2422
  %v2439 = vadd.f32 %v2407, %v2423
  %v2440 = vadd.f32 %v2408, %v2424
  %v2441 = vadd.f32 %v2409, %v2425
  %v2442 = vadd.f32 %v2410, %v2426
  %v2443 = vadd.f32 %v2411, %v2427
  %v2444 = vadd.f32 %v2412, %v2428
  %v2445 = vadd.f32 %v2413, %v2429
  %v2446 = vadd.f32 %v2414, %v2430
  %v2447 = vadd.f32 %v2415, %v2431
  %v2448 = vadd.f32 %v2416, %v2432
  %v2449 = vadd.f32 %v2417, %v2433
  %v2450 = vadd.f32 %v2418, %v2434
  %v2451 = vadd.f32 %v2419, %v2435
  %v2452 = vadd.f32 %v2420, %v2436
  %v2453 = vmul.f32 %v2358, %v2358
  %v2454 = vmul.f32 %v2361, %v2361
  %v2455 = vmul.f32 %v2364, %v2364
  %v2456 = vmul.f32 %v2367, %v2367
  %v2457 = vmul.f32 %v2370, %v2370
  %v2458 = vmul.f32 %v2373, %v2373
  %v2459 = vmul.f32 %v2376, %v2376
  %v2460 = vmul.f32 %v2379, %v2379
  %v2461 = vmul.f32 %v2382, %v2382
  %v2462 = vmul.f32 %v2385, %v2385
  %v2463 = vmul.f32 %v2388, %v2388
  %v2464 = vmul.f32 %v2391, %v2391
  %v2465 = vmul.f32 %v2394, %v2394
  %v2466 = vmul.f32 %v2397, %v2397
  %v2467 = vmul.f32 %v2400, %v2400
  %v2468 = vmul.f32 %v2403, %v2403
  %v2469 = vadd.f32 %v2437, %v2453
  %v2470 = vadd.f32 %v2438, %v2454
  %v2471 = vadd.f32 %v2439, %v2455
  %v2472 = vadd.f32 %v2440, %v2456
  %v2473 = vadd.f32 %v2441, %v2457
  %v2474 = vadd.f32 %v2442, %v2458
  %v2475 = vadd.f32 %v2443, %v2459
  %v2476 = vadd.f32 %v2444, %v2460
  %v2477 = vadd.f32 %v2445, %v2461
  %v2478 = vadd.f32 %v2446, %v2462
  %v2479 = vadd.f32 %v2447, %v2463
  %v2480 = vadd.f32 %v2448, %v2464
  %v2481 = vadd.f32 %v2449, %v2465
  %v2482 = vadd.f32 %v2450, %v2466
  %v2483 = vadd.f32 %v2451, %v2467
  %v2484 = vadd.f32 %v2452, %v2468
  %v2485 = vadd.f32 %v2469, 1e-08
  %v2486 = vadd.f32 %v2470, 1e-08
  %v2487 = vadd.f32 %v2471, 1e-08
  %v2488 = vadd.f32 %v2472, 1e-08
  %v2489 = vadd.f32 %v2473, 1e-08
  %v2490 = vadd.f32 %v2474, 1e-08
  %v2491 = vadd.f32 %v2475, 1e-08
  %v2492 = vadd.f32 %v2476, 1e-08
  %v2493 = vadd.f32 %v2477, 1e-08
  %v2494 = vadd.f32 %v2478, 1e-08
  %v2495 = vadd.f32 %v2479, 1e-08
  %v2496 = vadd.f32 %v2480, 1e-08
  %v2497 = vadd.f32 %v2481, 1e-08
  %v2498 = vadd.f32 %v2482, 1e-08
  %v2499 = vadd.f32 %v2483, 1e-08
  %v2500 = vadd.f32 %v2484, 1e-08
  %v2501 = vrsqrt.pop %v2485
  %v2502 = vmul.f32 %v2501, %v2485
  %v2503 = vmul.f32 %v2502, %v2501
  %v2504 = vmul.f32 0.5, %v2503
  %v2505 = vsub.f32 1.5, %v2504
  %v2506 = vmul.f32 %v2501, %v2505
  %v2507 = vmul.f32 %v2485, %v2506
  %vm2508 = vcmp.eq.f32.partialorder %v2485, inf
  %v2509 = vsel %vm2508, %v2485, %v2507
  %vm2510 = vcmp.eq.f32.partialorder %v2485, 0.0
  %v2511 = vand.u32 %v2485, 2147483648
  %v2512 = vsel %vm2510, %v2511, %v2509
  %v2513 = vrsqrt.pop %v2486
  %v2514 = vmul.f32 %v2513, %v2486
  %v2515 = vmul.f32 %v2514, %v2513
  %v2516 = vmul.f32 0.5, %v2515
  %v2517 = vsub.f32 1.5, %v2516
  %v2518 = vmul.f32 %v2513, %v2517
  %v2519 = vmul.f32 %v2486, %v2518
  %vm2520 = vcmp.eq.f32.partialorder %v2486, inf
  %v2521 = vsel %vm2520, %v2486, %v2519
  %vm2522 = vcmp.eq.f32.partialorder %v2486, 0.0
  %v2523 = vand.u32 %v2486, 2147483648
  %v2524 = vsel %vm2522, %v2523, %v2521
  %v2525 = vrsqrt.pop %v2487
  %v2526 = vmul.f32 %v2525, %v2487
  %v2527 = vmul.f32 %v2526, %v2525
  %v2528 = vmul.f32 0.5, %v2527
  %v2529 = vsub.f32 1.5, %v2528
  %v2530 = vmul.f32 %v2525, %v2529
  %v2531 = vmul.f32 %v2487, %v2530
  %vm2532 = vcmp.eq.f32.partialorder %v2487, inf
  %v2533 = vsel %vm2532, %v2487, %v2531
  %vm2534 = vcmp.eq.f32.partialorder %v2487, 0.0
  %v2535 = vand.u32 %v2487, 2147483648
  %v2536 = vsel %vm2534, %v2535, %v2533
  %v2537 = vrsqrt.pop %v2488
  %v2538 = vmul.f32 %v2537, %v2488
  %v2539 = vmul.f32 %v2538, %v2537
  %v2540 = vmul.f32 0.5, %v2539
  %v2541 = vsub.f32 1.5, %v2540
  %v2542 = vmul.f32 %v2537, %v2541
  %v2543 = vmul.f32 %v2488, %v2542
  %vm2544 = vcmp.eq.f32.partialorder %v2488, inf
  %v2545 = vsel %vm2544, %v2488, %v2543
  %vm2546 = vcmp.eq.f32.partialorder %v2488, 0.0
  %v2547 = vand.u32 %v2488, 2147483648
  %v2548 = vsel %vm2546, %v2547, %v2545
  %v2549 = vrsqrt.pop %v2489
  %v2550 = vmul.f32 %v2549, %v2489
  %v2551 = vmul.f32 %v2550, %v2549
  %v2552 = vmul.f32 0.5, %v2551
  %v2553 = vsub.f32 1.5, %v2552
  %v2554 = vmul.f32 %v2549, %v2553
  %v2555 = vmul.f32 %v2489, %v2554
  %vm2556 = vcmp.eq.f32.partialorder %v2489, inf
  %v2557 = vsel %vm2556, %v2489, %v2555
  %vm2558 = vcmp.eq.f32.partialorder %v2489, 0.0
  %v2559 = vand.u32 %v2489, 2147483648
  %v2560 = vsel %vm2558, %v2559, %v2557
  %v2561 = vrsqrt.pop %v2490
  %v2562 = vmul.f32 %v2561, %v2490
  %v2563 = vmul.f32 %v2562, %v2561
  %v2564 = vmul.f32 0.5, %v2563
  %v2565 = vsub.f32 1.5, %v2564
  %v2566 = vmul.f32 %v2561, %v2565
  %v2567 = vmul.f32 %v2490, %v2566
  %vm2568 = vcmp.eq.f32.partialorder %v2490, inf
  %v2569 = vsel %vm2568, %v2490, %v2567
  %vm2570 = vcmp.eq.f32.partialorder %v2490, 0.0
  %v2571 = vand.u32 %v2490, 2147483648
  %v2572 = vsel %vm2570, %v2571, %v2569
  %v2573 = vrsqrt.pop %v2491
  %v2574 = vmul.f32 %v2573, %v2491
  %v2575 = vmul.f32 %v2574, %v2573
  %v2576 = vmul.f32 0.5, %v2575
  %v2577 = vsub.f32 1.5, %v2576
  %v2578 = vmul.f32 %v2573, %v2577
  %v2579 = vmul.f32 %v2491, %v2578
  %vm2580 = vcmp.eq.f32.partialorder %v2491, inf
  %v2581 = vsel %vm2580, %v2491, %v2579
  %vm2582 = vcmp.eq.f32.partialorder %v2491, 0.0
  %v2583 = vand.u32 %v2491, 2147483648
  %v2584 = vsel %vm2582, %v2583, %v2581
  %v2585 = vrsqrt.pop %v2492
  %v2586 = vmul.f32 %v2585, %v2492
  %v2587 = vmul.f32 %v2586, %v2585
  %v2588 = vmul.f32 0.5, %v2587
  %v2589 = vsub.f32 1.5, %v2588
  %v2590 = vmul.f32 %v2585, %v2589
  %v2591 = vmul.f32 %v2492, %v2590
  %vm2592 = vcmp.eq.f32.partialorder %v2492, inf
  %v2593 = vsel %vm2592, %v2492, %v2591
  %vm2594 = vcmp.eq.f32.partialorder %v2492, 0.0
  %v2595 = vand.u32 %v2492, 2147483648
  %v2596 = vsel %vm2594, %v2595, %v2593
  %v2597 = vrsqrt.pop %v2493
  %v2598 = vmul.f32 %v2597, %v2493
  %v2599 = vmul.f32 %v2598, %v2597
  %v2600 = vmul.f32 0.5, %v2599
  %v2601 = vsub.f32 1.5, %v2600
  %v2602 = vmul.f32 %v2597, %v2601
  %v2603 = vmul.f32 %v2493, %v2602
  %vm2604 = vcmp.eq.f32.partialorder %v2493, inf
  %v2605 = vsel %vm2604, %v2493, %v2603
  %vm2606 = vcmp.eq.f32.partialorder %v2493, 0.0
  %v2607 = vand.u32 %v2493, 2147483648
  %v2608 = vsel %vm2606, %v2607, %v2605
  %v2609 = vrsqrt.pop %v2494
  %v2610 = vmul.f32 %v2609, %v2494
  %v2611 = vmul.f32 %v2610, %v2609
  %v2612 = vmul.f32 0.5, %v2611
  %v2613 = vsub.f32 1.5, %v2612
  %v2614 = vmul.f32 %v2609, %v2613
  %v2615 = vmul.f32 %v2494, %v2614
  %vm2616 = vcmp.eq.f32.partialorder %v2494, inf
  %v2617 = vsel %vm2616, %v2494, %v2615
  %vm2618 = vcmp.eq.f32.partialorder %v2494, 0.0
  %v2619 = vand.u32 %v2494, 2147483648
  %v2620 = vsel %vm2618, %v2619, %v2617
  %v2621 = vrsqrt.pop %v2495
  %v2622 = vmul.f32 %v2621, %v2495
  %v2623 = vmul.f32 %v2622, %v2621
  %v2624 = vmul.f32 0.5, %v2623
  %v2625 = vsub.f32 1.5, %v2624
  %v2626 = vmul.f32 %v2621, %v2625
  %v2627 = vmul.f32 %v2495, %v2626
  %vm2628 = vcmp.eq.f32.partialorder %v2495, inf
  %v2629 = vsel %vm2628, %v2495, %v2627
  %vm2630 = vcmp.eq.f32.partialorder %v2495, 0.0
  %v2631 = vand.u32 %v2495, 2147483648
  %v2632 = vsel %vm2630, %v2631, %v2629
  %v2633 = vrsqrt.pop %v2496
  %v2634 = vmul.f32 %v2633, %v2496
  %v2635 = vmul.f32 %v2634, %v2633
  %v2636 = vmul.f32 0.5, %v2635
  %v2637 = vsub.f32 1.5, %v2636
  %v2638 = vmul.f32 %v2633, %v2637
  %v2639 = vmul.f32 %v2496, %v2638
  %vm2640 = vcmp.eq.f32.partialorder %v2496, inf
  %v2641 = vsel %vm2640, %v2496, %v2639
  %vm2642 = vcmp.eq.f32.partialorder %v2496, 0.0
  %v2643 = vand.u32 %v2496, 2147483648
  %v2644 = vsel %vm2642, %v2643, %v2641
  %v2645 = vrsqrt.pop %v2497
  %v2646 = vmul.f32 %v2645, %v2497
  %v2647 = vmul.f32 %v2646, %v2645
  %v2648 = vmul.f32 0.5, %v2647
  %v2649 = vsub.f32 1.5, %v2648
  %v2650 = vmul.f32 %v2645, %v2649
  %v2651 = vmul.f32 %v2497, %v2650
  %vm2652 = vcmp.eq.f32.partialorder %v2497, inf
  %v2653 = vsel %vm2652, %v2497, %v2651
  %vm2654 = vcmp.eq.f32.partialorder %v2497, 0.0
  %v2655 = vand.u32 %v2497, 2147483648
  %v2656 = vsel %vm2654, %v2655, %v2653
  %v2657 = vrsqrt.pop %v2498
  %v2658 = vmul.f32 %v2657, %v2498
  %v2659 = vmul.f32 %v2658, %v2657
  %v2660 = vmul.f32 0.5, %v2659
  %v2661 = vsub.f32 1.5, %v2660
  %v2662 = vmul.f32 %v2657, %v2661
  %v2663 = vmul.f32 %v2498, %v2662
  %vm2664 = vcmp.eq.f32.partialorder %v2498, inf
  %v2665 = vsel %vm2664, %v2498, %v2663
  %vm2666 = vcmp.eq.f32.partialorder %v2498, 0.0
  %v2667 = vand.u32 %v2498, 2147483648
  %v2668 = vsel %vm2666, %v2667, %v2665
  %v2669 = vrsqrt.pop %v2499
  %v2670 = vmul.f32 %v2669, %v2499
  %v2671 = vmul.f32 %v2670, %v2669
  %v2672 = vmul.f32 0.5, %v2671
  %v2673 = vsub.f32 1.5, %v2672
  %v2674 = vmul.f32 %v2669, %v2673
  %v2675 = vmul.f32 %v2499, %v2674
  %vm2676 = vcmp.eq.f32.partialorder %v2499, inf
  %v2677 = vsel %vm2676, %v2499, %v2675
  %vm2678 = vcmp.eq.f32.partialorder %v2499, 0.0
  %v2679 = vand.u32 %v2499, 2147483648
  %v2680 = vsel %vm2678, %v2679, %v2677
  %v2681 = vrsqrt.pop %v2500
  %v2682 = vmul.f32 %v2681, %v2500
  %v2683 = vmul.f32 %v2682, %v2681
  %v2684 = vmul.f32 0.5, %v2683
  %v2685 = vsub.f32 1.5, %v2684
  %v2686 = vmul.f32 %v2681, %v2685
  %v2687 = vmul.f32 %v2500, %v2686
  %vm2688 = vcmp.eq.f32.partialorder %v2500, inf
  %v2689 = vsel %vm2688, %v2500, %v2687
  %vm2690 = vcmp.eq.f32.partialorder %v2500, 0.0
  %v2691 = vand.u32 %v2500, 2147483648
  %v2692 = vsel %vm2690, %v2691, %v2689
  %v2694 = vsel %vm2099, %v2512, 0
  %v2697 = vsel %vm2099, %v2524, 0
  %v2700 = vsel %vm2099, %v2536, 0
  %v2703 = vsel %vm2099, %v2548, 0
  %v2706 = vsel %vm2099, %v2560, 0
  %v2709 = vsel %vm2099, %v2572, 0
  %v2712 = vsel %vm2099, %v2584, 0
  %v2715 = vsel %vm2099, %v2596, 0
  %v2718 = vsel %vm2099, %v2608, 0
  %v2721 = vsel %vm2099, %v2620, 0
  %v2724 = vsel %vm2099, %v2632, 0
  %v2727 = vsel %vm2099, %v2644, 0
  %v2730 = vsel %vm2099, %v2656, 0
  %v2733 = vsel %vm2099, %v2668, 0
  %v2736 = vsel %vm2099, %v2680, 0
  %v2739 = vsel %vm2099, %v2692, 0
  %2741 = vmatpush.msra.mxu0 0.0
  %2742 = vmatpush.msra.mxu0 0.0
  %2743 = vmatpush.msra.mxu0 0.0
  %2744 = vmatpush.msra.mxu0 0.0
  %2745 = vmatpush.msra.mxu0 0.0
  %2746 = vmatpush.msra.mxu0 0.0
  %2747 = vmatpush.msra.mxu0 0.0
  %2748 = vmatpush.msra.mxu0 0.0
  %2749 = vmatpush.msra.mxu0 0.0
  %2750 = vmatpush.msra.mxu0 0.0
  %2751 = vmatpush.msra.mxu0 0.0
  %2752 = vmatpush.msra.mxu0 0.0
  %2753 = vmatpush.msra.mxu0 0.0
  %2754 = vmatpush.msra.mxu0 0.0
  %2755 = vmatpush.msra.mxu0 0.0
  %2756 = vmatpush.msra.mxu0 %v83
  %2757 = vmatmul.f32.gmra.mxu0 %v2694
  %v2758 = vpop.f32.mrf.mxu0
  %v2759 = vadd.f32 0.0, %v2758
  %2760 = vmatmul.f32.gmra.mxu0 %v2697
  %v2761 = vpop.f32.mrf.mxu0
  %v2762 = vadd.f32 0.0, %v2761
  %2763 = vmatmul.f32.gmra.mxu0 %v2700
  %v2764 = vpop.f32.mrf.mxu0
  %v2765 = vadd.f32 0.0, %v2764
  %2766 = vmatmul.f32.gmra.mxu0 %v2703
  %v2767 = vpop.f32.mrf.mxu0
  %v2768 = vadd.f32 0.0, %v2767
  %2769 = vmatmul.f32.gmra.mxu0 %v2706
  %v2770 = vpop.f32.mrf.mxu0
  %v2771 = vadd.f32 0.0, %v2770
  %2772 = vmatmul.f32.gmra.mxu0 %v2709
  %v2773 = vpop.f32.mrf.mxu0
  %v2774 = vadd.f32 0.0, %v2773
  %2775 = vmatmul.f32.gmra.mxu0 %v2712
  %v2776 = vpop.f32.mrf.mxu0
  %v2777 = vadd.f32 0.0, %v2776
  %2778 = vmatmul.f32.gmra.mxu0 %v2715
  %v2779 = vpop.f32.mrf.mxu0
  %v2780 = vadd.f32 0.0, %v2779
  %2781 = vmatmul.f32.gmra.mxu0 %v2718
  %v2782 = vpop.f32.mrf.mxu0
  %v2783 = vadd.f32 0.0, %v2782
  %2784 = vmatmul.f32.gmra.mxu0 %v2721
  %v2785 = vpop.f32.mrf.mxu0
  %v2786 = vadd.f32 0.0, %v2785
  %2787 = vmatmul.f32.gmra.mxu0 %v2724
  %v2788 = vpop.f32.mrf.mxu0
  %v2789 = vadd.f32 0.0, %v2788
  %2790 = vmatmul.f32.gmra.mxu0 %v2727
  %v2791 = vpop.f32.mrf.mxu0
  %v2792 = vadd.f32 0.0, %v2791
  %2793 = vmatmul.f32.gmra.mxu0 %v2730
  %v2794 = vpop.f32.mrf.mxu0
  %v2795 = vadd.f32 0.0, %v2794
  %2796 = vmatmul.f32.gmra.mxu0 %v2733
  %v2797 = vpop.f32.mrf.mxu0
  %v2798 = vadd.f32 0.0, %v2797
  %2799 = vmatmul.f32.gmra.mxu0 %v2736
  %v2800 = vpop.f32.mrf.mxu0
  %v2801 = vadd.f32 0.0, %v2800
  %2802 = vmatmul.f32.gmra.mxu0 %v2739
  %v2803 = vpop.f32.mrf.mxu0
  %v2804 = vadd.f32 0.0, %v2803
  %2805 = vdwg.mxu0
  %2806 = vmatpush.msra.mxu0 0.0
  %2807 = vmatpush.msra.mxu0 0.0
  %2808 = vmatpush.msra.mxu0 0.0
  %2809 = vmatpush.msra.mxu0 0.0
  %2810 = vmatpush.msra.mxu0 0.0
  %2811 = vmatpush.msra.mxu0 0.0
  %2812 = vmatpush.msra.mxu0 0.0
  %2813 = vmatpush.msra.mxu0 0.0
  %2814 = vmatpush.msra.mxu0 0.0
  %2815 = vmatpush.msra.mxu0 0.0
  %2816 = vmatpush.msra.mxu0 0.0
  %2817 = vmatpush.msra.mxu0 0.0
  %2818 = vmatpush.msra.mxu0 %v82
  %2819 = vmatpush.msra.mxu0 %v81
  %2820 = vmatpush.msra.mxu0 %v80
  %2821 = vmatpush.msra.mxu0 %v79
  %2822 = vmatmul.f32.gmra.mxu0 %v1327
  %v2823 = vpop.f32.mrf.mxu0
  %v2824 = vadd.f32 %v2759, %v2823
  %2825 = vmatmul.f32.gmra.mxu0 %v1330
  %v2826 = vpop.f32.mrf.mxu0
  %v2827 = vadd.f32 %v2762, %v2826
  %2828 = vmatmul.f32.gmra.mxu0 %v1333
  %v2829 = vpop.f32.mrf.mxu0
  %v2830 = vadd.f32 %v2765, %v2829
  %2831 = vmatmul.f32.gmra.mxu0 %v1336
  %v2832 = vpop.f32.mrf.mxu0
  %v2833 = vadd.f32 %v2768, %v2832
  %2834 = vmatmul.f32.gmra.mxu0 %v1339
  %v2835 = vpop.f32.mrf.mxu0
  %v2836 = vadd.f32 %v2771, %v2835
  %2837 = vmatmul.f32.gmra.mxu0 %v1342
  %v2838 = vpop.f32.mrf.mxu0
  %v2839 = vadd.f32 %v2774, %v2838
  %2840 = vmatmul.f32.gmra.mxu0 %v1345
  %v2841 = vpop.f32.mrf.mxu0
  %v2842 = vadd.f32 %v2777, %v2841
  %2843 = vmatmul.f32.gmra.mxu0 %v1348
  %v2844 = vpop.f32.mrf.mxu0
  %v2845 = vadd.f32 %v2780, %v2844
  %2846 = vmatmul.f32.gmra.mxu0 %v1351
  %v2847 = vpop.f32.mrf.mxu0
  %v2848 = vadd.f32 %v2783, %v2847
  %2849 = vmatmul.f32.gmra.mxu0 %v1354
  %v2850 = vpop.f32.mrf.mxu0
  %v2851 = vadd.f32 %v2786, %v2850
  %2852 = vmatmul.f32.gmra.mxu0 %v1357
  %v2853 = vpop.f32.mrf.mxu0
  %v2854 = vadd.f32 %v2789, %v2853
  %2855 = vmatmul.f32.gmra.mxu0 %v1360
  %v2856 = vpop.f32.mrf.mxu0
  %v2857 = vadd.f32 %v2792, %v2856
  %2858 = vmatmul.f32.gmra.mxu0 %v1363
  %v2859 = vpop.f32.mrf.mxu0
  %v2860 = vadd.f32 %v2795, %v2859
  %2861 = vmatmul.f32.gmra.mxu0 %v1366
  %v2862 = vpop.f32.mrf.mxu0
  %v2863 = vadd.f32 %v2798, %v2862
  %2864 = vmatmul.f32.gmra.mxu0 %v1369
  %v2865 = vpop.f32.mrf.mxu0
  %v2866 = vadd.f32 %v2801, %v2865
  %2867 = vmatmul.f32.gmra.mxu0 %v1372
  %v2868 = vpop.f32.mrf.mxu0
  %v2869 = vadd.f32 %v2804, %v2868
  %2870 = vdwg.mxu0
  %v2872 = vperm.slane %v84, 0
  %v2874 = vadd.f32 %v2824, %v2872
  %v2875 = vadd.f32 %v2827, %v2872
  %v2876 = vadd.f32 %v2830, %v2872
  %v2877 = vadd.f32 %v2833, %v2872
  %v2878 = vadd.f32 %v2836, %v2872
  %v2879 = vadd.f32 %v2839, %v2872
  %v2880 = vadd.f32 %v2842, %v2872
  %v2881 = vadd.f32 %v2845, %v2872
  %v2882 = vadd.f32 %v2848, %v2872
  %v2883 = vadd.f32 %v2851, %v2872
  %v2884 = vadd.f32 %v2854, %v2872
  %v2885 = vadd.f32 %v2857, %v2872
  %v2886 = vadd.f32 %v2860, %v2872
  %v2887 = vadd.f32 %v2863, %v2872
  %v2888 = vadd.f32 %v2866, %v2872
  %v2889 = vadd.f32 %v2869, %v2872
  %v2891 = vperm.slane %v90, 0
  %v2894 = vsel %vm1325, %v2874, 0
  %v2897 = vsel %vm1325, %v2875, 0
  %v2900 = vsel %vm1325, %v2876, 0
  %v2903 = vsel %vm1325, %v2877, 0
  %v2906 = vsel %vm1325, %v2878, 0
  %v2909 = vsel %vm1325, %v2879, 0
  %v2912 = vsel %vm1325, %v2880, 0
  %v2915 = vsel %vm1325, %v2881, 0
  %v2918 = vsel %vm1325, %v2882, 0
  %v2921 = vsel %vm1325, %v2883, 0
  %v2924 = vsel %vm1325, %v2884, 0
  %v2927 = vsel %vm1325, %v2885, 0
  %v2930 = vsel %vm1325, %v2886, 0
  %v2933 = vsel %vm1325, %v2887, 0
  %v2936 = vsel %vm1325, %v2888, 0
  %v2939 = vsel %vm1325, %v2889, 0
  %2941 = vmatpush.msra.mxu0 0.0
  %2942 = vmatpush.msra.mxu0 0.0
  %2943 = vmatpush.msra.mxu0 0.0
  %2944 = vmatpush.msra.mxu0 0.0
  %2945 = vmatpush.msra.mxu0 0.0
  %2946 = vmatpush.msra.mxu0 0.0
  %2947 = vmatpush.msra.mxu0 0.0
  %2948 = vmatpush.msra.mxu0 0.0
  %2949 = vmatpush.msra.mxu0 0.0
  %2950 = vmatpush.msra.mxu0 0.0
  %2951 = vmatpush.msra.mxu0 0.0
  %2952 = vmatpush.msra.mxu0 0.0
  %2953 = vmatpush.msra.mxu0 %v89
  %2954 = vmatpush.msra.mxu0 %v88
  %2955 = vmatpush.msra.mxu0 %v87
  %2956 = vmatpush.msra.mxu0 %v86
  %2957 = vmatmul.f32.gmra.mxu0 %v2894
  %v2958 = vpop.f32.mrf.mxu0
  %v2959 = vadd.f32 %v2891, %v2958
  %2960 = vmatmul.f32.gmra.mxu0 %v2897
  %v2961 = vpop.f32.mrf.mxu0
  %v2962 = vadd.f32 %v2891, %v2961
  %2963 = vmatmul.f32.gmra.mxu0 %v2900
  %v2964 = vpop.f32.mrf.mxu0
  %v2965 = vadd.f32 %v2891, %v2964
  %2966 = vmatmul.f32.gmra.mxu0 %v2903
  %v2967 = vpop.f32.mrf.mxu0
  %v2968 = vadd.f32 %v2891, %v2967
  %2969 = vmatmul.f32.gmra.mxu0 %v2906
  %v2970 = vpop.f32.mrf.mxu0
  %v2971 = vadd.f32 %v2891, %v2970
  %2972 = vmatmul.f32.gmra.mxu0 %v2909
  %v2973 = vpop.f32.mrf.mxu0
  %v2974 = vadd.f32 %v2891, %v2973
  %2975 = vmatmul.f32.gmra.mxu0 %v2912
  %v2976 = vpop.f32.mrf.mxu0
  %v2977 = vadd.f32 %v2891, %v2976
  %2978 = vmatmul.f32.gmra.mxu0 %v2915
  %v2979 = vpop.f32.mrf.mxu0
  %v2980 = vadd.f32 %v2891, %v2979
  %2981 = vmatmul.f32.gmra.mxu0 %v2918
  %v2982 = vpop.f32.mrf.mxu0
  %v2983 = vadd.f32 %v2891, %v2982
  %2984 = vmatmul.f32.gmra.mxu0 %v2921
  %v2985 = vpop.f32.mrf.mxu0
  %v2986 = vadd.f32 %v2891, %v2985
  %2987 = vmatmul.f32.gmra.mxu0 %v2924
  %v2988 = vpop.f32.mrf.mxu0
  %v2989 = vadd.f32 %v2891, %v2988
  %2990 = vmatmul.f32.gmra.mxu0 %v2927
  %v2991 = vpop.f32.mrf.mxu0
  %v2992 = vadd.f32 %v2891, %v2991
  %2993 = vmatmul.f32.gmra.mxu0 %v2930
  %v2994 = vpop.f32.mrf.mxu0
  %v2995 = vadd.f32 %v2891, %v2994
  %2996 = vmatmul.f32.gmra.mxu0 %v2933
  %v2997 = vpop.f32.mrf.mxu0
  %v2998 = vadd.f32 %v2891, %v2997
  %2999 = vmatmul.f32.gmra.mxu0 %v2936
  %v3000 = vpop.f32.mrf.mxu0
  %v3001 = vadd.f32 %v2891, %v3000
  %3002 = vmatmul.f32.gmra.mxu0 %v2939
  %v3003 = vpop.f32.mrf.mxu0
  %v3004 = vadd.f32 %v2891, %v3003
  %3005 = vdwg.mxu0
  %v3006 = vxor.u32 %v2959, 2147483648
  %v3007 = vxor.u32 %v2962, 2147483648
  %v3008 = vxor.u32 %v2965, 2147483648
  %v3009 = vxor.u32 %v2968, 2147483648
  %v3010 = vxor.u32 %v2971, 2147483648
  %v3011 = vxor.u32 %v2974, 2147483648
  %v3012 = vxor.u32 %v2977, 2147483648
  %v3013 = vxor.u32 %v2980, 2147483648
  %v3014 = vxor.u32 %v2983, 2147483648
  %v3015 = vxor.u32 %v2986, 2147483648
  %v3016 = vxor.u32 %v2989, 2147483648
  %v3017 = vxor.u32 %v2992, 2147483648
  %v3018 = vxor.u32 %v2995, 2147483648
  %v3019 = vxor.u32 %v2998, 2147483648
  %v3020 = vxor.u32 %v3001, 2147483648
  %v3021 = vxor.u32 %v3004, 2147483648
  %v3022 = vmul.f32 %v3006, 1.442695
  %v3023 = vpow.pop %v3022
  %v3024 = vmul.f32 %v3007, 1.442695
  %v3025 = vpow.pop %v3024
  %v3026 = vmul.f32 %v3008, 1.442695
  %v3027 = vpow.pop %v3026
  %v3028 = vmul.f32 %v3009, 1.442695
  %v3029 = vpow.pop %v3028
  %v3030 = vmul.f32 %v3010, 1.442695
  %v3031 = vpow.pop %v3030
  %v3032 = vmul.f32 %v3011, 1.442695
  %v3033 = vpow.pop %v3032
  %v3034 = vmul.f32 %v3012, 1.442695
  %v3035 = vpow.pop %v3034
  %v3036 = vmul.f32 %v3013, 1.442695
  %v3037 = vpow.pop %v3036
  %v3038 = vmul.f32 %v3014, 1.442695
  %v3039 = vpow.pop %v3038
  %v3040 = vmul.f32 %v3015, 1.442695
  %v3041 = vpow.pop %v3040
  %v3042 = vmul.f32 %v3016, 1.442695
  %v3043 = vpow.pop %v3042
  %v3044 = vmul.f32 %v3017, 1.442695
  %v3045 = vpow.pop %v3044
  %v3046 = vmul.f32 %v3018, 1.442695
  %v3047 = vpow.pop %v3046
  %v3048 = vmul.f32 %v3019, 1.442695
  %v3049 = vpow.pop %v3048
  %v3050 = vmul.f32 %v3020, 1.442695
  %v3051 = vpow.pop %v3050
  %v3052 = vmul.f32 %v3021, 1.442695
  %v3053 = vpow.pop %v3052
  %v3054 = vadd.f32 %v3023, 1.0
  %v3055 = vadd.f32 %v3025, 1.0
  %v3056 = vadd.f32 %v3027, 1.0
  %v3057 = vadd.f32 %v3029, 1.0
  %v3058 = vadd.f32 %v3031, 1.0
  %v3059 = vadd.f32 %v3033, 1.0
  %v3060 = vadd.f32 %v3035, 1.0
  %v3061 = vadd.f32 %v3037, 1.0
  %v3062 = vadd.f32 %v3039, 1.0
  %v3063 = vadd.f32 %v3041, 1.0
  %v3064 = vadd.f32 %v3043, 1.0
  %v3065 = vadd.f32 %v3045, 1.0
  %v3066 = vadd.f32 %v3047, 1.0
  %v3067 = vadd.f32 %v3049, 1.0
  %v3068 = vadd.f32 %v3051, 1.0
  %v3069 = vadd.f32 %v3053, 1.0
  %v3070 = vrcp.pop %v3054
  %v3071 = vmul.f32 %v3054, %v3070
  %v3072 = vsub.f32 1.0, %v3071
  %v3073 = vmul.f32 %v3070, %v3072
  %v3074 = vadd.f32 %v3070, %v3073
  %vm3075 = vweird.f32 %v3054
  %vm3076 = vweird.f32 %v3070
  %vm3077 = vmor %vm3075, %vm3076
  %v3078 = vsel %vm3077, %v3070, %v3074
  %v3079 = vand.u32 2147483647, %v3054
  %vm3080 = vcmp.eq.f32.partialorder %v3079, 8.507059e+37
  %v3081 = vand.u32 %v3054, 2147483648
  %v3082 = vor.u32 1.1754944e-38, %v3081
  %v3083 = vsel %vm3080, %v3082, %v3078
  %v3084 = vmul.f32 1.0, %v3083
  %v3085 = vrcp.pop %v3055
  %v3086 = vmul.f32 %v3055, %v3085
  %v3087 = vsub.f32 1.0, %v3086
  %v3088 = vmul.f32 %v3085, %v3087
  %v3089 = vadd.f32 %v3085, %v3088
  %vm3090 = vweird.f32 %v3055
  %vm3091 = vweird.f32 %v3085
  %vm3092 = vmor %vm3090, %vm3091
  %v3093 = vsel %vm3092, %v3085, %v3089
  %v3094 = vand.u32 2147483647, %v3055
  %vm3095 = vcmp.eq.f32.partialorder %v3094, 8.507059e+37
  %v3096 = vand.u32 %v3055, 2147483648
  %v3097 = vor.u32 1.1754944e-38, %v3096
  %v3098 = vsel %vm3095, %v3097, %v3093
  %v3099 = vmul.f32 1.0, %v3098
  %v3100 = vrcp.pop %v3056
  %v3101 = vmul.f32 %v3056, %v3100
  %v3102 = vsub.f32 1.0, %v3101
  %v3103 = vmul.f32 %v3100, %v3102
  %v3104 = vadd.f32 %v3100, %v3103
  %vm3105 = vweird.f32 %v3056
  %vm3106 = vweird.f32 %v3100
  %vm3107 = vmor %vm3105, %vm3106
  %v3108 = vsel %vm3107, %v3100, %v3104
  %v3109 = vand.u32 2147483647, %v3056
  %vm3110 = vcmp.eq.f32.partialorder %v3109, 8.507059e+37
  %v3111 = vand.u32 %v3056, 2147483648
  %v3112 = vor.u32 1.1754944e-38, %v3111
  %v3113 = vsel %vm3110, %v3112, %v3108
  %v3114 = vmul.f32 1.0, %v3113
  %v3115 = vrcp.pop %v3057
  %v3116 = vmul.f32 %v3057, %v3115
  %v3117 = vsub.f32 1.0, %v3116
  %v3118 = vmul.f32 %v3115, %v3117
  %v3119 = vadd.f32 %v3115, %v3118
  %vm3120 = vweird.f32 %v3057
  %vm3121 = vweird.f32 %v3115
  %vm3122 = vmor %vm3120, %vm3121
  %v3123 = vsel %vm3122, %v3115, %v3119
  %v3124 = vand.u32 2147483647, %v3057
  %vm3125 = vcmp.eq.f32.partialorder %v3124, 8.507059e+37
  %v3126 = vand.u32 %v3057, 2147483648
  %v3127 = vor.u32 1.1754944e-38, %v3126
  %v3128 = vsel %vm3125, %v3127, %v3123
  %v3129 = vmul.f32 1.0, %v3128
  %v3130 = vrcp.pop %v3058
  %v3131 = vmul.f32 %v3058, %v3130
  %v3132 = vsub.f32 1.0, %v3131
  %v3133 = vmul.f32 %v3130, %v3132
  %v3134 = vadd.f32 %v3130, %v3133
  %vm3135 = vweird.f32 %v3058
  %vm3136 = vweird.f32 %v3130
  %vm3137 = vmor %vm3135, %vm3136
  %v3138 = vsel %vm3137, %v3130, %v3134
  %v3139 = vand.u32 2147483647, %v3058
  %vm3140 = vcmp.eq.f32.partialorder %v3139, 8.507059e+37
  %v3141 = vand.u32 %v3058, 2147483648
  %v3142 = vor.u32 1.1754944e-38, %v3141
  %v3143 = vsel %vm3140, %v3142, %v3138
  %v3144 = vmul.f32 1.0, %v3143
  %v3145 = vrcp.pop %v3059
  %v3146 = vmul.f32 %v3059, %v3145
  %v3147 = vsub.f32 1.0, %v3146
  %v3148 = vmul.f32 %v3145, %v3147
  %v3149 = vadd.f32 %v3145, %v3148
  %vm3150 = vweird.f32 %v3059
  %vm3151 = vweird.f32 %v3145
  %vm3152 = vmor %vm3150, %vm3151
  %v3153 = vsel %vm3152, %v3145, %v3149
  %v3154 = vand.u32 2147483647, %v3059
  %vm3155 = vcmp.eq.f32.partialorder %v3154, 8.507059e+37
  %v3156 = vand.u32 %v3059, 2147483648
  %v3157 = vor.u32 1.1754944e-38, %v3156
  %v3158 = vsel %vm3155, %v3157, %v3153
  %v3159 = vmul.f32 1.0, %v3158
  %v3160 = vrcp.pop %v3060
  %v3161 = vmul.f32 %v3060, %v3160
  %v3162 = vsub.f32 1.0, %v3161
  %v3163 = vmul.f32 %v3160, %v3162
  %v3164 = vadd.f32 %v3160, %v3163
  %vm3165 = vweird.f32 %v3060
  %vm3166 = vweird.f32 %v3160
  %vm3167 = vmor %vm3165, %vm3166
  %v3168 = vsel %vm3167, %v3160, %v3164
  %v3169 = vand.u32 2147483647, %v3060
  %vm3170 = vcmp.eq.f32.partialorder %v3169, 8.507059e+37
  %v3171 = vand.u32 %v3060, 2147483648
  %v3172 = vor.u32 1.1754944e-38, %v3171
  %v3173 = vsel %vm3170, %v3172, %v3168
  %v3174 = vmul.f32 1.0, %v3173
  %v3175 = vrcp.pop %v3061
  %v3176 = vmul.f32 %v3061, %v3175
  %v3177 = vsub.f32 1.0, %v3176
  %v3178 = vmul.f32 %v3175, %v3177
  %v3179 = vadd.f32 %v3175, %v3178
  %vm3180 = vweird.f32 %v3061
  %vm3181 = vweird.f32 %v3175
  %vm3182 = vmor %vm3180, %vm3181
  %v3183 = vsel %vm3182, %v3175, %v3179
  %v3184 = vand.u32 2147483647, %v3061
  %vm3185 = vcmp.eq.f32.partialorder %v3184, 8.507059e+37
  %v3186 = vand.u32 %v3061, 2147483648
  %v3187 = vor.u32 1.1754944e-38, %v3186
  %v3188 = vsel %vm3185, %v3187, %v3183
  %v3189 = vmul.f32 1.0, %v3188
  %v3190 = vrcp.pop %v3062
  %v3191 = vmul.f32 %v3062, %v3190
  %v3192 = vsub.f32 1.0, %v3191
  %v3193 = vmul.f32 %v3190, %v3192
  %v3194 = vadd.f32 %v3190, %v3193
  %vm3195 = vweird.f32 %v3062
  %vm3196 = vweird.f32 %v3190
  %vm3197 = vmor %vm3195, %vm3196
  %v3198 = vsel %vm3197, %v3190, %v3194
  %v3199 = vand.u32 2147483647, %v3062
  %vm3200 = vcmp.eq.f32.partialorder %v3199, 8.507059e+37
  %v3201 = vand.u32 %v3062, 2147483648
  %v3202 = vor.u32 1.1754944e-38, %v3201
  %v3203 = vsel %vm3200, %v3202, %v3198
  %v3204 = vmul.f32 1.0, %v3203
  %v3205 = vrcp.pop %v3063
  %v3206 = vmul.f32 %v3063, %v3205
  %v3207 = vsub.f32 1.0, %v3206
  %v3208 = vmul.f32 %v3205, %v3207
  %v3209 = vadd.f32 %v3205, %v3208
  %vm3210 = vweird.f32 %v3063
  %vm3211 = vweird.f32 %v3205
  %vm3212 = vmor %vm3210, %vm3211
  %v3213 = vsel %vm3212, %v3205, %v3209
  %v3214 = vand.u32 2147483647, %v3063
  %vm3215 = vcmp.eq.f32.partialorder %v3214, 8.507059e+37
  %v3216 = vand.u32 %v3063, 2147483648
  %v3217 = vor.u32 1.1754944e-38, %v3216
  %v3218 = vsel %vm3215, %v3217, %v3213
  %v3219 = vmul.f32 1.0, %v3218
  %v3220 = vrcp.pop %v3064
  %v3221 = vmul.f32 %v3064, %v3220
  %v3222 = vsub.f32 1.0, %v3221
  %v3223 = vmul.f32 %v3220, %v3222
  %v3224 = vadd.f32 %v3220, %v3223
  %vm3225 = vweird.f32 %v3064
  %vm3226 = vweird.f32 %v3220
  %vm3227 = vmor %vm3225, %vm3226
  %v3228 = vsel %vm3227, %v3220, %v3224
  %v3229 = vand.u32 2147483647, %v3064
  %vm3230 = vcmp.eq.f32.partialorder %v3229, 8.507059e+37
  %v3231 = vand.u32 %v3064, 2147483648
  %v3232 = vor.u32 1.1754944e-38, %v3231
  %v3233 = vsel %vm3230, %v3232, %v3228
  %v3234 = vmul.f32 1.0, %v3233
  %v3235 = vrcp.pop %v3065
  %v3236 = vmul.f32 %v3065, %v3235
  %v3237 = vsub.f32 1.0, %v3236
  %v3238 = vmul.f32 %v3235, %v3237
  %v3239 = vadd.f32 %v3235, %v3238
  %vm3240 = vweird.f32 %v3065
  %vm3241 = vweird.f32 %v3235
  %vm3242 = vmor %vm3240, %vm3241
  %v3243 = vsel %vm3242, %v3235, %v3239
  %v3244 = vand.u32 2147483647, %v3065
  %vm3245 = vcmp.eq.f32.partialorder %v3244, 8.507059e+37
  %v3246 = vand.u32 %v3065, 2147483648
  %v3247 = vor.u32 1.1754944e-38, %v3246
  %v3248 = vsel %vm3245, %v3247, %v3243
  %v3249 = vmul.f32 1.0, %v3248
  %v3250 = vrcp.pop %v3066
  %v3251 = vmul.f32 %v3066, %v3250
  %v3252 = vsub.f32 1.0, %v3251
  %v3253 = vmul.f32 %v3250, %v3252
  %v3254 = vadd.f32 %v3250, %v3253
  %vm3255 = vweird.f32 %v3066
  %vm3256 = vweird.f32 %v3250
  %vm3257 = vmor %vm3255, %vm3256
  %v3258 = vsel %vm3257, %v3250, %v3254
  %v3259 = vand.u32 2147483647, %v3066
  %vm3260 = vcmp.eq.f32.partialorder %v3259, 8.507059e+37
  %v3261 = vand.u32 %v3066, 2147483648
  %v3262 = vor.u32 1.1754944e-38, %v3261
  %v3263 = vsel %vm3260, %v3262, %v3258
  %v3264 = vmul.f32 1.0, %v3263
  %v3265 = vrcp.pop %v3067
  %v3266 = vmul.f32 %v3067, %v3265
  %v3267 = vsub.f32 1.0, %v3266
  %v3268 = vmul.f32 %v3265, %v3267
  %v3269 = vadd.f32 %v3265, %v3268
  %vm3270 = vweird.f32 %v3067
  %vm3271 = vweird.f32 %v3265
  %vm3272 = vmor %vm3270, %vm3271
  %v3273 = vsel %vm3272, %v3265, %v3269
  %v3274 = vand.u32 2147483647, %v3067
  %vm3275 = vcmp.eq.f32.partialorder %v3274, 8.507059e+37
  %v3276 = vand.u32 %v3067, 2147483648
  %v3277 = vor.u32 1.1754944e-38, %v3276
  %v3278 = vsel %vm3275, %v3277, %v3273
  %v3279 = vmul.f32 1.0, %v3278
  %v3280 = vrcp.pop %v3068
  %v3281 = vmul.f32 %v3068, %v3280
  %v3282 = vsub.f32 1.0, %v3281
  %v3283 = vmul.f32 %v3280, %v3282
  %v3284 = vadd.f32 %v3280, %v3283
  %vm3285 = vweird.f32 %v3068
  %vm3286 = vweird.f32 %v3280
  %vm3287 = vmor %vm3285, %vm3286
  %v3288 = vsel %vm3287, %v3280, %v3284
  %v3289 = vand.u32 2147483647, %v3068
  %vm3290 = vcmp.eq.f32.partialorder %v3289, 8.507059e+37
  %v3291 = vand.u32 %v3068, 2147483648
  %v3292 = vor.u32 1.1754944e-38, %v3291
  %v3293 = vsel %vm3290, %v3292, %v3288
  %v3294 = vmul.f32 1.0, %v3293
  %v3295 = vrcp.pop %v3069
  %v3296 = vmul.f32 %v3069, %v3295
  %v3297 = vsub.f32 1.0, %v3296
  %v3298 = vmul.f32 %v3295, %v3297
  %v3299 = vadd.f32 %v3295, %v3298
  %vm3300 = vweird.f32 %v3069
  %vm3301 = vweird.f32 %v3295
  %vm3302 = vmor %vm3300, %vm3301
  %v3303 = vsel %vm3302, %v3295, %v3299
  %v3304 = vand.u32 2147483647, %v3069
  %vm3305 = vcmp.eq.f32.partialorder %v3304, 8.507059e+37
  %v3306 = vand.u32 %v3069, 2147483648
  %v3307 = vor.u32 1.1754944e-38, %v3306
  %v3308 = vsel %vm3305, %v3307, %v3303
  %v3309 = vmul.f32 1.0, %v3308
  %v3311 = vsel %vm2099, %v2262, 0
  %v3314 = vsel %vm2099, %v2265, 0
  %v3317 = vsel %vm2099, %v2268, 0
  %v3320 = vsel %vm2099, %v2271, 0
  %v3323 = vsel %vm2099, %v2274, 0
  %v3326 = vsel %vm2099, %v2277, 0
  %v3329 = vsel %vm2099, %v2280, 0
  %v3332 = vsel %vm2099, %v2283, 0
  %v3335 = vsel %vm2099, %v2286, 0
  %v3338 = vsel %vm2099, %v2289, 0
  %v3341 = vsel %vm2099, %v2292, 0
  %v3344 = vsel %vm2099, %v2295, 0
  %v3347 = vsel %vm2099, %v2298, 0
  %v3350 = vsel %vm2099, %v2301, 0
  %v3353 = vsel %vm2099, %v2304, 0
  %v3356 = vsel %vm2099, %v2307, 0
  %v3359 = vsel %vm2099, %v2310, 0
  %v3362 = vsel %vm2099, %v2313, 0
  %v3365 = vsel %vm2099, %v2316, 0
  %v3368 = vsel %vm2099, %v2319, 0
  %v3371 = vsel %vm2099, %v2322, 0
  %v3374 = vsel %vm2099, %v2325, 0
  %v3377 = vsel %vm2099, %v2328, 0
  %v3380 = vsel %vm2099, %v2331, 0
  %v3383 = vsel %vm2099, %v2334, 0
  %v3386 = vsel %vm2099, %v2337, 0
  %v3389 = vsel %vm2099, %v2340, 0
  %v3392 = vsel %vm2099, %v2343, 0
  %v3395 = vsel %vm2099, %v2346, 0
  %v3398 = vsel %vm2099, %v2349, 0
  %v3401 = vsel %vm2099, %v2352, 0
  %v3404 = vsel %vm2099, %v2355, 0
  %v3407 = vsel %vm2099, %v2358, 0
  %v3410 = vsel %vm2099, %v2361, 0
  %v3413 = vsel %vm2099, %v2364, 0
  %v3416 = vsel %vm2099, %v2367, 0
  %v3419 = vsel %vm2099, %v2370, 0
  %v3422 = vsel %vm2099, %v2373, 0
  %v3425 = vsel %vm2099, %v2376, 0
  %v3428 = vsel %vm2099, %v2379, 0
  %v3431 = vsel %vm2099, %v2382, 0
  %v3434 = vsel %vm2099, %v2385, 0
  %v3437 = vsel %vm2099, %v2388, 0
  %v3440 = vsel %vm2099, %v2391, 0
  %v3443 = vsel %vm2099, %v2394, 0
  %v3446 = vsel %vm2099, %v2397, 0
  %v3449 = vsel %vm2099, %v2400, 0
  %v3452 = vsel %vm2099, %v2403, 0
  %3454 = vmatpush.msra.mxu0 0.0
  %3455 = vmatpush.msra.mxu0 0.0
  %3456 = vmatpush.msra.mxu0 0.0
  %3457 = vmatpush.msra.mxu0 0.0
  %3458 = vmatpush.msra.mxu0 0.0
  %3459 = vmatpush.msra.mxu0 0.0
  %3460 = vmatpush.msra.mxu0 0.0
  %3461 = vmatpush.msra.mxu0 0.0
  %3462 = vmatpush.msra.mxu0 0.0
  %3463 = vmatpush.msra.mxu0 0.0
  %3464 = vmatpush.msra.mxu0 0.0
  %3465 = vmatpush.msra.mxu0 0.0
  %3466 = vmatpush.msra.mxu0 0.0
  %3467 = vmatpush.msra.mxu0 0.0
  %3468 = vmatpush.msra.mxu0 0.0
  %3469 = vmatpush.msra.mxu0 %v85
  %3470 = vmatmul.f32.gmra.mxu0 %v3311
  %v3471 = vpop.f32.mrf.mxu0
  %v3472 = vadd.f32 0.0, %v3471
  %3473 = vmatmul.f32.gmra.mxu0 %v3314
  %v3474 = vpop.f32.mrf.mxu0
  %v3475 = vadd.f32 0.0, %v3474
  %3476 = vmatmul.f32.gmra.mxu0 %v3317
  %v3477 = vpop.f32.mrf.mxu0
  %v3478 = vadd.f32 0.0, %v3477
  %3479 = vmatmul.f32.gmra.mxu0 %v3320
  %v3480 = vpop.f32.mrf.mxu0
  %v3481 = vadd.f32 0.0, %v3480
  %3482 = vmatmul.f32.gmra.mxu0 %v3323
  %v3483 = vpop.f32.mrf.mxu0
  %v3484 = vadd.f32 0.0, %v3483
  %3485 = vmatmul.f32.gmra.mxu0 %v3326
  %v3486 = vpop.f32.mrf.mxu0
  %v3487 = vadd.f32 0.0, %v3486
  %3488 = vmatmul.f32.gmra.mxu0 %v3329
  %v3489 = vpop.f32.mrf.mxu0
  %v3490 = vadd.f32 0.0, %v3489
  %3491 = vmatmul.f32.gmra.mxu0 %v3332
  %v3492 = vpop.f32.mrf.mxu0
  %v3493 = vadd.f32 0.0, %v3492
  %3494 = vmatmul.f32.gmra.mxu0 %v3335
  %v3495 = vpop.f32.mrf.mxu0
  %v3496 = vadd.f32 0.0, %v3495
  %3497 = vmatmul.f32.gmra.mxu0 %v3338
  %v3498 = vpop.f32.mrf.mxu0
  %v3499 = vadd.f32 0.0, %v3498
  %3500 = vmatmul.f32.gmra.mxu0 %v3341
  %v3501 = vpop.f32.mrf.mxu0
  %v3502 = vadd.f32 0.0, %v3501
  %3503 = vmatmul.f32.gmra.mxu0 %v3344
  %v3504 = vpop.f32.mrf.mxu0
  %v3505 = vadd.f32 0.0, %v3504
  %3506 = vmatmul.f32.gmra.mxu0 %v3347
  %v3507 = vpop.f32.mrf.mxu0
  %v3508 = vadd.f32 0.0, %v3507
  %3509 = vmatmul.f32.gmra.mxu0 %v3350
  %v3510 = vpop.f32.mrf.mxu0
  %v3511 = vadd.f32 0.0, %v3510
  %3512 = vmatmul.f32.gmra.mxu0 %v3353
  %v3513 = vpop.f32.mrf.mxu0
  %v3514 = vadd.f32 0.0, %v3513
  %3515 = vmatmul.f32.gmra.mxu0 %v3356
  %v3516 = vpop.f32.mrf.mxu0
  %v3517 = vadd.f32 0.0, %v3516
  %3518 = vmatmul.f32.gmra.mxu0 %v3359
  %v3519 = vpop.f32.mrf.mxu0
  %v3520 = vadd.f32 0.0, %v3519
  %3521 = vmatmul.f32.gmra.mxu0 %v3362
  %v3522 = vpop.f32.mrf.mxu0
  %v3523 = vadd.f32 0.0, %v3522
  %3524 = vmatmul.f32.gmra.mxu0 %v3365
  %v3525 = vpop.f32.mrf.mxu0
  %v3526 = vadd.f32 0.0, %v3525
  %3527 = vmatmul.f32.gmra.mxu0 %v3368
  %v3528 = vpop.f32.mrf.mxu0
  %v3529 = vadd.f32 0.0, %v3528
  %3530 = vmatmul.f32.gmra.mxu0 %v3371
  %v3531 = vpop.f32.mrf.mxu0
  %v3532 = vadd.f32 0.0, %v3531
  %3533 = vmatmul.f32.gmra.mxu0 %v3374
  %v3534 = vpop.f32.mrf.mxu0
  %v3535 = vadd.f32 0.0, %v3534
  %3536 = vmatmul.f32.gmra.mxu0 %v3377
  %v3537 = vpop.f32.mrf.mxu0
  %v3538 = vadd.f32 0.0, %v3537
  %3539 = vmatmul.f32.gmra.mxu0 %v3380
  %v3540 = vpop.f32.mrf.mxu0
  %v3541 = vadd.f32 0.0, %v3540
  %3542 = vmatmul.f32.gmra.mxu0 %v3383
  %v3543 = vpop.f32.mrf.mxu0
  %v3544 = vadd.f32 0.0, %v3543
  %3545 = vmatmul.f32.gmra.mxu0 %v3386
  %v3546 = vpop.f32.mrf.mxu0
  %v3547 = vadd.f32 0.0, %v3546
  %3548 = vmatmul.f32.gmra.mxu0 %v3389
  %v3549 = vpop.f32.mrf.mxu0
  %v3550 = vadd.f32 0.0, %v3549
  %3551 = vmatmul.f32.gmra.mxu0 %v3392
  %v3552 = vpop.f32.mrf.mxu0
  %v3553 = vadd.f32 0.0, %v3552
  %3554 = vmatmul.f32.gmra.mxu0 %v3395
  %v3555 = vpop.f32.mrf.mxu0
  %v3556 = vadd.f32 0.0, %v3555
  %3557 = vmatmul.f32.gmra.mxu0 %v3398
  %v3558 = vpop.f32.mrf.mxu0
  %v3559 = vadd.f32 0.0, %v3558
  %3560 = vmatmul.f32.gmra.mxu0 %v3401
  %v3561 = vpop.f32.mrf.mxu0
  %v3562 = vadd.f32 0.0, %v3561
  %3563 = vmatmul.f32.gmra.mxu0 %v3404
  %v3564 = vpop.f32.mrf.mxu0
  %v3565 = vadd.f32 0.0, %v3564
  %3566 = vmatmul.f32.gmra.mxu0 %v3407
  %v3567 = vpop.f32.mrf.mxu0
  %v3568 = vadd.f32 0.0, %v3567
  %3569 = vmatmul.f32.gmra.mxu0 %v3410
  %v3570 = vpop.f32.mrf.mxu0
  %v3571 = vadd.f32 0.0, %v3570
  %3572 = vmatmul.f32.gmra.mxu0 %v3413
  %v3573 = vpop.f32.mrf.mxu0
  %v3574 = vadd.f32 0.0, %v3573
  %3575 = vmatmul.f32.gmra.mxu0 %v3416
  %v3576 = vpop.f32.mrf.mxu0
  %v3577 = vadd.f32 0.0, %v3576
  %3578 = vmatmul.f32.gmra.mxu0 %v3419
  %v3579 = vpop.f32.mrf.mxu0
  %v3580 = vadd.f32 0.0, %v3579
  %3581 = vmatmul.f32.gmra.mxu0 %v3422
  %v3582 = vpop.f32.mrf.mxu0
  %v3583 = vadd.f32 0.0, %v3582
  %3584 = vmatmul.f32.gmra.mxu0 %v3425
  %v3585 = vpop.f32.mrf.mxu0
  %v3586 = vadd.f32 0.0, %v3585
  %3587 = vmatmul.f32.gmra.mxu0 %v3428
  %v3588 = vpop.f32.mrf.mxu0
  %v3589 = vadd.f32 0.0, %v3588
  %3590 = vmatmul.f32.gmra.mxu0 %v3431
  %v3591 = vpop.f32.mrf.mxu0
  %v3592 = vadd.f32 0.0, %v3591
  %3593 = vmatmul.f32.gmra.mxu0 %v3434
  %v3594 = vpop.f32.mrf.mxu0
  %v3595 = vadd.f32 0.0, %v3594
  %3596 = vmatmul.f32.gmra.mxu0 %v3437
  %v3597 = vpop.f32.mrf.mxu0
  %v3598 = vadd.f32 0.0, %v3597
  %3599 = vmatmul.f32.gmra.mxu0 %v3440
  %v3600 = vpop.f32.mrf.mxu0
  %v3601 = vadd.f32 0.0, %v3600
  %3602 = vmatmul.f32.gmra.mxu0 %v3443
  %v3603 = vpop.f32.mrf.mxu0
  %v3604 = vadd.f32 0.0, %v3603
  %3605 = vmatmul.f32.gmra.mxu0 %v3446
  %v3606 = vpop.f32.mrf.mxu0
  %v3607 = vadd.f32 0.0, %v3606
  %3608 = vmatmul.f32.gmra.mxu0 %v3449
  %v3609 = vpop.f32.mrf.mxu0
  %v3610 = vadd.f32 0.0, %v3609
  %3611 = vmatmul.f32.gmra.mxu0 %v3452
  %v3612 = vpop.f32.mrf.mxu0
  %v3613 = vadd.f32 0.0, %v3612
  %3614 = vdwg.mxu0
  %v3615 = vmul.f32 %v3472, %v3084
  %v3616 = vmul.f32 %v3475, %v3099
  %v3617 = vmul.f32 %v3478, %v3114
  %v3618 = vmul.f32 %v3481, %v3129
  %v3619 = vmul.f32 %v3484, %v3144
  %v3620 = vmul.f32 %v3487, %v3159
  %v3621 = vmul.f32 %v3490, %v3174
  %v3622 = vmul.f32 %v3493, %v3189
  %v3623 = vmul.f32 %v3496, %v3204
  %v3624 = vmul.f32 %v3499, %v3219
  %v3625 = vmul.f32 %v3502, %v3234
  %v3626 = vmul.f32 %v3505, %v3249
  %v3627 = vmul.f32 %v3508, %v3264
  %v3628 = vmul.f32 %v3511, %v3279
  %v3629 = vmul.f32 %v3514, %v3294
  %v3630 = vmul.f32 %v3517, %v3309
  %v3631 = vmul.f32 %v3520, %v3084
  %v3632 = vmul.f32 %v3523, %v3099
  %v3633 = vmul.f32 %v3526, %v3114
  %v3634 = vmul.f32 %v3529, %v3129
  %v3635 = vmul.f32 %v3532, %v3144
  %v3636 = vmul.f32 %v3535, %v3159
  %v3637 = vmul.f32 %v3538, %v3174
  %v3638 = vmul.f32 %v3541, %v3189
  %v3639 = vmul.f32 %v3544, %v3204
  %v3640 = vmul.f32 %v3547, %v3219
  %v3641 = vmul.f32 %v3550, %v3234
  %v3642 = vmul.f32 %v3553, %v3249
  %v3643 = vmul.f32 %v3556, %v3264
  %v3644 = vmul.f32 %v3559, %v3279
  %v3645 = vmul.f32 %v3562, %v3294
  %v3646 = vmul.f32 %v3565, %v3309
  %v3647 = vmul.f32 %v3568, %v3084
  %v3648 = vmul.f32 %v3571, %v3099
  %v3649 = vmul.f32 %v3574, %v3114
  %v3650 = vmul.f32 %v3577, %v3129
  %v3651 = vmul.f32 %v3580, %v3144
  %v3652 = vmul.f32 %v3583, %v3159
  %v3653 = vmul.f32 %v3586, %v3174
  %v3654 = vmul.f32 %v3589, %v3189
  %v3655 = vmul.f32 %v3592, %v3204
  %v3656 = vmul.f32 %v3595, %v3219
  %v3657 = vmul.f32 %v3598, %v3234
  %v3658 = vmul.f32 %v3601, %v3249
  %v3659 = vmul.f32 %v3604, %v3264
  %v3660 = vmul.f32 %v3607, %v3279
  %v3661 = vmul.f32 %v3610, %v3294
  %v3662 = vmul.f32 %v3613, %v3309
  %v3663 = vadd.f32 %v1306, %v2874
  %v3664 = vadd.f32 %v1307, %v2875
  %v3665 = vadd.f32 %v1308, %v2876
  %v3666 = vadd.f32 %v1309, %v2877
  %v3667 = vadd.f32 %v1310, %v2878
  %v3668 = vadd.f32 %v1311, %v2879
  %v3669 = vadd.f32 %v1312, %v2880
  %v3670 = vadd.f32 %v1313, %v2881
  %v3671 = vadd.f32 %v1314, %v2882
  %v3672 = vadd.f32 %v1315, %v2883
  %v3673 = vadd.f32 %v1316, %v2884
  %v3674 = vadd.f32 %v1317, %v2885
  %v3675 = vadd.f32 %v1318, %v2886
  %v3676 = vadd.f32 %v1319, %v2887
  %v3677 = vadd.f32 %v1320, %v2888
  %v3678 = vadd.f32 %v1321, %v2889
  %v3679 = vadd.f32 %v2051, %v3615
  %v3680 = vadd.f32 %v2052, %v3616
  %v3681 = vadd.f32 %v2053, %v3617
  %v3682 = vadd.f32 %v2054, %v3618
  %v3683 = vadd.f32 %v2055, %v3619
  %v3684 = vadd.f32 %v2056, %v3620
  %v3685 = vadd.f32 %v2057, %v3621
  %v3686 = vadd.f32 %v2058, %v3622
  %v3687 = vadd.f32 %v2059, %v3623
  %v3688 = vadd.f32 %v2060, %v3624
  %v3689 = vadd.f32 %v2061, %v3625
  %v3690 = vadd.f32 %v2062, %v3626
  %v3691 = vadd.f32 %v2063, %v3627
  %v3692 = vadd.f32 %v2064, %v3628
  %v3693 = vadd.f32 %v2065, %v3629
  %v3694 = vadd.f32 %v2066, %v3630
  %v3695 = vadd.f32 %v2067, %v3631
  %v3696 = vadd.f32 %v2068, %v3632
  %v3697 = vadd.f32 %v2069, %v3633
  %v3698 = vadd.f32 %v2070, %v3634
  %v3699 = vadd.f32 %v2071, %v3635
  %v3700 = vadd.f32 %v2072, %v3636
  %v3701 = vadd.f32 %v2073, %v3637
  %v3702 = vadd.f32 %v2074, %v3638
  %v3703 = vadd.f32 %v2075, %v3639
  %v3704 = vadd.f32 %v2076, %v3640
  %v3705 = vadd.f32 %v2077, %v3641
  %v3706 = vadd.f32 %v2078, %v3642
  %v3707 = vadd.f32 %v2079, %v3643
  %v3708 = vadd.f32 %v2080, %v3644
  %v3709 = vadd.f32 %v2081, %v3645
  %v3710 = vadd.f32 %v2082, %v3646
  %v3711 = vadd.f32 %v2083, %v3647
  %v3712 = vadd.f32 %v2084, %v3648
  %v3713 = vadd.f32 %v2085, %v3649
  %v3714 = vadd.f32 %v2086, %v3650
  %v3715 = vadd.f32 %v2087, %v3651
  %v3716 = vadd.f32 %v2088, %v3652
  %v3717 = vadd.f32 %v2089, %v3653
  %v3718 = vadd.f32 %v2090, %v3654
  %v3719 = vadd.f32 %v2091, %v3655
  %v3720 = vadd.f32 %v2092, %v3656
  %v3721 = vadd.f32 %v2093, %v3657
  %v3722 = vadd.f32 %v2094, %v3658
  %v3723 = vadd.f32 %v2095, %v3659
  %v3724 = vadd.f32 %v2096, %v3660
  %v3725 = vadd.f32 %v2097, %v3661
  %v3726 = vadd.f32 %v2098, %v3662
  %3743 = vrot.lane.b32.xlu0 %v3679, 32
  %v3744 = vpop.permute.xlu0 %3743
  %3745 = vrot.lane.b32.xlu0 %v3680, 32
  %v3746 = vpop.permute.xlu0 %3745
  %3747 = vrot.lane.b32.xlu0 %v3681, 32
  %v3748 = vpop.permute.xlu0 %3747
  %3749 = vrot.lane.b32.xlu0 %v3682, 32
  %v3750 = vpop.permute.xlu0 %3749
  %3751 = vrot.lane.b32.xlu0 %v3683, 32
  %v3752 = vpop.permute.xlu0 %3751
  %3753 = vrot.lane.b32.xlu0 %v3684, 32
  %v3754 = vpop.permute.xlu0 %3753
  %3755 = vrot.lane.b32.xlu0 %v3685, 32
  %v3756 = vpop.permute.xlu0 %3755
  %3757 = vrot.lane.b32.xlu0 %v3686, 32
  %v3758 = vpop.permute.xlu0 %3757
  %3759 = vrot.lane.b32.xlu0 %v3687, 32
  %v3760 = vpop.permute.xlu0 %3759
  %3761 = vrot.lane.b32.xlu0 %v3688, 32
  %v3762 = vpop.permute.xlu0 %3761
  %3763 = vrot.lane.b32.xlu0 %v3689, 32
  %v3764 = vpop.permute.xlu0 %3763
  %3765 = vrot.lane.b32.xlu0 %v3690, 32
  %v3766 = vpop.permute.xlu0 %3765
  %3767 = vrot.lane.b32.xlu0 %v3691, 32
  %v3768 = vpop.permute.xlu0 %3767
  %3769 = vrot.lane.b32.xlu0 %v3692, 32
  %v3770 = vpop.permute.xlu0 %3769
  %3771 = vrot.lane.b32.xlu0 %v3693, 32
  %v3772 = vpop.permute.xlu0 %3771
  %3773 = vrot.lane.b32.xlu0 %v3694, 32
  %v3774 = vpop.permute.xlu0 %3773
  %3807 = vrot.lane.b32.xlu0 %v3695, 40
  %v3808 = vpop.permute.xlu0 %3807
  %3809 = vrot.lane.b32.xlu0 %v3696, 40
  %v3810 = vpop.permute.xlu0 %3809
  %3811 = vrot.lane.b32.xlu0 %v3697, 40
  %v3812 = vpop.permute.xlu0 %3811
  %3813 = vrot.lane.b32.xlu0 %v3698, 40
  %v3814 = vpop.permute.xlu0 %3813
  %3815 = vrot.lane.b32.xlu0 %v3699, 40
  %v3816 = vpop.permute.xlu0 %3815
  %3817 = vrot.lane.b32.xlu0 %v3700, 40
  %v3818 = vpop.permute.xlu0 %3817
  %3819 = vrot.lane.b32.xlu0 %v3701, 40
  %v3820 = vpop.permute.xlu0 %3819
  %3821 = vrot.lane.b32.xlu0 %v3702, 40
  %v3822 = vpop.permute.xlu0 %3821
  %3823 = vrot.lane.b32.xlu0 %v3703, 40
  %v3824 = vpop.permute.xlu0 %3823
  %3825 = vrot.lane.b32.xlu0 %v3704, 40
  %v3826 = vpop.permute.xlu0 %3825
  %3827 = vrot.lane.b32.xlu0 %v3705, 40
  %v3828 = vpop.permute.xlu0 %3827
  %3829 = vrot.lane.b32.xlu0 %v3706, 40
  %v3830 = vpop.permute.xlu0 %3829
  %3831 = vrot.lane.b32.xlu0 %v3707, 40
  %v3832 = vpop.permute.xlu0 %3831
  %3833 = vrot.lane.b32.xlu0 %v3708, 40
  %v3834 = vpop.permute.xlu0 %3833
  %3835 = vrot.lane.b32.xlu0 %v3709, 40
  %v3836 = vpop.permute.xlu0 %3835
  %3837 = vrot.lane.b32.xlu0 %v3710, 40
  %v3838 = vpop.permute.xlu0 %3837
  %3871 = vrot.lane.b32.xlu0 %v3711, 48
  %v3872 = vpop.permute.xlu0 %3871
  %3873 = vrot.lane.b32.xlu0 %v3712, 48
  %v3874 = vpop.permute.xlu0 %3873
  %3875 = vrot.lane.b32.xlu0 %v3713, 48
  %v3876 = vpop.permute.xlu0 %3875
  %3877 = vrot.lane.b32.xlu0 %v3714, 48
  %v3878 = vpop.permute.xlu0 %3877
  %3879 = vrot.lane.b32.xlu0 %v3715, 48
  %v3880 = vpop.permute.xlu0 %3879
  %3881 = vrot.lane.b32.xlu0 %v3716, 48
  %v3882 = vpop.permute.xlu0 %3881
  %3883 = vrot.lane.b32.xlu0 %v3717, 48
  %v3884 = vpop.permute.xlu0 %3883
  %3885 = vrot.lane.b32.xlu0 %v3718, 48
  %v3886 = vpop.permute.xlu0 %3885
  %3887 = vrot.lane.b32.xlu0 %v3719, 48
  %v3888 = vpop.permute.xlu0 %3887
  %3889 = vrot.lane.b32.xlu0 %v3720, 48
  %v3890 = vpop.permute.xlu0 %3889
  %3891 = vrot.lane.b32.xlu0 %v3721, 48
  %v3892 = vpop.permute.xlu0 %3891
  %3893 = vrot.lane.b32.xlu0 %v3722, 48
  %v3894 = vpop.permute.xlu0 %3893
  %3895 = vrot.lane.b32.xlu0 %v3723, 48
  %v3896 = vpop.permute.xlu0 %3895
  %3897 = vrot.lane.b32.xlu0 %v3724, 48
  %v3898 = vpop.permute.xlu0 %3897
  %3899 = vrot.lane.b32.xlu0 %v3725, 48
  %v3900 = vpop.permute.xlu0 %3899
  %3901 = vrot.lane.b32.xlu0 %v3726, 48
  %v3902 = vpop.permute.xlu0 %3901
  %v3919 = vsel %vm1325, %v3663, %v3744
  %v3920 = vsel %vm1325, %v3664, %v3746
  %v3921 = vsel %vm1325, %v3665, %v3748
  %v3922 = vsel %vm1325, %v3666, %v3750
  %v3923 = vsel %vm1325, %v3667, %v3752
  %v3924 = vsel %vm1325, %v3668, %v3754
  %v3925 = vsel %vm1325, %v3669, %v3756
  %v3926 = vsel %vm1325, %v3670, %v3758
  %v3927 = vsel %vm1325, %v3671, %v3760
  %v3928 = vsel %vm1325, %v3672, %v3762
  %v3929 = vsel %vm1325, %v3673, %v3764
  %v3930 = vsel %vm1325, %v3674, %v3766
  %v3931 = vsel %vm1325, %v3675, %v3768
  %v3932 = vsel %vm1325, %v3676, %v3770
  %v3933 = vsel %vm1325, %v3677, %v3772
  %v3934 = vsel %vm1325, %v3678, %v3774
  %vm3935 = vcmask 326656
  %v3936 = vsel %vm3935, %v3919, %v3808
  %v3937 = vsel %vm3935, %v3920, %v3810
  %v3938 = vsel %vm3935, %v3921, %v3812
  %v3939 = vsel %vm3935, %v3922, %v3814
  %v3940 = vsel %vm3935, %v3923, %v3816
  %v3941 = vsel %vm3935, %v3924, %v3818
  %v3942 = vsel %vm3935, %v3925, %v3820
  %v3943 = vsel %vm3935, %v3926, %v3822
  %v3944 = vsel %vm3935, %v3927, %v3824
  %v3945 = vsel %vm3935, %v3928, %v3826
  %v3946 = vsel %vm3935, %v3929, %v3828
  %v3947 = vsel %vm3935, %v3930, %v3830
  %v3948 = vsel %vm3935, %v3931, %v3832
  %v3949 = vsel %vm3935, %v3932, %v3834
  %v3950 = vsel %vm3935, %v3933, %v3836
  %v3951 = vsel %vm3935, %v3934, %v3838
  %vm3952 = vcmask 392192
  %v3953 = vsel %vm3952, %v3936, %v3872
  %v3954 = vsel %vm3952, %v3937, %v3874
  %v3955 = vsel %vm3952, %v3938, %v3876
  %v3956 = vsel %vm3952, %v3939, %v3878
  %v3957 = vsel %vm3952, %v3940, %v3880
  %v3958 = vsel %vm3952, %v3941, %v3882
  %v3959 = vsel %vm3952, %v3942, %v3884
  %v3960 = vsel %vm3952, %v3943, %v3886
  %v3961 = vsel %vm3952, %v3944, %v3888
  %v3962 = vsel %vm3952, %v3945, %v3890
  %v3963 = vsel %vm3952, %v3946, %v3892
  %v3964 = vsel %vm3952, %v3947, %v3894
  %v3965 = vsel %vm3952, %v3948, %v3896
  %v3966 = vsel %vm3952, %v3949, %v3898
  %v3967 = vsel %vm3952, %v3950, %v3900
  %v3968 = vsel %vm3952, %v3951, %v3902
  %vm3969 = vcmask 457728
  %3970 = vst.msk [vmem:[%s16] sm:$0xff] %vm3969, %v3953
  %3971 = vst.msk [vmem:[%s16 + $0x8] sm:$0xff] %vm3969, %v3954
  %3972 = vst.msk [vmem:[%s16 + $0x10] sm:$0xff] %vm3969, %v3955
  %3973 = vst.msk [vmem:[%s16 + $0x18] sm:$0xff] %vm3969, %v3956
  %3974 = vst.msk [vmem:[%s16 + $0x20] sm:$0xff] %vm3969, %v3957
  %3975 = vst.msk [vmem:[%s16 + $0x28] sm:$0xff] %vm3969, %v3958
  %3976 = vst.msk [vmem:[%s16 + $0x30] sm:$0xff] %vm3969, %v3959
  %3977 = vst.msk [vmem:[%s16 + $0x38] sm:$0xff] %vm3969, %v3960
  %3978 = vst.msk [vmem:[%s16 + $0x40] sm:$0xff] %vm3969, %v3961
  %3979 = vst.msk [vmem:[%s16 + $0x48] sm:$0xff] %vm3969, %v3962
  %3980 = vst.msk [vmem:[%s16 + $0x50] sm:$0xff] %vm3969, %v3963
  %3981 = vst.msk [vmem:[%s16 + $0x58] sm:$0xff] %vm3969, %v3964
  %3982 = vst.msk [vmem:[%s16 + $0x60] sm:$0xff] %vm3969, %v3965
  %3983 = vst.msk [vmem:[%s16 + $0x68] sm:$0xff] %vm3969, %v3966
  %3984 = vst.msk [vmem:[%s16 + $0x70] sm:$0xff] %vm3969, %v3967
  %3985 = vst.msk [vmem:[%s16 + $0x78] sm:$0xff] %vm3969, %v3968
  // Predicated region
  $region66: #{gcp_interactions_forward.5} parent=0 // pred_check
    _
  $region67: #{gcp_interactions_forward.5} parent=0 // pred_check_branch
    %3987 = sbr.rel (0) target = $region69
  $region68: #{gcp_interactions_forward.5} parent=0 // pred_region
    _
  $region69: #{gcp_interactions_forward.5} parent=0 // pred_fallthru
    _
  // Predicated region
  $region70: #{gcp_interactions_forward.5} parent=0 // pred_check
    _
  $region71: #{gcp_interactions_forward.5} parent=0 // pred_check_branch
    %3989 = sbr.rel (0) target = $region73
  $region72: #{gcp_interactions_forward.5} parent=0 // pred_region
    _
  $region73: #{gcp_interactions_forward.5} parent=0 // pred_fallthru
    _

</llo_original>
